<compile_context>
chip_gen: v6e
topology: v6e:2x2x1
jax: 0.10.0
libtpu: 0.0.40
codegen_flags: <defaults>
</compile_context>

<pallas_src>
import functools

import jax
import jax.numpy as jnp
from jax import lax
from jax.experimental import pallas as pl
from jax.experimental.pallas import tpu as pltpu

C_PAD = 128                    # every channel dim padded to one lane width
OUT_LANES = 128                # lane-dense LID score / top-(k+1) width
BIG = 1e30                     # "removed / padded" sentinel for k-NN
VMEM_LIMIT = 32 * 1024 * 1024  # demo shapes; re-derive tile sizes for v7x (64 MiB)


def _round_up(x, m):
    return ((x + m - 1) // m) * m


# ---------------------------------------------------------------------------
# Fused feature extractor: L x (conv3x3 + bias + ReLU) + global average pools
# ---------------------------------------------------------------------------
def _feature_kernel(x_ref, w_ref, b_ref, xpos_ref, pool_ref, pad_ref, strip_ref,
                    *, H, W, num_layers, l_pad):
    # x_ref    : (1, H*W, C_PAD) bf16   flattened-NHWC image
    # w_ref    : (L, 9*C_PAD, C_PAD) bf16  tap-major weight slabs
    # b_ref    : (L, 1, C_PAD) f32
    # xpos_ref : (H*W, 1) int32         x position of each flattened pixel
    # pool_ref : (1, l_pad, C_PAD) f32  row l = layer-l spatial mean
    # pad_ref  : (pad_rows, C_PAD) bf16 spatially zero-padded activation
    # strip_ref: (H*W, 9*C_PAD) bf16    im2col strip
    HW = H * W
    off = _round_up(W + 1, 16)            # packing-aligned interior offset
    pad_rows = pad_ref.shape[0]

    # Zero only the halo bands; the interior is fully rewritten each layer.
    pad_ref[0:off, :] = jnp.zeros((off, C_PAD), jnp.bfloat16)
    pad_ref[off + HW:pad_rows, :] = jnp.zeros((pad_rows - off - HW, C_PAD),
                                              jnp.bfloat16)
    pad_ref[off:off + HW, :] = x_ref[0]

    xpos = xpos_ref[...]                  # (HW, 1)
    left_ok = xpos > 0                    # column x-1 exists
    right_ok = xpos < (W - 1)             # column x+1 exists

    pools = []
    for l in range(num_layers):
        # Build the im2col strip: 9 shifted taps, masked in bf16 (matmul dtype).
        for dy in range(3):
            for dx in range(3):
                t = dy * 3 + dx
                start = off + (dy - 1) * W + (dx - 1)      # static offset
                tap = pad_ref[start:start + HW, :]
                if dx == 0:
                    tap = jnp.where(left_ok, tap, jnp.zeros_like(tap))
                elif dx == 2:
                    tap = jnp.where(right_ok, tap, jnp.zeros_like(tap))
                strip_ref[:, t * C_PAD:(t + 1) * C_PAD] = tap

        # Single K = 9*C_PAD matmul per layer, f32 accumulation on the MXU.
        acc = jnp.dot(strip_ref[...], w_ref[l],
                      preferred_element_type=jnp.float32)
        acc = jnp.maximum(acc + b_ref[l], 0.0)             # bias + ReLU, f32
        pools.append(jnp.mean(acc, axis=0, keepdims=True))  # (1, C_PAD)

        if l + 1 < num_layers:
            # Next layer's input goes straight back into the pad buffer:
            # the intermediate feature map never touches HBM.
            pad_ref[off:off + HW, :] = acc.astype(jnp.bfloat16)

    if l_pad > num_layers:
        pools.append(jnp.zeros((l_pad - num_layers, C_PAD), jnp.float32))
    pool_ref[0] = jnp.concatenate(pools, axis=0)           # one dense store


def extract_pooled(x_nchw, w_all, b_all):
    """(B,C,H,W) f32 -> (B, L, C_PAD) f32 pooled per-layer features."""
    B, C, H, W = x_nchw.shape
    HW = H * W
    assert HW % 8 == 0
    L = w_all.shape[0]
    l_pad = _round_up(max(L, 1), 8)
    off = _round_up(W + 1, 16)
    pad_rows = _round_up(off + HW + W + 1, 16)

    # NCHW f32 -> flattened NHWC bf16, channels zero-padded to 128 lanes.
    x2 = jnp.transpose(x_nchw, (0, 2, 3, 1)).reshape(B, HW, C)
    x2 = jnp.pad(x2, ((0, 0), (0, 0), (0, C_PAD - C))).astype(jnp.bfloat16)
    xpos = (jnp.arange(HW, dtype=jnp.int32) % W).reshape(HW, 1)

    pool = pl.pallas_call(
        functools.partial(_feature_kernel, H=H, W=W, num_layers=L, l_pad=l_pad),
        out_shape=jax.ShapeDtypeStruct((B, l_pad, C_PAD), jnp.float32),
        grid_spec=pltpu.PrefetchScalarGridSpec(
            num_scalar_prefetch=0,
            grid=(B,),
            in_specs=[
                pl.BlockSpec((1, HW, C_PAD), lambda b: (b, 0, 0)),
                pl.BlockSpec((L, 9 * C_PAD, C_PAD), lambda b: (0, 0, 0)),
                pl.BlockSpec((L, 1, C_PAD), lambda b: (0, 0, 0)),
                pl.BlockSpec((HW, 1), lambda b: (0, 0)),
            ],
            out_specs=pl.BlockSpec((1, l_pad, C_PAD), lambda b: (b, 0, 0)),
            scratch_shapes=[pltpu.VMEM((pad_rows, C_PAD), jnp.bfloat16),
                            pltpu.VMEM((HW, 9 * C_PAD), jnp.bfloat16)],
        ),
        compiler_params=pltpu.CompilerParams(
            dimension_semantics=("parallel",),
            vmem_limit_bytes=VMEM_LIMIT,
        ),
    )(x2, w_all, b_all, xpos)
    return pool[:, :L, :]


# ---------------------------------------------------------------------------
# LID kernel: bank streamed in N-tiles, running top-(k+1), f32 distances
# ---------------------------------------------------------------------------
def _lid_kernel(f_ref, t_ref, t2_ref, o_ref, top_ref, *, k, n_valid, n_tile):
    # f_ref  : (1, B, C_PAD) f32  pooled features of layer l
    # t_ref  : (1, C_PAD, n_tile) f32  bank tile
    # t2_ref : (1, 1, n_tile) f32      precomputed ||t||^2 for the tile
    # o_ref  : (B, OUT_LANES) f32      lane l holds the layer-l LID score
    # top_ref: (B, OUT_LANES) f32      running top-(k+1) squared distances
    l = pl.program_id(0)
    n = pl.program_id(1)
    n_last = pl.num_programs(1) - 1

    @pl.when((l == 0) & (n == 0))
    def _():
        o_ref[...] = jnp.zeros_like(o_ref)

    @pl.when(n == 0)
    def _():
        top_ref[...] = jnp.full_like(top_ref, BIG)

    f = f_ref[0]                                         # (B, C_PAD)
    t = t_ref[0]                                         # (C_PAD, n_tile)
    f2 = jnp.sum(f * f, axis=-1, keepdims=True)          # (B, 1)
    # f32 gram on the MXU: avoids the bf16 cancellation on the smallest
    # distances (exactly the ones LID's log(d_j / r_k) uses).
    gram = jnp.dot(f, t, preferred_element_type=jnp.float32)
    d2 = jnp.maximum(f2 + t2_ref[0] - 2.0 * gram, 1e-12)
    col = lax.broadcasted_iota(jnp.int32, d2.shape, 1) + n * n_tile
    d2 = jnp.where(col < n_valid, d2, BIG)               # mask padded columns

    # Running top-(k+1) merge: one cross-lane min per extraction, ties are
    # poisoned directly (no second "argmin" reduction).
    # TODO(synk): exactly-tied duplicate bank points are collapsed into one
    # neighbor here, whereas sklearn counts them separately.
    cand = jnp.concatenate([top_ref[...], d2], axis=-1)  # (B, 128 + n_tile)
    lane = lax.broadcasted_iota(jnp.int32, top_ref.shape, 1)
    new_top = jnp.full(top_ref.shape, BIG, jnp.float32)
    for j in range(k + 1):
        m = jnp.min(cand, axis=-1, keepdims=True)        # (B, 1)
        new_top = jnp.where(lane == j, m, new_top)
        cand = jnp.where(cand == m, BIG, cand)
    top_ref[...] = new_top

    @pl.when(n == n_last)
    def _():
        top = top_ref[...]                               # lanes 0..k ascending
        logs = jnp.log(top)                              # log of squared dists
        in_1k = (lane >= 1) & (lane <= k)                # drop nearest (as ref)
        sum_log = jnp.sum(jnp.where(in_1k, logs, 0.0), axis=-1, keepdims=True)
        log_rk = jnp.sum(jnp.where(lane == k, logs, 0.0), axis=-1, keepdims=True)
        # sum_j log(d_j / r_k) = 0.5 * (sum_j log d2_j - k * log r2_k): no sqrt.
        denom = 0.5 * (sum_log - jnp.float32(k) * log_rk)
        score = -jnp.float32(k) * pl.reciprocal(denom, approx=True)
        out_lane = lax.broadcasted_iota(jnp.int32, o_ref.shape, 1)
        o_ref[...] = jnp.where(out_lane == l, score, o_ref[...])


def lid_scores(pooled_all, banks, bank_norms, *, k, n_tile):
    """pooled_all (L,B,C_PAD), banks (L,C_PAD,N), norms (L,1,N) -> (B,L)."""
    L, B, _ = pooled_all.shape
    n_train = banks.shape[2]
    assert n_train > k, "need at least k+1 bank points"
    n_pad = _round_up(n_train, n_tile)
    banks_p = jnp.pad(banks, ((0, 0), (0, 0), (0, n_pad - n_train)))
    norms_p = jnp.pad(bank_norms, ((0, 0), (0, 0), (0, n_pad - n_train)))
    out = pl.pallas_call(
        functools.partial(_lid_kernel, k=k, n_valid=n_train, n_tile=n_tile),
        out_shape=jax.ShapeDtypeStruct((B, OUT_LANES), jnp.float32),
        grid_spec=pltpu.PrefetchScalarGridSpec(
            num_scalar_prefetch=0,
            grid=(L, n_pad // n_tile),
            in_specs=[
                pl.BlockSpec((1, B, C_PAD), lambda l, n: (l, 0, 0)),
                pl.BlockSpec((1, C_PAD, n_tile), lambda l, n: (l, 0, n)),
                pl.BlockSpec((1, 1, n_tile), lambda l, n: (l, 0, n)),
            ],
            out_specs=pl.BlockSpec((B, OUT_LANES), lambda l, n: (0, 0)),
            scratch_shapes=[pltpu.VMEM((B, OUT_LANES), jnp.float32)],
        ),
        compiler_params=pltpu.CompilerParams(
            dimension_semantics=("arbitrary", "arbitrary"),
            vmem_limit_bytes=VMEM_LIMIT,
        ),
    )(pooled_all, banks_p, norms_p)
    return out[:, :L]


# ---------------------------------------------------------------------------
# Parameter prep + detector-level wrappers
# ---------------------------------------------------------------------------
def prep_layers(raw_params):
    """[(w (Cout,Cin,3,3), b (Cout,)), ...] -> (L,9*C_PAD,C_PAD) bf16, (L,1,C_PAD) f32."""
    wts, bps = [], []
    for w, b in raw_params:
        cout, cin = w.shape[0], w.shape[1]
        wt = jnp.transpose(w, (2, 3, 1, 0)).reshape(9, cin, cout)
        wt = jnp.pad(wt, ((0, 0), (0, C_PAD - cin), (0, C_PAD - cout)))
        wts.append(wt.reshape(9 * C_PAD, C_PAD).astype(jnp.bfloat16))
        bps.append(jnp.pad(b, (0, C_PAD - cout)).reshape(1, C_PAD)
                   .astype(jnp.float32))
    return jnp.stack(wts, axis=0), jnp.stack(bps, axis=0)


@jax.jit
def fit_banks(x_train_nchw, w_all, b_all):
    """LIDDetector.fit: per-layer pooled-feature banks + precomputed ||t||^2.

    # TODO(synk): sklearn NearestNeighbors index is replaced by exact
    # brute-force top-(k+1) over this stored bank inside the LID kernel.
    """
    pooled = extract_pooled(x_train_nchw, w_all, b_all)     # (N, L, C_PAD)
    banks = jnp.transpose(pooled, (1, 2, 0))                # (L, C_PAD, N)
    norms = jnp.sum(banks * banks, axis=1, keepdims=True)   # (L, 1, N)
    return banks, norms


@functools.partial(jax.jit, static_argnames=("k", "n_tile"))
def lid_forward(x_nchw, w_all, b_all, banks, bank_norms, *, k, n_tile=128):
    """LIDDetector.forward: (B, C, H, W) -> (B, num_layers) LID scores."""
    pooled = extract_pooled(x_nchw, w_all, b_all)            # (B, L, C_PAD)
    pooled_all = jnp.transpose(pooled, (1, 0, 2))            # (L, B, C_PAD)
    return lid_scores(pooled_all, banks, bank_norms, k=k, n_tile=n_tile)


# ---------------------------------------------------------------------------
# Driver
# ---------------------------------------------------------------------------
if __name__ == "__main__":
    key = jax.random.PRNGKey(0)
    k_neighbors = 4                  # LID "k" (small for the demo)
    B, C_in, H, W = 2, 4, 16, 16     # NCHW input
    C1, C2 = 8, 16                   # feature channels of the 2 conv layers
    N_train = 200                    # > one LID N-tile -> exercises the merge

    k0, k1, k2, k3 = jax.random.split(key, 4)
    raw_params = [
        (0.1 * jax.random.normal(k0, (C1, C_in, 3, 3), jnp.float32),
         0.01 * jnp.arange(C1, dtype=jnp.float32)),
        (0.1 * jax.random.normal(k1, (C2, C1, 3, 3), jnp.float32),
         0.01 * jnp.arange(C2, dtype=jnp.float32)),
    ]
    w_all, b_all = prep_layers(raw_params)

    # Emulate .fit() on in-distribution data with the same fused pipeline.
    x_train = jax.random.normal(k2, (N_train, C_in, H, W), jnp.float32)
    banks, bank_norms = fit_banks(x_train, w_all, b_all)

    x = jax.random.normal(k3, (B, C_in, H, W), jnp.float32)
    scores = lid_forward(x, w_all, b_all, banks, bank_norms, k=k_neighbors)
    scores = jax.block_until_ready(scores)

    assert scores.shape == (B, len(raw_params))
    assert bool(jnp.all(jnp.isfinite(scores)))
    print("KERNEL_OK")
</pallas_src>

<mosaic_0001>
module attributes {stable_mosaic.version = 11 : i64} {
  func.func @_feature_kernel(%arg0: i32, %arg1: memref<1x256x128xbf16, #tpu.memory_space<vmem>>, %arg2: memref<2x1152x128xbf16, #tpu.memory_space<vmem>>, %arg3: memref<2x1x128xf32, #tpu.memory_space<vmem>>, %arg4: memref<256x1xi32, #tpu.memory_space<vmem>>, %arg5: memref<1x8x128xf32, #tpu.memory_space<vmem>>, %arg6: memref<320x128xbf16, #tpu.memory_space<vmem>>, %arg7: memref<256x1152xbf16, #tpu.memory_space<vmem>>) attributes {dimension_semantics = [#tpu.dimension_semantics<parallel>], iteration_bounds = array<i64: 200>, scalar_prefetch = 0 : i64, scratch_operands = 2 : i64, tpu.core_type = #tpu.core_type<tc>, window_params = [{transform_indices = @transform_0, window_bounds = array<i64: 1, 256, 128>}, {pipeline_mode = #tpu.pipeline_mode<synchronous>, transform_indices = @transform_1, window_bounds = array<i64: 2, 1152, 128>}, {pipeline_mode = #tpu.pipeline_mode<synchronous>, transform_indices = @transform_2, window_bounds = array<i64: 2, 1, 128>}, {pipeline_mode = #tpu.pipeline_mode<synchronous>, transform_indices = @transform_3, window_bounds = array<i64: 256, 1>}, {transform_indices = @transform_4, window_bounds = array<i64: 1, 8, 128>}]} {
    %cst = arith.constant 0.000000e+00 : bf16
    %0 = vector.broadcast %cst : bf16 to vector<32x128xbf16>
    %c0 = arith.constant 0 : index
    %c0_0 = arith.constant 0 : index
    %1 = vector.load %arg6[%c0, %c0_0] : memref<320x128xbf16, #tpu.memory_space<vmem>>, vector<32x128xbf16>
    tpu.vector_store %arg6[%c0, %c0_0], %0 {strides = array<i32>} : memref<320x128xbf16, #tpu.memory_space<vmem>>, vector<32x128xbf16>,
    %cst_1 = arith.constant 0.000000e+00 : bf16
    %2 = vector.broadcast %cst_1 : bf16 to vector<32x128xbf16>
    %c288 = arith.constant 288 : index
    %c0_2 = arith.constant 0 : index
    %3 = vector.load %arg6[%c288, %c0_2] : memref<320x128xbf16, #tpu.memory_space<vmem>>, vector<32x128xbf16>
    tpu.vector_store %arg6[%c288, %c0_2], %2 {strides = array<i32>} : memref<320x128xbf16, #tpu.memory_space<vmem>>, vector<32x128xbf16>,
    %c0_3 = arith.constant 0 : index
    %c0_4 = arith.constant 0 : index
    %c0_5 = arith.constant 0 : index
    %4 = vector.load %arg1[%c0_3, %c0_4, %c0_5] : memref<1x256x128xbf16, #tpu.memory_space<vmem>>, vector<1x256x128xbf16>
    %5 = vector.shape_cast %4 : vector<1x256x128xbf16> to vector<256x128xbf16>
    %c32 = arith.constant 32 : index
    %c0_6 = arith.constant 0 : index
    %6 = vector.load %arg6[%c32, %c0_6] : memref<320x128xbf16, #tpu.memory_space<vmem>>, vector<256x128xbf16>
    tpu.vector_store %arg6[%c32, %c0_6], %5 {strides = array<i32>} : memref<320x128xbf16, #tpu.memory_space<vmem>>, vector<256x128xbf16>,
    %c0_7 = arith.constant 0 : index
    %c0_8 = arith.constant 0 : index
    %7 = vector.load %arg4[%c0_7, %c0_8] : memref<256x1xi32, #tpu.memory_space<vmem>>, vector<256x1xi32>
    %c0_i32 = arith.constant 0 : i32
    %8 = vector.broadcast %c0_i32 : i32 to vector<256x1xi32>
    %9 = arith.cmpi sgt, %7, %8 : vector<256x1xi32>
    %c15_i32 = arith.constant 15 : i32
    %10 = vector.broadcast %c15_i32 : i32 to vector<256x1xi32>
    %11 = arith.cmpi slt, %7, %10 : vector<256x1xi32>
    %c15 = arith.constant 15 : index
    %c0_9 = arith.constant 0 : index
    %12 = vector.load %arg6[%c15, %c0_9] : memref<320x128xbf16, #tpu.memory_space<vmem>>, vector<256x128xbf16>
    %cst_10 = arith.constant 0.000000e+00 : bf16
    %13 = vector.broadcast %cst_10 : bf16 to vector<256x128xbf16>
    %14 = vector.shape_cast %9 : vector<256x1xi1> to vector<256x1xi1>
    %15 = vector.broadcast %14 : vector<256x1xi1> to vector<256x128xi1>
    %16 = arith.select %15, %12, %13 : vector<256x128xi1>, vector<256x128xbf16>
    %c0_11 = arith.constant 0 : index
    %c0_12 = arith.constant 0 : index
    %17 = vector.load %arg7[%c0_11, %c0_12] : memref<256x1152xbf16, #tpu.memory_space<vmem>>, vector<256x128xbf16>
    tpu.vector_store %arg7[%c0_11, %c0_12], %16 {strides = array<i32>} : memref<256x1152xbf16, #tpu.memory_space<vmem>>, vector<256x128xbf16>,
    %c16 = arith.constant 16 : index
    %c0_13 = arith.constant 0 : index
    %18 = vector.load %arg6[%c16, %c0_13] : memref<320x128xbf16, #tpu.memory_space<vmem>>, vector<256x128xbf16>
    %c0_14 = arith.constant 0 : index
    %c128 = arith.constant 128 : index
    %19 = vector.load %arg7[%c0_14, %c128] : memref<256x1152xbf16, #tpu.memory_space<vmem>>, vector<256x128xbf16>
    tpu.vector_store %arg7[%c0_14, %c128], %18 {strides = array<i32>} : memref<256x1152xbf16, #tpu.memory_space<vmem>>, vector<256x128xbf16>,
    %c17 = arith.constant 17 : index
    %c0_15 = arith.constant 0 : index
    %20 = vector.load %arg6[%c17, %c0_15] : memref<320x128xbf16, #tpu.memory_space<vmem>>, vector<256x128xbf16>
    %cst_16 = arith.constant 0.000000e+00 : bf16
    %21 = vector.broadcast %cst_16 : bf16 to vector<256x128xbf16>
    %22 = vector.shape_cast %11 : vector<256x1xi1> to vector<256x1xi1>
    %23 = vector.broadcast %22 : vector<256x1xi1> to vector<256x128xi1>
    %24 = arith.select %23, %20, %21 : vector<256x128xi1>, vector<256x128xbf16>
    %c0_17 = arith.constant 0 : index
    %c256 = arith.constant 256 : index
    %25 = vector.load %arg7[%c0_17, %c256] : memref<256x1152xbf16, #tpu.memory_space<vmem>>, vector<256x128xbf16>
    tpu.vector_store %arg7[%c0_17, %c256], %24 {strides = array<i32>} : memref<256x1152xbf16, #tpu.memory_space<vmem>>, vector<256x128xbf16>,
    %c31 = arith.constant 31 : index
    %c0_18 = arith.constant 0 : index
    %26 = vector.load %arg6[%c31, %c0_18] : memref<320x128xbf16, #tpu.memory_space<vmem>>, vector<256x128xbf16>
    %cst_19 = arith.constant 0.000000e+00 : bf16
    %27 = vector.broadcast %cst_19 : bf16 to vector<256x128xbf16>
    %28 = vector.shape_cast %9 : vector<256x1xi1> to vector<256x1xi1>
    %29 = vector.broadcast %28 : vector<256x1xi1> to vector<256x128xi1>
    %30 = arith.select %29, %26, %27 : vector<256x128xi1>, vector<256x128xbf16>
    %c0_20 = arith.constant 0 : index
    %c384 = arith.constant 384 : index
    %31 = vector.load %arg7[%c0_20, %c384] : memref<256x1152xbf16, #tpu.memory_space<vmem>>, vector<256x128xbf16>
    tpu.vector_store %arg7[%c0_20, %c384], %30 {strides = array<i32>} : memref<256x1152xbf16, #tpu.memory_space<vmem>>, vector<256x128xbf16>,
    %c32_21 = arith.constant 32 : index
    %c0_22 = arith.constant 0 : index
    %32 = vector.load %arg6[%c32_21, %c0_22] : memref<320x128xbf16, #tpu.memory_space<vmem>>, vector<256x128xbf16>
    %c0_23 = arith.constant 0 : index
    %c512 = arith.constant 512 : index
    %33 = vector.load %arg7[%c0_23, %c512] : memref<256x1152xbf16, #tpu.memory_space<vmem>>, vector<256x128xbf16>
    tpu.vector_store %arg7[%c0_23, %c512], %32 {strides = array<i32>} : memref<256x1152xbf16, #tpu.memory_space<vmem>>, vector<256x128xbf16>,
    %c33 = arith.constant 33 : index
    %c0_24 = arith.constant 0 : index
    %34 = vector.load %arg6[%c33, %c0_24] : memref<320x128xbf16, #tpu.memory_space<vmem>>, vector<256x128xbf16>
    %cst_25 = arith.constant 0.000000e+00 : bf16
    %35 = vector.broadcast %cst_25 : bf16 to vector<256x128xbf16>
    %36 = vector.shape_cast %11 : vector<256x1xi1> to vector<256x1xi1>
    %37 = vector.broadcast %36 : vector<256x1xi1> to vector<256x128xi1>
    %38 = arith.select %37, %34, %35 : vector<256x128xi1>, vector<256x128xbf16>
    %c0_26 = arith.constant 0 : index
    %c640 = arith.constant 640 : index
    %39 = vector.load %arg7[%c0_26, %c640] : memref<256x1152xbf16, #tpu.memory_space<vmem>>, vector<256x128xbf16>
    tpu.vector_store %arg7[%c0_26, %c640], %38 {strides = array<i32>} : memref<256x1152xbf16, #tpu.memory_space<vmem>>, vector<256x128xbf16>,
    %c47 = arith.constant 47 : index
    %c0_27 = arith.constant 0 : index
    %40 = vector.load %arg6[%c47, %c0_27] : memref<320x128xbf16, #tpu.memory_space<vmem>>, vector<256x128xbf16>
    %cst_28 = arith.constant 0.000000e+00 : bf16
    %41 = vector.broadcast %cst_28 : bf16 to vector<256x128xbf16>
    %42 = vector.shape_cast %9 : vector<256x1xi1> to vector<256x1xi1>
    %43 = vector.broadcast %42 : vector<256x1xi1> to vector<256x128xi1>
    %44 = arith.select %43, %40, %41 : vector<256x128xi1>, vector<256x128xbf16>
    %c0_29 = arith.constant 0 : index
    %c768 = arith.constant 768 : index
    %45 = vector.load %arg7[%c0_29, %c768] : memref<256x1152xbf16, #tpu.memory_space<vmem>>, vector<256x128xbf16>
    tpu.vector_store %arg7[%c0_29, %c768], %44 {strides = array<i32>} : memref<256x1152xbf16, #tpu.memory_space<vmem>>, vector<256x128xbf16>,
    %c48 = arith.constant 48 : index
    %c0_30 = arith.constant 0 : index
    %46 = vector.load %arg6[%c48, %c0_30] : memref<320x128xbf16, #tpu.memory_space<vmem>>, vector<256x128xbf16>
    %c0_31 = arith.constant 0 : index
    %c896 = arith.constant 896 : index
    %47 = vector.load %arg7[%c0_31, %c896] : memref<256x1152xbf16, #tpu.memory_space<vmem>>, vector<256x128xbf16>
    tpu.vector_store %arg7[%c0_31, %c896], %46 {strides = array<i32>} : memref<256x1152xbf16, #tpu.memory_space<vmem>>, vector<256x128xbf16>,
    %c49 = arith.constant 49 : index
    %c0_32 = arith.constant 0 : index
    %48 = vector.load %arg6[%c49, %c0_32] : memref<320x128xbf16, #tpu.memory_space<vmem>>, vector<256x128xbf16>
    %cst_33 = arith.constant 0.000000e+00 : bf16
    %49 = vector.broadcast %cst_33 : bf16 to vector<256x128xbf16>
    %50 = vector.shape_cast %11 : vector<256x1xi1> to vector<256x1xi1>
    %51 = vector.broadcast %50 : vector<256x1xi1> to vector<256x128xi1>
    %52 = arith.select %51, %48, %49 : vector<256x128xi1>, vector<256x128xbf16>
    %c0_34 = arith.constant 0 : index
    %c1024 = arith.constant 1024 : index
    %53 = vector.load %arg7[%c0_34, %c1024] : memref<256x1152xbf16, #tpu.memory_space<vmem>>, vector<256x128xbf16>
    tpu.vector_store %arg7[%c0_34, %c1024], %52 {strides = array<i32>} : memref<256x1152xbf16, #tpu.memory_space<vmem>>, vector<256x128xbf16>,
    %c0_35 = arith.constant 0 : index
    %c0_36 = arith.constant 0 : index
    %54 = vector.load %arg7[%c0_35, %c0_36] : memref<256x1152xbf16, #tpu.memory_space<vmem>>, vector<256x1152xbf16>
    %c0_37 = arith.constant 0 : index
    %c0_38 = arith.constant 0 : index
    %c0_39 = arith.constant 0 : index
    %55 = vector.load %arg2[%c0_37, %c0_38, %c0_39] : memref<2x1152x128xbf16, #tpu.memory_space<vmem>>, vector<1x1152x128xbf16>
    %56 = vector.shape_cast %55 : vector<1x1152x128xbf16> to vector<1152x128xbf16>
    %cst_40 = arith.constant dense<0.000000e+00> : vector<256x128xf32>
    %57 = tpu.matmul %54, %56, %cst_40 {dimension_numbers = #tpu.dot_dimension_numbers<[1], [0], [0], [1], [0, 0, 1, 1], [], []>} : vector<256x1152xbf16>, vector<1152x128xbf16>, vector<256x128xf32> -> vector<256x128xf32>
    %c0_41 = arith.constant 0 : index
    %c0_42 = arith.constant 0 : index
    %c0_43 = arith.constant 0 : index
    %58 = vector.load %arg3[%c0_41, %c0_42, %c0_43] : memref<2x1x128xf32, #tpu.memory_space<vmem>>, vector<1x1x128xf32>
    %59 = vector.shape_cast %58 : vector<1x1x128xf32> to vector<1x128xf32>
    %60 = vector.broadcast %59 : vector<1x128xf32> to vector<256x128xf32>
    %61 = arith.addf %57, %60 : vector<256x128xf32>
    %cst_44 = arith.constant 0.000000e+00 : f32
    %62 = vector.broadcast %cst_44 : f32 to vector<256x128xf32>
    %63 = arith.maximumf %61, %62 : vector<256x128xf32>
    %cst_45 = arith.constant dense<0.000000e+00> : vector<128xf32>
    %64 = vector.multi_reduction <add>, %63, %cst_45 [0] : vector<256x128xf32> to vector<128xf32>
    %65 = vector.shape_cast %64 : vector<128xf32> to vector<1x128xf32>
    %cst_46 = arith.constant 2.560000e+02 : f32
    %66 = vector.broadcast %cst_46 : f32 to vector<1x128xf32>
    %67 = arith.divf %65, %66 : vector<1x128xf32>
    %68 = arith.truncf %63 : vector<256x128xf32> to vector<256x128xbf16>
    %c32_47 = arith.constant 32 : index
    %c0_48 = arith.constant 0 : index
    %69 = vector.load %arg6[%c32_47, %c0_48] : memref<320x128xbf16, #tpu.memory_space<vmem>>, vector<256x128xbf16>
    tpu.vector_store %arg6[%c32_47, %c0_48], %68 {strides = array<i32>} : memref<320x128xbf16, #tpu.memory_space<vmem>>, vector<256x128xbf16>,
    %c15_49 = arith.constant 15 : index
    %c0_50 = arith.constant 0 : index
    %70 = vector.load %arg6[%c15_49, %c0_50] : memref<320x128xbf16, #tpu.memory_space<vmem>>, vector<256x128xbf16>
    %cst_51 = arith.constant 0.000000e+00 : bf16
    %71 = vector.broadcast %cst_51 : bf16 to vector<256x128xbf16>
    %72 = vector.shape_cast %9 : vector<256x1xi1> to vector<256x1xi1>
    %73 = vector.broadcast %72 : vector<256x1xi1> to vector<256x128xi1>
    %74 = arith.select %73, %70, %71 : vector<256x128xi1>, vector<256x128xbf16>
    %c0_52 = arith.constant 0 : index
    %c0_53 = arith.constant 0 : index
    %75 = vector.load %arg7[%c0_52, %c0_53] : memref<256x1152xbf16, #tpu.memory_space<vmem>>, vector<256x128xbf16>
    tpu.vector_store %arg7[%c0_52, %c0_53], %74 {strides = array<i32>} : memref<256x1152xbf16, #tpu.memory_space<vmem>>, vector<256x128xbf16>,
    %c16_54 = arith.constant 16 : index
    %c0_55 = arith.constant 0 : index
    %76 = vector.load %arg6[%c16_54, %c0_55] : memref<320x128xbf16, #tpu.memory_space<vmem>>, vector<256x128xbf16>
    %c0_56 = arith.constant 0 : index
    %c128_57 = arith.constant 128 : index
    %77 = vector.load %arg7[%c0_56, %c128_57] : memref<256x1152xbf16, #tpu.memory_space<vmem>>, vector<256x128xbf16>
    tpu.vector_store %arg7[%c0_56, %c128_57], %76 {strides = array<i32>} : memref<256x1152xbf16, #tpu.memory_space<vmem>>, vector<256x128xbf16>,
    %c17_58 = arith.constant 17 : index
    %c0_59 = arith.constant 0 : index
    %78 = vector.load %arg6[%c17_58, %c0_59] : memref<320x128xbf16, #tpu.memory_space<vmem>>, vector<256x128xbf16>
    %cst_60 = arith.constant 0.000000e+00 : bf16
    %79 = vector.broadcast %cst_60 : bf16 to vector<256x128xbf16>
    %80 = vector.shape_cast %11 : vector<256x1xi1> to vector<256x1xi1>
    %81 = vector.broadcast %80 : vector<256x1xi1> to vector<256x128xi1>
    %82 = arith.select %81, %78, %79 : vector<256x128xi1>, vector<256x128xbf16>
    %c0_61 = arith.constant 0 : index
    %c256_62 = arith.constant 256 : index
    %83 = vector.load %arg7[%c0_61, %c256_62] : memref<256x1152xbf16, #tpu.memory_space<vmem>>, vector<256x128xbf16>
    tpu.vector_store %arg7[%c0_61, %c256_62], %82 {strides = array<i32>} : memref<256x1152xbf16, #tpu.memory_space<vmem>>, vector<256x128xbf16>,
    %c31_63 = arith.constant 31 : index
    %c0_64 = arith.constant 0 : index
    %84 = vector.load %arg6[%c31_63, %c0_64] : memref<320x128xbf16, #tpu.memory_space<vmem>>, vector<256x128xbf16>
    %cst_65 = arith.constant 0.000000e+00 : bf16
    %85 = vector.broadcast %cst_65 : bf16 to vector<256x128xbf16>
    %86 = vector.shape_cast %9 : vector<256x1xi1> to vector<256x1xi1>
    %87 = vector.broadcast %86 : vector<256x1xi1> to vector<256x128xi1>
    %88 = arith.select %87, %84, %85 : vector<256x128xi1>, vector<256x128xbf16>
    %c0_66 = arith.constant 0 : index
    %c384_67 = arith.constant 384 : index
    %89 = vector.load %arg7[%c0_66, %c384_67] : memref<256x1152xbf16, #tpu.memory_space<vmem>>, vector<256x128xbf16>
    tpu.vector_store %arg7[%c0_66, %c384_67], %88 {strides = array<i32>} : memref<256x1152xbf16, #tpu.memory_space<vmem>>, vector<256x128xbf16>,
    %c32_68 = arith.constant 32 : index
    %c0_69 = arith.constant 0 : index
    %90 = vector.load %arg6[%c32_68, %c0_69] : memref<320x128xbf16, #tpu.memory_space<vmem>>, vector<256x128xbf16>
    %c0_70 = arith.constant 0 : index
    %c512_71 = arith.constant 512 : index
    %91 = vector.load %arg7[%c0_70, %c512_71] : memref<256x1152xbf16, #tpu.memory_space<vmem>>, vector<256x128xbf16>
    tpu.vector_store %arg7[%c0_70, %c512_71], %90 {strides = array<i32>} : memref<256x1152xbf16, #tpu.memory_space<vmem>>, vector<256x128xbf16>,
    %c33_72 = arith.constant 33 : index
    %c0_73 = arith.constant 0 : index
    %92 = vector.load %arg6[%c33_72, %c0_73] : memref<320x128xbf16, #tpu.memory_space<vmem>>, vector<256x128xbf16>
    %cst_74 = arith.constant 0.000000e+00 : bf16
    %93 = vector.broadcast %cst_74 : bf16 to vector<256x128xbf16>
    %94 = vector.shape_cast %11 : vector<256x1xi1> to vector<256x1xi1>
    %95 = vector.broadcast %94 : vector<256x1xi1> to vector<256x128xi1>
    %96 = arith.select %95, %92, %93 : vector<256x128xi1>, vector<256x128xbf16>
    %c0_75 = arith.constant 0 : index
    %c640_76 = arith.constant 640 : index
    %97 = vector.load %arg7[%c0_75, %c640_76] : memref<256x1152xbf16, #tpu.memory_space<vmem>>, vector<256x128xbf16>
    tpu.vector_store %arg7[%c0_75, %c640_76], %96 {strides = array<i32>} : memref<256x1152xbf16, #tpu.memory_space<vmem>>, vector<256x128xbf16>,
    %c47_77 = arith.constant 47 : index
    %c0_78 = arith.constant 0 : index
    %98 = vector.load %arg6[%c47_77, %c0_78] : memref<320x128xbf16, #tpu.memory_space<vmem>>, vector<256x128xbf16>
    %cst_79 = arith.constant 0.000000e+00 : bf16
    %99 = vector.broadcast %cst_79 : bf16 to vector<256x128xbf16>
    %100 = vector.shape_cast %9 : vector<256x1xi1> to vector<256x1xi1>
    %101 = vector.broadcast %100 : vector<256x1xi1> to vector<256x128xi1>
    %102 = arith.select %101, %98, %99 : vector<256x128xi1>, vector<256x128xbf16>
    %c0_80 = arith.constant 0 : index
    %c768_81 = arith.constant 768 : index
    %103 = vector.load %arg7[%c0_80, %c768_81] : memref<256x1152xbf16, #tpu.memory_space<vmem>>, vector<256x128xbf16>
    tpu.vector_store %arg7[%c0_80, %c768_81], %102 {strides = array<i32>} : memref<256x1152xbf16, #tpu.memory_space<vmem>>, vector<256x128xbf16>,
    %c48_82 = arith.constant 48 : index
    %c0_83 = arith.constant 0 : index
    %104 = vector.load %arg6[%c48_82, %c0_83] : memref<320x128xbf16, #tpu.memory_space<vmem>>, vector<256x128xbf16>
    %c0_84 = arith.constant 0 : index
    %c896_85 = arith.constant 896 : index
    %105 = vector.load %arg7[%c0_84, %c896_85] : memref<256x1152xbf16, #tpu.memory_space<vmem>>, vector<256x128xbf16>
    tpu.vector_store %arg7[%c0_84, %c896_85], %104 {strides = array<i32>} : memref<256x1152xbf16, #tpu.memory_space<vmem>>, vector<256x128xbf16>,
    %c49_86 = arith.constant 49 : index
    %c0_87 = arith.constant 0 : index
    %106 = vector.load %arg6[%c49_86, %c0_87] : memref<320x128xbf16, #tpu.memory_space<vmem>>, vector<256x128xbf16>
    %cst_88 = arith.constant 0.000000e+00 : bf16
    %107 = vector.broadcast %cst_88 : bf16 to vector<256x128xbf16>
    %108 = vector.shape_cast %11 : vector<256x1xi1> to vector<256x1xi1>
    %109 = vector.broadcast %108 : vector<256x1xi1> to vector<256x128xi1>
    %110 = arith.select %109, %106, %107 : vector<256x128xi1>, vector<256x128xbf16>
    %c0_89 = arith.constant 0 : index
    %c1024_90 = arith.constant 1024 : index
    %111 = vector.load %arg7[%c0_89, %c1024_90] : memref<256x1152xbf16, #tpu.memory_space<vmem>>, vector<256x128xbf16>
    tpu.vector_store %arg7[%c0_89, %c1024_90], %110 {strides = array<i32>} : memref<256x1152xbf16, #tpu.memory_space<vmem>>, vector<256x128xbf16>,
    %c0_91 = arith.constant 0 : index
    %c0_92 = arith.constant 0 : index
    %112 = vector.load %arg7[%c0_91, %c0_92] : memref<256x1152xbf16, #tpu.memory_space<vmem>>, vector<256x1152xbf16>
    %c1 = arith.constant 1 : index
    %c0_93 = arith.constant 0 : index
    %c0_94 = arith.constant 0 : index
    %113 = vector.load %arg2[%c1, %c0_93, %c0_94] : memref<2x1152x128xbf16, #tpu.memory_space<vmem>>, vector<1x1152x128xbf16>
    %114 = vector.shape_cast %113 : vector<1x1152x128xbf16> to vector<1152x128xbf16>
    %cst_95 = arith.constant dense<0.000000e+00> : vector<256x128xf32>
    %115 = tpu.matmul %112, %114, %cst_95 {dimension_numbers = #tpu.dot_dimension_numbers<[1], [0], [0], [1], [0, 0, 1, 1], [], []>} : vector<256x1152xbf16>, vector<1152x128xbf16>, vector<256x128xf32> -> vector<256x128xf32>
    %c1_96 = arith.constant 1 : index
    %c0_97 = arith.constant 0 : index
    %c0_98 = arith.constant 0 : index
    %116 = vector.load %arg3[%c1_96, %c0_97, %c0_98] : memref<2x1x128xf32, #tpu.memory_space<vmem>>, vector<1x1x128xf32>
    %117 = vector.shape_cast %116 : vector<1x1x128xf32> to vector<1x128xf32>
    %118 = vector.broadcast %117 : vector<1x128xf32> to vector<256x128xf32>
    %119 = arith.addf %115, %118 : vector<256x128xf32>
    %cst_99 = arith.constant 0.000000e+00 : f32
    %120 = vector.broadcast %cst_99 : f32 to vector<256x128xf32>
    %121 = arith.maximumf %119, %120 : vector<256x128xf32>
    %cst_100 = arith.constant dense<0.000000e+00> : vector<128xf32>
    %122 = vector.multi_reduction <add>, %121, %cst_100 [0] : vector<256x128xf32> to vector<128xf32>
    %123 = vector.shape_cast %122 : vector<128xf32> to vector<1x128xf32>
    %cst_101 = arith.constant 2.560000e+02 : f32
    %124 = vector.broadcast %cst_101 : f32 to vector<1x128xf32>
    %125 = arith.divf %123, %124 : vector<1x128xf32>
    %cst_102 = arith.constant 0.000000e+00 : f32
    %126 = vector.broadcast %cst_102 : f32 to vector<6x128xf32>
    %127 = tpu.concatenate %67, %125, %126 in 0 : vector<1x128xf32>, vector<1x128xf32>, vector<6x128xf32> -> vector<8x128xf32>
    %c0_103 = arith.constant 0 : index
    %c0_104 = arith.constant 0 : index
    %c0_105 = arith.constant 0 : index
    %128 = vector.load %arg5[%c0_103, %c0_104, %c0_105] : memref<1x8x128xf32, #tpu.memory_space<vmem>>, vector<1x8x128xf32>
    %129 = vector.shape_cast %128 : vector<1x8x128xf32> to vector<8x128xf32>
    %130 = vector.shape_cast %127 : vector<8x128xf32> to vector<1x8x128xf32>
    tpu.vector_store %arg5[%c0_103, %c0_104, %c0_105], %130 {strides = array<i32>} : memref<1x8x128xf32, #tpu.memory_space<vmem>>, vector<1x8x128xf32>,
    return
  }
  func.func @transform_0(%arg0: i32) -> (i32, i32, i32) {
    %c0_i32 = arith.constant 0 : i32
    %c0_i32_0 = arith.constant 0 : i32
    %c0_i32_1 = arith.constant 0 : i32
    return %arg0, %c0_i32, %c0_i32_0 : i32, i32, i32
  }
  func.func @transform_1(%arg0: i32) -> (i32, i32, i32) {
    %c0_i32 = arith.constant 0 : i32
    %c0_i32_0 = arith.constant 0 : i32
    %c0_i32_1 = arith.constant 0 : i32
    %c0_i32_2 = arith.constant 0 : i32
    return %c0_i32, %c0_i32_0, %c0_i32_1 : i32, i32, i32
  }
  func.func @transform_2(%arg0: i32) -> (i32, i32, i32) {
    %c0_i32 = arith.constant 0 : i32
    %c0_i32_0 = arith.constant 0 : i32
    %c0_i32_1 = arith.constant 0 : i32
    %c0_i32_2 = arith.constant 0 : i32
    return %c0_i32, %c0_i32_0, %c0_i32_1 : i32, i32, i32
  }
  func.func @transform_3(%arg0: i32) -> (i32, i32) {
    %c0_i32 = arith.constant 0 : i32
    %c0_i32_0 = arith.constant 0 : i32
    %c0_i32_1 = arith.constant 0 : i32
    return %c0_i32, %c0_i32_0 : i32, i32
  }
  func.func @transform_4(%arg0: i32) -> (i32, i32, i32) {
    %c0_i32 = arith.constant 0 : i32
    %c0_i32_0 = arith.constant 0 : i32
    %c0_i32_1 = arith.constant 0 : i32
    return %arg0, %c0_i32, %c0_i32_0 : i32, i32, i32
  }
}

</mosaic_0001>

<llo_original>
// kernel: fit_banks.1
$region0: #{fit_banks.1}
  #allocation0 [shape = 'u32[]', space=smem, size = 0x4, offset = 0x4, fixed_abs, tag = 'smem constant byte address 0x4 - core index']
  #allocation1 [shape = 'u32[144,128]{1,0:T(1,128)}', space=vmem, size = 0x12000, scoped, tag = 'internal scratch']
  #allocation2 [shape = 'bf16[320,128]{1,0:T(8,128)(2,1)}', space=vmem, size = 0x14000, scoped, tag = 'scratch operand']
  #allocation3 [shape = 'bf16[256,1152]{1,0:T(8,128)(2,1)}', space=vmem, size = 0x90000, scoped, tag = 'scratch operand']
  %s0 = inlined_call_operand.vmem [shape: bf16[200,256,128], index: 0, kind: input, shape index: {}]
  %s1 = inlined_call_operand.vmem [shape: bf16[2,1152,128], index: 1, kind: input, shape index: {}]
  %s2 = inlined_call_operand.vmem [shape: f32[2,1,128], index: 2, kind: input, shape index: {}]
  %s3 = inlined_call_operand.vmem [shape: s32[256,1], index: 3, kind: input, shape index: {}]
  %s4 = inlined_call_operand.vmem [shape: f32[200,8,128], index: 4, kind: output, shape index: {}]
  %s5 = sld [smem:[#allocation0]]
  $region49: #{fit_banks.1} parent=0
    _
  %s7 = ssub.s32 1, %s5
  %s8 = scalar_select 0, %s7, %s5
  loop: start=0, step=1, limit=202
  $region2: #{fit_banks.1} parent=0 // loop_pre_header
    _
  $region3: #{fit_banks.1} parent=0 // loop_header
    %s10 = sphi 0, %s14
    %p11 = scmp.ge.s32.totalorder %s10, 202
    %s20 = sphi 0, %s22
    %s23 = sphi 0, %s20
    %s24 = sphi 0, %s23
    %s40 = sphi 0, %s24
    %s44 = sphi 0, %s44
    %s46 = sphi 0, %s44
    %s47 = sphi 0, %s46
    %s61 = sphi 0, %s47
    %s65 = sphi 0, %s65
    %s67 = sphi 0, %s65
    %s68 = sphi 0, %s67
    %s82 = sphi 0, %s68
    %s86 = sphi 0, %s86
    %s88 = sphi 0, %s86
    %s89 = sphi 0, %s88
    %s103 = sphi 0, %s89
    %s109 = sphi 0, %s111
    %s112 = sphi 0, %s109
    %s113 = sphi 0, %s112
    %s129 = sphi 0, %s113
  $region4: #{fit_banks.1} parent=0 // loop_header_branch
    %13 = sbr.rel (%p11) target = $region8
  $region5: #{fit_banks.1} parent=0 // loop_body
    %s15 = ssub.s32 %s10, 1
    %s16 = ssub.s32 %s10, 2
    %s17 = sadd.s32 %s10, 1
    %s18 = ssub.s32 %s10, %s17
    %p19 = scmp.eq.s32.totalorder %s18, 0
    %s21 = sadd.s32 %s20, 1
    %s22 = scalar_select %p19, %s20, %s21
    %p25 = pneg %p19
    %p26 = scmp.eq.s32.totalorder %s10, 199
    %p27 = por %p25, %p26
    %p28 = scmp.ne.s32.totalorder %s20, %s23
    %p29 = scmp.eq.s32.totalorder %s10, 0
    %p30 = por %p28, %p29
    %p31 = scmp.ne.s32.totalorder %s20, %s23
    %p32 = scmp.eq.s32.totalorder %s15, 199
    %p33 = por %p31, %p32
    %p34 = scmp.ne.s32.totalorder %s23, %s24
    %p35 = scmp.eq.s32.totalorder %s15, 0
    %p36 = por %p34, %p35
    %p37 = scmp.ne.s32.totalorder %s23, %s24
    %p38 = scmp.eq.s32.totalorder %s16, 199
    %p39 = por %p37, %p38
    %p41 = scmp.ne.s32.totalorder %s24, %s40
    %p42 = scmp.eq.s32.totalorder %s16, 0
    %p43 = por %p41, %p42
    %s45 = sadd.s32 %s44, 1
    %p48 = scmp.eq.s32.totalorder %s10, 199
    %p49 = scmp.ne.s32.totalorder %s44, %s46
    %p50 = scmp.eq.s32.totalorder %s10, 0
    %p51 = por %p49, %p50
    %p52 = scmp.ne.s32.totalorder %s44, %s46
    %p53 = scmp.eq.s32.totalorder %s15, 199
    %p54 = por %p52, %p53
    %p55 = scmp.ne.s32.totalorder %s46, %s47
    %p56 = scmp.eq.s32.totalorder %s15, 0
    %p57 = por %p55, %p56
    %p58 = scmp.ne.s32.totalorder %s46, %s47
    %p59 = scmp.eq.s32.totalorder %s16, 199
    %p60 = por %p58, %p59
    %p62 = scmp.ne.s32.totalorder %s47, %s61
    %p63 = scmp.eq.s32.totalorder %s16, 0
    %p64 = por %p62, %p63
    %s66 = sadd.s32 %s65, 1
    %p69 = scmp.eq.s32.totalorder %s10, 199
    %p70 = scmp.ne.s32.totalorder %s65, %s67
    %p71 = scmp.eq.s32.totalorder %s10, 0
    %p72 = por %p70, %p71
    %p73 = scmp.ne.s32.totalorder %s65, %s67
    %p74 = scmp.eq.s32.totalorder %s15, 199
    %p75 = por %p73, %p74
    %p76 = scmp.ne.s32.totalorder %s67, %s68
    %p77 = scmp.eq.s32.totalorder %s15, 0
    %p78 = por %p76, %p77
    %p79 = scmp.ne.s32.totalorder %s67, %s68
    %p80 = scmp.eq.s32.totalorder %s16, 199
    %p81 = por %p79, %p80
    %p83 = scmp.ne.s32.totalorder %s68, %s82
    %p84 = scmp.eq.s32.totalorder %s16, 0
    %p85 = por %p83, %p84
    %s87 = sadd.s32 %s86, 1
    %p90 = scmp.eq.s32.totalorder %s10, 199
    %p91 = scmp.ne.s32.totalorder %s86, %s88
    %p92 = scmp.eq.s32.totalorder %s10, 0
    %p93 = por %p91, %p92
    %p94 = scmp.ne.s32.totalorder %s86, %s88
    %p95 = scmp.eq.s32.totalorder %s15, 199
    %p96 = por %p94, %p95
    %p97 = scmp.ne.s32.totalorder %s88, %s89
    %p98 = scmp.eq.s32.totalorder %s15, 0
    %p99 = por %p97, %p98
    %p100 = scmp.ne.s32.totalorder %s88, %s89
    %p101 = scmp.eq.s32.totalorder %s16, 199
    %p102 = por %p100, %p101
    %p104 = scmp.ne.s32.totalorder %s89, %s103
    %p105 = scmp.eq.s32.totalorder %s16, 0
    %p106 = por %p104, %p105
    %s107 = ssub.s32 %s10, %s17
    %p108 = scmp.eq.s32.totalorder %s107, 0
    %s110 = sadd.s32 %s109, 1
    %s111 = scalar_select %p108, %s109, %s110
    %p114 = pneg %p108
    %p115 = scmp.eq.s32.totalorder %s10, 199
    %p116 = por %p114, %p115
    %p117 = scmp.ne.s32.totalorder %s109, %s112
    %p118 = scmp.eq.s32.totalorder %s10, 0
    %p119 = por %p117, %p118
    %p120 = scmp.ne.s32.totalorder %s109, %s112
    %p121 = scmp.eq.s32.totalorder %s15, 199
    %p122 = por %p120, %p121
    %p123 = scmp.ne.s32.totalorder %s112, %s113
    %p124 = scmp.eq.s32.totalorder %s15, 0
    %p125 = por %p123, %p124
    %p126 = scmp.ne.s32.totalorder %s112, %s113
    %p127 = scmp.eq.s32.totalorder %s16, 199
    %p128 = por %p126, %p127
    %p130 = scmp.ne.s32.totalorder %s113, %s129
    %p131 = scmp.eq.s32.totalorder %s16, 0
    %p132 = por %p130, %p131
    %p133 = scmp.le.s32.totalorder 1, %s10
    %p134 = scmp.lt.s32.totalorder %s10, 201
    %p135 = pnand %p133, %p134
    %p136 = pneg %p135
    // Predicated region
    $region9: #{fit_banks.1} parent=5 // pred_check
      _
    $region10: #{fit_banks.1} parent=5 // pred_check_branch
      %138 = sbr.rel (%p135) target = $region12
    $region11: #{fit_banks.1} parent=5 // pred_region
      %s139 = ssub.s32 %s10, 1
      // Predicated region
      $region13: #{fit_banks.1} parent=11 // pred_check
        %p140 = pneg %p57
      $region14: #{fit_banks.1} parent=11 // pred_check_branch
        %142 = sbr.rel (%p140) target = $region16
      $region15: #{fit_banks.1} parent=11 // pred_region
        _
      $region16: #{fit_banks.1} parent=11 // pred_fallthru
        _
      // Predicated region
      $region17: #{fit_banks.1} parent=11 // pred_check
        %p143 = pneg %p78
      $region18: #{fit_banks.1} parent=11 // pred_check_branch
        %145 = sbr.rel (%p143) target = $region20
      $region19: #{fit_banks.1} parent=11 // pred_region
        _
      $region20: #{fit_banks.1} parent=11 // pred_fallthru
        _
      // Predicated region
      $region21: #{fit_banks.1} parent=11 // pred_check
        %p146 = pneg %p99
      $region22: #{fit_banks.1} parent=11 // pred_check_branch
        %148 = sbr.rel (%p146) target = $region24
      $region23: #{fit_banks.1} parent=11 // pred_region
        _
      $region24: #{fit_banks.1} parent=11 // pred_fallthru
        _
    $region12: #{fit_banks.1} parent=5 // pred_fallthru
      _
    %p149 = scmp.lt.s32.totalorder %s10, 200
    // Predicated region
    $region25: #{fit_banks.1} parent=5 // pred_check
      %p150 = pneg %p149
    $region26: #{fit_banks.1} parent=5 // pred_check_branch
      %152 = sbr.rel (%p150) target = $region28
    $region27: #{fit_banks.1} parent=5 // pred_region
      // Predicated region
      $region29: #{fit_banks.1} parent=27 // pred_check
        %p153 = pneg %p30
      $region30: #{fit_banks.1} parent=27 // pred_check_branch
        %155 = sbr.rel (%p153) target = $region32
      $region31: #{fit_banks.1} parent=27 // pred_region
        %p156 = scmp.lt.s32.totalorder %s10, 199
        %s157 = scalar_select %p156, %s10, 199
        %s158 = smul.addr %s157, 32
        %s159 = smul.addr %s158, 4
        %s160 = scalar_lea.vmem %s0, %s159
      $region32: #{fit_banks.1} parent=27 // pred_fallthru
        _
    $region28: #{fit_banks.1} parent=5 // pred_fallthru
      _
    %p161 = scmp.le.s32.totalorder 1, %s10
    %p162 = scmp.lt.s32.totalorder %s10, 201
    %p163 = pnand %p161, %p162
    %p164 = pneg %p163
    // Predicated region
    $region33: #{fit_banks.1} parent=5 // pred_check
      _
    $region34: #{fit_banks.1} parent=5 // pred_check_branch
      %166 = sbr.rel (%p163) target = $region36
    $region35: #{fit_banks.1} parent=5 // pred_region
      %s167 = ssub.s32 %s10, 1
      %p168 = scmp.lt.s32.totalorder %s15, 199
      %s169 = scalar_select %p168, %s15, 199
      %s170 = smul.addr %s169, 32
      %s171 = smul.addr %s170, 4
      %s172 = scalar_lea.vmem %s0, %s171
      %p173 = pneg %p36
      %p174 = pneg %p33
      %p175 = pneg %p57
      %p176 = pneg %p54
      %p177 = pneg %p78
      %p178 = pneg %p75
      %p179 = pneg %p99
      %p180 = pneg %p96
      %p181 = pneg %p125
      %p182 = pneg %p122
      %p183 = scmp.lt.s32.totalorder %s15, 199
      %s184 = scalar_select %p183, %s15, 199
      %s185 = smul.addr %s184, 8
      %s186 = scalar_lea.vmem %s4, %s185
      %p187 = scmp.lt.s32.totalorder %s15, 199
      %s188 = scalar_select %p187, %s15, 199
      %s189 = smul.addr %s188, 32
      %s190 = smul.addr %s189, 4
      %s191 = scalar_lea.vmem %s0, %s190
      %p192 = scmp.lt.s32.totalorder %s15, 199
      %s193 = scalar_select %p192, %s15, 199
      %s194 = smul.addr %s193, 8
      %s195 = scalar_lea.vmem %s4, %s194
      %199 = vst [vmem:[#allocation2] sm:$0xf] 0
      %200 = vst [vmem:[#allocation2 + $0x4] sm:$0xf] 0
      %201 = vst [vmem:[#allocation2 + $0x8] sm:$0xf] 0
      %202 = vst [vmem:[#allocation2 + $0xc] sm:$0xf] 0
      %203 = vst [vmem:[#allocation2 + $0x90] sm:$0xf] 0
      %204 = vst [vmem:[#allocation2 + $0x94] sm:$0xf] 0
      %205 = vst [vmem:[#allocation2 + $0x98] sm:$0xf] 0
      %206 = vst [vmem:[#allocation2 + $0x9c] sm:$0xf] 0
      %v207 = vld [vmem:[%s191] sm:$0xf]
      %v208 = vld [vmem:[%s191 + $0x4] sm:$0xf]
      %v209 = vld [vmem:[%s191 + $0x8] sm:$0xf]
      %v210 = vld [vmem:[%s191 + $0xc] sm:$0xf]
      %v211 = vld [vmem:[%s191 + $0x10] sm:$0xf]
      %v212 = vld [vmem:[%s191 + $0x14] sm:$0xf]
      %v213 = vld [vmem:[%s191 + $0x18] sm:$0xf]
      %v214 = vld [vmem:[%s191 + $0x1c] sm:$0xf]
      %v215 = vld [vmem:[%s191 + $0x20] sm:$0xf]
      %v216 = vld [vmem:[%s191 + $0x24] sm:$0xf]
      %v217 = vld [vmem:[%s191 + $0x28] sm:$0xf]
      %v218 = vld [vmem:[%s191 + $0x2c] sm:$0xf]
      %v219 = vld [vmem:[%s191 + $0x30] sm:$0xf]
      %v220 = vld [vmem:[%s191 + $0x34] sm:$0xf]
      %v221 = vld [vmem:[%s191 + $0x38] sm:$0xf]
      %v222 = vld [vmem:[%s191 + $0x3c] sm:$0xf]
      %v223 = vld [vmem:[%s191 + $0x40] sm:$0xf]
      %v224 = vld [vmem:[%s191 + $0x44] sm:$0xf]
      %v225 = vld [vmem:[%s191 + $0x48] sm:$0xf]
      %v226 = vld [vmem:[%s191 + $0x4c] sm:$0xf]
      %v227 = vld [vmem:[%s191 + $0x50] sm:$0xf]
      %v228 = vld [vmem:[%s191 + $0x54] sm:$0xf]
      %v229 = vld [vmem:[%s191 + $0x58] sm:$0xf]
      %v230 = vld [vmem:[%s191 + $0x5c] sm:$0xf]
      %v231 = vld [vmem:[%s191 + $0x60] sm:$0xf]
      %v232 = vld [vmem:[%s191 + $0x64] sm:$0xf]
      %v233 = vld [vmem:[%s191 + $0x68] sm:$0xf]
      %v234 = vld [vmem:[%s191 + $0x6c] sm:$0xf]
      %v235 = vld [vmem:[%s191 + $0x70] sm:$0xf]
      %v236 = vld [vmem:[%s191 + $0x74] sm:$0xf]
      %v237 = vld [vmem:[%s191 + $0x78] sm:$0xf]
      %v238 = vld [vmem:[%s191 + $0x7c] sm:$0xf]
      %239 = vst [vmem:[#allocation2 + $0x10] sm:$0xf] %v207
      %240 = vst [vmem:[#allocation2 + $0x14] sm:$0xf] %v208
      %241 = vst [vmem:[#allocation2 + $0x18] sm:$0xf] %v209
      %242 = vst [vmem:[#allocation2 + $0x1c] sm:$0xf] %v210
      %243 = vst [vmem:[#allocation2 + $0x20] sm:$0xf] %v211
      %244 = vst [vmem:[#allocation2 + $0x24] sm:$0xf] %v212
      %245 = vst [vmem:[#allocation2 + $0x28] sm:$0xf] %v213
      %246 = vst [vmem:[#allocation2 + $0x2c] sm:$0xf] %v214
      %247 = vst [vmem:[#allocation2 + $0x30] sm:$0xf] %v215
      %248 = vst [vmem:[#allocation2 + $0x34] sm:$0xf] %v216
      %249 = vst [vmem:[#allocation2 + $0x38] sm:$0xf] %v217
      %250 = vst [vmem:[#allocation2 + $0x3c] sm:$0xf] %v218
      %251 = vst [vmem:[#allocation2 + $0x40] sm:$0xf] %v219
      %252 = vst [vmem:[#allocation2 + $0x44] sm:$0xf] %v220
      %253 = vst [vmem:[#allocation2 + $0x48] sm:$0xf] %v221
      %254 = vst [vmem:[#allocation2 + $0x4c] sm:$0xf] %v222
      %255 = vst [vmem:[#allocation2 + $0x50] sm:$0xf] %v223
      %256 = vst [vmem:[#allocation2 + $0x54] sm:$0xf] %v224
      %257 = vst [vmem:[#allocation2 + $0x58] sm:$0xf] %v225
      %258 = vst [vmem:[#allocation2 + $0x5c] sm:$0xf] %v226
      %259 = vst [vmem:[#allocation2 + $0x60] sm:$0xf] %v227
      %260 = vst [vmem:[#allocation2 + $0x64] sm:$0xf] %v228
      %261 = vst [vmem:[#allocation2 + $0x68] sm:$0xf] %v229
      %262 = vst [vmem:[#allocation2 + $0x6c] sm:$0xf] %v230
      %263 = vst [vmem:[#allocation2 + $0x70] sm:$0xf] %v231
      %264 = vst [vmem:[#allocation2 + $0x74] sm:$0xf] %v232
      %265 = vst [vmem:[#allocation2 + $0x78] sm:$0xf] %v233
      %266 = vst [vmem:[#allocation2 + $0x7c] sm:$0xf] %v234
      %267 = vst [vmem:[#allocation2 + $0x80] sm:$0xf] %v235
      %268 = vst [vmem:[#allocation2 + $0x84] sm:$0xf] %v236
      %269 = vst [vmem:[#allocation2 + $0x88] sm:$0xf] %v237
      %270 = vst [vmem:[#allocation2 + $0x8c] sm:$0xf] %v238
      %v271 = vld [vmem:[%s3] sm:$0xff]
      %v272 = vld [vmem:[%s3 + $0x8] sm:$0xff]
      %v273 = vld [vmem:[%s3 + $0x10] sm:$0xff]
      %v274 = vld [vmem:[%s3 + $0x18] sm:$0xff]
      %v275 = vld [vmem:[%s3 + $0x20] sm:$0xff]
      %v276 = vld [vmem:[%s3 + $0x28] sm:$0xff]
      %v277 = vld [vmem:[%s3 + $0x30] sm:$0xff]
      %v278 = vld [vmem:[%s3 + $0x38] sm:$0xff]
      %v279 = vld [vmem:[%s3 + $0x40] sm:$0xff]
      %v280 = vld [vmem:[%s3 + $0x48] sm:$0xff]
      %v281 = vld [vmem:[%s3 + $0x50] sm:$0xff]
      %v282 = vld [vmem:[%s3 + $0x58] sm:$0xff]
      %v283 = vld [vmem:[%s3 + $0x60] sm:$0xff]
      %v284 = vld [vmem:[%s3 + $0x68] sm:$0xff]
      %v285 = vld [vmem:[%s3 + $0x70] sm:$0xff]
      %v286 = vld [vmem:[%s3 + $0x78] sm:$0xff]
      %v287 = vld [vmem:[%s3 + $0x80] sm:$0xff]
      %v288 = vld [vmem:[%s3 + $0x88] sm:$0xff]
      %v289 = vld [vmem:[%s3 + $0x90] sm:$0xff]
      %v290 = vld [vmem:[%s3 + $0x98] sm:$0xff]
      %v291 = vld [vmem:[%s3 + $0xa0] sm:$0xff]
      %v292 = vld [vmem:[%s3 + $0xa8] sm:$0xff]
      %v293 = vld [vmem:[%s3 + $0xb0] sm:$0xff]
      %v294 = vld [vmem:[%s3 + $0xb8] sm:$0xff]
      %v295 = vld [vmem:[%s3 + $0xc0] sm:$0xff]
      %v296 = vld [vmem:[%s3 + $0xc8] sm:$0xff]
      %v297 = vld [vmem:[%s3 + $0xd0] sm:$0xff]
      %v298 = vld [vmem:[%s3 + $0xd8] sm:$0xff]
      %v299 = vld [vmem:[%s3 + $0xe0] sm:$0xff]
      %v300 = vld [vmem:[%s3 + $0xe8] sm:$0xff]
      %v301 = vld [vmem:[%s3 + $0xf0] sm:$0xff]
      %v302 = vld [vmem:[%s3 + $0xf8] sm:$0xff]
      %vm303 = vcmp.gt.s32.totalorder %v271, 0
      %vm304 = vcmp.gt.s32.totalorder %v272, 0
      %vm305 = vcmp.gt.s32.totalorder %v273, 0
      %vm306 = vcmp.gt.s32.totalorder %v274, 0
      %vm307 = vcmp.gt.s32.totalorder %v275, 0
      %vm308 = vcmp.gt.s32.totalorder %v276, 0
      %vm309 = vcmp.gt.s32.totalorder %v277, 0
      %vm310 = vcmp.gt.s32.totalorder %v278, 0
      %vm311 = vcmp.gt.s32.totalorder %v279, 0
      %vm312 = vcmp.gt.s32.totalorder %v280, 0
      %vm313 = vcmp.gt.s32.totalorder %v281, 0
      %vm314 = vcmp.gt.s32.totalorder %v282, 0
      %vm315 = vcmp.gt.s32.totalorder %v283, 0
      %vm316 = vcmp.gt.s32.totalorder %v284, 0
      %vm317 = vcmp.gt.s32.totalorder %v285, 0
      %vm318 = vcmp.gt.s32.totalorder %v286, 0
      %vm319 = vcmp.gt.s32.totalorder %v287, 0
      %vm320 = vcmp.gt.s32.totalorder %v288, 0
      %vm321 = vcmp.gt.s32.totalorder %v289, 0
      %vm322 = vcmp.gt.s32.totalorder %v290, 0
      %vm323 = vcmp.gt.s32.totalorder %v291, 0
      %vm324 = vcmp.gt.s32.totalorder %v292, 0
      %vm325 = vcmp.gt.s32.totalorder %v293, 0
      %vm326 = vcmp.gt.s32.totalorder %v294, 0
      %vm327 = vcmp.gt.s32.totalorder %v295, 0
      %vm328 = vcmp.gt.s32.totalorder %v296, 0
      %vm329 = vcmp.gt.s32.totalorder %v297, 0
      %vm330 = vcmp.gt.s32.totalorder %v298, 0
      %vm331 = vcmp.gt.s32.totalorder %v299, 0
      %vm332 = vcmp.gt.s32.totalorder %v300, 0
      %vm333 = vcmp.gt.s32.totalorder %v301, 0
      %vm334 = vcmp.gt.s32.totalorder %v302, 0
      %vm335 = vcmp.lt.s32.totalorder %v271, 15
      %vm336 = vcmp.lt.s32.totalorder %v272, 15
      %vm337 = vcmp.lt.s32.totalorder %v273, 15
      %vm338 = vcmp.lt.s32.totalorder %v274, 15
      %vm339 = vcmp.lt.s32.totalorder %v275, 15
      %vm340 = vcmp.lt.s32.totalorder %v276, 15
      %vm341 = vcmp.lt.s32.totalorder %v277, 15
      %vm342 = vcmp.lt.s32.totalorder %v278, 15
      %vm343 = vcmp.lt.s32.totalorder %v279, 15
      %vm344 = vcmp.lt.s32.totalorder %v280, 15
      %vm345 = vcmp.lt.s32.totalorder %v281, 15
      %vm346 = vcmp.lt.s32.totalorder %v282, 15
      %vm347 = vcmp.lt.s32.totalorder %v283, 15
      %vm348 = vcmp.lt.s32.totalorder %v284, 15
      %vm349 = vcmp.lt.s32.totalorder %v285, 15
      %vm350 = vcmp.lt.s32.totalorder %v286, 15
      %vm351 = vcmp.lt.s32.totalorder %v287, 15
      %vm352 = vcmp.lt.s32.totalorder %v288, 15
      %vm353 = vcmp.lt.s32.totalorder %v289, 15
      %vm354 = vcmp.lt.s32.totalorder %v290, 15
      %vm355 = vcmp.lt.s32.totalorder %v291, 15
      %vm356 = vcmp.lt.s32.totalorder %v292, 15
      %vm357 = vcmp.lt.s32.totalorder %v293, 15
      %vm358 = vcmp.lt.s32.totalorder %v294, 15
      %vm359 = vcmp.lt.s32.totalorder %v295, 15
      %vm360 = vcmp.lt.s32.totalorder %v296, 15
      %vm361 = vcmp.lt.s32.totalorder %v297, 15
      %vm362 = vcmp.lt.s32.totalorder %v298, 15
      %vm363 = vcmp.lt.s32.totalorder %v299, 15
      %vm364 = vcmp.lt.s32.totalorder %v300, 15
      %vm365 = vcmp.lt.s32.totalorder %v301, 15
      %vm366 = vcmp.lt.s32.totalorder %v302, 15
      %v367 = vld [vmem:[#allocation2 + $0x4] sm:$0x8]
      %v368 = vld [vmem:[#allocation2 + $0x8] sm:$0xf]
      %v369 = vld [vmem:[#allocation2 + $0xc] sm:$0xf]
      %v370 = vld [vmem:[#allocation2 + $0x10] sm:$0xf]
      %v371 = vld [vmem:[#allocation2 + $0x14] sm:$0xf]
      %v372 = vld [vmem:[#allocation2 + $0x18] sm:$0xf]
      %v373 = vld [vmem:[#allocation2 + $0x1c] sm:$0xf]
      %v374 = vld [vmem:[#allocation2 + $0x20] sm:$0xf]
      %v375 = vld [vmem:[#allocation2 + $0x24] sm:$0xf]
      %v376 = vld [vmem:[#allocation2 + $0x28] sm:$0xf]
      %v377 = vld [vmem:[#allocation2 + $0x2c] sm:$0xf]
      %v378 = vld [vmem:[#allocation2 + $0x30] sm:$0xf]
      %v379 = vld [vmem:[#allocation2 + $0x34] sm:$0xf]
      %v380 = vld [vmem:[#allocation2 + $0x38] sm:$0xf]
      %v381 = vld [vmem:[#allocation2 + $0x3c] sm:$0xf]
      %v382 = vld [vmem:[#allocation2 + $0x40] sm:$0xf]
      %v383 = vld [vmem:[#allocation2 + $0x44] sm:$0xf]
      %v384 = vld [vmem:[#allocation2 + $0x48] sm:$0xf]
      %v385 = vld [vmem:[#allocation2 + $0x4c] sm:$0xf]
      %v386 = vld [vmem:[#allocation2 + $0x50] sm:$0xf]
      %v387 = vld [vmem:[#allocation2 + $0x54] sm:$0xf]
      %v388 = vld [vmem:[#allocation2 + $0x58] sm:$0xf]
      %v389 = vld [vmem:[#allocation2 + $0x5c] sm:$0xf]
      %v390 = vld [vmem:[#allocation2 + $0x60] sm:$0xf]
      %v391 = vld [vmem:[#allocation2 + $0x64] sm:$0xf]
      %v392 = vld [vmem:[#allocation2 + $0x68] sm:$0xf]
      %v393 = vld [vmem:[#allocation2 + $0x6c] sm:$0xf]
      %v394 = vld [vmem:[#allocation2 + $0x70] sm:$0xf]
      %v395 = vld [vmem:[#allocation2 + $0x74] sm:$0xf]
      %v396 = vld [vmem:[#allocation2 + $0x78] sm:$0xf]
      %v397 = vld [vmem:[#allocation2 + $0x7c] sm:$0xf]
      %v398 = vld [vmem:[#allocation2 + $0x80] sm:$0xf]
      %v399 = vld [vmem:[#allocation2 + $0x84] sm:$0xf]
      %v400 = vsel %vm303, 1, 0
      %v401 = vsel %vm304, 1, 0
      %v402 = vsel %vm305, 1, 0
      %v403 = vsel %vm306, 1, 0
      %v404 = vsel %vm307, 1, 0
      %v405 = vsel %vm308, 1, 0
      %v406 = vsel %vm309, 1, 0
      %v407 = vsel %vm310, 1, 0
      %v408 = vsel %vm311, 1, 0
      %v409 = vsel %vm312, 1, 0
      %v410 = vsel %vm313, 1, 0
      %v411 = vsel %vm314, 1, 0
      %v412 = vsel %vm315, 1, 0
      %v413 = vsel %vm316, 1, 0
      %v414 = vsel %vm317, 1, 0
      %v415 = vsel %vm318, 1, 0
      %v416 = vsel %vm319, 1, 0
      %v417 = vsel %vm320, 1, 0
      %v418 = vsel %vm321, 1, 0
      %v419 = vsel %vm322, 1, 0
      %v420 = vsel %vm323, 1, 0
      %v421 = vsel %vm324, 1, 0
      %v422 = vsel %vm325, 1, 0
      %v423 = vsel %vm326, 1, 0
      %v424 = vsel %vm327, 1, 0
      %v425 = vsel %vm328, 1, 0
      %v426 = vsel %vm329, 1, 0
      %v427 = vsel %vm330, 1, 0
      %v428 = vsel %vm331, 1, 0
      %v429 = vsel %vm332, 1, 0
      %v430 = vsel %vm333, 1, 0
      %v431 = vsel %vm334, 1, 0
      %432 = vset.pattern.permute.xlu0 0
      %433 = vperm.xlu0 %432, %v400
      %v434 = vpop.permute.xlu0 %433
      %435 = vset.pattern.permute.xlu0 0
      %436 = vperm.xlu0 %435, %v401
      %v437 = vpop.permute.xlu0 %436
      %438 = vset.pattern.permute.xlu0 0
      %439 = vperm.xlu0 %438, %v402
      %v440 = vpop.permute.xlu0 %439
      %441 = vset.pattern.permute.xlu0 0
      %442 = vperm.xlu0 %441, %v403
      %v443 = vpop.permute.xlu0 %442
      %444 = vset.pattern.permute.xlu0 0
      %445 = vperm.xlu0 %444, %v404
      %v446 = vpop.permute.xlu0 %445
      %447 = vset.pattern.permute.xlu0 0
      %448 = vperm.xlu0 %447, %v405
      %v449 = vpop.permute.xlu0 %448
      %450 = vset.pattern.permute.xlu0 0
      %451 = vperm.xlu0 %450, %v406
      %v452 = vpop.permute.xlu0 %451
      %453 = vset.pattern.permute.xlu0 0
      %454 = vperm.xlu0 %453, %v407
      %v455 = vpop.permute.xlu0 %454
      %456 = vset.pattern.permute.xlu0 0
      %457 = vperm.xlu0 %456, %v408
      %v458 = vpop.permute.xlu0 %457
      %459 = vset.pattern.permute.xlu0 0
      %460 = vperm.xlu0 %459, %v409
      %v461 = vpop.permute.xlu0 %460
      %462 = vset.pattern.permute.xlu0 0
      %463 = vperm.xlu0 %462, %v410
      %v464 = vpop.permute.xlu0 %463
      %465 = vset.pattern.permute.xlu0 0
      %466 = vperm.xlu0 %465, %v411
      %v467 = vpop.permute.xlu0 %466
      %468 = vset.pattern.permute.xlu0 0
      %469 = vperm.xlu0 %468, %v412
      %v470 = vpop.permute.xlu0 %469
      %471 = vset.pattern.permute.xlu0 0
      %472 = vperm.xlu0 %471, %v413
      %v473 = vpop.permute.xlu0 %472
      %474 = vset.pattern.permute.xlu0 0
      %475 = vperm.xlu0 %474, %v414
      %v476 = vpop.permute.xlu0 %475
      %477 = vset.pattern.permute.xlu0 0
      %478 = vperm.xlu0 %477, %v415
      %v479 = vpop.permute.xlu0 %478
      %480 = vset.pattern.permute.xlu0 0
      %481 = vperm.xlu0 %480, %v416
      %v482 = vpop.permute.xlu0 %481
      %483 = vset.pattern.permute.xlu0 0
      %484 = vperm.xlu0 %483, %v417
      %v485 = vpop.permute.xlu0 %484
      %486 = vset.pattern.permute.xlu0 0
      %487 = vperm.xlu0 %486, %v418
      %v488 = vpop.permute.xlu0 %487
      %489 = vset.pattern.permute.xlu0 0
      %490 = vperm.xlu0 %489, %v419
      %v491 = vpop.permute.xlu0 %490
      %492 = vset.pattern.permute.xlu0 0
      %493 = vperm.xlu0 %492, %v420
      %v494 = vpop.permute.xlu0 %493
      %495 = vset.pattern.permute.xlu0 0
      %496 = vperm.xlu0 %495, %v421
      %v497 = vpop.permute.xlu0 %496
      %498 = vset.pattern.permute.xlu0 0
      %499 = vperm.xlu0 %498, %v422
      %v500 = vpop.permute.xlu0 %499
      %501 = vset.pattern.permute.xlu0 0
      %502 = vperm.xlu0 %501, %v423
      %v503 = vpop.permute.xlu0 %502
      %504 = vset.pattern.permute.xlu0 0
      %505 = vperm.xlu0 %504, %v424
      %v506 = vpop.permute.xlu0 %505
      %507 = vset.pattern.permute.xlu0 0
      %508 = vperm.xlu0 %507, %v425
      %v509 = vpop.permute.xlu0 %508
      %510 = vset.pattern.permute.xlu0 0
      %511 = vperm.xlu0 %510, %v426
      %v512 = vpop.permute.xlu0 %511
      %513 = vset.pattern.permute.xlu0 0
      %514 = vperm.xlu0 %513, %v427
      %v515 = vpop.permute.xlu0 %514
      %516 = vset.pattern.permute.xlu0 0
      %517 = vperm.xlu0 %516, %v428
      %v518 = vpop.permute.xlu0 %517
      %519 = vset.pattern.permute.xlu0 0
      %520 = vperm.xlu0 %519, %v429
      %v521 = vpop.permute.xlu0 %520
      %522 = vset.pattern.permute.xlu0 0
      %523 = vperm.xlu0 %522, %v430
      %v524 = vpop.permute.xlu0 %523
      %525 = vset.pattern.permute.xlu0 0
      %526 = vperm.xlu0 %525, %v431
      %v527 = vpop.permute.xlu0 %526
      %vm528 = vcmp.eq.s32.totalorder %v434, 1
      %vm529 = vcmp.eq.s32.totalorder %v437, 1
      %vm530 = vcmp.eq.s32.totalorder %v440, 1
      %vm531 = vcmp.eq.s32.totalorder %v443, 1
      %vm532 = vcmp.eq.s32.totalorder %v446, 1
      %vm533 = vcmp.eq.s32.totalorder %v449, 1
      %vm534 = vcmp.eq.s32.totalorder %v452, 1
      %vm535 = vcmp.eq.s32.totalorder %v455, 1
      %vm536 = vcmp.eq.s32.totalorder %v458, 1
      %vm537 = vcmp.eq.s32.totalorder %v461, 1
      %vm538 = vcmp.eq.s32.totalorder %v464, 1
      %vm539 = vcmp.eq.s32.totalorder %v467, 1
      %vm540 = vcmp.eq.s32.totalorder %v470, 1
      %vm541 = vcmp.eq.s32.totalorder %v473, 1
      %vm542 = vcmp.eq.s32.totalorder %v476, 1
      %vm543 = vcmp.eq.s32.totalorder %v479, 1
      %vm544 = vcmp.eq.s32.totalorder %v482, 1
      %vm545 = vcmp.eq.s32.totalorder %v485, 1
      %vm546 = vcmp.eq.s32.totalorder %v488, 1
      %vm547 = vcmp.eq.s32.totalorder %v491, 1
      %vm548 = vcmp.eq.s32.totalorder %v494, 1
      %vm549 = vcmp.eq.s32.totalorder %v497, 1
      %vm550 = vcmp.eq.s32.totalorder %v500, 1
      %vm551 = vcmp.eq.s32.totalorder %v503, 1
      %vm552 = vcmp.eq.s32.totalorder %v506, 1
      %vm553 = vcmp.eq.s32.totalorder %v509, 1
      %vm554 = vcmp.eq.s32.totalorder %v512, 1
      %vm555 = vcmp.eq.s32.totalorder %v515, 1
      %vm556 = vcmp.eq.s32.totalorder %v518, 1
      %vm557 = vcmp.eq.s32.totalorder %v521, 1
      %vm558 = vcmp.eq.s32.totalorder %v524, 1
      %vm559 = vcmp.eq.s32.totalorder %v527, 1
      %vm560 = vmpackc.low %vm528, %vm528
      %vm561 = vmpackc.low %vm529, %vm529
      %vm562 = vmpackc.low %vm530, %vm530
      %vm563 = vmpackc.low %vm531, %vm531
      %vm564 = vmpackc.low %vm532, %vm532
      %vm565 = vmpackc.low %vm533, %vm533
      %vm566 = vmpackc.low %vm534, %vm534
      %vm567 = vmpackc.low %vm535, %vm535
      %vm568 = vmpackc.low %vm536, %vm536
      %vm569 = vmpackc.low %vm537, %vm537
      %vm570 = vmpackc.low %vm538, %vm538
      %vm571 = vmpackc.low %vm539, %vm539
      %vm572 = vmpackc.low %vm540, %vm540
      %vm573 = vmpackc.low %vm541, %vm541
      %vm574 = vmpackc.low %vm542, %vm542
      %vm575 = vmpackc.low %vm543, %vm543
      %vm576 = vmpackc.low %vm544, %vm544
      %vm577 = vmpackc.low %vm545, %vm545
      %vm578 = vmpackc.low %vm546, %vm546
      %vm579 = vmpackc.low %vm547, %vm547
      %vm580 = vmpackc.low %vm548, %vm548
      %vm581 = vmpackc.low %vm549, %vm549
      %vm582 = vmpackc.low %vm550, %vm550
      %vm583 = vmpackc.low %vm551, %vm551
      %vm584 = vmpackc.low %vm552, %vm552
      %vm585 = vmpackc.low %vm553, %vm553
      %vm586 = vmpackc.low %vm554, %vm554
      %vm587 = vmpackc.low %vm555, %vm555
      %vm588 = vmpackc.low %vm556, %vm556
      %vm589 = vmpackc.low %vm557, %vm557
      %vm590 = vmpackc.low %vm558, %vm558
      %vm591 = vmpackc.low %vm559, %vm559
      %v592 = vsel %vm560, 65537, 0
      %v593 = vsel %vm561, 65537, 0
      %v594 = vsel %vm562, 65537, 0
      %v595 = vsel %vm563, 65537, 0
      %v596 = vsel %vm564, 65537, 0
      %v597 = vsel %vm565, 65537, 0
      %v598 = vsel %vm566, 65537, 0
      %v599 = vsel %vm567, 65537, 0
      %v600 = vsel %vm568, 65537, 0
      %v601 = vsel %vm569, 65537, 0
      %v602 = vsel %vm570, 65537, 0
      %v603 = vsel %vm571, 65537, 0
      %v604 = vsel %vm572, 65537, 0
      %v605 = vsel %vm573, 65537, 0
      %v606 = vsel %vm574, 65537, 0
      %v607 = vsel %vm575, 65537, 0
      %v608 = vsel %vm576, 65537, 0
      %v609 = vsel %vm577, 65537, 0
      %v610 = vsel %vm578, 65537, 0
      %v611 = vsel %vm579, 65537, 0
      %v612 = vsel %vm580, 65537, 0
      %v613 = vsel %vm581, 65537, 0
      %v614 = vsel %vm582, 65537, 0
      %v615 = vsel %vm583, 65537, 0
      %v616 = vsel %vm584, 65537, 0
      %v617 = vsel %vm585, 65537, 0
      %v618 = vsel %vm586, 65537, 0
      %v619 = vsel %vm587, 65537, 0
      %v620 = vsel %vm588, 65537, 0
      %v621 = vsel %vm589, 65537, 0
      %v622 = vsel %vm590, 65537, 0
      %v623 = vsel %vm591, 65537, 0
      %vm624 = vsmask.f32 3328
      %vm625 = vsmask.f32 7440
      %vm626 = vmor %vm624, %vm625
      %v628 = vshll.u32 %v592, 16
      %v630 = vrot.slane %v628, 5
      %v631 = vshrl.u32 %v592, 16
      %v633 = vrot.slane %v631, 4
      %v634 = vor.u32 %v633, %v630
      %v635 = vrot.slane %v634, 4
      %v637 = vshll.u32 %v593, 16
      %v639 = vrot.slane %v637, 5
      %v640 = vsel %vm626, %v635, %v639
      %v641 = vshrl.u32 %v593, 16
      %v643 = vrot.slane %v641, 4
      %v644 = vor.u32 %v643, %v639
      %v645 = vrot.slane %v644, 4
      %v647 = vshll.u32 %v594, 16
      %v649 = vrot.slane %v647, 5
      %v650 = vsel %vm626, %v645, %v649
      %v651 = vshrl.u32 %v594, 16
      %v653 = vrot.slane %v651, 4
      %v654 = vor.u32 %v653, %v649
      %v655 = vrot.slane %v654, 4
      %v657 = vshll.u32 %v595, 16
      %v659 = vrot.slane %v657, 5
      %v660 = vsel %vm626, %v655, %v659
      %v661 = vshrl.u32 %v595, 16
      %v663 = vrot.slane %v661, 4
      %v664 = vor.u32 %v663, %v659
      %v665 = vrot.slane %v664, 4
      %v667 = vshll.u32 %v596, 16
      %v669 = vrot.slane %v667, 5
      %v670 = vsel %vm626, %v665, %v669
      %v671 = vshrl.u32 %v596, 16
      %v673 = vrot.slane %v671, 4
      %v674 = vor.u32 %v673, %v669
      %v675 = vrot.slane %v674, 4
      %v677 = vshll.u32 %v597, 16
      %v679 = vrot.slane %v677, 5
      %v680 = vsel %vm626, %v675, %v679
      %v681 = vshrl.u32 %v597, 16
      %v683 = vrot.slane %v681, 4
      %v684 = vor.u32 %v683, %v679
      %v685 = vrot.slane %v684, 4
      %v687 = vshll.u32 %v598, 16
      %v689 = vrot.slane %v687, 5
      %v690 = vsel %vm626, %v685, %v689
      %v691 = vshrl.u32 %v598, 16
      %v693 = vrot.slane %v691, 4
      %v694 = vor.u32 %v693, %v689
      %v695 = vrot.slane %v694, 4
      %v697 = vshll.u32 %v599, 16
      %v699 = vrot.slane %v697, 5
      %v700 = vsel %vm626, %v695, %v699
      %v701 = vshrl.u32 %v599, 16
      %v703 = vrot.slane %v701, 4
      %v704 = vor.u32 %v703, %v699
      %v705 = vrot.slane %v704, 4
      %v707 = vshll.u32 %v600, 16
      %v709 = vrot.slane %v707, 5
      %v710 = vsel %vm626, %v705, %v709
      %v711 = vshrl.u32 %v600, 16
      %v713 = vrot.slane %v711, 4
      %v714 = vor.u32 %v713, %v709
      %v715 = vrot.slane %v714, 4
      %v717 = vshll.u32 %v601, 16
      %v719 = vrot.slane %v717, 5
      %v720 = vsel %vm626, %v715, %v719
      %v721 = vshrl.u32 %v601, 16
      %v723 = vrot.slane %v721, 4
      %v724 = vor.u32 %v723, %v719
      %v725 = vrot.slane %v724, 4
      %v727 = vshll.u32 %v602, 16
      %v729 = vrot.slane %v727, 5
      %v730 = vsel %vm626, %v725, %v729
      %v731 = vshrl.u32 %v602, 16
      %v733 = vrot.slane %v731, 4
      %v734 = vor.u32 %v733, %v729
      %v735 = vrot.slane %v734, 4
      %v737 = vshll.u32 %v603, 16
      %v739 = vrot.slane %v737, 5
      %v740 = vsel %vm626, %v735, %v739
      %v741 = vshrl.u32 %v603, 16
      %v743 = vrot.slane %v741, 4
      %v744 = vor.u32 %v743, %v739
      %v745 = vrot.slane %v744, 4
      %v747 = vshll.u32 %v604, 16
      %v749 = vrot.slane %v747, 5
      %v750 = vsel %vm626, %v745, %v749
      %v751 = vshrl.u32 %v604, 16
      %v753 = vrot.slane %v751, 4
      %v754 = vor.u32 %v753, %v749
      %v755 = vrot.slane %v754, 4
      %v757 = vshll.u32 %v605, 16
      %v759 = vrot.slane %v757, 5
      %v760 = vsel %vm626, %v755, %v759
      %v761 = vshrl.u32 %v605, 16
      %v763 = vrot.slane %v761, 4
      %v764 = vor.u32 %v763, %v759
      %v765 = vrot.slane %v764, 4
      %v767 = vshll.u32 %v606, 16
      %v769 = vrot.slane %v767, 5
      %v770 = vsel %vm626, %v765, %v769
      %v771 = vshrl.u32 %v606, 16
      %v773 = vrot.slane %v771, 4
      %v774 = vor.u32 %v773, %v769
      %v775 = vrot.slane %v774, 4
      %v777 = vshll.u32 %v607, 16
      %v779 = vrot.slane %v777, 5
      %v780 = vsel %vm626, %v775, %v779
      %v781 = vshrl.u32 %v607, 16
      %v783 = vrot.slane %v781, 4
      %v784 = vor.u32 %v783, %v779
      %v785 = vrot.slane %v784, 4
      %v787 = vshll.u32 %v608, 16
      %v789 = vrot.slane %v787, 5
      %v790 = vsel %vm626, %v785, %v789
      %v791 = vshrl.u32 %v608, 16
      %v793 = vrot.slane %v791, 4
      %v794 = vor.u32 %v793, %v789
      %v795 = vrot.slane %v794, 4
      %v797 = vshll.u32 %v609, 16
      %v799 = vrot.slane %v797, 5
      %v800 = vsel %vm626, %v795, %v799
      %v801 = vshrl.u32 %v609, 16
      %v803 = vrot.slane %v801, 4
      %v804 = vor.u32 %v803, %v799
      %v805 = vrot.slane %v804, 4
      %v807 = vshll.u32 %v610, 16
      %v809 = vrot.slane %v807, 5
      %v810 = vsel %vm626, %v805, %v809
      %v811 = vshrl.u32 %v610, 16
      %v813 = vrot.slane %v811, 4
      %v814 = vor.u32 %v813, %v809
      %v815 = vrot.slane %v814, 4
      %v817 = vshll.u32 %v611, 16
      %v819 = vrot.slane %v817, 5
      %v820 = vsel %vm626, %v815, %v819
      %v821 = vshrl.u32 %v611, 16
      %v823 = vrot.slane %v821, 4
      %v824 = vor.u32 %v823, %v819
      %v825 = vrot.slane %v824, 4
      %v827 = vshll.u32 %v612, 16
      %v829 = vrot.slane %v827, 5
      %v830 = vsel %vm626, %v825, %v829
      %v831 = vshrl.u32 %v612, 16
      %v833 = vrot.slane %v831, 4
      %v834 = vor.u32 %v833, %v829
      %v835 = vrot.slane %v834, 4
      %v837 = vshll.u32 %v613, 16
      %v839 = vrot.slane %v837, 5
      %v840 = vsel %vm626, %v835, %v839
      %v841 = vshrl.u32 %v613, 16
      %v843 = vrot.slane %v841, 4
      %v844 = vor.u32 %v843, %v839
      %v845 = vrot.slane %v844, 4
      %v847 = vshll.u32 %v614, 16
      %v849 = vrot.slane %v847, 5
      %v850 = vsel %vm626, %v845, %v849
      %v851 = vshrl.u32 %v614, 16
      %v853 = vrot.slane %v851, 4
      %v854 = vor.u32 %v853, %v849
      %v855 = vrot.slane %v854, 4
      %v857 = vshll.u32 %v615, 16
      %v859 = vrot.slane %v857, 5
      %v860 = vsel %vm626, %v855, %v859
      %v861 = vshrl.u32 %v615, 16
      %v863 = vrot.slane %v861, 4
      %v864 = vor.u32 %v863, %v859
      %v865 = vrot.slane %v864, 4
      %v867 = vshll.u32 %v616, 16
      %v869 = vrot.slane %v867, 5
      %v870 = vsel %vm626, %v865, %v869
      %v871 = vshrl.u32 %v616, 16
      %v873 = vrot.slane %v871, 4
      %v874 = vor.u32 %v873, %v869
      %v875 = vrot.slane %v874, 4
      %v877 = vshll.u32 %v617, 16
      %v879 = vrot.slane %v877, 5
      %v880 = vsel %vm626, %v875, %v879
      %v881 = vshrl.u32 %v617, 16
      %v883 = vrot.slane %v881, 4
      %v884 = vor.u32 %v883, %v879
      %v885 = vrot.slane %v884, 4
      %v887 = vshll.u32 %v618, 16
      %v889 = vrot.slane %v887, 5
      %v890 = vsel %vm626, %v885, %v889
      %v891 = vshrl.u32 %v618, 16
      %v893 = vrot.slane %v891, 4
      %v894 = vor.u32 %v893, %v889
      %v895 = vrot.slane %v894, 4
      %v897 = vshll.u32 %v619, 16
      %v899 = vrot.slane %v897, 5
      %v900 = vsel %vm626, %v895, %v899
      %v901 = vshrl.u32 %v619, 16
      %v903 = vrot.slane %v901, 4
      %v904 = vor.u32 %v903, %v899
      %v905 = vrot.slane %v904, 4
      %v907 = vshll.u32 %v620, 16
      %v909 = vrot.slane %v907, 5
      %v910 = vsel %vm626, %v905, %v909
      %v911 = vshrl.u32 %v620, 16
      %v913 = vrot.slane %v911, 4
      %v914 = vor.u32 %v913, %v909
      %v915 = vrot.slane %v914, 4
      %v917 = vshll.u32 %v621, 16
      %v919 = vrot.slane %v917, 5
      %v920 = vsel %vm626, %v915, %v919
      %v921 = vshrl.u32 %v621, 16
      %v923 = vrot.slane %v921, 4
      %v924 = vor.u32 %v923, %v919
      %v925 = vrot.slane %v924, 4
      %v927 = vshll.u32 %v622, 16
      %v929 = vrot.slane %v927, 5
      %v930 = vsel %vm626, %v925, %v929
      %v931 = vshrl.u32 %v622, 16
      %v933 = vrot.slane %v931, 4
      %v934 = vor.u32 %v933, %v929
      %v935 = vrot.slane %v934, 4
      %v937 = vshll.u32 %v623, 16
      %v939 = vrot.slane %v937, 5
      %v940 = vsel %vm626, %v935, %v939
      %v941 = vshrl.u32 %v623, 16
      %v943 = vrot.slane %v941, 4
      %v944 = vor.u32 %v943, %v939
      %v945 = vrot.slane %v944, 4
      %vm946 = vcmp.ne.s16.totalorder %v630, 0
      %vm947 = vcmp.ne.s16.totalorder %v640, 0
      %vm948 = vcmp.ne.s16.totalorder %v650, 0
      %vm949 = vcmp.ne.s16.totalorder %v660, 0
      %vm950 = vcmp.ne.s16.totalorder %v670, 0
      %vm951 = vcmp.ne.s16.totalorder %v680, 0
      %vm952 = vcmp.ne.s16.totalorder %v690, 0
      %vm953 = vcmp.ne.s16.totalorder %v700, 0
      %vm954 = vcmp.ne.s16.totalorder %v710, 0
      %vm955 = vcmp.ne.s16.totalorder %v720, 0
      %vm956 = vcmp.ne.s16.totalorder %v730, 0
      %vm957 = vcmp.ne.s16.totalorder %v740, 0
      %vm958 = vcmp.ne.s16.totalorder %v750, 0
      %vm959 = vcmp.ne.s16.totalorder %v760, 0
      %vm960 = vcmp.ne.s16.totalorder %v770, 0
      %vm961 = vcmp.ne.s16.totalorder %v780, 0
      %vm962 = vcmp.ne.s16.totalorder %v790, 0
      %vm963 = vcmp.ne.s16.totalorder %v800, 0
      %vm964 = vcmp.ne.s16.totalorder %v810, 0
      %vm965 = vcmp.ne.s16.totalorder %v820, 0
      %vm966 = vcmp.ne.s16.totalorder %v830, 0
      %vm967 = vcmp.ne.s16.totalorder %v840, 0
      %vm968 = vcmp.ne.s16.totalorder %v850, 0
      %vm969 = vcmp.ne.s16.totalorder %v860, 0
      %vm970 = vcmp.ne.s16.totalorder %v870, 0
      %vm971 = vcmp.ne.s16.totalorder %v880, 0
      %vm972 = vcmp.ne.s16.totalorder %v890, 0
      %vm973 = vcmp.ne.s16.totalorder %v900, 0
      %vm974 = vcmp.ne.s16.totalorder %v910, 0
      %vm975 = vcmp.ne.s16.totalorder %v920, 0
      %vm976 = vcmp.ne.s16.totalorder %v930, 0
      %vm977 = vcmp.ne.s16.totalorder %v940, 0
      %vm978 = vcmp.ne.s16.totalorder %v945, 0
      %v979 = vsel %vm946, %v367, 0
      %v980 = vsel %vm947, %v368, 0
      %v981 = vsel %vm948, %v369, 0
      %v982 = vsel %vm949, %v370, 0
      %v983 = vsel %vm950, %v371, 0
      %v984 = vsel %vm951, %v372, 0
      %v985 = vsel %vm952, %v373, 0
      %v986 = vsel %vm953, %v374, 0
      %v987 = vsel %vm954, %v375, 0
      %v988 = vsel %vm955, %v376, 0
      %v989 = vsel %vm956, %v377, 0
      %v990 = vsel %vm957, %v378, 0
      %v991 = vsel %vm958, %v379, 0
      %v992 = vsel %vm959, %v380, 0
      %v993 = vsel %vm960, %v381, 0
      %v994 = vsel %vm961, %v382, 0
      %v995 = vsel %vm962, %v383, 0
      %v996 = vsel %vm963, %v384, 0
      %v997 = vsel %vm964, %v385, 0
      %v998 = vsel %vm965, %v386, 0
      %v999 = vsel %vm966, %v387, 0
      %v1000 = vsel %vm967, %v388, 0
      %v1001 = vsel %vm968, %v389, 0
      %v1002 = vsel %vm969, %v390, 0
      %v1003 = vsel %vm970, %v391, 0
      %v1004 = vsel %vm971, %v392, 0
      %v1005 = vsel %vm972, %v393, 0
      %v1006 = vsel %vm973, %v394, 0
      %v1007 = vsel %vm974, %v395, 0
      %v1008 = vsel %vm975, %v396, 0
      %v1009 = vsel %vm976, %v397, 0
      %v1010 = vsel %vm977, %v398, 0
      %v1011 = vsel %vm978, %v399, 0
      %vm1012 = vsmask.f32 256
      %vm1013 = vsmask.f32 4368
      %vm1014 = vmor %vm1012, %vm1013
      %v1016 = vshrl.u32 %v979, 16
      %v1018 = vrot.slane %v1016, 7
      %v1019 = vrot.slane %v1018, 4
      %v1021 = vshrl.u32 %v980, 16
      %v1023 = vrot.slane %v1021, 7
      %v1024 = vshll.u32 %v980, 16
      %v1026 = vor.u32 %v1023, %v1024
      %v1027 = vsel %vm1014, %v1019, %v1026
      %v1028 = vrot.slane %v1023, 4
      %v1030 = vshrl.u32 %v981, 16
      %v1032 = vrot.slane %v1030, 7
      %v1033 = vshll.u32 %v981, 16
      %v1035 = vor.u32 %v1032, %v1033
      %v1036 = vsel %vm1014, %v1028, %v1035
      %v1037 = vrot.slane %v1032, 4
      %v1039 = vshrl.u32 %v982, 16
      %v1041 = vrot.slane %v1039, 7
      %v1042 = vshll.u32 %v982, 16
      %v1044 = vor.u32 %v1041, %v1042
      %v1045 = vsel %vm1014, %v1037, %v1044
      %v1046 = vrot.slane %v1041, 4
      %v1048 = vshrl.u32 %v983, 16
      %v1050 = vrot.slane %v1048, 7
      %v1051 = vshll.u32 %v983, 16
      %v1053 = vor.u32 %v1050, %v1051
      %v1054 = vsel %vm1014, %v1046, %v1053
      %v1055 = vrot.slane %v1050, 4
      %v1057 = vshrl.u32 %v984, 16
      %v1059 = vrot.slane %v1057, 7
      %v1060 = vshll.u32 %v984, 16
      %v1062 = vor.u32 %v1059, %v1060
      %v1063 = vsel %vm1014, %v1055, %v1062
      %v1064 = vrot.slane %v1059, 4
      %v1066 = vshrl.u32 %v985, 16
      %v1068 = vrot.slane %v1066, 7
      %v1069 = vshll.u32 %v985, 16
      %v1071 = vor.u32 %v1068, %v1069
      %v1072 = vsel %vm1014, %v1064, %v1071
      %v1073 = vrot.slane %v1068, 4
      %v1075 = vshrl.u32 %v986, 16
      %v1077 = vrot.slane %v1075, 7
      %v1078 = vshll.u32 %v986, 16
      %v1080 = vor.u32 %v1077, %v1078
      %v1081 = vsel %vm1014, %v1073, %v1080
      %v1082 = vrot.slane %v1077, 4
      %v1084 = vshrl.u32 %v987, 16
      %v1086 = vrot.slane %v1084, 7
      %v1087 = vshll.u32 %v987, 16
      %v1089 = vor.u32 %v1086, %v1087
      %v1090 = vsel %vm1014, %v1082, %v1089
      %v1091 = vrot.slane %v1086, 4
      %v1093 = vshrl.u32 %v988, 16
      %v1095 = vrot.slane %v1093, 7
      %v1096 = vshll.u32 %v988, 16
      %v1098 = vor.u32 %v1095, %v1096
      %v1099 = vsel %vm1014, %v1091, %v1098
      %v1100 = vrot.slane %v1095, 4
      %v1102 = vshrl.u32 %v989, 16
      %v1104 = vrot.slane %v1102, 7
      %v1105 = vshll.u32 %v989, 16
      %v1107 = vor.u32 %v1104, %v1105
      %v1108 = vsel %vm1014, %v1100, %v1107
      %v1109 = vrot.slane %v1104, 4
      %v1111 = vshrl.u32 %v990, 16
      %v1113 = vrot.slane %v1111, 7
      %v1114 = vshll.u32 %v990, 16
      %v1116 = vor.u32 %v1113, %v1114
      %v1117 = vsel %vm1014, %v1109, %v1116
      %v1118 = vrot.slane %v1113, 4
      %v1120 = vshrl.u32 %v991, 16
      %v1122 = vrot.slane %v1120, 7
      %v1123 = vshll.u32 %v991, 16
      %v1125 = vor.u32 %v1122, %v1123
      %v1126 = vsel %vm1014, %v1118, %v1125
      %v1127 = vrot.slane %v1122, 4
      %v1129 = vshrl.u32 %v992, 16
      %v1131 = vrot.slane %v1129, 7
      %v1132 = vshll.u32 %v992, 16
      %v1134 = vor.u32 %v1131, %v1132
      %v1135 = vsel %vm1014, %v1127, %v1134
      %v1136 = vrot.slane %v1131, 4
      %v1138 = vshrl.u32 %v993, 16
      %v1140 = vrot.slane %v1138, 7
      %v1141 = vshll.u32 %v993, 16
      %v1143 = vor.u32 %v1140, %v1141
      %v1144 = vsel %vm1014, %v1136, %v1143
      %v1145 = vrot.slane %v1140, 4
      %v1147 = vshrl.u32 %v994, 16
      %v1149 = vrot.slane %v1147, 7
      %v1150 = vshll.u32 %v994, 16
      %v1152 = vor.u32 %v1149, %v1150
      %v1153 = vsel %vm1014, %v1145, %v1152
      %v1154 = vrot.slane %v1149, 4
      %v1156 = vshrl.u32 %v995, 16
      %v1158 = vrot.slane %v1156, 7
      %v1159 = vshll.u32 %v995, 16
      %v1161 = vor.u32 %v1158, %v1159
      %v1162 = vsel %vm1014, %v1154, %v1161
      %v1163 = vrot.slane %v1158, 4
      %v1165 = vshrl.u32 %v996, 16
      %v1167 = vrot.slane %v1165, 7
      %v1168 = vshll.u32 %v996, 16
      %v1170 = vor.u32 %v1167, %v1168
      %v1171 = vsel %vm1014, %v1163, %v1170
      %v1172 = vrot.slane %v1167, 4
      %v1174 = vshrl.u32 %v997, 16
      %v1176 = vrot.slane %v1174, 7
      %v1177 = vshll.u32 %v997, 16
      %v1179 = vor.u32 %v1176, %v1177
      %v1180 = vsel %vm1014, %v1172, %v1179
      %v1181 = vrot.slane %v1176, 4
      %v1183 = vshrl.u32 %v998, 16
      %v1185 = vrot.slane %v1183, 7
      %v1186 = vshll.u32 %v998, 16
      %v1188 = vor.u32 %v1185, %v1186
      %v1189 = vsel %vm1014, %v1181, %v1188
      %v1190 = vrot.slane %v1185, 4
      %v1192 = vshrl.u32 %v999, 16
      %v1194 = vrot.slane %v1192, 7
      %v1195 = vshll.u32 %v999, 16
      %v1197 = vor.u32 %v1194, %v1195
      %v1198 = vsel %vm1014, %v1190, %v1197
      %v1199 = vrot.slane %v1194, 4
      %v1201 = vshrl.u32 %v1000, 16
      %v1203 = vrot.slane %v1201, 7
      %v1204 = vshll.u32 %v1000, 16
      %v1206 = vor.u32 %v1203, %v1204
      %v1207 = vsel %vm1014, %v1199, %v1206
      %v1208 = vrot.slane %v1203, 4
      %v1210 = vshrl.u32 %v1001, 16
      %v1212 = vrot.slane %v1210, 7
      %v1213 = vshll.u32 %v1001, 16
      %v1215 = vor.u32 %v1212, %v1213
      %v1216 = vsel %vm1014, %v1208, %v1215
      %v1217 = vrot.slane %v1212, 4
      %v1219 = vshrl.u32 %v1002, 16
      %v1221 = vrot.slane %v1219, 7
      %v1222 = vshll.u32 %v1002, 16
      %v1224 = vor.u32 %v1221, %v1222
      %v1225 = vsel %vm1014, %v1217, %v1224
      %v1226 = vrot.slane %v1221, 4
      %v1228 = vshrl.u32 %v1003, 16
      %v1230 = vrot.slane %v1228, 7
      %v1231 = vshll.u32 %v1003, 16
      %v1233 = vor.u32 %v1230, %v1231
      %v1234 = vsel %vm1014, %v1226, %v1233
      %v1235 = vrot.slane %v1230, 4
      %v1237 = vshrl.u32 %v1004, 16
      %v1239 = vrot.slane %v1237, 7
      %v1240 = vshll.u32 %v1004, 16
      %v1242 = vor.u32 %v1239, %v1240
      %v1243 = vsel %vm1014, %v1235, %v1242
      %v1244 = vrot.slane %v1239, 4
      %v1246 = vshrl.u32 %v1005, 16
      %v1248 = vrot.slane %v1246, 7
      %v1249 = vshll.u32 %v1005, 16
      %v1251 = vor.u32 %v1248, %v1249
      %v1252 = vsel %vm1014, %v1244, %v1251
      %v1253 = vrot.slane %v1248, 4
      %v1255 = vshrl.u32 %v1006, 16
      %v1257 = vrot.slane %v1255, 7
      %v1258 = vshll.u32 %v1006, 16
      %v1260 = vor.u32 %v1257, %v1258
      %v1261 = vsel %vm1014, %v1253, %v1260
      %v1262 = vrot.slane %v1257, 4
      %v1264 = vshrl.u32 %v1007, 16
      %v1266 = vrot.slane %v1264, 7
      %v1267 = vshll.u32 %v1007, 16
      %v1269 = vor.u32 %v1266, %v1267
      %v1270 = vsel %vm1014, %v1262, %v1269
      %v1271 = vrot.slane %v1266, 4
      %v1273 = vshrl.u32 %v1008, 16
      %v1275 = vrot.slane %v1273, 7
      %v1276 = vshll.u32 %v1008, 16
      %v1278 = vor.u32 %v1275, %v1276
      %v1279 = vsel %vm1014, %v1271, %v1278
      %v1280 = vrot.slane %v1275, 4
      %v1282 = vshrl.u32 %v1009, 16
      %v1284 = vrot.slane %v1282, 7
      %v1285 = vshll.u32 %v1009, 16
      %v1287 = vor.u32 %v1284, %v1285
      %v1288 = vsel %vm1014, %v1280, %v1287
      %v1289 = vrot.slane %v1284, 4
      %v1291 = vshrl.u32 %v1010, 16
      %v1293 = vrot.slane %v1291, 7
      %v1294 = vshll.u32 %v1010, 16
      %v1296 = vor.u32 %v1293, %v1294
      %v1297 = vsel %vm1014, %v1289, %v1296
      %v1298 = vrot.slane %v1293, 4
      %v1300 = vshrl.u32 %v1011, 16
      %v1302 = vrot.slane %v1300, 7
      %v1303 = vshll.u32 %v1011, 16
      %v1305 = vor.u32 %v1302, %v1303
      %v1306 = vsel %vm1014, %v1298, %v1305
      %1339 = vst [vmem:[#allocation3] sm:$0xf] %v1027
      %1340 = vst [vmem:[#allocation3 + $0x24] sm:$0xf] %v1036
      %1341 = vst [vmem:[#allocation3 + $0x48] sm:$0xf] %v1045
      %1342 = vst [vmem:[#allocation3 + $0x6c] sm:$0xf] %v1054
      %1343 = vst [vmem:[#allocation3 + $0x90] sm:$0xf] %v1063
      %1344 = vst [vmem:[#allocation3 + $0xb4] sm:$0xf] %v1072
      %1345 = vst [vmem:[#allocation3 + $0xd8] sm:$0xf] %v1081
      %1346 = vst [vmem:[#allocation3 + $0xfc] sm:$0xf] %v1090
      %1347 = vst [vmem:[#allocation3 + $0x120] sm:$0xf] %v1099
      %1348 = vst [vmem:[#allocation3 + $0x144] sm:$0xf] %v1108
      %1349 = vst [vmem:[#allocation3 + $0x168] sm:$0xf] %v1117
      %1350 = vst [vmem:[#allocation3 + $0x18c] sm:$0xf] %v1126
      %1351 = vst [vmem:[#allocation3 + $0x1b0] sm:$0xf] %v1135
      %1352 = vst [vmem:[#allocation3 + $0x1d4] sm:$0xf] %v1144
      %1353 = vst [vmem:[#allocation3 + $0x1f8] sm:$0xf] %v1153
      %1354 = vst [vmem:[#allocation3 + $0x21c] sm:$0xf] %v1162
      %1355 = vst [vmem:[#allocation3 + $0x240] sm:$0xf] %v1171
      %1356 = vst [vmem:[#allocation3 + $0x264] sm:$0xf] %v1180
      %1357 = vst [vmem:[#allocation3 + $0x288] sm:$0xf] %v1189
      %1358 = vst [vmem:[#allocation3 + $0x2ac] sm:$0xf] %v1198
      %1359 = vst [vmem:[#allocation3 + $0x2d0] sm:$0xf] %v1207
      %1360 = vst [vmem:[#allocation3 + $0x2f4] sm:$0xf] %v1216
      %1361 = vst [vmem:[#allocation3 + $0x318] sm:$0xf] %v1225
      %1362 = vst [vmem:[#allocation3 + $0x33c] sm:$0xf] %v1234
      %1363 = vst [vmem:[#allocation3 + $0x360] sm:$0xf] %v1243
      %1364 = vst [vmem:[#allocation3 + $0x384] sm:$0xf] %v1252
      %1365 = vst [vmem:[#allocation3 + $0x3a8] sm:$0xf] %v1261
      %1366 = vst [vmem:[#allocation3 + $0x3cc] sm:$0xf] %v1270
      %1367 = vst [vmem:[#allocation3 + $0x3f0] sm:$0xf] %v1279
      %1368 = vst [vmem:[#allocation3 + $0x414] sm:$0xf] %v1288
      %1369 = vst [vmem:[#allocation3 + $0x438] sm:$0xf] %v1297
      %1370 = vst [vmem:[#allocation3 + $0x45c] sm:$0xf] %v1306
      %v1371 = vld [vmem:[#allocation2 + $0x8] sm:$0xf]
      %v1372 = vld [vmem:[#allocation2 + $0xc] sm:$0xf]
      %v1373 = vld [vmem:[#allocation2 + $0x10] sm:$0xf]
      %v1374 = vld [vmem:[#allocation2 + $0x14] sm:$0xf]
      %v1375 = vld [vmem:[#allocation2 + $0x18] sm:$0xf]
      %v1376 = vld [vmem:[#allocation2 + $0x1c] sm:$0xf]
      %v1377 = vld [vmem:[#allocation2 + $0x20] sm:$0xf]
      %v1378 = vld [vmem:[#allocation2 + $0x24] sm:$0xf]
      %v1379 = vld [vmem:[#allocation2 + $0x28] sm:$0xf]
      %v1380 = vld [vmem:[#allocation2 + $0x2c] sm:$0xf]
      %v1381 = vld [vmem:[#allocation2 + $0x30] sm:$0xf]
      %v1382 = vld [vmem:[#allocation2 + $0x34] sm:$0xf]
      %v1383 = vld [vmem:[#allocation2 + $0x38] sm:$0xf]
      %v1384 = vld [vmem:[#allocation2 + $0x3c] sm:$0xf]
      %v1385 = vld [vmem:[#allocation2 + $0x40] sm:$0xf]
      %v1386 = vld [vmem:[#allocation2 + $0x44] sm:$0xf]
      %v1387 = vld [vmem:[#allocation2 + $0x48] sm:$0xf]
      %v1388 = vld [vmem:[#allocation2 + $0x4c] sm:$0xf]
      %v1389 = vld [vmem:[#allocation2 + $0x50] sm:$0xf]
      %v1390 = vld [vmem:[#allocation2 + $0x54] sm:$0xf]
      %v1391 = vld [vmem:[#allocation2 + $0x58] sm:$0xf]
      %v1392 = vld [vmem:[#allocation2 + $0x5c] sm:$0xf]
      %v1393 = vld [vmem:[#allocation2 + $0x60] sm:$0xf]
      %v1394 = vld [vmem:[#allocation2 + $0x64] sm:$0xf]
      %v1395 = vld [vmem:[#allocation2 + $0x68] sm:$0xf]
      %v1396 = vld [vmem:[#allocation2 + $0x6c] sm:$0xf]
      %v1397 = vld [vmem:[#allocation2 + $0x70] sm:$0xf]
      %v1398 = vld [vmem:[#allocation2 + $0x74] sm:$0xf]
      %v1399 = vld [vmem:[#allocation2 + $0x78] sm:$0xf]
      %v1400 = vld [vmem:[#allocation2 + $0x7c] sm:$0xf]
      %v1401 = vld [vmem:[#allocation2 + $0x80] sm:$0xf]
      %v1402 = vld [vmem:[#allocation2 + $0x84] sm:$0xf]
      %1403 = vst [vmem:[#allocation3 + $0x4] sm:$0xf] %v1371
      %1404 = vst [vmem:[#allocation3 + $0x28] sm:$0xf] %v1372
      %1405 = vst [vmem:[#allocation3 + $0x4c] sm:$0xf] %v1373
      %1406 = vst [vmem:[#allocation3 + $0x70] sm:$0xf] %v1374
      %1407 = vst [vmem:[#allocation3 + $0x94] sm:$0xf] %v1375
      %1408 = vst [vmem:[#allocation3 + $0xb8] sm:$0xf] %v1376
      %1409 = vst [vmem:[#allocation3 + $0xdc] sm:$0xf] %v1377
      %1410 = vst [vmem:[#allocation3 + $0x100] sm:$0xf] %v1378
      %1411 = vst [vmem:[#allocation3 + $0x124] sm:$0xf] %v1379
      %1412 = vst [vmem:[#allocation3 + $0x148] sm:$0xf] %v1380
      %1413 = vst [vmem:[#allocation3 + $0x16c] sm:$0xf] %v1381
      %1414 = vst [vmem:[#allocation3 + $0x190] sm:$0xf] %v1382
      %1415 = vst [vmem:[#allocation3 + $0x1b4] sm:$0xf] %v1383
      %1416 = vst [vmem:[#allocation3 + $0x1d8] sm:$0xf] %v1384
      %1417 = vst [vmem:[#allocation3 + $0x1fc] sm:$0xf] %v1385
      %1418 = vst [vmem:[#allocation3 + $0x220] sm:$0xf] %v1386
      %1419 = vst [vmem:[#allocation3 + $0x244] sm:$0xf] %v1387
      %1420 = vst [vmem:[#allocation3 + $0x268] sm:$0xf] %v1388
      %1421 = vst [vmem:[#allocation3 + $0x28c] sm:$0xf] %v1389
      %1422 = vst [vmem:[#allocation3 + $0x2b0] sm:$0xf] %v1390
      %1423 = vst [vmem:[#allocation3 + $0x2d4] sm:$0xf] %v1391
      %1424 = vst [vmem:[#allocation3 + $0x2f8] sm:$0xf] %v1392
      %1425 = vst [vmem:[#allocation3 + $0x31c] sm:$0xf] %v1393
      %1426 = vst [vmem:[#allocation3 + $0x340] sm:$0xf] %v1394
      %1427 = vst [vmem:[#allocation3 + $0x364] sm:$0xf] %v1395
      %1428 = vst [vmem:[#allocation3 + $0x388] sm:$0xf] %v1396
      %1429 = vst [vmem:[#allocation3 + $0x3ac] sm:$0xf] %v1397
      %1430 = vst [vmem:[#allocation3 + $0x3d0] sm:$0xf] %v1398
      %1431 = vst [vmem:[#allocation3 + $0x3f4] sm:$0xf] %v1399
      %1432 = vst [vmem:[#allocation3 + $0x418] sm:$0xf] %v1400
      %1433 = vst [vmem:[#allocation3 + $0x43c] sm:$0xf] %v1401
      %1434 = vst [vmem:[#allocation3 + $0x460] sm:$0xf] %v1402
      %v1435 = vld [vmem:[#allocation2 + $0x8] sm:$0xf]
      %v1436 = vld [vmem:[#allocation2 + $0xc] sm:$0xf]
      %v1437 = vld [vmem:[#allocation2 + $0x10] sm:$0xf]
      %v1438 = vld [vmem:[#allocation2 + $0x14] sm:$0xf]
      %v1439 = vld [vmem:[#allocation2 + $0x18] sm:$0xf]
      %v1440 = vld [vmem:[#allocation2 + $0x1c] sm:$0xf]
      %v1441 = vld [vmem:[#allocation2 + $0x20] sm:$0xf]
      %v1442 = vld [vmem:[#allocation2 + $0x24] sm:$0xf]
      %v1443 = vld [vmem:[#allocation2 + $0x28] sm:$0xf]
      %v1444 = vld [vmem:[#allocation2 + $0x2c] sm:$0xf]
      %v1445 = vld [vmem:[#allocation2 + $0x30] sm:$0xf]
      %v1446 = vld [vmem:[#allocation2 + $0x34] sm:$0xf]
      %v1447 = vld [vmem:[#allocation2 + $0x38] sm:$0xf]
      %v1448 = vld [vmem:[#allocation2 + $0x3c] sm:$0xf]
      %v1449 = vld [vmem:[#allocation2 + $0x40] sm:$0xf]
      %v1450 = vld [vmem:[#allocation2 + $0x44] sm:$0xf]
      %v1451 = vld [vmem:[#allocation2 + $0x48] sm:$0xf]
      %v1452 = vld [vmem:[#allocation2 + $0x4c] sm:$0xf]
      %v1453 = vld [vmem:[#allocation2 + $0x50] sm:$0xf]
      %v1454 = vld [vmem:[#allocation2 + $0x54] sm:$0xf]
      %v1455 = vld [vmem:[#allocation2 + $0x58] sm:$0xf]
      %v1456 = vld [vmem:[#allocation2 + $0x5c] sm:$0xf]
      %v1457 = vld [vmem:[#allocation2 + $0x60] sm:$0xf]
      %v1458 = vld [vmem:[#allocation2 + $0x64] sm:$0xf]
      %v1459 = vld [vmem:[#allocation2 + $0x68] sm:$0xf]
      %v1460 = vld [vmem:[#allocation2 + $0x6c] sm:$0xf]
      %v1461 = vld [vmem:[#allocation2 + $0x70] sm:$0xf]
      %v1462 = vld [vmem:[#allocation2 + $0x74] sm:$0xf]
      %v1463 = vld [vmem:[#allocation2 + $0x78] sm:$0xf]
      %v1464 = vld [vmem:[#allocation2 + $0x7c] sm:$0xf]
      %v1465 = vld [vmem:[#allocation2 + $0x80] sm:$0xf]
      %v1466 = vld [vmem:[#allocation2 + $0x84] sm:$0xf]
      %v1467 = vld [vmem:[#allocation2 + $0x88] sm:$0x1]
      %v1468 = vsel %vm335, 1, 0
      %v1469 = vsel %vm336, 1, 0
      %v1470 = vsel %vm337, 1, 0
      %v1471 = vsel %vm338, 1, 0
      %v1472 = vsel %vm339, 1, 0
      %v1473 = vsel %vm340, 1, 0
      %v1474 = vsel %vm341, 1, 0
      %v1475 = vsel %vm342, 1, 0
      %v1476 = vsel %vm343, 1, 0
      %v1477 = vsel %vm344, 1, 0
      %v1478 = vsel %vm345, 1, 0
      %v1479 = vsel %vm346, 1, 0
      %v1480 = vsel %vm347, 1, 0
      %v1481 = vsel %vm348, 1, 0
      %v1482 = vsel %vm349, 1, 0
      %v1483 = vsel %vm350, 1, 0
      %v1484 = vsel %vm351, 1, 0
      %v1485 = vsel %vm352, 1, 0
      %v1486 = vsel %vm353, 1, 0
      %v1487 = vsel %vm354, 1, 0
      %v1488 = vsel %vm355, 1, 0
      %v1489 = vsel %vm356, 1, 0
      %v1490 = vsel %vm357, 1, 0
      %v1491 = vsel %vm358, 1, 0
      %v1492 = vsel %vm359, 1, 0
      %v1493 = vsel %vm360, 1, 0
      %v1494 = vsel %vm361, 1, 0
      %v1495 = vsel %vm362, 1, 0
      %v1496 = vsel %vm363, 1, 0
      %v1497 = vsel %vm364, 1, 0
      %v1498 = vsel %vm365, 1, 0
      %v1499 = vsel %vm366, 1, 0
      %1500 = vset.pattern.permute.xlu0 0
      %1501 = vperm.xlu0 %1500, %v1468
      %v1502 = vpop.permute.xlu0 %1501
      %1503 = vset.pattern.permute.xlu0 0
      %1504 = vperm.xlu0 %1503, %v1469
      %v1505 = vpop.permute.xlu0 %1504
      %1506 = vset.pattern.permute.xlu0 0
      %1507 = vperm.xlu0 %1506, %v1470
      %v1508 = vpop.permute.xlu0 %1507
      %1509 = vset.pattern.permute.xlu0 0
      %1510 = vperm.xlu0 %1509, %v1471
      %v1511 = vpop.permute.xlu0 %1510
      %1512 = vset.pattern.permute.xlu0 0
      %1513 = vperm.xlu0 %1512, %v1472
      %v1514 = vpop.permute.xlu0 %1513
      %1515 = vset.pattern.permute.xlu0 0
      %1516 = vperm.xlu0 %1515, %v1473
      %v1517 = vpop.permute.xlu0 %1516
      %1518 = vset.pattern.permute.xlu0 0
      %1519 = vperm.xlu0 %1518, %v1474
      %v1520 = vpop.permute.xlu0 %1519
      %1521 = vset.pattern.permute.xlu0 0
      %1522 = vperm.xlu0 %1521, %v1475
      %v1523 = vpop.permute.xlu0 %1522
      %1524 = vset.pattern.permute.xlu0 0
      %1525 = vperm.xlu0 %1524, %v1476
      %v1526 = vpop.permute.xlu0 %1525
      %1527 = vset.pattern.permute.xlu0 0
      %1528 = vperm.xlu0 %1527, %v1477
      %v1529 = vpop.permute.xlu0 %1528
      %1530 = vset.pattern.permute.xlu0 0
      %1531 = vperm.xlu0 %1530, %v1478
      %v1532 = vpop.permute.xlu0 %1531
      %1533 = vset.pattern.permute.xlu0 0
      %1534 = vperm.xlu0 %1533, %v1479
      %v1535 = vpop.permute.xlu0 %1534
      %1536 = vset.pattern.permute.xlu0 0
      %1537 = vperm.xlu0 %1536, %v1480
      %v1538 = vpop.permute.xlu0 %1537
      %1539 = vset.pattern.permute.xlu0 0
      %1540 = vperm.xlu0 %1539, %v1481
      %v1541 = vpop.permute.xlu0 %1540
      %1542 = vset.pattern.permute.xlu0 0
      %1543 = vperm.xlu0 %1542, %v1482
      %v1544 = vpop.permute.xlu0 %1543
      %1545 = vset.pattern.permute.xlu0 0
      %1546 = vperm.xlu0 %1545, %v1483
      %v1547 = vpop.permute.xlu0 %1546
      %1548 = vset.pattern.permute.xlu0 0
      %1549 = vperm.xlu0 %1548, %v1484
      %v1550 = vpop.permute.xlu0 %1549
      %1551 = vset.pattern.permute.xlu0 0
      %1552 = vperm.xlu0 %1551, %v1485
      %v1553 = vpop.permute.xlu0 %1552
      %1554 = vset.pattern.permute.xlu0 0
      %1555 = vperm.xlu0 %1554, %v1486
      %v1556 = vpop.permute.xlu0 %1555
      %1557 = vset.pattern.permute.xlu0 0
      %1558 = vperm.xlu0 %1557, %v1487
      %v1559 = vpop.permute.xlu0 %1558
      %1560 = vset.pattern.permute.xlu0 0
      %1561 = vperm.xlu0 %1560, %v1488
      %v1562 = vpop.permute.xlu0 %1561
      %1563 = vset.pattern.permute.xlu0 0
      %1564 = vperm.xlu0 %1563, %v1489
      %v1565 = vpop.permute.xlu0 %1564
      %1566 = vset.pattern.permute.xlu0 0
      %1567 = vperm.xlu0 %1566, %v1490
      %v1568 = vpop.permute.xlu0 %1567
      %1569 = vset.pattern.permute.xlu0 0
      %1570 = vperm.xlu0 %1569, %v1491
      %v1571 = vpop.permute.xlu0 %1570
      %1572 = vset.pattern.permute.xlu0 0
      %1573 = vperm.xlu0 %1572, %v1492
      %v1574 = vpop.permute.xlu0 %1573
      %1575 = vset.pattern.permute.xlu0 0
      %1576 = vperm.xlu0 %1575, %v1493
      %v1577 = vpop.permute.xlu0 %1576
      %1578 = vset.pattern.permute.xlu0 0
      %1579 = vperm.xlu0 %1578, %v1494
      %v1580 = vpop.permute.xlu0 %1579
      %1581 = vset.pattern.permute.xlu0 0
      %1582 = vperm.xlu0 %1581, %v1495
      %v1583 = vpop.permute.xlu0 %1582
      %1584 = vset.pattern.permute.xlu0 0
      %1585 = vperm.xlu0 %1584, %v1496
      %v1586 = vpop.permute.xlu0 %1585
      %1587 = vset.pattern.permute.xlu0 0
      %1588 = vperm.xlu0 %1587, %v1497
      %v1589 = vpop.permute.xlu0 %1588
      %1590 = vset.pattern.permute.xlu0 0
      %1591 = vperm.xlu0 %1590, %v1498
      %v1592 = vpop.permute.xlu0 %1591
      %1593 = vset.pattern.permute.xlu0 0
      %1594 = vperm.xlu0 %1593, %v1499
      %v1595 = vpop.permute.xlu0 %1594
      %vm1596 = vcmp.eq.s32.totalorder %v1502, 1
      %vm1597 = vcmp.eq.s32.totalorder %v1505, 1
      %vm1598 = vcmp.eq.s32.totalorder %v1508, 1
      %vm1599 = vcmp.eq.s32.totalorder %v1511, 1
      %vm1600 = vcmp.eq.s32.totalorder %v1514, 1
      %vm1601 = vcmp.eq.s32.totalorder %v1517, 1
      %vm1602 = vcmp.eq.s32.totalorder %v1520, 1
      %vm1603 = vcmp.eq.s32.totalorder %v1523, 1
      %vm1604 = vcmp.eq.s32.totalorder %v1526, 1
      %vm1605 = vcmp.eq.s32.totalorder %v1529, 1
      %vm1606 = vcmp.eq.s32.totalorder %v1532, 1
      %vm1607 = vcmp.eq.s32.totalorder %v1535, 1
      %vm1608 = vcmp.eq.s32.totalorder %v1538, 1
      %vm1609 = vcmp.eq.s32.totalorder %v1541, 1
      %vm1610 = vcmp.eq.s32.totalorder %v1544, 1
      %vm1611 = vcmp.eq.s32.totalorder %v1547, 1
      %vm1612 = vcmp.eq.s32.totalorder %v1550, 1
      %vm1613 = vcmp.eq.s32.totalorder %v1553, 1
      %vm1614 = vcmp.eq.s32.totalorder %v1556, 1
      %vm1615 = vcmp.eq.s32.totalorder %v1559, 1
      %vm1616 = vcmp.eq.s32.totalorder %v1562, 1
      %vm1617 = vcmp.eq.s32.totalorder %v1565, 1
      %vm1618 = vcmp.eq.s32.totalorder %v1568, 1
      %vm1619 = vcmp.eq.s32.totalorder %v1571, 1
      %vm1620 = vcmp.eq.s32.totalorder %v1574, 1
      %vm1621 = vcmp.eq.s32.totalorder %v1577, 1
      %vm1622 = vcmp.eq.s32.totalorder %v1580, 1
      %vm1623 = vcmp.eq.s32.totalorder %v1583, 1
      %vm1624 = vcmp.eq.s32.totalorder %v1586, 1
      %vm1625 = vcmp.eq.s32.totalorder %v1589, 1
      %vm1626 = vcmp.eq.s32.totalorder %v1592, 1
      %vm1627 = vcmp.eq.s32.totalorder %v1595, 1
      %vm1628 = vmpackc.low %vm1596, %vm1596
      %vm1629 = vmpackc.low %vm1597, %vm1597
      %vm1630 = vmpackc.low %vm1598, %vm1598
      %vm1631 = vmpackc.low %vm1599, %vm1599
      %vm1632 = vmpackc.low %vm1600, %vm1600
      %vm1633 = vmpackc.low %vm1601, %vm1601
      %vm1634 = vmpackc.low %vm1602, %vm1602
      %vm1635 = vmpackc.low %vm1603, %vm1603
      %vm1636 = vmpackc.low %vm1604, %vm1604
      %vm1637 = vmpackc.low %vm1605, %vm1605
      %vm1638 = vmpackc.low %vm1606, %vm1606
      %vm1639 = vmpackc.low %vm1607, %vm1607
      %vm1640 = vmpackc.low %vm1608, %vm1608
      %vm1641 = vmpackc.low %vm1609, %vm1609
      %vm1642 = vmpackc.low %vm1610, %vm1610
      %vm1643 = vmpackc.low %vm1611, %vm1611
      %vm1644 = vmpackc.low %vm1612, %vm1612
      %vm1645 = vmpackc.low %vm1613, %vm1613
      %vm1646 = vmpackc.low %vm1614, %vm1614
      %vm1647 = vmpackc.low %vm1615, %vm1615
      %vm1648 = vmpackc.low %vm1616, %vm1616
      %vm1649 = vmpackc.low %vm1617, %vm1617
      %vm1650 = vmpackc.low %vm1618, %vm1618
      %vm1651 = vmpackc.low %vm1619, %vm1619
      %vm1652 = vmpackc.low %vm1620, %vm1620
      %vm1653 = vmpackc.low %vm1621, %vm1621
      %vm1654 = vmpackc.low %vm1622, %vm1622
      %vm1655 = vmpackc.low %vm1623, %vm1623
      %vm1656 = vmpackc.low %vm1624, %vm1624
      %vm1657 = vmpackc.low %vm1625, %vm1625
      %vm1658 = vmpackc.low %vm1626, %vm1626
      %vm1659 = vmpackc.low %vm1627, %vm1627
      %v1660 = vsel %vm1628, 65537, 0
      %v1661 = vsel %vm1629, 65537, 0
      %v1662 = vsel %vm1630, 65537, 0
      %v1663 = vsel %vm1631, 65537, 0
      %v1664 = vsel %vm1632, 65537, 0
      %v1665 = vsel %vm1633, 65537, 0
      %v1666 = vsel %vm1634, 65537, 0
      %v1667 = vsel %vm1635, 65537, 0
      %v1668 = vsel %vm1636, 65537, 0
      %v1669 = vsel %vm1637, 65537, 0
      %v1670 = vsel %vm1638, 65537, 0
      %v1671 = vsel %vm1639, 65537, 0
      %v1672 = vsel %vm1640, 65537, 0
      %v1673 = vsel %vm1641, 65537, 0
      %v1674 = vsel %vm1642, 65537, 0
      %v1675 = vsel %vm1643, 65537, 0
      %v1676 = vsel %vm1644, 65537, 0
      %v1677 = vsel %vm1645, 65537, 0
      %v1678 = vsel %vm1646, 65537, 0
      %v1679 = vsel %vm1647, 65537, 0
      %v1680 = vsel %vm1648, 65537, 0
      %v1681 = vsel %vm1649, 65537, 0
      %v1682 = vsel %vm1650, 65537, 0
      %v1683 = vsel %vm1651, 65537, 0
      %v1684 = vsel %vm1652, 65537, 0
      %v1685 = vsel %vm1653, 65537, 0
      %v1686 = vsel %vm1654, 65537, 0
      %v1687 = vsel %vm1655, 65537, 0
      %v1688 = vsel %vm1656, 65537, 0
      %v1689 = vsel %vm1657, 65537, 0
      %v1690 = vsel %vm1658, 65537, 0
      %v1691 = vsel %vm1659, 65537, 0
      %v1693 = vshrl.u32 %v1660, 16
      %v1695 = vrot.slane %v1693, 7
      %v1696 = vshll.u32 %v1660, 16
      %v1698 = vor.u32 %v1695, %v1696
      %v1699 = vrot.slane %v1695, 4
      %v1701 = vshrl.u32 %v1661, 16
      %v1703 = vrot.slane %v1701, 7
      %v1704 = vshll.u32 %v1661, 16
      %v1706 = vor.u32 %v1703, %v1704
      %v1707 = vsel %vm1014, %v1699, %v1706
      %v1708 = vrot.slane %v1703, 4
      %v1710 = vshrl.u32 %v1662, 16
      %v1712 = vrot.slane %v1710, 7
      %v1713 = vshll.u32 %v1662, 16
      %v1715 = vor.u32 %v1712, %v1713
      %v1716 = vsel %vm1014, %v1708, %v1715
      %v1717 = vrot.slane %v1712, 4
      %v1719 = vshrl.u32 %v1663, 16
      %v1721 = vrot.slane %v1719, 7
      %v1722 = vshll.u32 %v1663, 16
      %v1724 = vor.u32 %v1721, %v1722
      %v1725 = vsel %vm1014, %v1717, %v1724
      %v1726 = vrot.slane %v1721, 4
      %v1728 = vshrl.u32 %v1664, 16
      %v1730 = vrot.slane %v1728, 7
      %v1731 = vshll.u32 %v1664, 16
      %v1733 = vor.u32 %v1730, %v1731
      %v1734 = vsel %vm1014, %v1726, %v1733
      %v1735 = vrot.slane %v1730, 4
      %v1737 = vshrl.u32 %v1665, 16
      %v1739 = vrot.slane %v1737, 7
      %v1740 = vshll.u32 %v1665, 16
      %v1742 = vor.u32 %v1739, %v1740
      %v1743 = vsel %vm1014, %v1735, %v1742
      %v1744 = vrot.slane %v1739, 4
      %v1746 = vshrl.u32 %v1666, 16
      %v1748 = vrot.slane %v1746, 7
      %v1749 = vshll.u32 %v1666, 16
      %v1751 = vor.u32 %v1748, %v1749
      %v1752 = vsel %vm1014, %v1744, %v1751
      %v1753 = vrot.slane %v1748, 4
      %v1755 = vshrl.u32 %v1667, 16
      %v1757 = vrot.slane %v1755, 7
      %v1758 = vshll.u32 %v1667, 16
      %v1760 = vor.u32 %v1757, %v1758
      %v1761 = vsel %vm1014, %v1753, %v1760
      %v1762 = vrot.slane %v1757, 4
      %v1764 = vshrl.u32 %v1668, 16
      %v1766 = vrot.slane %v1764, 7
      %v1767 = vshll.u32 %v1668, 16
      %v1769 = vor.u32 %v1766, %v1767
      %v1770 = vsel %vm1014, %v1762, %v1769
      %v1771 = vrot.slane %v1766, 4
      %v1773 = vshrl.u32 %v1669, 16
      %v1775 = vrot.slane %v1773, 7
      %v1776 = vshll.u32 %v1669, 16
      %v1778 = vor.u32 %v1775, %v1776
      %v1779 = vsel %vm1014, %v1771, %v1778
      %v1780 = vrot.slane %v1775, 4
      %v1782 = vshrl.u32 %v1670, 16
      %v1784 = vrot.slane %v1782, 7
      %v1785 = vshll.u32 %v1670, 16
      %v1787 = vor.u32 %v1784, %v1785
      %v1788 = vsel %vm1014, %v1780, %v1787
      %v1789 = vrot.slane %v1784, 4
      %v1791 = vshrl.u32 %v1671, 16
      %v1793 = vrot.slane %v1791, 7
      %v1794 = vshll.u32 %v1671, 16
      %v1796 = vor.u32 %v1793, %v1794
      %v1797 = vsel %vm1014, %v1789, %v1796
      %v1798 = vrot.slane %v1793, 4
      %v1800 = vshrl.u32 %v1672, 16
      %v1802 = vrot.slane %v1800, 7
      %v1803 = vshll.u32 %v1672, 16
      %v1805 = vor.u32 %v1802, %v1803
      %v1806 = vsel %vm1014, %v1798, %v1805
      %v1807 = vrot.slane %v1802, 4
      %v1809 = vshrl.u32 %v1673, 16
      %v1811 = vrot.slane %v1809, 7
      %v1812 = vshll.u32 %v1673, 16
      %v1814 = vor.u32 %v1811, %v1812
      %v1815 = vsel %vm1014, %v1807, %v1814
      %v1816 = vrot.slane %v1811, 4
      %v1818 = vshrl.u32 %v1674, 16
      %v1820 = vrot.slane %v1818, 7
      %v1821 = vshll.u32 %v1674, 16
      %v1823 = vor.u32 %v1820, %v1821
      %v1824 = vsel %vm1014, %v1816, %v1823
      %v1825 = vrot.slane %v1820, 4
      %v1827 = vshrl.u32 %v1675, 16
      %v1829 = vrot.slane %v1827, 7
      %v1830 = vshll.u32 %v1675, 16
      %v1832 = vor.u32 %v1829, %v1830
      %v1833 = vsel %vm1014, %v1825, %v1832
      %v1834 = vrot.slane %v1829, 4
      %v1836 = vshrl.u32 %v1676, 16
      %v1838 = vrot.slane %v1836, 7
      %v1839 = vshll.u32 %v1676, 16
      %v1841 = vor.u32 %v1838, %v1839
      %v1842 = vsel %vm1014, %v1834, %v1841
      %v1843 = vrot.slane %v1838, 4
      %v1845 = vshrl.u32 %v1677, 16
      %v1847 = vrot.slane %v1845, 7
      %v1848 = vshll.u32 %v1677, 16
      %v1850 = vor.u32 %v1847, %v1848
      %v1851 = vsel %vm1014, %v1843, %v1850
      %v1852 = vrot.slane %v1847, 4
      %v1854 = vshrl.u32 %v1678, 16
      %v1856 = vrot.slane %v1854, 7
      %v1857 = vshll.u32 %v1678, 16
      %v1859 = vor.u32 %v1856, %v1857
      %v1860 = vsel %vm1014, %v1852, %v1859
      %v1861 = vrot.slane %v1856, 4
      %v1863 = vshrl.u32 %v1679, 16
      %v1865 = vrot.slane %v1863, 7
      %v1866 = vshll.u32 %v1679, 16
      %v1868 = vor.u32 %v1865, %v1866
      %v1869 = vsel %vm1014, %v1861, %v1868
      %v1870 = vrot.slane %v1865, 4
      %v1872 = vshrl.u32 %v1680, 16
      %v1874 = vrot.slane %v1872, 7
      %v1875 = vshll.u32 %v1680, 16
      %v1877 = vor.u32 %v1874, %v1875
      %v1878 = vsel %vm1014, %v1870, %v1877
      %v1879 = vrot.slane %v1874, 4
      %v1881 = vshrl.u32 %v1681, 16
      %v1883 = vrot.slane %v1881, 7
      %v1884 = vshll.u32 %v1681, 16
      %v1886 = vor.u32 %v1883, %v1884
      %v1887 = vsel %vm1014, %v1879, %v1886
      %v1888 = vrot.slane %v1883, 4
      %v1890 = vshrl.u32 %v1682, 16
      %v1892 = vrot.slane %v1890, 7
      %v1893 = vshll.u32 %v1682, 16
      %v1895 = vor.u32 %v1892, %v1893
      %v1896 = vsel %vm1014, %v1888, %v1895
      %v1897 = vrot.slane %v1892, 4
      %v1899 = vshrl.u32 %v1683, 16
      %v1901 = vrot.slane %v1899, 7
      %v1902 = vshll.u32 %v1683, 16
      %v1904 = vor.u32 %v1901, %v1902
      %v1905 = vsel %vm1014, %v1897, %v1904
      %v1906 = vrot.slane %v1901, 4
      %v1908 = vshrl.u32 %v1684, 16
      %v1910 = vrot.slane %v1908, 7
      %v1911 = vshll.u32 %v1684, 16
      %v1913 = vor.u32 %v1910, %v1911
      %v1914 = vsel %vm1014, %v1906, %v1913
      %v1915 = vrot.slane %v1910, 4
      %v1917 = vshrl.u32 %v1685, 16
      %v1919 = vrot.slane %v1917, 7
      %v1920 = vshll.u32 %v1685, 16
      %v1922 = vor.u32 %v1919, %v1920
      %v1923 = vsel %vm1014, %v1915, %v1922
      %v1924 = vrot.slane %v1919, 4
      %v1926 = vshrl.u32 %v1686, 16
      %v1928 = vrot.slane %v1926, 7
      %v1929 = vshll.u32 %v1686, 16
      %v1931 = vor.u32 %v1928, %v1929
      %v1932 = vsel %vm1014, %v1924, %v1931
      %v1933 = vrot.slane %v1928, 4
      %v1935 = vshrl.u32 %v1687, 16
      %v1937 = vrot.slane %v1935, 7
      %v1938 = vshll.u32 %v1687, 16
      %v1940 = vor.u32 %v1937, %v1938
      %v1941 = vsel %vm1014, %v1933, %v1940
      %v1942 = vrot.slane %v1937, 4
      %v1944 = vshrl.u32 %v1688, 16
      %v1946 = vrot.slane %v1944, 7
      %v1947 = vshll.u32 %v1688, 16
      %v1949 = vor.u32 %v1946, %v1947
      %v1950 = vsel %vm1014, %v1942, %v1949
      %v1951 = vrot.slane %v1946, 4
      %v1953 = vshrl.u32 %v1689, 16
      %v1955 = vrot.slane %v1953, 7
      %v1956 = vshll.u32 %v1689, 16
      %v1958 = vor.u32 %v1955, %v1956
      %v1959 = vsel %vm1014, %v1951, %v1958
      %v1960 = vrot.slane %v1955, 4
      %v1962 = vshrl.u32 %v1690, 16
      %v1964 = vrot.slane %v1962, 7
      %v1965 = vshll.u32 %v1690, 16
      %v1967 = vor.u32 %v1964, %v1965
      %v1968 = vsel %vm1014, %v1960, %v1967
      %v1969 = vrot.slane %v1964, 4
      %v1971 = vshrl.u32 %v1691, 16
      %v1973 = vrot.slane %v1971, 7
      %v1974 = vshll.u32 %v1691, 16
      %v1976 = vor.u32 %v1973, %v1974
      %v1977 = vsel %vm1014, %v1969, %v1976
      %v1978 = vrot.slane %v1973, 4
      %vm1979 = vcmp.ne.s16.totalorder %v1698, 0
      %vm1980 = vcmp.ne.s16.totalorder %v1707, 0
      %vm1981 = vcmp.ne.s16.totalorder %v1716, 0
      %vm1982 = vcmp.ne.s16.totalorder %v1725, 0
      %vm1983 = vcmp.ne.s16.totalorder %v1734, 0
      %vm1984 = vcmp.ne.s16.totalorder %v1743, 0
      %vm1985 = vcmp.ne.s16.totalorder %v1752, 0
      %vm1986 = vcmp.ne.s16.totalorder %v1761, 0
      %vm1987 = vcmp.ne.s16.totalorder %v1770, 0
      %vm1988 = vcmp.ne.s16.totalorder %v1779, 0
      %vm1989 = vcmp.ne.s16.totalorder %v1788, 0
      %vm1990 = vcmp.ne.s16.totalorder %v1797, 0
      %vm1991 = vcmp.ne.s16.totalorder %v1806, 0
      %vm1992 = vcmp.ne.s16.totalorder %v1815, 0
      %vm1993 = vcmp.ne.s16.totalorder %v1824, 0
      %vm1994 = vcmp.ne.s16.totalorder %v1833, 0
      %vm1995 = vcmp.ne.s16.totalorder %v1842, 0
      %vm1996 = vcmp.ne.s16.totalorder %v1851, 0
      %vm1997 = vcmp.ne.s16.totalorder %v1860, 0
      %vm1998 = vcmp.ne.s16.totalorder %v1869, 0
      %vm1999 = vcmp.ne.s16.totalorder %v1878, 0
      %vm2000 = vcmp.ne.s16.totalorder %v1887, 0
      %vm2001 = vcmp.ne.s16.totalorder %v1896, 0
      %vm2002 = vcmp.ne.s16.totalorder %v1905, 0
      %vm2003 = vcmp.ne.s16.totalorder %v1914, 0
      %vm2004 = vcmp.ne.s16.totalorder %v1923, 0
      %vm2005 = vcmp.ne.s16.totalorder %v1932, 0
      %vm2006 = vcmp.ne.s16.totalorder %v1941, 0
      %vm2007 = vcmp.ne.s16.totalorder %v1950, 0
      %vm2008 = vcmp.ne.s16.totalorder %v1959, 0
      %vm2009 = vcmp.ne.s16.totalorder %v1968, 0
      %vm2010 = vcmp.ne.s16.totalorder %v1977, 0
      %vm2011 = vcmp.ne.s16.totalorder %v1978, 0
      %v2012 = vsel %vm1979, %v1435, 0
      %v2013 = vsel %vm1980, %v1436, 0
      %v2014 = vsel %vm1981, %v1437, 0
      %v2015 = vsel %vm1982, %v1438, 0
      %v2016 = vsel %vm1983, %v1439, 0
      %v2017 = vsel %vm1984, %v1440, 0
      %v2018 = vsel %vm1985, %v1441, 0
      %v2019 = vsel %vm1986, %v1442, 0
      %v2020 = vsel %vm1987, %v1443, 0
      %v2021 = vsel %vm1988, %v1444, 0
      %v2022 = vsel %vm1989, %v1445, 0
      %v2023 = vsel %vm1990, %v1446, 0
      %v2024 = vsel %vm1991, %v1447, 0
      %v2025 = vsel %vm1992, %v1448, 0
      %v2026 = vsel %vm1993, %v1449, 0
      %v2027 = vsel %vm1994, %v1450, 0
      %v2028 = vsel %vm1995, %v1451, 0
      %v2029 = vsel %vm1996, %v1452, 0
      %v2030 = vsel %vm1997, %v1453, 0
      %v2031 = vsel %vm1998, %v1454, 0
      %v2032 = vsel %vm1999, %v1455, 0
      %v2033 = vsel %vm2000, %v1456, 0
      %v2034 = vsel %vm2001, %v1457, 0
      %v2035 = vsel %vm2002, %v1458, 0
      %v2036 = vsel %vm2003, %v1459, 0
      %v2037 = vsel %vm2004, %v1460, 0
      %v2038 = vsel %vm2005, %v1461, 0
      %v2039 = vsel %vm2006, %v1462, 0
      %v2040 = vsel %vm2007, %v1463, 0
      %v2041 = vsel %vm2008, %v1464, 0
      %v2042 = vsel %vm2009, %v1465, 0
      %v2043 = vsel %vm2010, %v1466, 0
      %v2044 = vsel %vm2011, %v1467, 0
      %v2046 = vshrl.u32 %v2012, 16
      %v2048 = vrot.slane %v2046, 4
      %v2049 = vshll.u32 %v2012, 16
      %v2051 = vrot.slane %v2049, 5
      %v2052 = vor.u32 %v2048, %v2051
      %v2053 = vrot.slane %v2052, 4
      %v2055 = vshll.u32 %v2013, 16
      %v2057 = vrot.slane %v2055, 5
      %v2058 = vsel %vm626, %v2053, %v2057
      %v2059 = vshrl.u32 %v2013, 16
      %v2061 = vrot.slane %v2059, 4
      %v2062 = vor.u32 %v2061, %v2057
      %v2063 = vrot.slane %v2062, 4
      %v2065 = vshll.u32 %v2014, 16
      %v2067 = vrot.slane %v2065, 5
      %v2068 = vsel %vm626, %v2063, %v2067
      %v2069 = vshrl.u32 %v2014, 16
      %v2071 = vrot.slane %v2069, 4
      %v2072 = vor.u32 %v2071, %v2067
      %v2073 = vrot.slane %v2072, 4
      %v2075 = vshll.u32 %v2015, 16
      %v2077 = vrot.slane %v2075, 5
      %v2078 = vsel %vm626, %v2073, %v2077
      %v2079 = vshrl.u32 %v2015, 16
      %v2081 = vrot.slane %v2079, 4
      %v2082 = vor.u32 %v2081, %v2077
      %v2083 = vrot.slane %v2082, 4
      %v2085 = vshll.u32 %v2016, 16
      %v2087 = vrot.slane %v2085, 5
      %v2088 = vsel %vm626, %v2083, %v2087
      %v2089 = vshrl.u32 %v2016, 16
      %v2091 = vrot.slane %v2089, 4
      %v2092 = vor.u32 %v2091, %v2087
      %v2093 = vrot.slane %v2092, 4
      %v2095 = vshll.u32 %v2017, 16
      %v2097 = vrot.slane %v2095, 5
      %v2098 = vsel %vm626, %v2093, %v2097
      %v2099 = vshrl.u32 %v2017, 16
      %v2101 = vrot.slane %v2099, 4
      %v2102 = vor.u32 %v2101, %v2097
      %v2103 = vrot.slane %v2102, 4
      %v2105 = vshll.u32 %v2018, 16
      %v2107 = vrot.slane %v2105, 5
      %v2108 = vsel %vm626, %v2103, %v2107
      %v2109 = vshrl.u32 %v2018, 16
      %v2111 = vrot.slane %v2109, 4
      %v2112 = vor.u32 %v2111, %v2107
      %v2113 = vrot.slane %v2112, 4
      %v2115 = vshll.u32 %v2019, 16
      %v2117 = vrot.slane %v2115, 5
      %v2118 = vsel %vm626, %v2113, %v2117
      %v2119 = vshrl.u32 %v2019, 16
      %v2121 = vrot.slane %v2119, 4
      %v2122 = vor.u32 %v2121, %v2117
      %v2123 = vrot.slane %v2122, 4
      %v2125 = vshll.u32 %v2020, 16
      %v2127 = vrot.slane %v2125, 5
      %v2128 = vsel %vm626, %v2123, %v2127
      %v2129 = vshrl.u32 %v2020, 16
      %v2131 = vrot.slane %v2129, 4
      %v2132 = vor.u32 %v2131, %v2127
      %v2133 = vrot.slane %v2132, 4
      %v2135 = vshll.u32 %v2021, 16
      %v2137 = vrot.slane %v2135, 5
      %v2138 = vsel %vm626, %v2133, %v2137
      %v2139 = vshrl.u32 %v2021, 16
      %v2141 = vrot.slane %v2139, 4
      %v2142 = vor.u32 %v2141, %v2137
      %v2143 = vrot.slane %v2142, 4
      %v2145 = vshll.u32 %v2022, 16
      %v2147 = vrot.slane %v2145, 5
      %v2148 = vsel %vm626, %v2143, %v2147
      %v2149 = vshrl.u32 %v2022, 16
      %v2151 = vrot.slane %v2149, 4
      %v2152 = vor.u32 %v2151, %v2147
      %v2153 = vrot.slane %v2152, 4
      %v2155 = vshll.u32 %v2023, 16
      %v2157 = vrot.slane %v2155, 5
      %v2158 = vsel %vm626, %v2153, %v2157
      %v2159 = vshrl.u32 %v2023, 16
      %v2161 = vrot.slane %v2159, 4
      %v2162 = vor.u32 %v2161, %v2157
      %v2163 = vrot.slane %v2162, 4
      %v2165 = vshll.u32 %v2024, 16
      %v2167 = vrot.slane %v2165, 5
      %v2168 = vsel %vm626, %v2163, %v2167
      %v2169 = vshrl.u32 %v2024, 16
      %v2171 = vrot.slane %v2169, 4
      %v2172 = vor.u32 %v2171, %v2167
      %v2173 = vrot.slane %v2172, 4
      %v2175 = vshll.u32 %v2025, 16
      %v2177 = vrot.slane %v2175, 5
      %v2178 = vsel %vm626, %v2173, %v2177
      %v2179 = vshrl.u32 %v2025, 16
      %v2181 = vrot.slane %v2179, 4
      %v2182 = vor.u32 %v2181, %v2177
      %v2183 = vrot.slane %v2182, 4
      %v2185 = vshll.u32 %v2026, 16
      %v2187 = vrot.slane %v2185, 5
      %v2188 = vsel %vm626, %v2183, %v2187
      %v2189 = vshrl.u32 %v2026, 16
      %v2191 = vrot.slane %v2189, 4
      %v2192 = vor.u32 %v2191, %v2187
      %v2193 = vrot.slane %v2192, 4
      %v2195 = vshll.u32 %v2027, 16
      %v2197 = vrot.slane %v2195, 5
      %v2198 = vsel %vm626, %v2193, %v2197
      %v2199 = vshrl.u32 %v2027, 16
      %v2201 = vrot.slane %v2199, 4
      %v2202 = vor.u32 %v2201, %v2197
      %v2203 = vrot.slane %v2202, 4
      %v2205 = vshll.u32 %v2028, 16
      %v2207 = vrot.slane %v2205, 5
      %v2208 = vsel %vm626, %v2203, %v2207
      %v2209 = vshrl.u32 %v2028, 16
      %v2211 = vrot.slane %v2209, 4
      %v2212 = vor.u32 %v2211, %v2207
      %v2213 = vrot.slane %v2212, 4
      %v2215 = vshll.u32 %v2029, 16
      %v2217 = vrot.slane %v2215, 5
      %v2218 = vsel %vm626, %v2213, %v2217
      %v2219 = vshrl.u32 %v2029, 16
      %v2221 = vrot.slane %v2219, 4
      %v2222 = vor.u32 %v2221, %v2217
      %v2223 = vrot.slane %v2222, 4
      %v2225 = vshll.u32 %v2030, 16
      %v2227 = vrot.slane %v2225, 5
      %v2228 = vsel %vm626, %v2223, %v2227
      %v2229 = vshrl.u32 %v2030, 16
      %v2231 = vrot.slane %v2229, 4
      %v2232 = vor.u32 %v2231, %v2227
      %v2233 = vrot.slane %v2232, 4
      %v2235 = vshll.u32 %v2031, 16
      %v2237 = vrot.slane %v2235, 5
      %v2238 = vsel %vm626, %v2233, %v2237
      %v2239 = vshrl.u32 %v2031, 16
      %v2241 = vrot.slane %v2239, 4
      %v2242 = vor.u32 %v2241, %v2237
      %v2243 = vrot.slane %v2242, 4
      %v2245 = vshll.u32 %v2032, 16
      %v2247 = vrot.slane %v2245, 5
      %v2248 = vsel %vm626, %v2243, %v2247
      %v2249 = vshrl.u32 %v2032, 16
      %v2251 = vrot.slane %v2249, 4
      %v2252 = vor.u32 %v2251, %v2247
      %v2253 = vrot.slane %v2252, 4
      %v2255 = vshll.u32 %v2033, 16
      %v2257 = vrot.slane %v2255, 5
      %v2258 = vsel %vm626, %v2253, %v2257
      %v2259 = vshrl.u32 %v2033, 16
      %v2261 = vrot.slane %v2259, 4
      %v2262 = vor.u32 %v2261, %v2257
      %v2263 = vrot.slane %v2262, 4
      %v2265 = vshll.u32 %v2034, 16
      %v2267 = vrot.slane %v2265, 5
      %v2268 = vsel %vm626, %v2263, %v2267
      %v2269 = vshrl.u32 %v2034, 16
      %v2271 = vrot.slane %v2269, 4
      %v2272 = vor.u32 %v2271, %v2267
      %v2273 = vrot.slane %v2272, 4
      %v2275 = vshll.u32 %v2035, 16
      %v2277 = vrot.slane %v2275, 5
      %v2278 = vsel %vm626, %v2273, %v2277
      %v2279 = vshrl.u32 %v2035, 16
      %v2281 = vrot.slane %v2279, 4
      %v2282 = vor.u32 %v2281, %v2277
      %v2283 = vrot.slane %v2282, 4
      %v2285 = vshll.u32 %v2036, 16
      %v2287 = vrot.slane %v2285, 5
      %v2288 = vsel %vm626, %v2283, %v2287
      %v2289 = vshrl.u32 %v2036, 16
      %v2291 = vrot.slane %v2289, 4
      %v2292 = vor.u32 %v2291, %v2287
      %v2293 = vrot.slane %v2292, 4
      %v2295 = vshll.u32 %v2037, 16
      %v2297 = vrot.slane %v2295, 5
      %v2298 = vsel %vm626, %v2293, %v2297
      %v2299 = vshrl.u32 %v2037, 16
      %v2301 = vrot.slane %v2299, 4
      %v2302 = vor.u32 %v2301, %v2297
      %v2303 = vrot.slane %v2302, 4
      %v2305 = vshll.u32 %v2038, 16
      %v2307 = vrot.slane %v2305, 5
      %v2308 = vsel %vm626, %v2303, %v2307
      %v2309 = vshrl.u32 %v2038, 16
      %v2311 = vrot.slane %v2309, 4
      %v2312 = vor.u32 %v2311, %v2307
      %v2313 = vrot.slane %v2312, 4
      %v2315 = vshll.u32 %v2039, 16
      %v2317 = vrot.slane %v2315, 5
      %v2318 = vsel %vm626, %v2313, %v2317
      %v2319 = vshrl.u32 %v2039, 16
      %v2321 = vrot.slane %v2319, 4
      %v2322 = vor.u32 %v2321, %v2317
      %v2323 = vrot.slane %v2322, 4
      %v2325 = vshll.u32 %v2040, 16
      %v2327 = vrot.slane %v2325, 5
      %v2328 = vsel %vm626, %v2323, %v2327
      %v2329 = vshrl.u32 %v2040, 16
      %v2331 = vrot.slane %v2329, 4
      %v2332 = vor.u32 %v2331, %v2327
      %v2333 = vrot.slane %v2332, 4
      %v2335 = vshll.u32 %v2041, 16
      %v2337 = vrot.slane %v2335, 5
      %v2338 = vsel %vm626, %v2333, %v2337
      %v2339 = vshrl.u32 %v2041, 16
      %v2341 = vrot.slane %v2339, 4
      %v2342 = vor.u32 %v2341, %v2337
      %v2343 = vrot.slane %v2342, 4
      %v2345 = vshll.u32 %v2042, 16
      %v2347 = vrot.slane %v2345, 5
      %v2348 = vsel %vm626, %v2343, %v2347
      %v2349 = vshrl.u32 %v2042, 16
      %v2351 = vrot.slane %v2349, 4
      %v2352 = vor.u32 %v2351, %v2347
      %v2353 = vrot.slane %v2352, 4
      %v2355 = vshll.u32 %v2043, 16
      %v2357 = vrot.slane %v2355, 5
      %v2358 = vsel %vm626, %v2353, %v2357
      %v2359 = vshrl.u32 %v2043, 16
      %v2361 = vrot.slane %v2359, 4
      %v2362 = vor.u32 %v2361, %v2357
      %v2363 = vrot.slane %v2362, 4
      %v2365 = vshll.u32 %v2044, 16
      %v2367 = vrot.slane %v2365, 5
      %v2368 = vsel %vm626, %v2363, %v2367
      %2401 = vst [vmem:[#allocation3 + $0x8] sm:$0xf] %v2058
      %2402 = vst [vmem:[#allocation3 + $0x2c] sm:$0xf] %v2068
      %2403 = vst [vmem:[#allocation3 + $0x50] sm:$0xf] %v2078
      %2404 = vst [vmem:[#allocation3 + $0x74] sm:$0xf] %v2088
      %2405 = vst [vmem:[#allocation3 + $0x98] sm:$0xf] %v2098
      %2406 = vst [vmem:[#allocation3 + $0xbc] sm:$0xf] %v2108
      %2407 = vst [vmem:[#allocation3 + $0xe0] sm:$0xf] %v2118
      %2408 = vst [vmem:[#allocation3 + $0x104] sm:$0xf] %v2128
      %2409 = vst [vmem:[#allocation3 + $0x128] sm:$0xf] %v2138
      %2410 = vst [vmem:[#allocation3 + $0x14c] sm:$0xf] %v2148
      %2411 = vst [vmem:[#allocation3 + $0x170] sm:$0xf] %v2158
      %2412 = vst [vmem:[#allocation3 + $0x194] sm:$0xf] %v2168
      %2413 = vst [vmem:[#allocation3 + $0x1b8] sm:$0xf] %v2178
      %2414 = vst [vmem:[#allocation3 + $0x1dc] sm:$0xf] %v2188
      %2415 = vst [vmem:[#allocation3 + $0x200] sm:$0xf] %v2198
      %2416 = vst [vmem:[#allocation3 + $0x224] sm:$0xf] %v2208
      %2417 = vst [vmem:[#allocation3 + $0x248] sm:$0xf] %v2218
      %2418 = vst [vmem:[#allocation3 + $0x26c] sm:$0xf] %v2228
      %2419 = vst [vmem:[#allocation3 + $0x290] sm:$0xf] %v2238
      %2420 = vst [vmem:[#allocation3 + $0x2b4] sm:$0xf] %v2248
      %2421 = vst [vmem:[#allocation3 + $0x2d8] sm:$0xf] %v2258
      %2422 = vst [vmem:[#allocation3 + $0x2fc] sm:$0xf] %v2268
      %2423 = vst [vmem:[#allocation3 + $0x320] sm:$0xf] %v2278
      %2424 = vst [vmem:[#allocation3 + $0x344] sm:$0xf] %v2288
      %2425 = vst [vmem:[#allocation3 + $0x368] sm:$0xf] %v2298
      %2426 = vst [vmem:[#allocation3 + $0x38c] sm:$0xf] %v2308
      %2427 = vst [vmem:[#allocation3 + $0x3b0] sm:$0xf] %v2318
      %2428 = vst [vmem:[#allocation3 + $0x3d4] sm:$0xf] %v2328
      %2429 = vst [vmem:[#allocation3 + $0x3f8] sm:$0xf] %v2338
      %2430 = vst [vmem:[#allocation3 + $0x41c] sm:$0xf] %v2348
      %2431 = vst [vmem:[#allocation3 + $0x440] sm:$0xf] %v2358
      %2432 = vst [vmem:[#allocation3 + $0x464] sm:$0xf] %v2368
      %v2433 = vld [vmem:[#allocation2 + $0xc] sm:$0x8]
      %v2434 = vld [vmem:[#allocation2 + $0x10] sm:$0xf]
      %v2435 = vld [vmem:[#allocation2 + $0x14] sm:$0xf]
      %v2436 = vld [vmem:[#allocation2 + $0x18] sm:$0xf]
      %v2437 = vld [vmem:[#allocation2 + $0x1c] sm:$0xf]
      %v2438 = vld [vmem:[#allocation2 + $0x20] sm:$0xf]
      %v2439 = vld [vmem:[#allocation2 + $0x24] sm:$0xf]
      %v2440 = vld [vmem:[#allocation2 + $0x28] sm:$0xf]
      %v2441 = vld [vmem:[#allocation2 + $0x2c] sm:$0xf]
      %v2442 = vld [vmem:[#allocation2 + $0x30] sm:$0xf]
      %v2443 = vld [vmem:[#allocation2 + $0x34] sm:$0xf]
      %v2444 = vld [vmem:[#allocation2 + $0x38] sm:$0xf]
      %v2445 = vld [vmem:[#allocation2 + $0x3c] sm:$0xf]
      %v2446 = vld [vmem:[#allocation2 + $0x40] sm:$0xf]
      %v2447 = vld [vmem:[#allocation2 + $0x44] sm:$0xf]
      %v2448 = vld [vmem:[#allocation2 + $0x48] sm:$0xf]
      %v2449 = vld [vmem:[#allocation2 + $0x4c] sm:$0xf]
      %v2450 = vld [vmem:[#allocation2 + $0x50] sm:$0xf]
      %v2451 = vld [vmem:[#allocation2 + $0x54] sm:$0xf]
      %v2452 = vld [vmem:[#allocation2 + $0x58] sm:$0xf]
      %v2453 = vld [vmem:[#allocation2 + $0x5c] sm:$0xf]
      %v2454 = vld [vmem:[#allocation2 + $0x60] sm:$0xf]
      %v2455 = vld [vmem:[#allocation2 + $0x64] sm:$0xf]
      %v2456 = vld [vmem:[#allocation2 + $0x68] sm:$0xf]
      %v2457 = vld [vmem:[#allocation2 + $0x6c] sm:$0xf]
      %v2458 = vld [vmem:[#allocation2 + $0x70] sm:$0xf]
      %v2459 = vld [vmem:[#allocation2 + $0x74] sm:$0xf]
      %v2460 = vld [vmem:[#allocation2 + $0x78] sm:$0xf]
      %v2461 = vld [vmem:[#allocation2 + $0x7c] sm:$0xf]
      %v2462 = vld [vmem:[#allocation2 + $0x80] sm:$0xf]
      %v2463 = vld [vmem:[#allocation2 + $0x84] sm:$0xf]
      %v2464 = vld [vmem:[#allocation2 + $0x88] sm:$0xf]
      %v2465 = vld [vmem:[#allocation2 + $0x8c] sm:$0xf]
      %v2466 = vsel %vm946, %v2433, 0
      %v2467 = vsel %vm947, %v2434, 0
      %v2468 = vsel %vm948, %v2435, 0
      %v2469 = vsel %vm949, %v2436, 0
      %v2470 = vsel %vm950, %v2437, 0
      %v2471 = vsel %vm951, %v2438, 0
      %v2472 = vsel %vm952, %v2439, 0
      %v2473 = vsel %vm953, %v2440, 0
      %v2474 = vsel %vm954, %v2441, 0
      %v2475 = vsel %vm955, %v2442, 0
      %v2476 = vsel %vm956, %v2443, 0
      %v2477 = vsel %vm957, %v2444, 0
      %v2478 = vsel %vm958, %v2445, 0
      %v2479 = vsel %vm959, %v2446, 0
      %v2480 = vsel %vm960, %v2447, 0
      %v2481 = vsel %vm961, %v2448, 0
      %v2482 = vsel %vm962, %v2449, 0
      %v2483 = vsel %vm963, %v2450, 0
      %v2484 = vsel %vm964, %v2451, 0
      %v2485 = vsel %vm965, %v2452, 0
      %v2486 = vsel %vm966, %v2453, 0
      %v2487 = vsel %vm967, %v2454, 0
      %v2488 = vsel %vm968, %v2455, 0
      %v2489 = vsel %vm969, %v2456, 0
      %v2490 = vsel %vm970, %v2457, 0
      %v2491 = vsel %vm971, %v2458, 0
      %v2492 = vsel %vm972, %v2459, 0
      %v2493 = vsel %vm973, %v2460, 0
      %v2494 = vsel %vm974, %v2461, 0
      %v2495 = vsel %vm975, %v2462, 0
      %v2496 = vsel %vm976, %v2463, 0
      %v2497 = vsel %vm977, %v2464, 0
      %v2498 = vsel %vm978, %v2465, 0
      %v2500 = vshrl.u32 %v2466, 16
      %v2502 = vrot.slane %v2500, 7
      %v2503 = vrot.slane %v2502, 4
      %v2505 = vshrl.u32 %v2467, 16
      %v2507 = vrot.slane %v2505, 7
      %v2508 = vshll.u32 %v2467, 16
      %v2510 = vor.u32 %v2507, %v2508
      %v2511 = vsel %vm1014, %v2503, %v2510
      %v2512 = vrot.slane %v2507, 4
      %v2514 = vshrl.u32 %v2468, 16
      %v2516 = vrot.slane %v2514, 7
      %v2517 = vshll.u32 %v2468, 16
      %v2519 = vor.u32 %v2516, %v2517
      %v2520 = vsel %vm1014, %v2512, %v2519
      %v2521 = vrot.slane %v2516, 4
      %v2523 = vshrl.u32 %v2469, 16
      %v2525 = vrot.slane %v2523, 7
      %v2526 = vshll.u32 %v2469, 16
      %v2528 = vor.u32 %v2525, %v2526
      %v2529 = vsel %vm1014, %v2521, %v2528
      %v2530 = vrot.slane %v2525, 4
      %v2532 = vshrl.u32 %v2470, 16
      %v2534 = vrot.slane %v2532, 7
      %v2535 = vshll.u32 %v2470, 16
      %v2537 = vor.u32 %v2534, %v2535
      %v2538 = vsel %vm1014, %v2530, %v2537
      %v2539 = vrot.slane %v2534, 4
      %v2541 = vshrl.u32 %v2471, 16
      %v2543 = vrot.slane %v2541, 7
      %v2544 = vshll.u32 %v2471, 16
      %v2546 = vor.u32 %v2543, %v2544
      %v2547 = vsel %vm1014, %v2539, %v2546
      %v2548 = vrot.slane %v2543, 4
      %v2550 = vshrl.u32 %v2472, 16
      %v2552 = vrot.slane %v2550, 7
      %v2553 = vshll.u32 %v2472, 16
      %v2555 = vor.u32 %v2552, %v2553
      %v2556 = vsel %vm1014, %v2548, %v2555
      %v2557 = vrot.slane %v2552, 4
      %v2559 = vshrl.u32 %v2473, 16
      %v2561 = vrot.slane %v2559, 7
      %v2562 = vshll.u32 %v2473, 16
      %v2564 = vor.u32 %v2561, %v2562
      %v2565 = vsel %vm1014, %v2557, %v2564
      %v2566 = vrot.slane %v2561, 4
      %v2568 = vshrl.u32 %v2474, 16
      %v2570 = vrot.slane %v2568, 7
      %v2571 = vshll.u32 %v2474, 16
      %v2573 = vor.u32 %v2570, %v2571
      %v2574 = vsel %vm1014, %v2566, %v2573
      %v2575 = vrot.slane %v2570, 4
      %v2577 = vshrl.u32 %v2475, 16
      %v2579 = vrot.slane %v2577, 7
      %v2580 = vshll.u32 %v2475, 16
      %v2582 = vor.u32 %v2579, %v2580
      %v2583 = vsel %vm1014, %v2575, %v2582
      %v2584 = vrot.slane %v2579, 4
      %v2586 = vshrl.u32 %v2476, 16
      %v2588 = vrot.slane %v2586, 7
      %v2589 = vshll.u32 %v2476, 16
      %v2591 = vor.u32 %v2588, %v2589
      %v2592 = vsel %vm1014, %v2584, %v2591
      %v2593 = vrot.slane %v2588, 4
      %v2595 = vshrl.u32 %v2477, 16
      %v2597 = vrot.slane %v2595, 7
      %v2598 = vshll.u32 %v2477, 16
      %v2600 = vor.u32 %v2597, %v2598
      %v2601 = vsel %vm1014, %v2593, %v2600
      %v2602 = vrot.slane %v2597, 4
      %v2604 = vshrl.u32 %v2478, 16
      %v2606 = vrot.slane %v2604, 7
      %v2607 = vshll.u32 %v2478, 16
      %v2609 = vor.u32 %v2606, %v2607
      %v2610 = vsel %vm1014, %v2602, %v2609
      %v2611 = vrot.slane %v2606, 4
      %v2613 = vshrl.u32 %v2479, 16
      %v2615 = vrot.slane %v2613, 7
      %v2616 = vshll.u32 %v2479, 16
      %v2618 = vor.u32 %v2615, %v2616
      %v2619 = vsel %vm1014, %v2611, %v2618
      %v2620 = vrot.slane %v2615, 4
      %v2622 = vshrl.u32 %v2480, 16
      %v2624 = vrot.slane %v2622, 7
      %v2625 = vshll.u32 %v2480, 16
      %v2627 = vor.u32 %v2624, %v2625
      %v2628 = vsel %vm1014, %v2620, %v2627
      %v2629 = vrot.slane %v2624, 4
      %v2631 = vshrl.u32 %v2481, 16
      %v2633 = vrot.slane %v2631, 7
      %v2634 = vshll.u32 %v2481, 16
      %v2636 = vor.u32 %v2633, %v2634
      %v2637 = vsel %vm1014, %v2629, %v2636
      %v2638 = vrot.slane %v2633, 4
      %v2640 = vshrl.u32 %v2482, 16
      %v2642 = vrot.slane %v2640, 7
      %v2643 = vshll.u32 %v2482, 16
      %v2645 = vor.u32 %v2642, %v2643
      %v2646 = vsel %vm1014, %v2638, %v2645
      %v2647 = vrot.slane %v2642, 4
      %v2649 = vshrl.u32 %v2483, 16
      %v2651 = vrot.slane %v2649, 7
      %v2652 = vshll.u32 %v2483, 16
      %v2654 = vor.u32 %v2651, %v2652
      %v2655 = vsel %vm1014, %v2647, %v2654
      %v2656 = vrot.slane %v2651, 4
      %v2658 = vshrl.u32 %v2484, 16
      %v2660 = vrot.slane %v2658, 7
      %v2661 = vshll.u32 %v2484, 16
      %v2663 = vor.u32 %v2660, %v2661
      %v2664 = vsel %vm1014, %v2656, %v2663
      %v2665 = vrot.slane %v2660, 4
      %v2667 = vshrl.u32 %v2485, 16
      %v2669 = vrot.slane %v2667, 7
      %v2670 = vshll.u32 %v2485, 16
      %v2672 = vor.u32 %v2669, %v2670
      %v2673 = vsel %vm1014, %v2665, %v2672
      %v2674 = vrot.slane %v2669, 4
      %v2676 = vshrl.u32 %v2486, 16
      %v2678 = vrot.slane %v2676, 7
      %v2679 = vshll.u32 %v2486, 16
      %v2681 = vor.u32 %v2678, %v2679
      %v2682 = vsel %vm1014, %v2674, %v2681
      %v2683 = vrot.slane %v2678, 4
      %v2685 = vshrl.u32 %v2487, 16
      %v2687 = vrot.slane %v2685, 7
      %v2688 = vshll.u32 %v2487, 16
      %v2690 = vor.u32 %v2687, %v2688
      %v2691 = vsel %vm1014, %v2683, %v2690
      %v2692 = vrot.slane %v2687, 4
      %v2694 = vshrl.u32 %v2488, 16
      %v2696 = vrot.slane %v2694, 7
      %v2697 = vshll.u32 %v2488, 16
      %v2699 = vor.u32 %v2696, %v2697
      %v2700 = vsel %vm1014, %v2692, %v2699
      %v2701 = vrot.slane %v2696, 4
      %v2703 = vshrl.u32 %v2489, 16
      %v2705 = vrot.slane %v2703, 7
      %v2706 = vshll.u32 %v2489, 16
      %v2708 = vor.u32 %v2705, %v2706
      %v2709 = vsel %vm1014, %v2701, %v2708
      %v2710 = vrot.slane %v2705, 4
      %v2712 = vshrl.u32 %v2490, 16
      %v2714 = vrot.slane %v2712, 7
      %v2715 = vshll.u32 %v2490, 16
      %v2717 = vor.u32 %v2714, %v2715
      %v2718 = vsel %vm1014, %v2710, %v2717
      %v2719 = vrot.slane %v2714, 4
      %v2721 = vshrl.u32 %v2491, 16
      %v2723 = vrot.slane %v2721, 7
      %v2724 = vshll.u32 %v2491, 16
      %v2726 = vor.u32 %v2723, %v2724
      %v2727 = vsel %vm1014, %v2719, %v2726
      %v2728 = vrot.slane %v2723, 4
      %v2730 = vshrl.u32 %v2492, 16
      %v2732 = vrot.slane %v2730, 7
      %v2733 = vshll.u32 %v2492, 16
      %v2735 = vor.u32 %v2732, %v2733
      %v2736 = vsel %vm1014, %v2728, %v2735
      %v2737 = vrot.slane %v2732, 4
      %v2739 = vshrl.u32 %v2493, 16
      %v2741 = vrot.slane %v2739, 7
      %v2742 = vshll.u32 %v2493, 16
      %v2744 = vor.u32 %v2741, %v2742
      %v2745 = vsel %vm1014, %v2737, %v2744
      %v2746 = vrot.slane %v2741, 4
      %v2748 = vshrl.u32 %v2494, 16
      %v2750 = vrot.slane %v2748, 7
      %v2751 = vshll.u32 %v2494, 16
      %v2753 = vor.u32 %v2750, %v2751
      %v2754 = vsel %vm1014, %v2746, %v2753
      %v2755 = vrot.slane %v2750, 4
      %v2757 = vshrl.u32 %v2495, 16
      %v2759 = vrot.slane %v2757, 7
      %v2760 = vshll.u32 %v2495, 16
      %v2762 = vor.u32 %v2759, %v2760
      %v2763 = vsel %vm1014, %v2755, %v2762
      %v2764 = vrot.slane %v2759, 4
      %v2766 = vshrl.u32 %v2496, 16
      %v2768 = vrot.slane %v2766, 7
      %v2769 = vshll.u32 %v2496, 16
      %v2771 = vor.u32 %v2768, %v2769
      %v2772 = vsel %vm1014, %v2764, %v2771
      %v2773 = vrot.slane %v2768, 4
      %v2775 = vshrl.u32 %v2497, 16
      %v2777 = vrot.slane %v2775, 7
      %v2778 = vshll.u32 %v2497, 16
      %v2780 = vor.u32 %v2777, %v2778
      %v2781 = vsel %vm1014, %v2773, %v2780
      %v2782 = vrot.slane %v2777, 4
      %v2784 = vshrl.u32 %v2498, 16
      %v2786 = vrot.slane %v2784, 7
      %v2787 = vshll.u32 %v2498, 16
      %v2789 = vor.u32 %v2786, %v2787
      %v2790 = vsel %vm1014, %v2782, %v2789
      %2823 = vst [vmem:[#allocation3 + $0xc] sm:$0xf] %v2511
      %2824 = vst [vmem:[#allocation3 + $0x30] sm:$0xf] %v2520
      %2825 = vst [vmem:[#allocation3 + $0x54] sm:$0xf] %v2529
      %2826 = vst [vmem:[#allocation3 + $0x78] sm:$0xf] %v2538
      %2827 = vst [vmem:[#allocation3 + $0x9c] sm:$0xf] %v2547
      %2828 = vst [vmem:[#allocation3 + $0xc0] sm:$0xf] %v2556
      %2829 = vst [vmem:[#allocation3 + $0xe4] sm:$0xf] %v2565
      %2830 = vst [vmem:[#allocation3 + $0x108] sm:$0xf] %v2574
      %2831 = vst [vmem:[#allocation3 + $0x12c] sm:$0xf] %v2583
      %2832 = vst [vmem:[#allocation3 + $0x150] sm:$0xf] %v2592
      %2833 = vst [vmem:[#allocation3 + $0x174] sm:$0xf] %v2601
      %2834 = vst [vmem:[#allocation3 + $0x198] sm:$0xf] %v2610
      %2835 = vst [vmem:[#allocation3 + $0x1bc] sm:$0xf] %v2619
      %2836 = vst [vmem:[#allocation3 + $0x1e0] sm:$0xf] %v2628
      %2837 = vst [vmem:[#allocation3 + $0x204] sm:$0xf] %v2637
      %2838 = vst [vmem:[#allocation3 + $0x228] sm:$0xf] %v2646
      %2839 = vst [vmem:[#allocation3 + $0x24c] sm:$0xf] %v2655
      %2840 = vst [vmem:[#allocation3 + $0x270] sm:$0xf] %v2664
      %2841 = vst [vmem:[#allocation3 + $0x294] sm:$0xf] %v2673
      %2842 = vst [vmem:[#allocation3 + $0x2b8] sm:$0xf] %v2682
      %2843 = vst [vmem:[#allocation3 + $0x2dc] sm:$0xf] %v2691
      %2844 = vst [vmem:[#allocation3 + $0x300] sm:$0xf] %v2700
      %2845 = vst [vmem:[#allocation3 + $0x324] sm:$0xf] %v2709
      %2846 = vst [vmem:[#allocation3 + $0x348] sm:$0xf] %v2718
      %2847 = vst [vmem:[#allocation3 + $0x36c] sm:$0xf] %v2727
      %2848 = vst [vmem:[#allocation3 + $0x390] sm:$0xf] %v2736
      %2849 = vst [vmem:[#allocation3 + $0x3b4] sm:$0xf] %v2745
      %2850 = vst [vmem:[#allocation3 + $0x3d8] sm:$0xf] %v2754
      %2851 = vst [vmem:[#allocation3 + $0x3fc] sm:$0xf] %v2763
      %2852 = vst [vmem:[#allocation3 + $0x420] sm:$0xf] %v2772
      %2853 = vst [vmem:[#allocation3 + $0x444] sm:$0xf] %v2781
      %2854 = vst [vmem:[#allocation3 + $0x468] sm:$0xf] %v2790
      %v2855 = vld [vmem:[#allocation2 + $0x10] sm:$0xf]
      %v2856 = vld [vmem:[#allocation2 + $0x14] sm:$0xf]
      %v2857 = vld [vmem:[#allocation2 + $0x18] sm:$0xf]
      %v2858 = vld [vmem:[#allocation2 + $0x1c] sm:$0xf]
      %v2859 = vld [vmem:[#allocation2 + $0x20] sm:$0xf]
      %v2860 = vld [vmem:[#allocation2 + $0x24] sm:$0xf]
      %v2861 = vld [vmem:[#allocation2 + $0x28] sm:$0xf]
      %v2862 = vld [vmem:[#allocation2 + $0x2c] sm:$0xf]
      %v2863 = vld [vmem:[#allocation2 + $0x30] sm:$0xf]
      %v2864 = vld [vmem:[#allocation2 + $0x34] sm:$0xf]
      %v2865 = vld [vmem:[#allocation2 + $0x38] sm:$0xf]
      %v2866 = vld [vmem:[#allocation2 + $0x3c] sm:$0xf]
      %v2867 = vld [vmem:[#allocation2 + $0x40] sm:$0xf]
      %v2868 = vld [vmem:[#allocation2 + $0x44] sm:$0xf]
      %v2869 = vld [vmem:[#allocation2 + $0x48] sm:$0xf]
      %v2870 = vld [vmem:[#allocation2 + $0x4c] sm:$0xf]
      %v2871 = vld [vmem:[#allocation2 + $0x50] sm:$0xf]
      %v2872 = vld [vmem:[#allocation2 + $0x54] sm:$0xf]
      %v2873 = vld [vmem:[#allocation2 + $0x58] sm:$0xf]
      %v2874 = vld [vmem:[#allocation2 + $0x5c] sm:$0xf]
      %v2875 = vld [vmem:[#allocation2 + $0x60] sm:$0xf]
      %v2876 = vld [vmem:[#allocation2 + $0x64] sm:$0xf]
      %v2877 = vld [vmem:[#allocation2 + $0x68] sm:$0xf]
      %v2878 = vld [vmem:[#allocation2 + $0x6c] sm:$0xf]
      %v2879 = vld [vmem:[#allocation2 + $0x70] sm:$0xf]
      %v2880 = vld [vmem:[#allocation2 + $0x74] sm:$0xf]
      %v2881 = vld [vmem:[#allocation2 + $0x78] sm:$0xf]
      %v2882 = vld [vmem:[#allocation2 + $0x7c] sm:$0xf]
      %v2883 = vld [vmem:[#allocation2 + $0x80] sm:$0xf]
      %v2884 = vld [vmem:[#allocation2 + $0x84] sm:$0xf]
      %v2885 = vld [vmem:[#allocation2 + $0x88] sm:$0xf]
      %v2886 = vld [vmem:[#allocation2 + $0x8c] sm:$0xf]
      %2887 = vst [vmem:[#allocation3 + $0x10] sm:$0xf] %v2855
      %2888 = vst [vmem:[#allocation3 + $0x34] sm:$0xf] %v2856
      %2889 = vst [vmem:[#allocation3 + $0x58] sm:$0xf] %v2857
      %2890 = vst [vmem:[#allocation3 + $0x7c] sm:$0xf] %v2858
      %2891 = vst [vmem:[#allocation3 + $0xa0] sm:$0xf] %v2859
      %2892 = vst [vmem:[#allocation3 + $0xc4] sm:$0xf] %v2860
      %2893 = vst [vmem:[#allocation3 + $0xe8] sm:$0xf] %v2861
      %2894 = vst [vmem:[#allocation3 + $0x10c] sm:$0xf] %v2862
      %2895 = vst [vmem:[#allocation3 + $0x130] sm:$0xf] %v2863
      %2896 = vst [vmem:[#allocation3 + $0x154] sm:$0xf] %v2864
      %2897 = vst [vmem:[#allocation3 + $0x178] sm:$0xf] %v2865
      %2898 = vst [vmem:[#allocation3 + $0x19c] sm:$0xf] %v2866
      %2899 = vst [vmem:[#allocation3 + $0x1c0] sm:$0xf] %v2867
      %2900 = vst [vmem:[#allocation3 + $0x1e4] sm:$0xf] %v2868
      %2901 = vst [vmem:[#allocation3 + $0x208] sm:$0xf] %v2869
      %2902 = vst [vmem:[#allocation3 + $0x22c] sm:$0xf] %v2870
      %2903 = vst [vmem:[#allocation3 + $0x250] sm:$0xf] %v2871
      %2904 = vst [vmem:[#allocation3 + $0x274] sm:$0xf] %v2872
      %2905 = vst [vmem:[#allocation3 + $0x298] sm:$0xf] %v2873
      %2906 = vst [vmem:[#allocation3 + $0x2bc] sm:$0xf] %v2874
      %2907 = vst [vmem:[#allocation3 + $0x2e0] sm:$0xf] %v2875
      %2908 = vst [vmem:[#allocation3 + $0x304] sm:$0xf] %v2876
      %2909 = vst [vmem:[#allocation3 + $0x328] sm:$0xf] %v2877
      %2910 = vst [vmem:[#allocation3 + $0x34c] sm:$0xf] %v2878
      %2911 = vst [vmem:[#allocation3 + $0x370] sm:$0xf] %v2879
      %2912 = vst [vmem:[#allocation3 + $0x394] sm:$0xf] %v2880
      %2913 = vst [vmem:[#allocation3 + $0x3b8] sm:$0xf] %v2881
      %2914 = vst [vmem:[#allocation3 + $0x3dc] sm:$0xf] %v2882
      %2915 = vst [vmem:[#allocation3 + $0x400] sm:$0xf] %v2883
      %2916 = vst [vmem:[#allocation3 + $0x424] sm:$0xf] %v2884
      %2917 = vst [vmem:[#allocation3 + $0x448] sm:$0xf] %v2885
      %2918 = vst [vmem:[#allocation3 + $0x46c] sm:$0xf] %v2886
      %v2919 = vld [vmem:[#allocation2 + $0x10] sm:$0xf]
      %v2920 = vld [vmem:[#allocation2 + $0x14] sm:$0xf]
      %v2921 = vld [vmem:[#allocation2 + $0x18] sm:$0xf]
      %v2922 = vld [vmem:[#allocation2 + $0x1c] sm:$0xf]
      %v2923 = vld [vmem:[#allocation2 + $0x20] sm:$0xf]
      %v2924 = vld [vmem:[#allocation2 + $0x24] sm:$0xf]
      %v2925 = vld [vmem:[#allocation2 + $0x28] sm:$0xf]
      %v2926 = vld [vmem:[#allocation2 + $0x2c] sm:$0xf]
      %v2927 = vld [vmem:[#allocation2 + $0x30] sm:$0xf]
      %v2928 = vld [vmem:[#allocation2 + $0x34] sm:$0xf]
      %v2929 = vld [vmem:[#allocation2 + $0x38] sm:$0xf]
      %v2930 = vld [vmem:[#allocation2 + $0x3c] sm:$0xf]
      %v2931 = vld [vmem:[#allocation2 + $0x40] sm:$0xf]
      %v2932 = vld [vmem:[#allocation2 + $0x44] sm:$0xf]
      %v2933 = vld [vmem:[#allocation2 + $0x48] sm:$0xf]
      %v2934 = vld [vmem:[#allocation2 + $0x4c] sm:$0xf]
      %v2935 = vld [vmem:[#allocation2 + $0x50] sm:$0xf]
      %v2936 = vld [vmem:[#allocation2 + $0x54] sm:$0xf]
      %v2937 = vld [vmem:[#allocation2 + $0x58] sm:$0xf]
      %v2938 = vld [vmem:[#allocation2 + $0x5c] sm:$0xf]
      %v2939 = vld [vmem:[#allocation2 + $0x60] sm:$0xf]
      %v2940 = vld [vmem:[#allocation2 + $0x64] sm:$0xf]
      %v2941 = vld [vmem:[#allocation2 + $0x68] sm:$0xf]
      %v2942 = vld [vmem:[#allocation2 + $0x6c] sm:$0xf]
      %v2943 = vld [vmem:[#allocation2 + $0x70] sm:$0xf]
      %v2944 = vld [vmem:[#allocation2 + $0x74] sm:$0xf]
      %v2945 = vld [vmem:[#allocation2 + $0x78] sm:$0xf]
      %v2946 = vld [vmem:[#allocation2 + $0x7c] sm:$0xf]
      %v2947 = vld [vmem:[#allocation2 + $0x80] sm:$0xf]
      %v2948 = vld [vmem:[#allocation2 + $0x84] sm:$0xf]
      %v2949 = vld [vmem:[#allocation2 + $0x88] sm:$0xf]
      %v2950 = vld [vmem:[#allocation2 + $0x8c] sm:$0xf]
      %v2951 = vld [vmem:[#allocation2 + $0x90] sm:$0x1]
      %v2952 = vsel %vm1979, %v2919, 0
      %v2953 = vsel %vm1980, %v2920, 0
      %v2954 = vsel %vm1981, %v2921, 0
      %v2955 = vsel %vm1982, %v2922, 0
      %v2956 = vsel %vm1983, %v2923, 0
      %v2957 = vsel %vm1984, %v2924, 0
      %v2958 = vsel %vm1985, %v2925, 0
      %v2959 = vsel %vm1986, %v2926, 0
      %v2960 = vsel %vm1987, %v2927, 0
      %v2961 = vsel %vm1988, %v2928, 0
      %v2962 = vsel %vm1989, %v2929, 0
      %v2963 = vsel %vm1990, %v2930, 0
      %v2964 = vsel %vm1991, %v2931, 0
      %v2965 = vsel %vm1992, %v2932, 0
      %v2966 = vsel %vm1993, %v2933, 0
      %v2967 = vsel %vm1994, %v2934, 0
      %v2968 = vsel %vm1995, %v2935, 0
      %v2969 = vsel %vm1996, %v2936, 0
      %v2970 = vsel %vm1997, %v2937, 0
      %v2971 = vsel %vm1998, %v2938, 0
      %v2972 = vsel %vm1999, %v2939, 0
      %v2973 = vsel %vm2000, %v2940, 0
      %v2974 = vsel %vm2001, %v2941, 0
      %v2975 = vsel %vm2002, %v2942, 0
      %v2976 = vsel %vm2003, %v2943, 0
      %v2977 = vsel %vm2004, %v2944, 0
      %v2978 = vsel %vm2005, %v2945, 0
      %v2979 = vsel %vm2006, %v2946, 0
      %v2980 = vsel %vm2007, %v2947, 0
      %v2981 = vsel %vm2008, %v2948, 0
      %v2982 = vsel %vm2009, %v2949, 0
      %v2983 = vsel %vm2010, %v2950, 0
      %v2984 = vsel %vm2011, %v2951, 0
      %v2986 = vshrl.u32 %v2952, 16
      %v2988 = vrot.slane %v2986, 4
      %v2989 = vshll.u32 %v2952, 16
      %v2991 = vrot.slane %v2989, 5
      %v2992 = vor.u32 %v2988, %v2991
      %v2993 = vrot.slane %v2992, 4
      %v2995 = vshll.u32 %v2953, 16
      %v2997 = vrot.slane %v2995, 5
      %v2998 = vsel %vm626, %v2993, %v2997
      %v2999 = vshrl.u32 %v2953, 16
      %v3001 = vrot.slane %v2999, 4
      %v3002 = vor.u32 %v3001, %v2997
      %v3003 = vrot.slane %v3002, 4
      %v3005 = vshll.u32 %v2954, 16
      %v3007 = vrot.slane %v3005, 5
      %v3008 = vsel %vm626, %v3003, %v3007
      %v3009 = vshrl.u32 %v2954, 16
      %v3011 = vrot.slane %v3009, 4
      %v3012 = vor.u32 %v3011, %v3007
      %v3013 = vrot.slane %v3012, 4
      %v3015 = vshll.u32 %v2955, 16
      %v3017 = vrot.slane %v3015, 5
      %v3018 = vsel %vm626, %v3013, %v3017
      %v3019 = vshrl.u32 %v2955, 16
      %v3021 = vrot.slane %v3019, 4
      %v3022 = vor.u32 %v3021, %v3017
      %v3023 = vrot.slane %v3022, 4
      %v3025 = vshll.u32 %v2956, 16
      %v3027 = vrot.slane %v3025, 5
      %v3028 = vsel %vm626, %v3023, %v3027
      %v3029 = vshrl.u32 %v2956, 16
      %v3031 = vrot.slane %v3029, 4
      %v3032 = vor.u32 %v3031, %v3027
      %v3033 = vrot.slane %v3032, 4
      %v3035 = vshll.u32 %v2957, 16
      %v3037 = vrot.slane %v3035, 5
      %v3038 = vsel %vm626, %v3033, %v3037
      %v3039 = vshrl.u32 %v2957, 16
      %v3041 = vrot.slane %v3039, 4
      %v3042 = vor.u32 %v3041, %v3037
      %v3043 = vrot.slane %v3042, 4
      %v3045 = vshll.u32 %v2958, 16
      %v3047 = vrot.slane %v3045, 5
      %v3048 = vsel %vm626, %v3043, %v3047
      %v3049 = vshrl.u32 %v2958, 16
      %v3051 = vrot.slane %v3049, 4
      %v3052 = vor.u32 %v3051, %v3047
      %v3053 = vrot.slane %v3052, 4
      %v3055 = vshll.u32 %v2959, 16
      %v3057 = vrot.slane %v3055, 5
      %v3058 = vsel %vm626, %v3053, %v3057
      %v3059 = vshrl.u32 %v2959, 16
      %v3061 = vrot.slane %v3059, 4
      %v3062 = vor.u32 %v3061, %v3057
      %v3063 = vrot.slane %v3062, 4
      %v3065 = vshll.u32 %v2960, 16
      %v3067 = vrot.slane %v3065, 5
      %v3068 = vsel %vm626, %v3063, %v3067
      %v3069 = vshrl.u32 %v2960, 16
      %v3071 = vrot.slane %v3069, 4
      %v3072 = vor.u32 %v3071, %v3067
      %v3073 = vrot.slane %v3072, 4
      %v3075 = vshll.u32 %v2961, 16
      %v3077 = vrot.slane %v3075, 5
      %v3078 = vsel %vm626, %v3073, %v3077
      %v3079 = vshrl.u32 %v2961, 16
      %v3081 = vrot.slane %v3079, 4
      %v3082 = vor.u32 %v3081, %v3077
      %v3083 = vrot.slane %v3082, 4
      %v3085 = vshll.u32 %v2962, 16
      %v3087 = vrot.slane %v3085, 5
      %v3088 = vsel %vm626, %v3083, %v3087
      %v3089 = vshrl.u32 %v2962, 16
      %v3091 = vrot.slane %v3089, 4
      %v3092 = vor.u32 %v3091, %v3087
      %v3093 = vrot.slane %v3092, 4
      %v3095 = vshll.u32 %v2963, 16
      %v3097 = vrot.slane %v3095, 5
      %v3098 = vsel %vm626, %v3093, %v3097
      %v3099 = vshrl.u32 %v2963, 16
      %v3101 = vrot.slane %v3099, 4
      %v3102 = vor.u32 %v3101, %v3097
      %v3103 = vrot.slane %v3102, 4
      %v3105 = vshll.u32 %v2964, 16
      %v3107 = vrot.slane %v3105, 5
      %v3108 = vsel %vm626, %v3103, %v3107
      %v3109 = vshrl.u32 %v2964, 16
      %v3111 = vrot.slane %v3109, 4
      %v3112 = vor.u32 %v3111, %v3107
      %v3113 = vrot.slane %v3112, 4
      %v3115 = vshll.u32 %v2965, 16
      %v3117 = vrot.slane %v3115, 5
      %v3118 = vsel %vm626, %v3113, %v3117
      %v3119 = vshrl.u32 %v2965, 16
      %v3121 = vrot.slane %v3119, 4
      %v3122 = vor.u32 %v3121, %v3117
      %v3123 = vrot.slane %v3122, 4
      %v3125 = vshll.u32 %v2966, 16
      %v3127 = vrot.slane %v3125, 5
      %v3128 = vsel %vm626, %v3123, %v3127
      %v3129 = vshrl.u32 %v2966, 16
      %v3131 = vrot.slane %v3129, 4
      %v3132 = vor.u32 %v3131, %v3127
      %v3133 = vrot.slane %v3132, 4
      %v3135 = vshll.u32 %v2967, 16
      %v3137 = vrot.slane %v3135, 5
      %v3138 = vsel %vm626, %v3133, %v3137
      %v3139 = vshrl.u32 %v2967, 16
      %v3141 = vrot.slane %v3139, 4
      %v3142 = vor.u32 %v3141, %v3137
      %v3143 = vrot.slane %v3142, 4
      %v3145 = vshll.u32 %v2968, 16
      %v3147 = vrot.slane %v3145, 5
      %v3148 = vsel %vm626, %v3143, %v3147
      %v3149 = vshrl.u32 %v2968, 16
      %v3151 = vrot.slane %v3149, 4
      %v3152 = vor.u32 %v3151, %v3147
      %v3153 = vrot.slane %v3152, 4
      %v3155 = vshll.u32 %v2969, 16
      %v3157 = vrot.slane %v3155, 5
      %v3158 = vsel %vm626, %v3153, %v3157
      %v3159 = vshrl.u32 %v2969, 16
      %v3161 = vrot.slane %v3159, 4
      %v3162 = vor.u32 %v3161, %v3157
      %v3163 = vrot.slane %v3162, 4
      %v3165 = vshll.u32 %v2970, 16
      %v3167 = vrot.slane %v3165, 5
      %v3168 = vsel %vm626, %v3163, %v3167
      %v3169 = vshrl.u32 %v2970, 16
      %v3171 = vrot.slane %v3169, 4
      %v3172 = vor.u32 %v3171, %v3167
      %v3173 = vrot.slane %v3172, 4
      %v3175 = vshll.u32 %v2971, 16
      %v3177 = vrot.slane %v3175, 5
      %v3178 = vsel %vm626, %v3173, %v3177
      %v3179 = vshrl.u32 %v2971, 16
      %v3181 = vrot.slane %v3179, 4
      %v3182 = vor.u32 %v3181, %v3177
      %v3183 = vrot.slane %v3182, 4
      %v3185 = vshll.u32 %v2972, 16
      %v3187 = vrot.slane %v3185, 5
      %v3188 = vsel %vm626, %v3183, %v3187
      %v3189 = vshrl.u32 %v2972, 16
      %v3191 = vrot.slane %v3189, 4
      %v3192 = vor.u32 %v3191, %v3187
      %v3193 = vrot.slane %v3192, 4
      %v3195 = vshll.u32 %v2973, 16
      %v3197 = vrot.slane %v3195, 5
      %v3198 = vsel %vm626, %v3193, %v3197
      %v3199 = vshrl.u32 %v2973, 16
      %v3201 = vrot.slane %v3199, 4
      %v3202 = vor.u32 %v3201, %v3197
      %v3203 = vrot.slane %v3202, 4
      %v3205 = vshll.u32 %v2974, 16
      %v3207 = vrot.slane %v3205, 5
      %v3208 = vsel %vm626, %v3203, %v3207
      %v3209 = vshrl.u32 %v2974, 16
      %v3211 = vrot.slane %v3209, 4
      %v3212 = vor.u32 %v3211, %v3207
      %v3213 = vrot.slane %v3212, 4
      %v3215 = vshll.u32 %v2975, 16
      %v3217 = vrot.slane %v3215, 5
      %v3218 = vsel %vm626, %v3213, %v3217
      %v3219 = vshrl.u32 %v2975, 16
      %v3221 = vrot.slane %v3219, 4
      %v3222 = vor.u32 %v3221, %v3217
      %v3223 = vrot.slane %v3222, 4
      %v3225 = vshll.u32 %v2976, 16
      %v3227 = vrot.slane %v3225, 5
      %v3228 = vsel %vm626, %v3223, %v3227
      %v3229 = vshrl.u32 %v2976, 16
      %v3231 = vrot.slane %v3229, 4
      %v3232 = vor.u32 %v3231, %v3227
      %v3233 = vrot.slane %v3232, 4
      %v3235 = vshll.u32 %v2977, 16
      %v3237 = vrot.slane %v3235, 5
      %v3238 = vsel %vm626, %v3233, %v3237
      %v3239 = vshrl.u32 %v2977, 16
      %v3241 = vrot.slane %v3239, 4
      %v3242 = vor.u32 %v3241, %v3237
      %v3243 = vrot.slane %v3242, 4
      %v3245 = vshll.u32 %v2978, 16
      %v3247 = vrot.slane %v3245, 5
      %v3248 = vsel %vm626, %v3243, %v3247
      %v3249 = vshrl.u32 %v2978, 16
      %v3251 = vrot.slane %v3249, 4
      %v3252 = vor.u32 %v3251, %v3247
      %v3253 = vrot.slane %v3252, 4
      %v3255 = vshll.u32 %v2979, 16
      %v3257 = vrot.slane %v3255, 5
      %v3258 = vsel %vm626, %v3253, %v3257
      %v3259 = vshrl.u32 %v2979, 16
      %v3261 = vrot.slane %v3259, 4
      %v3262 = vor.u32 %v3261, %v3257
      %v3263 = vrot.slane %v3262, 4
      %v3265 = vshll.u32 %v2980, 16
      %v3267 = vrot.slane %v3265, 5
      %v3268 = vsel %vm626, %v3263, %v3267
      %v3269 = vshrl.u32 %v2980, 16
      %v3271 = vrot.slane %v3269, 4
      %v3272 = vor.u32 %v3271, %v3267
      %v3273 = vrot.slane %v3272, 4
      %v3275 = vshll.u32 %v2981, 16
      %v3277 = vrot.slane %v3275, 5
      %v3278 = vsel %vm626, %v3273, %v3277
      %v3279 = vshrl.u32 %v2981, 16
      %v3281 = vrot.slane %v3279, 4
      %v3282 = vor.u32 %v3281, %v3277
      %v3283 = vrot.slane %v3282, 4
      %v3285 = vshll.u32 %v2982, 16
      %v3287 = vrot.slane %v3285, 5
      %v3288 = vsel %vm626, %v3283, %v3287
      %v3289 = vshrl.u32 %v2982, 16
      %v3291 = vrot.slane %v3289, 4
      %v3292 = vor.u32 %v3291, %v3287
      %v3293 = vrot.slane %v3292, 4
      %v3295 = vshll.u32 %v2983, 16
      %v3297 = vrot.slane %v3295, 5
      %v3298 = vsel %vm626, %v3293, %v3297
      %v3299 = vshrl.u32 %v2983, 16
      %v3301 = vrot.slane %v3299, 4
      %v3302 = vor.u32 %v3301, %v3297
      %v3303 = vrot.slane %v3302, 4
      %v3305 = vshll.u32 %v2984, 16
      %v3307 = vrot.slane %v3305, 5
      %v3308 = vsel %vm626, %v3303, %v3307
      %3341 = vst [vmem:[#allocation3 + $0x14] sm:$0xf] %v2998
      %3342 = vst [vmem:[#allocation3 + $0x38] sm:$0xf] %v3008
      %3343 = vst [vmem:[#allocation3 + $0x5c] sm:$0xf] %v3018
      %3344 = vst [vmem:[#allocation3 + $0x80] sm:$0xf] %v3028
      %3345 = vst [vmem:[#allocation3 + $0xa4] sm:$0xf] %v3038
      %3346 = vst [vmem:[#allocation3 + $0xc8] sm:$0xf] %v3048
      %3347 = vst [vmem:[#allocation3 + $0xec] sm:$0xf] %v3058
      %3348 = vst [vmem:[#allocation3 + $0x110] sm:$0xf] %v3068
      %3349 = vst [vmem:[#allocation3 + $0x134] sm:$0xf] %v3078
      %3350 = vst [vmem:[#allocation3 + $0x158] sm:$0xf] %v3088
      %3351 = vst [vmem:[#allocation3 + $0x17c] sm:$0xf] %v3098
      %3352 = vst [vmem:[#allocation3 + $0x1a0] sm:$0xf] %v3108
      %3353 = vst [vmem:[#allocation3 + $0x1c4] sm:$0xf] %v3118
      %3354 = vst [vmem:[#allocation3 + $0x1e8] sm:$0xf] %v3128
      %3355 = vst [vmem:[#allocation3 + $0x20c] sm:$0xf] %v3138
      %3356 = vst [vmem:[#allocation3 + $0x230] sm:$0xf] %v3148
      %3357 = vst [vmem:[#allocation3 + $0x254] sm:$0xf] %v3158
      %3358 = vst [vmem:[#allocation3 + $0x278] sm:$0xf] %v3168
      %3359 = vst [vmem:[#allocation3 + $0x29c] sm:$0xf] %v3178
      %3360 = vst [vmem:[#allocation3 + $0x2c0] sm:$0xf] %v3188
      %3361 = vst [vmem:[#allocation3 + $0x2e4] sm:$0xf] %v3198
      %3362 = vst [vmem:[#allocation3 + $0x308] sm:$0xf] %v3208
      %3363 = vst [vmem:[#allocation3 + $0x32c] sm:$0xf] %v3218
      %3364 = vst [vmem:[#allocation3 + $0x350] sm:$0xf] %v3228
      %3365 = vst [vmem:[#allocation3 + $0x374] sm:$0xf] %v3238
      %3366 = vst [vmem:[#allocation3 + $0x398] sm:$0xf] %v3248
      %3367 = vst [vmem:[#allocation3 + $0x3bc] sm:$0xf] %v3258
      %3368 = vst [vmem:[#allocation3 + $0x3e0] sm:$0xf] %v3268
      %3369 = vst [vmem:[#allocation3 + $0x404] sm:$0xf] %v3278
      %3370 = vst [vmem:[#allocation3 + $0x428] sm:$0xf] %v3288
      %3371 = vst [vmem:[#allocation3 + $0x44c] sm:$0xf] %v3298
      %3372 = vst [vmem:[#allocation3 + $0x470] sm:$0xf] %v3308
      %v3373 = vld [vmem:[#allocation2 + $0x14] sm:$0x8]
      %v3374 = vld [vmem:[#allocation2 + $0x18] sm:$0xf]
      %v3375 = vld [vmem:[#allocation2 + $0x1c] sm:$0xf]
      %v3376 = vld [vmem:[#allocation2 + $0x20] sm:$0xf]
      %v3377 = vld [vmem:[#allocation2 + $0x24] sm:$0xf]
      %v3378 = vld [vmem:[#allocation2 + $0x28] sm:$0xf]
      %v3379 = vld [vmem:[#allocation2 + $0x2c] sm:$0xf]
      %v3380 = vld [vmem:[#allocation2 + $0x30] sm:$0xf]
      %v3381 = vld [vmem:[#allocation2 + $0x34] sm:$0xf]
      %v3382 = vld [vmem:[#allocation2 + $0x38] sm:$0xf]
      %v3383 = vld [vmem:[#allocation2 + $0x3c] sm:$0xf]
      %v3384 = vld [vmem:[#allocation2 + $0x40] sm:$0xf]
      %v3385 = vld [vmem:[#allocation2 + $0x44] sm:$0xf]
      %v3386 = vld [vmem:[#allocation2 + $0x48] sm:$0xf]
      %v3387 = vld [vmem:[#allocation2 + $0x4c] sm:$0xf]
      %v3388 = vld [vmem:[#allocation2 + $0x50] sm:$0xf]
      %v3389 = vld [vmem:[#allocation2 + $0x54] sm:$0xf]
      %v3390 = vld [vmem:[#allocation2 + $0x58] sm:$0xf]
      %v3391 = vld [vmem:[#allocation2 + $0x5c] sm:$0xf]
      %v3392 = vld [vmem:[#allocation2 + $0x60] sm:$0xf]
      %v3393 = vld [vmem:[#allocation2 + $0x64] sm:$0xf]
      %v3394 = vld [vmem:[#allocation2 + $0x68] sm:$0xf]
      %v3395 = vld [vmem:[#allocation2 + $0x6c] sm:$0xf]
      %v3396 = vld [vmem:[#allocation2 + $0x70] sm:$0xf]
      %v3397 = vld [vmem:[#allocation2 + $0x74] sm:$0xf]
      %v3398 = vld [vmem:[#allocation2 + $0x78] sm:$0xf]
      %v3399 = vld [vmem:[#allocation2 + $0x7c] sm:$0xf]
      %v3400 = vld [vmem:[#allocation2 + $0x80] sm:$0xf]
      %v3401 = vld [vmem:[#allocation2 + $0x84] sm:$0xf]
      %v3402 = vld [vmem:[#allocation2 + $0x88] sm:$0xf]
      %v3403 = vld [vmem:[#allocation2 + $0x8c] sm:$0xf]
      %v3404 = vld [vmem:[#allocation2 + $0x90] sm:$0xf]
      %v3405 = vld [vmem:[#allocation2 + $0x94] sm:$0xf]
      %v3406 = vsel %vm946, %v3373, 0
      %v3407 = vsel %vm947, %v3374, 0
      %v3408 = vsel %vm948, %v3375, 0
      %v3409 = vsel %vm949, %v3376, 0
      %v3410 = vsel %vm950, %v3377, 0
      %v3411 = vsel %vm951, %v3378, 0
      %v3412 = vsel %vm952, %v3379, 0
      %v3413 = vsel %vm953, %v3380, 0
      %v3414 = vsel %vm954, %v3381, 0
      %v3415 = vsel %vm955, %v3382, 0
      %v3416 = vsel %vm956, %v3383, 0
      %v3417 = vsel %vm957, %v3384, 0
      %v3418 = vsel %vm958, %v3385, 0
      %v3419 = vsel %vm959, %v3386, 0
      %v3420 = vsel %vm960, %v3387, 0
      %v3421 = vsel %vm961, %v3388, 0
      %v3422 = vsel %vm962, %v3389, 0
      %v3423 = vsel %vm963, %v3390, 0
      %v3424 = vsel %vm964, %v3391, 0
      %v3425 = vsel %vm965, %v3392, 0
      %v3426 = vsel %vm966, %v3393, 0
      %v3427 = vsel %vm967, %v3394, 0
      %v3428 = vsel %vm968, %v3395, 0
      %v3429 = vsel %vm969, %v3396, 0
      %v3430 = vsel %vm970, %v3397, 0
      %v3431 = vsel %vm971, %v3398, 0
      %v3432 = vsel %vm972, %v3399, 0
      %v3433 = vsel %vm973, %v3400, 0
      %v3434 = vsel %vm974, %v3401, 0
      %v3435 = vsel %vm975, %v3402, 0
      %v3436 = vsel %vm976, %v3403, 0
      %v3437 = vsel %vm977, %v3404, 0
      %v3438 = vsel %vm978, %v3405, 0
      %v3440 = vshrl.u32 %v3406, 16
      %v3442 = vrot.slane %v3440, 7
      %v3443 = vrot.slane %v3442, 4
      %v3445 = vshrl.u32 %v3407, 16
      %v3447 = vrot.slane %v3445, 7
      %v3448 = vshll.u32 %v3407, 16
      %v3450 = vor.u32 %v3447, %v3448
      %v3451 = vsel %vm1014, %v3443, %v3450
      %v3452 = vrot.slane %v3447, 4
      %v3454 = vshrl.u32 %v3408, 16
      %v3456 = vrot.slane %v3454, 7
      %v3457 = vshll.u32 %v3408, 16
      %v3459 = vor.u32 %v3456, %v3457
      %v3460 = vsel %vm1014, %v3452, %v3459
      %v3461 = vrot.slane %v3456, 4
      %v3463 = vshrl.u32 %v3409, 16
      %v3465 = vrot.slane %v3463, 7
      %v3466 = vshll.u32 %v3409, 16
      %v3468 = vor.u32 %v3465, %v3466
      %v3469 = vsel %vm1014, %v3461, %v3468
      %v3470 = vrot.slane %v3465, 4
      %v3472 = vshrl.u32 %v3410, 16
      %v3474 = vrot.slane %v3472, 7
      %v3475 = vshll.u32 %v3410, 16
      %v3477 = vor.u32 %v3474, %v3475
      %v3478 = vsel %vm1014, %v3470, %v3477
      %v3479 = vrot.slane %v3474, 4
      %v3481 = vshrl.u32 %v3411, 16
      %v3483 = vrot.slane %v3481, 7
      %v3484 = vshll.u32 %v3411, 16
      %v3486 = vor.u32 %v3483, %v3484
      %v3487 = vsel %vm1014, %v3479, %v3486
      %v3488 = vrot.slane %v3483, 4
      %v3490 = vshrl.u32 %v3412, 16
      %v3492 = vrot.slane %v3490, 7
      %v3493 = vshll.u32 %v3412, 16
      %v3495 = vor.u32 %v3492, %v3493
      %v3496 = vsel %vm1014, %v3488, %v3495
      %v3497 = vrot.slane %v3492, 4
      %v3499 = vshrl.u32 %v3413, 16
      %v3501 = vrot.slane %v3499, 7
      %v3502 = vshll.u32 %v3413, 16
      %v3504 = vor.u32 %v3501, %v3502
      %v3505 = vsel %vm1014, %v3497, %v3504
      %v3506 = vrot.slane %v3501, 4
      %v3508 = vshrl.u32 %v3414, 16
      %v3510 = vrot.slane %v3508, 7
      %v3511 = vshll.u32 %v3414, 16
      %v3513 = vor.u32 %v3510, %v3511
      %v3514 = vsel %vm1014, %v3506, %v3513
      %v3515 = vrot.slane %v3510, 4
      %v3517 = vshrl.u32 %v3415, 16
      %v3519 = vrot.slane %v3517, 7
      %v3520 = vshll.u32 %v3415, 16
      %v3522 = vor.u32 %v3519, %v3520
      %v3523 = vsel %vm1014, %v3515, %v3522
      %v3524 = vrot.slane %v3519, 4
      %v3526 = vshrl.u32 %v3416, 16
      %v3528 = vrot.slane %v3526, 7
      %v3529 = vshll.u32 %v3416, 16
      %v3531 = vor.u32 %v3528, %v3529
      %v3532 = vsel %vm1014, %v3524, %v3531
      %v3533 = vrot.slane %v3528, 4
      %v3535 = vshrl.u32 %v3417, 16
      %v3537 = vrot.slane %v3535, 7
      %v3538 = vshll.u32 %v3417, 16
      %v3540 = vor.u32 %v3537, %v3538
      %v3541 = vsel %vm1014, %v3533, %v3540
      %v3542 = vrot.slane %v3537, 4
      %v3544 = vshrl.u32 %v3418, 16
      %v3546 = vrot.slane %v3544, 7
      %v3547 = vshll.u32 %v3418, 16
      %v3549 = vor.u32 %v3546, %v3547
      %v3550 = vsel %vm1014, %v3542, %v3549
      %v3551 = vrot.slane %v3546, 4
      %v3553 = vshrl.u32 %v3419, 16
      %v3555 = vrot.slane %v3553, 7
      %v3556 = vshll.u32 %v3419, 16
      %v3558 = vor.u32 %v3555, %v3556
      %v3559 = vsel %vm1014, %v3551, %v3558
      %v3560 = vrot.slane %v3555, 4
      %v3562 = vshrl.u32 %v3420, 16
      %v3564 = vrot.slane %v3562, 7
      %v3565 = vshll.u32 %v3420, 16
      %v3567 = vor.u32 %v3564, %v3565
      %v3568 = vsel %vm1014, %v3560, %v3567
      %v3569 = vrot.slane %v3564, 4
      %v3571 = vshrl.u32 %v3421, 16
      %v3573 = vrot.slane %v3571, 7
      %v3574 = vshll.u32 %v3421, 16
      %v3576 = vor.u32 %v3573, %v3574
      %v3577 = vsel %vm1014, %v3569, %v3576
      %v3578 = vrot.slane %v3573, 4
      %v3580 = vshrl.u32 %v3422, 16
      %v3582 = vrot.slane %v3580, 7
      %v3583 = vshll.u32 %v3422, 16
      %v3585 = vor.u32 %v3582, %v3583
      %v3586 = vsel %vm1014, %v3578, %v3585
      %v3587 = vrot.slane %v3582, 4
      %v3589 = vshrl.u32 %v3423, 16
      %v3591 = vrot.slane %v3589, 7
      %v3592 = vshll.u32 %v3423, 16
      %v3594 = vor.u32 %v3591, %v3592
      %v3595 = vsel %vm1014, %v3587, %v3594
      %v3596 = vrot.slane %v3591, 4
      %v3598 = vshrl.u32 %v3424, 16
      %v3600 = vrot.slane %v3598, 7
      %v3601 = vshll.u32 %v3424, 16
      %v3603 = vor.u32 %v3600, %v3601
      %v3604 = vsel %vm1014, %v3596, %v3603
      %v3605 = vrot.slane %v3600, 4
      %v3607 = vshrl.u32 %v3425, 16
      %v3609 = vrot.slane %v3607, 7
      %v3610 = vshll.u32 %v3425, 16
      %v3612 = vor.u32 %v3609, %v3610
      %v3613 = vsel %vm1014, %v3605, %v3612
      %v3614 = vrot.slane %v3609, 4
      %v3616 = vshrl.u32 %v3426, 16
      %v3618 = vrot.slane %v3616, 7
      %v3619 = vshll.u32 %v3426, 16
      %v3621 = vor.u32 %v3618, %v3619
      %v3622 = vsel %vm1014, %v3614, %v3621
      %v3623 = vrot.slane %v3618, 4
      %v3625 = vshrl.u32 %v3427, 16
      %v3627 = vrot.slane %v3625, 7
      %v3628 = vshll.u32 %v3427, 16
      %v3630 = vor.u32 %v3627, %v3628
      %v3631 = vsel %vm1014, %v3623, %v3630
      %v3632 = vrot.slane %v3627, 4
      %v3634 = vshrl.u32 %v3428, 16
      %v3636 = vrot.slane %v3634, 7
      %v3637 = vshll.u32 %v3428, 16
      %v3639 = vor.u32 %v3636, %v3637
      %v3640 = vsel %vm1014, %v3632, %v3639
      %v3641 = vrot.slane %v3636, 4
      %v3643 = vshrl.u32 %v3429, 16
      %v3645 = vrot.slane %v3643, 7
      %v3646 = vshll.u32 %v3429, 16
      %v3648 = vor.u32 %v3645, %v3646
      %v3649 = vsel %vm1014, %v3641, %v3648
      %v3650 = vrot.slane %v3645, 4
      %v3652 = vshrl.u32 %v3430, 16
      %v3654 = vrot.slane %v3652, 7
      %v3655 = vshll.u32 %v3430, 16
      %v3657 = vor.u32 %v3654, %v3655
      %v3658 = vsel %vm1014, %v3650, %v3657
      %v3659 = vrot.slane %v3654, 4
      %v3661 = vshrl.u32 %v3431, 16
      %v3663 = vrot.slane %v3661, 7
      %v3664 = vshll.u32 %v3431, 16
      %v3666 = vor.u32 %v3663, %v3664
      %v3667 = vsel %vm1014, %v3659, %v3666
      %v3668 = vrot.slane %v3663, 4
      %v3670 = vshrl.u32 %v3432, 16
      %v3672 = vrot.slane %v3670, 7
      %v3673 = vshll.u32 %v3432, 16
      %v3675 = vor.u32 %v3672, %v3673
      %v3676 = vsel %vm1014, %v3668, %v3675
      %v3677 = vrot.slane %v3672, 4
      %v3679 = vshrl.u32 %v3433, 16
      %v3681 = vrot.slane %v3679, 7
      %v3682 = vshll.u32 %v3433, 16
      %v3684 = vor.u32 %v3681, %v3682
      %v3685 = vsel %vm1014, %v3677, %v3684
      %v3686 = vrot.slane %v3681, 4
      %v3688 = vshrl.u32 %v3434, 16
      %v3690 = vrot.slane %v3688, 7
      %v3691 = vshll.u32 %v3434, 16
      %v3693 = vor.u32 %v3690, %v3691
      %v3694 = vsel %vm1014, %v3686, %v3693
      %v3695 = vrot.slane %v3690, 4
      %v3697 = vshrl.u32 %v3435, 16
      %v3699 = vrot.slane %v3697, 7
      %v3700 = vshll.u32 %v3435, 16
      %v3702 = vor.u32 %v3699, %v3700
      %v3703 = vsel %vm1014, %v3695, %v3702
      %v3704 = vrot.slane %v3699, 4
      %v3706 = vshrl.u32 %v3436, 16
      %v3708 = vrot.slane %v3706, 7
      %v3709 = vshll.u32 %v3436, 16
      %v3711 = vor.u32 %v3708, %v3709
      %v3712 = vsel %vm1014, %v3704, %v3711
      %v3713 = vrot.slane %v3708, 4
      %v3715 = vshrl.u32 %v3437, 16
      %v3717 = vrot.slane %v3715, 7
      %v3718 = vshll.u32 %v3437, 16
      %v3720 = vor.u32 %v3717, %v3718
      %v3721 = vsel %vm1014, %v3713, %v3720
      %v3722 = vrot.slane %v3717, 4
      %v3724 = vshrl.u32 %v3438, 16
      %v3726 = vrot.slane %v3724, 7
      %v3727 = vshll.u32 %v3438, 16
      %v3729 = vor.u32 %v3726, %v3727
      %v3730 = vsel %vm1014, %v3722, %v3729
      %3763 = vst [vmem:[#allocation3 + $0x18] sm:$0xf] %v3451
      %3764 = vst [vmem:[#allocation3 + $0x3c] sm:$0xf] %v3460
      %3765 = vst [vmem:[#allocation3 + $0x60] sm:$0xf] %v3469
      %3766 = vst [vmem:[#allocation3 + $0x84] sm:$0xf] %v3478
      %3767 = vst [vmem:[#allocation3 + $0xa8] sm:$0xf] %v3487
      %3768 = vst [vmem:[#allocation3 + $0xcc] sm:$0xf] %v3496
      %3769 = vst [vmem:[#allocation3 + $0xf0] sm:$0xf] %v3505
      %3770 = vst [vmem:[#allocation3 + $0x114] sm:$0xf] %v3514
      %3771 = vst [vmem:[#allocation3 + $0x138] sm:$0xf] %v3523
      %3772 = vst [vmem:[#allocation3 + $0x15c] sm:$0xf] %v3532
      %3773 = vst [vmem:[#allocation3 + $0x180] sm:$0xf] %v3541
      %3774 = vst [vmem:[#allocation3 + $0x1a4] sm:$0xf] %v3550
      %3775 = vst [vmem:[#allocation3 + $0x1c8] sm:$0xf] %v3559
      %3776 = vst [vmem:[#allocation3 + $0x1ec] sm:$0xf] %v3568
      %3777 = vst [vmem:[#allocation3 + $0x210] sm:$0xf] %v3577
      %3778 = vst [vmem:[#allocation3 + $0x234] sm:$0xf] %v3586
      %3779 = vst [vmem:[#allocation3 + $0x258] sm:$0xf] %v3595
      %3780 = vst [vmem:[#allocation3 + $0x27c] sm:$0xf] %v3604
      %3781 = vst [vmem:[#allocation3 + $0x2a0] sm:$0xf] %v3613
      %3782 = vst [vmem:[#allocation3 + $0x2c4] sm:$0xf] %v3622
      %3783 = vst [vmem:[#allocation3 + $0x2e8] sm:$0xf] %v3631
      %3784 = vst [vmem:[#allocation3 + $0x30c] sm:$0xf] %v3640
      %3785 = vst [vmem:[#allocation3 + $0x330] sm:$0xf] %v3649
      %3786 = vst [vmem:[#allocation3 + $0x354] sm:$0xf] %v3658
      %3787 = vst [vmem:[#allocation3 + $0x378] sm:$0xf] %v3667
      %3788 = vst [vmem:[#allocation3 + $0x39c] sm:$0xf] %v3676
      %3789 = vst [vmem:[#allocation3 + $0x3c0] sm:$0xf] %v3685
      %3790 = vst [vmem:[#allocation3 + $0x3e4] sm:$0xf] %v3694
      %3791 = vst [vmem:[#allocation3 + $0x408] sm:$0xf] %v3703
      %3792 = vst [vmem:[#allocation3 + $0x42c] sm:$0xf] %v3712
      %3793 = vst [vmem:[#allocation3 + $0x450] sm:$0xf] %v3721
      %3794 = vst [vmem:[#allocation3 + $0x474] sm:$0xf] %v3730
      %v3795 = vld [vmem:[#allocation2 + $0x18] sm:$0xf]
      %v3796 = vld [vmem:[#allocation2 + $0x1c] sm:$0xf]
      %v3797 = vld [vmem:[#allocation2 + $0x20] sm:$0xf]
      %v3798 = vld [vmem:[#allocation2 + $0x24] sm:$0xf]
      %v3799 = vld [vmem:[#allocation2 + $0x28] sm:$0xf]
      %v3800 = vld [vmem:[#allocation2 + $0x2c] sm:$0xf]
      %v3801 = vld [vmem:[#allocation2 + $0x30] sm:$0xf]
      %v3802 = vld [vmem:[#allocation2 + $0x34] sm:$0xf]
      %v3803 = vld [vmem:[#allocation2 + $0x38] sm:$0xf]
      %v3804 = vld [vmem:[#allocation2 + $0x3c] sm:$0xf]
      %v3805 = vld [vmem:[#allocation2 + $0x40] sm:$0xf]
      %v3806 = vld [vmem:[#allocation2 + $0x44] sm:$0xf]
      %v3807 = vld [vmem:[#allocation2 + $0x48] sm:$0xf]
      %v3808 = vld [vmem:[#allocation2 + $0x4c] sm:$0xf]
      %v3809 = vld [vmem:[#allocation2 + $0x50] sm:$0xf]
      %v3810 = vld [vmem:[#allocation2 + $0x54] sm:$0xf]
      %v3811 = vld [vmem:[#allocation2 + $0x58] sm:$0xf]
      %v3812 = vld [vmem:[#allocation2 + $0x5c] sm:$0xf]
      %v3813 = vld [vmem:[#allocation2 + $0x60] sm:$0xf]
      %v3814 = vld [vmem:[#allocation2 + $0x64] sm:$0xf]
      %v3815 = vld [vmem:[#allocation2 + $0x68] sm:$0xf]
      %v3816 = vld [vmem:[#allocation2 + $0x6c] sm:$0xf]
      %v3817 = vld [vmem:[#allocation2 + $0x70] sm:$0xf]
      %v3818 = vld [vmem:[#allocation2 + $0x74] sm:$0xf]
      %v3819 = vld [vmem:[#allocation2 + $0x78] sm:$0xf]
      %v3820 = vld [vmem:[#allocation2 + $0x7c] sm:$0xf]
      %v3821 = vld [vmem:[#allocation2 + $0x80] sm:$0xf]
      %v3822 = vld [vmem:[#allocation2 + $0x84] sm:$0xf]
      %v3823 = vld [vmem:[#allocation2 + $0x88] sm:$0xf]
      %v3824 = vld [vmem:[#allocation2 + $0x8c] sm:$0xf]
      %v3825 = vld [vmem:[#allocation2 + $0x90] sm:$0xf]
      %v3826 = vld [vmem:[#allocation2 + $0x94] sm:$0xf]
      %3827 = vst [vmem:[#allocation3 + $0x1c] sm:$0xf] %v3795
      %3828 = vst [vmem:[#allocation3 + $0x40] sm:$0xf] %v3796
      %3829 = vst [vmem:[#allocation3 + $0x64] sm:$0xf] %v3797
      %3830 = vst [vmem:[#allocation3 + $0x88] sm:$0xf] %v3798
      %3831 = vst [vmem:[#allocation3 + $0xac] sm:$0xf] %v3799
      %3832 = vst [vmem:[#allocation3 + $0xd0] sm:$0xf] %v3800
      %3833 = vst [vmem:[#allocation3 + $0xf4] sm:$0xf] %v3801
      %3834 = vst [vmem:[#allocation3 + $0x118] sm:$0xf] %v3802
      %3835 = vst [vmem:[#allocation3 + $0x13c] sm:$0xf] %v3803
      %3836 = vst [vmem:[#allocation3 + $0x160] sm:$0xf] %v3804
      %3837 = vst [vmem:[#allocation3 + $0x184] sm:$0xf] %v3805
      %3838 = vst [vmem:[#allocation3 + $0x1a8] sm:$0xf] %v3806
      %3839 = vst [vmem:[#allocation3 + $0x1cc] sm:$0xf] %v3807
      %3840 = vst [vmem:[#allocation3 + $0x1f0] sm:$0xf] %v3808
      %3841 = vst [vmem:[#allocation3 + $0x214] sm:$0xf] %v3809
      %3842 = vst [vmem:[#allocation3 + $0x238] sm:$0xf] %v3810
      %3843 = vst [vmem:[#allocation3 + $0x25c] sm:$0xf] %v3811
      %3844 = vst [vmem:[#allocation3 + $0x280] sm:$0xf] %v3812
      %3845 = vst [vmem:[#allocation3 + $0x2a4] sm:$0xf] %v3813
      %3846 = vst [vmem:[#allocation3 + $0x2c8] sm:$0xf] %v3814
      %3847 = vst [vmem:[#allocation3 + $0x2ec] sm:$0xf] %v3815
      %3848 = vst [vmem:[#allocation3 + $0x310] sm:$0xf] %v3816
      %3849 = vst [vmem:[#allocation3 + $0x334] sm:$0xf] %v3817
      %3850 = vst [vmem:[#allocation3 + $0x358] sm:$0xf] %v3818
      %3851 = vst [vmem:[#allocation3 + $0x37c] sm:$0xf] %v3819
      %3852 = vst [vmem:[#allocation3 + $0x3a0] sm:$0xf] %v3820
      %3853 = vst [vmem:[#allocation3 + $0x3c4] sm:$0xf] %v3821
      %3854 = vst [vmem:[#allocation3 + $0x3e8] sm:$0xf] %v3822
      %3855 = vst [vmem:[#allocation3 + $0x40c] sm:$0xf] %v3823
      %3856 = vst [vmem:[#allocation3 + $0x430] sm:$0xf] %v3824
      %3857 = vst [vmem:[#allocation3 + $0x454] sm:$0xf] %v3825
      %3858 = vst [vmem:[#allocation3 + $0x478] sm:$0xf] %v3826
      %v3859 = vld [vmem:[#allocation2 + $0x18] sm:$0xf]
      %v3860 = vld [vmem:[#allocation2 + $0x1c] sm:$0xf]
      %v3861 = vld [vmem:[#allocation2 + $0x20] sm:$0xf]
      %v3862 = vld [vmem:[#allocation2 + $0x24] sm:$0xf]
      %v3863 = vld [vmem:[#allocation2 + $0x28] sm:$0xf]
      %v3864 = vld [vmem:[#allocation2 + $0x2c] sm:$0xf]
      %v3865 = vld [vmem:[#allocation2 + $0x30] sm:$0xf]
      %v3866 = vld [vmem:[#allocation2 + $0x34] sm:$0xf]
      %v3867 = vld [vmem:[#allocation2 + $0x38] sm:$0xf]
      %v3868 = vld [vmem:[#allocation2 + $0x3c] sm:$0xf]
      %v3869 = vld [vmem:[#allocation2 + $0x40] sm:$0xf]
      %v3870 = vld [vmem:[#allocation2 + $0x44] sm:$0xf]
      %v3871 = vld [vmem:[#allocation2 + $0x48] sm:$0xf]
      %v3872 = vld [vmem:[#allocation2 + $0x4c] sm:$0xf]
      %v3873 = vld [vmem:[#allocation2 + $0x50] sm:$0xf]
      %v3874 = vld [vmem:[#allocation2 + $0x54] sm:$0xf]
      %v3875 = vld [vmem:[#allocation2 + $0x58] sm:$0xf]
      %v3876 = vld [vmem:[#allocation2 + $0x5c] sm:$0xf]
      %v3877 = vld [vmem:[#allocation2 + $0x60] sm:$0xf]
      %v3878 = vld [vmem:[#allocation2 + $0x64] sm:$0xf]
      %v3879 = vld [vmem:[#allocation2 + $0x68] sm:$0xf]
      %v3880 = vld [vmem:[#allocation2 + $0x6c] sm:$0xf]
      %v3881 = vld [vmem:[#allocation2 + $0x70] sm:$0xf]
      %v3882 = vld [vmem:[#allocation2 + $0x74] sm:$0xf]
      %v3883 = vld [vmem:[#allocation2 + $0x78] sm:$0xf]
      %v3884 = vld [vmem:[#allocation2 + $0x7c] sm:$0xf]
      %v3885 = vld [vmem:[#allocation2 + $0x80] sm:$0xf]
      %v3886 = vld [vmem:[#allocation2 + $0x84] sm:$0xf]
      %v3887 = vld [vmem:[#allocation2 + $0x88] sm:$0xf]
      %v3888 = vld [vmem:[#allocation2 + $0x8c] sm:$0xf]
      %v3889 = vld [vmem:[#allocation2 + $0x90] sm:$0xf]
      %v3890 = vld [vmem:[#allocation2 + $0x94] sm:$0xf]
      %v3891 = vld [vmem:[#allocation2 + $0x98] sm:$0x1]
      %v3892 = vsel %vm1979, %v3859, 0
      %v3893 = vsel %vm1980, %v3860, 0
      %v3894 = vsel %vm1981, %v3861, 0
      %v3895 = vsel %vm1982, %v3862, 0
      %v3896 = vsel %vm1983, %v3863, 0
      %v3897 = vsel %vm1984, %v3864, 0
      %v3898 = vsel %vm1985, %v3865, 0
      %v3899 = vsel %vm1986, %v3866, 0
      %v3900 = vsel %vm1987, %v3867, 0
      %v3901 = vsel %vm1988, %v3868, 0
      %v3902 = vsel %vm1989, %v3869, 0
      %v3903 = vsel %vm1990, %v3870, 0
      %v3904 = vsel %vm1991, %v3871, 0
      %v3905 = vsel %vm1992, %v3872, 0
      %v3906 = vsel %vm1993, %v3873, 0
      %v3907 = vsel %vm1994, %v3874, 0
      %v3908 = vsel %vm1995, %v3875, 0
      %v3909 = vsel %vm1996, %v3876, 0
      %v3910 = vsel %vm1997, %v3877, 0
      %v3911 = vsel %vm1998, %v3878, 0
      %v3912 = vsel %vm1999, %v3879, 0
      %v3913 = vsel %vm2000, %v3880, 0
      %v3914 = vsel %vm2001, %v3881, 0
      %v3915 = vsel %vm2002, %v3882, 0
      %v3916 = vsel %vm2003, %v3883, 0
      %v3917 = vsel %vm2004, %v3884, 0
      %v3918 = vsel %vm2005, %v3885, 0
      %v3919 = vsel %vm2006, %v3886, 0
      %v3920 = vsel %vm2007, %v3887, 0
      %v3921 = vsel %vm2008, %v3888, 0
      %v3922 = vsel %vm2009, %v3889, 0
      %v3923 = vsel %vm2010, %v3890, 0
      %v3924 = vsel %vm2011, %v3891, 0
      %v3926 = vshrl.u32 %v3892, 16
      %v3928 = vrot.slane %v3926, 4
      %v3929 = vshll.u32 %v3892, 16
      %v3931 = vrot.slane %v3929, 5
      %v3932 = vor.u32 %v3928, %v3931
      %v3933 = vrot.slane %v3932, 4
      %v3935 = vshll.u32 %v3893, 16
      %v3937 = vrot.slane %v3935, 5
      %v3938 = vsel %vm626, %v3933, %v3937
      %v3939 = vshrl.u32 %v3893, 16
      %v3941 = vrot.slane %v3939, 4
      %v3942 = vor.u32 %v3941, %v3937
      %v3943 = vrot.slane %v3942, 4
      %v3945 = vshll.u32 %v3894, 16
      %v3947 = vrot.slane %v3945, 5
      %v3948 = vsel %vm626, %v3943, %v3947
      %v3949 = vshrl.u32 %v3894, 16
      %v3951 = vrot.slane %v3949, 4
      %v3952 = vor.u32 %v3951, %v3947
      %v3953 = vrot.slane %v3952, 4
      %v3955 = vshll.u32 %v3895, 16
      %v3957 = vrot.slane %v3955, 5
      %v3958 = vsel %vm626, %v3953, %v3957
      %v3959 = vshrl.u32 %v3895, 16
      %v3961 = vrot.slane %v3959, 4
      %v3962 = vor.u32 %v3961, %v3957
      %v3963 = vrot.slane %v3962, 4
      %v3965 = vshll.u32 %v3896, 16
      %v3967 = vrot.slane %v3965, 5
      %v3968 = vsel %vm626, %v3963, %v3967
      %v3969 = vshrl.u32 %v3896, 16
      %v3971 = vrot.slane %v3969, 4
      %v3972 = vor.u32 %v3971, %v3967
      %v3973 = vrot.slane %v3972, 4
      %v3975 = vshll.u32 %v3897, 16
      %v3977 = vrot.slane %v3975, 5
      %v3978 = vsel %vm626, %v3973, %v3977
      %v3979 = vshrl.u32 %v3897, 16
      %v3981 = vrot.slane %v3979, 4
      %v3982 = vor.u32 %v3981, %v3977
      %v3983 = vrot.slane %v3982, 4
      %v3985 = vshll.u32 %v3898, 16
      %v3987 = vrot.slane %v3985, 5
      %v3988 = vsel %vm626, %v3983, %v3987
      %v3989 = vshrl.u32 %v3898, 16
      %v3991 = vrot.slane %v3989, 4
      %v3992 = vor.u32 %v3991, %v3987
      %v3993 = vrot.slane %v3992, 4
      %v3995 = vshll.u32 %v3899, 16
      %v3997 = vrot.slane %v3995, 5
      %v3998 = vsel %vm626, %v3993, %v3997
      %v3999 = vshrl.u32 %v3899, 16
      %v4001 = vrot.slane %v3999, 4
      %v4002 = vor.u32 %v4001, %v3997
      %v4003 = vrot.slane %v4002, 4
      %v4005 = vshll.u32 %v3900, 16
      %v4007 = vrot.slane %v4005, 5
      %v4008 = vsel %vm626, %v4003, %v4007
      %v4009 = vshrl.u32 %v3900, 16
      %v4011 = vrot.slane %v4009, 4
      %v4012 = vor.u32 %v4011, %v4007
      %v4013 = vrot.slane %v4012, 4
      %v4015 = vshll.u32 %v3901, 16
      %v4017 = vrot.slane %v4015, 5
      %v4018 = vsel %vm626, %v4013, %v4017
      %v4019 = vshrl.u32 %v3901, 16
      %v4021 = vrot.slane %v4019, 4
      %v4022 = vor.u32 %v4021, %v4017
      %v4023 = vrot.slane %v4022, 4
      %v4025 = vshll.u32 %v3902, 16
      %v4027 = vrot.slane %v4025, 5
      %v4028 = vsel %vm626, %v4023, %v4027
      %v4029 = vshrl.u32 %v3902, 16
      %v4031 = vrot.slane %v4029, 4
      %v4032 = vor.u32 %v4031, %v4027
      %v4033 = vrot.slane %v4032, 4
      %v4035 = vshll.u32 %v3903, 16
      %v4037 = vrot.slane %v4035, 5
      %v4038 = vsel %vm626, %v4033, %v4037
      %v4039 = vshrl.u32 %v3903, 16
      %v4041 = vrot.slane %v4039, 4
      %v4042 = vor.u32 %v4041, %v4037
      %v4043 = vrot.slane %v4042, 4
      %v4045 = vshll.u32 %v3904, 16
      %v4047 = vrot.slane %v4045, 5
      %v4048 = vsel %vm626, %v4043, %v4047
      %v4049 = vshrl.u32 %v3904, 16
      %v4051 = vrot.slane %v4049, 4
      %v4052 = vor.u32 %v4051, %v4047
      %v4053 = vrot.slane %v4052, 4
      %v4055 = vshll.u32 %v3905, 16
      %v4057 = vrot.slane %v4055, 5
      %v4058 = vsel %vm626, %v4053, %v4057
      %v4059 = vshrl.u32 %v3905, 16
      %v4061 = vrot.slane %v4059, 4
      %v4062 = vor.u32 %v4061, %v4057
      %v4063 = vrot.slane %v4062, 4
      %v4065 = vshll.u32 %v3906, 16
      %v4067 = vrot.slane %v4065, 5
      %v4068 = vsel %vm626, %v4063, %v4067
      %v4069 = vshrl.u32 %v3906, 16
      %v4071 = vrot.slane %v4069, 4
      %v4072 = vor.u32 %v4071, %v4067
      %v4073 = vrot.slane %v4072, 4
      %v4075 = vshll.u32 %v3907, 16
      %v4077 = vrot.slane %v4075, 5
      %v4078 = vsel %vm626, %v4073, %v4077
      %v4079 = vshrl.u32 %v3907, 16
      %v4081 = vrot.slane %v4079, 4
      %v4082 = vor.u32 %v4081, %v4077
      %v4083 = vrot.slane %v4082, 4
      %v4085 = vshll.u32 %v3908, 16
      %v4087 = vrot.slane %v4085, 5
      %v4088 = vsel %vm626, %v4083, %v4087
      %v4089 = vshrl.u32 %v3908, 16
      %v4091 = vrot.slane %v4089, 4
      %v4092 = vor.u32 %v4091, %v4087
      %v4093 = vrot.slane %v4092, 4
      %v4095 = vshll.u32 %v3909, 16
      %v4097 = vrot.slane %v4095, 5
      %v4098 = vsel %vm626, %v4093, %v4097
      %v4099 = vshrl.u32 %v3909, 16
      %v4101 = vrot.slane %v4099, 4
      %v4102 = vor.u32 %v4101, %v4097
      %v4103 = vrot.slane %v4102, 4
      %v4105 = vshll.u32 %v3910, 16
      %v4107 = vrot.slane %v4105, 5
      %v4108 = vsel %vm626, %v4103, %v4107
      %v4109 = vshrl.u32 %v3910, 16
      %v4111 = vrot.slane %v4109, 4
      %v4112 = vor.u32 %v4111, %v4107
      %v4113 = vrot.slane %v4112, 4
      %v4115 = vshll.u32 %v3911, 16
      %v4117 = vrot.slane %v4115, 5
      %v4118 = vsel %vm626, %v4113, %v4117
      %v4119 = vshrl.u32 %v3911, 16
      %v4121 = vrot.slane %v4119, 4
      %v4122 = vor.u32 %v4121, %v4117
      %v4123 = vrot.slane %v4122, 4
      %v4125 = vshll.u32 %v3912, 16
      %v4127 = vrot.slane %v4125, 5
      %v4128 = vsel %vm626, %v4123, %v4127
      %v4129 = vshrl.u32 %v3912, 16
      %v4131 = vrot.slane %v4129, 4
      %v4132 = vor.u32 %v4131, %v4127
      %v4133 = vrot.slane %v4132, 4
      %v4135 = vshll.u32 %v3913, 16
      %v4137 = vrot.slane %v4135, 5
      %v4138 = vsel %vm626, %v4133, %v4137
      %v4139 = vshrl.u32 %v3913, 16
      %v4141 = vrot.slane %v4139, 4
      %v4142 = vor.u32 %v4141, %v4137
      %v4143 = vrot.slane %v4142, 4
      %v4145 = vshll.u32 %v3914, 16
      %v4147 = vrot.slane %v4145, 5
      %v4148 = vsel %vm626, %v4143, %v4147
      %v4149 = vshrl.u32 %v3914, 16
      %v4151 = vrot.slane %v4149, 4
      %v4152 = vor.u32 %v4151, %v4147
      %v4153 = vrot.slane %v4152, 4
      %v4155 = vshll.u32 %v3915, 16
      %v4157 = vrot.slane %v4155, 5
      %v4158 = vsel %vm626, %v4153, %v4157
      %v4159 = vshrl.u32 %v3915, 16
      %v4161 = vrot.slane %v4159, 4
      %v4162 = vor.u32 %v4161, %v4157
      %v4163 = vrot.slane %v4162, 4
      %v4165 = vshll.u32 %v3916, 16
      %v4167 = vrot.slane %v4165, 5
      %v4168 = vsel %vm626, %v4163, %v4167
      %v4169 = vshrl.u32 %v3916, 16
      %v4171 = vrot.slane %v4169, 4
      %v4172 = vor.u32 %v4171, %v4167
      %v4173 = vrot.slane %v4172, 4
      %v4175 = vshll.u32 %v3917, 16
      %v4177 = vrot.slane %v4175, 5
      %v4178 = vsel %vm626, %v4173, %v4177
      %v4179 = vshrl.u32 %v3917, 16
      %v4181 = vrot.slane %v4179, 4
      %v4182 = vor.u32 %v4181, %v4177
      %v4183 = vrot.slane %v4182, 4
      %v4185 = vshll.u32 %v3918, 16
      %v4187 = vrot.slane %v4185, 5
      %v4188 = vsel %vm626, %v4183, %v4187
      %v4189 = vshrl.u32 %v3918, 16
      %v4191 = vrot.slane %v4189, 4
      %v4192 = vor.u32 %v4191, %v4187
      %v4193 = vrot.slane %v4192, 4
      %v4195 = vshll.u32 %v3919, 16
      %v4197 = vrot.slane %v4195, 5
      %v4198 = vsel %vm626, %v4193, %v4197
      %v4199 = vshrl.u32 %v3919, 16
      %v4201 = vrot.slane %v4199, 4
      %v4202 = vor.u32 %v4201, %v4197
      %v4203 = vrot.slane %v4202, 4
      %v4205 = vshll.u32 %v3920, 16
      %v4207 = vrot.slane %v4205, 5
      %v4208 = vsel %vm626, %v4203, %v4207
      %v4209 = vshrl.u32 %v3920, 16
      %v4211 = vrot.slane %v4209, 4
      %v4212 = vor.u32 %v4211, %v4207
      %v4213 = vrot.slane %v4212, 4
      %v4215 = vshll.u32 %v3921, 16
      %v4217 = vrot.slane %v4215, 5
      %v4218 = vsel %vm626, %v4213, %v4217
      %v4219 = vshrl.u32 %v3921, 16
      %v4221 = vrot.slane %v4219, 4
      %v4222 = vor.u32 %v4221, %v4217
      %v4223 = vrot.slane %v4222, 4
      %v4225 = vshll.u32 %v3922, 16
      %v4227 = vrot.slane %v4225, 5
      %v4228 = vsel %vm626, %v4223, %v4227
      %v4229 = vshrl.u32 %v3922, 16
      %v4231 = vrot.slane %v4229, 4
      %v4232 = vor.u32 %v4231, %v4227
      %v4233 = vrot.slane %v4232, 4
      %v4235 = vshll.u32 %v3923, 16
      %v4237 = vrot.slane %v4235, 5
      %v4238 = vsel %vm626, %v4233, %v4237
      %v4239 = vshrl.u32 %v3923, 16
      %v4241 = vrot.slane %v4239, 4
      %v4242 = vor.u32 %v4241, %v4237
      %v4243 = vrot.slane %v4242, 4
      %v4245 = vshll.u32 %v3924, 16
      %v4247 = vrot.slane %v4245, 5
      %v4248 = vsel %vm626, %v4243, %v4247
      %4281 = vst [vmem:[#allocation3 + $0x20] sm:$0xf] %v3938
      %4282 = vst [vmem:[#allocation3 + $0x44] sm:$0xf] %v3948
      %4283 = vst [vmem:[#allocation3 + $0x68] sm:$0xf] %v3958
      %4284 = vst [vmem:[#allocation3 + $0x8c] sm:$0xf] %v3968
      %4285 = vst [vmem:[#allocation3 + $0xb0] sm:$0xf] %v3978
      %4286 = vst [vmem:[#allocation3 + $0xd4] sm:$0xf] %v3988
      %4287 = vst [vmem:[#allocation3 + $0xf8] sm:$0xf] %v3998
      %4288 = vst [vmem:[#allocation3 + $0x11c] sm:$0xf] %v4008
      %4289 = vst [vmem:[#allocation3 + $0x140] sm:$0xf] %v4018
      %4290 = vst [vmem:[#allocation3 + $0x164] sm:$0xf] %v4028
      %4291 = vst [vmem:[#allocation3 + $0x188] sm:$0xf] %v4038
      %4292 = vst [vmem:[#allocation3 + $0x1ac] sm:$0xf] %v4048
      %4293 = vst [vmem:[#allocation3 + $0x1d0] sm:$0xf] %v4058
      %4294 = vst [vmem:[#allocation3 + $0x1f4] sm:$0xf] %v4068
      %4295 = vst [vmem:[#allocation3 + $0x218] sm:$0xf] %v4078
      %4296 = vst [vmem:[#allocation3 + $0x23c] sm:$0xf] %v4088
      %4297 = vst [vmem:[#allocation3 + $0x260] sm:$0xf] %v4098
      %4298 = vst [vmem:[#allocation3 + $0x284] sm:$0xf] %v4108
      %4299 = vst [vmem:[#allocation3 + $0x2a8] sm:$0xf] %v4118
      %4300 = vst [vmem:[#allocation3 + $0x2cc] sm:$0xf] %v4128
      %4301 = vst [vmem:[#allocation3 + $0x2f0] sm:$0xf] %v4138
      %4302 = vst [vmem:[#allocation3 + $0x314] sm:$0xf] %v4148
      %4303 = vst [vmem:[#allocation3 + $0x338] sm:$0xf] %v4158
      %4304 = vst [vmem:[#allocation3 + $0x35c] sm:$0xf] %v4168
      %4305 = vst [vmem:[#allocation3 + $0x380] sm:$0xf] %v4178
      %4306 = vst [vmem:[#allocation3 + $0x3a4] sm:$0xf] %v4188
      %4307 = vst [vmem:[#allocation3 + $0x3c8] sm:$0xf] %v4198
      %4308 = vst [vmem:[#allocation3 + $0x3ec] sm:$0xf] %v4208
      %4309 = vst [vmem:[#allocation3 + $0x410] sm:$0xf] %v4218
      %4310 = vst [vmem:[#allocation3 + $0x434] sm:$0xf] %v4228
      %4311 = vst [vmem:[#allocation3 + $0x458] sm:$0xf] %v4238
      %4312 = vst [vmem:[#allocation3 + $0x47c] sm:$0xf] %v4248
      %v4313 = vld [vmem:[#allocation3] sm:$0xff]
      %v4314 = vld [vmem:[#allocation3 + $0x8] sm:$0xff]
      %v4315 = vld [vmem:[#allocation3 + $0x10] sm:$0xff]
      %v4316 = vld [vmem:[#allocation3 + $0x18] sm:$0xff]
      %v4317 = vld [vmem:[#allocation3 + $0x20] sm:$0xf]
      %v4318 = vld [vmem:[#allocation3 + $0x24] sm:$0xff]
      %v4319 = vld [vmem:[#allocation3 + $0x2c] sm:$0xff]
      %v4320 = vld [vmem:[#allocation3 + $0x34] sm:$0xff]
      %v4321 = vld [vmem:[#allocation3 + $0x3c] sm:$0xff]
      %v4322 = vld [vmem:[#allocation3 + $0x44] sm:$0xf]
      %v4323 = vld [vmem:[#allocation3 + $0x48] sm:$0xff]
      %v4324 = vld [vmem:[#allocation3 + $0x50] sm:$0xff]
      %v4325 = vld [vmem:[#allocation3 + $0x58] sm:$0xff]
      %v4326 = vld [vmem:[#allocation3 + $0x60] sm:$0xff]
      %v4327 = vld [vmem:[#allocation3 + $0x68] sm:$0xf]
      %v4328 = vld [vmem:[#allocation3 + $0x6c] sm:$0xff]
      %v4329 = vld [vmem:[#allocation3 + $0x74] sm:$0xff]
      %v4330 = vld [vmem:[#allocation3 + $0x7c] sm:$0xff]
      %v4331 = vld [vmem:[#allocation3 + $0x84] sm:$0xff]
      %v4332 = vld [vmem:[#allocation3 + $0x8c] sm:$0xf]
      %v4333 = vld [vmem:[#allocation3 + $0x90] sm:$0xff]
      %v4334 = vld [vmem:[#allocation3 + $0x98] sm:$0xff]
      %v4335 = vld [vmem:[#allocation3 + $0xa0] sm:$0xff]
      %v4336 = vld [vmem:[#allocation3 + $0xa8] sm:$0xff]
      %v4337 = vld [vmem:[#allocation3 + $0xb0] sm:$0xf]
      %v4338 = vld [vmem:[#allocation3 + $0xb4] sm:$0xff]
      %v4339 = vld [vmem:[#allocation3 + $0xbc] sm:$0xff]
      %v4340 = vld [vmem:[#allocation3 + $0xc4] sm:$0xff]
      %v4341 = vld [vmem:[#allocation3 + $0xcc] sm:$0xff]
      %v4342 = vld [vmem:[#allocation3 + $0xd4] sm:$0xf]
      %v4343 = vld [vmem:[#allocation3 + $0xd8] sm:$0xff]
      %v4344 = vld [vmem:[#allocation3 + $0xe0] sm:$0xff]
      %v4345 = vld [vmem:[#allocation3 + $0xe8] sm:$0xff]
      %v4346 = vld [vmem:[#allocation3 + $0xf0] sm:$0xff]
      %v4347 = vld [vmem:[#allocation3 + $0xf8] sm:$0xf]
      %v4348 = vld [vmem:[#allocation3 + $0xfc] sm:$0xff]
      %v4349 = vld [vmem:[#allocation3 + $0x104] sm:$0xff]
      %v4350 = vld [vmem:[#allocation3 + $0x10c] sm:$0xff]
      %v4351 = vld [vmem:[#allocation3 + $0x114] sm:$0xff]
      %v4352 = vld [vmem:[#allocation3 + $0x11c] sm:$0xf]
      %v4353 = vld [vmem:[#allocation3 + $0x120] sm:$0xff]
      %v4354 = vld [vmem:[#allocation3 + $0x128] sm:$0xff]
      %v4355 = vld [vmem:[#allocation3 + $0x130] sm:$0xff]
      %v4356 = vld [vmem:[#allocation3 + $0x138] sm:$0xff]
      %v4357 = vld [vmem:[#allocation3 + $0x140] sm:$0xf]
      %v4358 = vld [vmem:[#allocation3 + $0x144] sm:$0xff]
      %v4359 = vld [vmem:[#allocation3 + $0x14c] sm:$0xff]
      %v4360 = vld [vmem:[#allocation3 + $0x154] sm:$0xff]
      %v4361 = vld [vmem:[#allocation3 + $0x15c] sm:$0xff]
      %v4362 = vld [vmem:[#allocation3 + $0x164] sm:$0xf]
      %v4363 = vld [vmem:[#allocation3 + $0x168] sm:$0xff]
      %v4364 = vld [vmem:[#allocation3 + $0x170] sm:$0xff]
      %v4365 = vld [vmem:[#allocation3 + $0x178] sm:$0xff]
      %v4366 = vld [vmem:[#allocation3 + $0x180] sm:$0xff]
      %v4367 = vld [vmem:[#allocation3 + $0x188] sm:$0xf]
      %v4368 = vld [vmem:[#allocation3 + $0x18c] sm:$0xff]
      %v4369 = vld [vmem:[#allocation3 + $0x194] sm:$0xff]
      %v4370 = vld [vmem:[#allocation3 + $0x19c] sm:$0xff]
      %v4371 = vld [vmem:[#allocation3 + $0x1a4] sm:$0xff]
      %v4372 = vld [vmem:[#allocation3 + $0x1ac] sm:$0xf]
      %v4373 = vld [vmem:[#allocation3 + $0x1b0] sm:$0xff]
      %v4374 = vld [vmem:[#allocation3 + $0x1b8] sm:$0xff]
      %v4375 = vld [vmem:[#allocation3 + $0x1c0] sm:$0xff]
      %v4376 = vld [vmem:[#allocation3 + $0x1c8] sm:$0xff]
      %v4377 = vld [vmem:[#allocation3 + $0x1d0] sm:$0xf]
      %v4378 = vld [vmem:[#allocation3 + $0x1d4] sm:$0xff]
      %v4379 = vld [vmem:[#allocation3 + $0x1dc] sm:$0xff]
      %v4380 = vld [vmem:[#allocation3 + $0x1e4] sm:$0xff]
      %v4381 = vld [vmem:[#allocation3 + $0x1ec] sm:$0xff]
      %v4382 = vld [vmem:[#allocation3 + $0x1f4] sm:$0xf]
      %v4383 = vld [vmem:[#allocation3 + $0x1f8] sm:$0xff]
      %v4384 = vld [vmem:[#allocation3 + $0x200] sm:$0xff]
      %v4385 = vld [vmem:[#allocation3 + $0x208] sm:$0xff]
      %v4386 = vld [vmem:[#allocation3 + $0x210] sm:$0xff]
      %v4387 = vld [vmem:[#allocation3 + $0x218] sm:$0xf]
      %v4388 = vld [vmem:[#allocation3 + $0x21c] sm:$0xff]
      %v4389 = vld [vmem:[#allocation3 + $0x224] sm:$0xff]
      %v4390 = vld [vmem:[#allocation3 + $0x22c] sm:$0xff]
      %v4391 = vld [vmem:[#allocation3 + $0x234] sm:$0xff]
      %v4392 = vld [vmem:[#allocation3 + $0x23c] sm:$0xf]
      %v4393 = vld [vmem:[#allocation3 + $0x240] sm:$0xff]
      %v4394 = vld [vmem:[#allocation3 + $0x248] sm:$0xff]
      %v4395 = vld [vmem:[#allocation3 + $0x250] sm:$0xff]
      %v4396 = vld [vmem:[#allocation3 + $0x258] sm:$0xff]
      %v4397 = vld [vmem:[#allocation3 + $0x260] sm:$0xf]
      %v4398 = vld [vmem:[#allocation3 + $0x264] sm:$0xff]
      %v4399 = vld [vmem:[#allocation3 + $0x26c] sm:$0xff]
      %v4400 = vld [vmem:[#allocation3 + $0x274] sm:$0xff]
      %v4401 = vld [vmem:[#allocation3 + $0x27c] sm:$0xff]
      %v4402 = vld [vmem:[#allocation3 + $0x284] sm:$0xf]
      %v4403 = vld [vmem:[#allocation3 + $0x288] sm:$0xff]
      %v4404 = vld [vmem:[#allocation3 + $0x290] sm:$0xff]
      %v4405 = vld [vmem:[#allocation3 + $0x298] sm:$0xff]
      %v4406 = vld [vmem:[#allocation3 + $0x2a0] sm:$0xff]
      %v4407 = vld [vmem:[#allocation3 + $0x2a8] sm:$0xf]
      %v4408 = vld [vmem:[#allocation3 + $0x2ac] sm:$0xff]
      %v4409 = vld [vmem:[#allocation3 + $0x2b4] sm:$0xff]
      %v4410 = vld [vmem:[#allocation3 + $0x2bc] sm:$0xff]
      %v4411 = vld [vmem:[#allocation3 + $0x2c4] sm:$0xff]
      %v4412 = vld [vmem:[#allocation3 + $0x2cc] sm:$0xf]
      %v4413 = vld [vmem:[#allocation3 + $0x2d0] sm:$0xff]
      %v4414 = vld [vmem:[#allocation3 + $0x2d8] sm:$0xff]
      %v4415 = vld [vmem:[#allocation3 + $0x2e0] sm:$0xff]
      %v4416 = vld [vmem:[#allocation3 + $0x2e8] sm:$0xff]
      %v4417 = vld [vmem:[#allocation3 + $0x2f0] sm:$0xf]
      %v4418 = vld [vmem:[#allocation3 + $0x2f4] sm:$0xff]
      %v4419 = vld [vmem:[#allocation3 + $0x2fc] sm:$0xff]
      %v4420 = vld [vmem:[#allocation3 + $0x304] sm:$0xff]
      %v4421 = vld [vmem:[#allocation3 + $0x30c] sm:$0xff]
      %v4422 = vld [vmem:[#allocation3 + $0x314] sm:$0xf]
      %v4423 = vld [vmem:[#allocation3 + $0x318] sm:$0xff]
      %v4424 = vld [vmem:[#allocation3 + $0x320] sm:$0xff]
      %v4425 = vld [vmem:[#allocation3 + $0x328] sm:$0xff]
      %v4426 = vld [vmem:[#allocation3 + $0x330] sm:$0xff]
      %v4427 = vld [vmem:[#allocation3 + $0x338] sm:$0xf]
      %v4428 = vld [vmem:[#allocation3 + $0x33c] sm:$0xff]
      %v4429 = vld [vmem:[#allocation3 + $0x344] sm:$0xff]
      %v4430 = vld [vmem:[#allocation3 + $0x34c] sm:$0xff]
      %v4431 = vld [vmem:[#allocation3 + $0x354] sm:$0xff]
      %v4432 = vld [vmem:[#allocation3 + $0x35c] sm:$0xf]
      %v4433 = vld [vmem:[#allocation3 + $0x360] sm:$0xff]
      %v4434 = vld [vmem:[#allocation3 + $0x368] sm:$0xff]
      %v4435 = vld [vmem:[#allocation3 + $0x370] sm:$0xff]
      %v4436 = vld [vmem:[#allocation3 + $0x378] sm:$0xff]
      %v4437 = vld [vmem:[#allocation3 + $0x380] sm:$0xf]
      %v4438 = vld [vmem:[#allocation3 + $0x384] sm:$0xff]
      %v4439 = vld [vmem:[#allocation3 + $0x38c] sm:$0xff]
      %v4440 = vld [vmem:[#allocation3 + $0x394] sm:$0xff]
      %v4441 = vld [vmem:[#allocation3 + $0x39c] sm:$0xff]
      %v4442 = vld [vmem:[#allocation3 + $0x3a4] sm:$0xf]
      %v4443 = vld [vmem:[#allocation3 + $0x3a8] sm:$0xff]
      %v4444 = vld [vmem:[#allocation3 + $0x3b0] sm:$0xff]
      %v4445 = vld [vmem:[#allocation3 + $0x3b8] sm:$0xff]
      %v4446 = vld [vmem:[#allocation3 + $0x3c0] sm:$0xff]
      %v4447 = vld [vmem:[#allocation3 + $0x3c8] sm:$0xf]
      %v4448 = vld [vmem:[#allocation3 + $0x3cc] sm:$0xff]
      %v4449 = vld [vmem:[#allocation3 + $0x3d4] sm:$0xff]
      %v4450 = vld [vmem:[#allocation3 + $0x3dc] sm:$0xff]
      %v4451 = vld [vmem:[#allocation3 + $0x3e4] sm:$0xff]
      %v4452 = vld [vmem:[#allocation3 + $0x3ec] sm:$0xf]
      %v4453 = vld [vmem:[#allocation3 + $0x3f0] sm:$0xff]
      %v4454 = vld [vmem:[#allocation3 + $0x3f8] sm:$0xff]
      %v4455 = vld [vmem:[#allocation3 + $0x400] sm:$0xff]
      %v4456 = vld [vmem:[#allocation3 + $0x408] sm:$0xff]
      %v4457 = vld [vmem:[#allocation3 + $0x410] sm:$0xf]
      %v4458 = vld [vmem:[#allocation3 + $0x414] sm:$0xff]
      %v4459 = vld [vmem:[#allocation3 + $0x41c] sm:$0xff]
      %v4460 = vld [vmem:[#allocation3 + $0x424] sm:$0xff]
      %v4461 = vld [vmem:[#allocation3 + $0x42c] sm:$0xff]
      %v4462 = vld [vmem:[#allocation3 + $0x434] sm:$0xf]
      %v4463 = vld [vmem:[#allocation3 + $0x438] sm:$0xff]
      %v4464 = vld [vmem:[#allocation3 + $0x440] sm:$0xff]
      %v4465 = vld [vmem:[#allocation3 + $0x448] sm:$0xff]
      %v4466 = vld [vmem:[#allocation3 + $0x450] sm:$0xff]
      %v4467 = vld [vmem:[#allocation3 + $0x458] sm:$0xf]
      %v4468 = vld [vmem:[#allocation3 + $0x45c] sm:$0xff]
      %v4469 = vld [vmem:[#allocation3 + $0x464] sm:$0xff]
      %v4470 = vld [vmem:[#allocation3 + $0x46c] sm:$0xff]
      %v4471 = vld [vmem:[#allocation3 + $0x474] sm:$0xff]
      %v4472 = vld [vmem:[#allocation3 + $0x47c] sm:$0xf]
      %v4473 = vld [vmem:[%s1] sm:$0xf]
      %v4474 = vld [vmem:[%s1 + $0x4] sm:$0xf]
      %v4475 = vld [vmem:[%s1 + $0x8] sm:$0xf]
      %v4476 = vld [vmem:[%s1 + $0xc] sm:$0xf]
      %v4477 = vld [vmem:[%s1 + $0x10] sm:$0xf]
      %v4478 = vld [vmem:[%s1 + $0x14] sm:$0xf]
      %v4479 = vld [vmem:[%s1 + $0x18] sm:$0xf]
      %v4480 = vld [vmem:[%s1 + $0x1c] sm:$0xf]
      %v4481 = vld [vmem:[%s1 + $0x20] sm:$0xf]
      %v4482 = vld [vmem:[%s1 + $0x24] sm:$0xf]
      %v4483 = vld [vmem:[%s1 + $0x28] sm:$0xf]
      %v4484 = vld [vmem:[%s1 + $0x2c] sm:$0xf]
      %v4485 = vld [vmem:[%s1 + $0x30] sm:$0xf]
      %v4486 = vld [vmem:[%s1 + $0x34] sm:$0xf]
      %v4487 = vld [vmem:[%s1 + $0x38] sm:$0xf]
      %v4488 = vld [vmem:[%s1 + $0x3c] sm:$0xf]
      %v4489 = vld [vmem:[%s1 + $0x40] sm:$0xf]
      %v4490 = vld [vmem:[%s1 + $0x44] sm:$0xf]
      %v4491 = vld [vmem:[%s1 + $0x48] sm:$0xf]
      %v4492 = vld [vmem:[%s1 + $0x4c] sm:$0xf]
      %v4493 = vld [vmem:[%s1 + $0x50] sm:$0xf]
      %v4494 = vld [vmem:[%s1 + $0x54] sm:$0xf]
      %v4495 = vld [vmem:[%s1 + $0x58] sm:$0xf]
      %v4496 = vld [vmem:[%s1 + $0x5c] sm:$0xf]
      %v4497 = vld [vmem:[%s1 + $0x60] sm:$0xf]
      %v4498 = vld [vmem:[%s1 + $0x64] sm:$0xf]
      %v4499 = vld [vmem:[%s1 + $0x68] sm:$0xf]
      %v4500 = vld [vmem:[%s1 + $0x6c] sm:$0xf]
      %v4501 = vld [vmem:[%s1 + $0x70] sm:$0xf]
      %v4502 = vld [vmem:[%s1 + $0x74] sm:$0xf]
      %v4503 = vld [vmem:[%s1 + $0x78] sm:$0xf]
      %v4504 = vld [vmem:[%s1 + $0x7c] sm:$0xf]
      %v4505 = vld [vmem:[%s1 + $0x80] sm:$0xf]
      %v4506 = vld [vmem:[%s1 + $0x84] sm:$0xf]
      %v4507 = vld [vmem:[%s1 + $0x88] sm:$0xf]
      %v4508 = vld [vmem:[%s1 + $0x8c] sm:$0xf]
      %v4509 = vld [vmem:[%s1 + $0x90] sm:$0xf]
      %v4510 = vld [vmem:[%s1 + $0x94] sm:$0xf]
      %v4511 = vld [vmem:[%s1 + $0x98] sm:$0xf]
      %v4512 = vld [vmem:[%s1 + $0x9c] sm:$0xf]
      %v4513 = vld [vmem:[%s1 + $0xa0] sm:$0xf]
      %v4514 = vld [vmem:[%s1 + $0xa4] sm:$0xf]
      %v4515 = vld [vmem:[%s1 + $0xa8] sm:$0xf]
      %v4516 = vld [vmem:[%s1 + $0xac] sm:$0xf]
      %v4517 = vld [vmem:[%s1 + $0xb0] sm:$0xf]
      %v4518 = vld [vmem:[%s1 + $0xb4] sm:$0xf]
      %v4519 = vld [vmem:[%s1 + $0xb8] sm:$0xf]
      %v4520 = vld [vmem:[%s1 + $0xbc] sm:$0xf]
      %v4521 = vld [vmem:[%s1 + $0xc0] sm:$0xf]
      %v4522 = vld [vmem:[%s1 + $0xc4] sm:$0xf]
      %v4523 = vld [vmem:[%s1 + $0xc8] sm:$0xf]
      %v4524 = vld [vmem:[%s1 + $0xcc] sm:$0xf]
      %v4525 = vld [vmem:[%s1 + $0xd0] sm:$0xf]
      %v4526 = vld [vmem:[%s1 + $0xd4] sm:$0xf]
      %v4527 = vld [vmem:[%s1 + $0xd8] sm:$0xf]
      %v4528 = vld [vmem:[%s1 + $0xdc] sm:$0xf]
      %v4529 = vld [vmem:[%s1 + $0xe0] sm:$0xf]
      %v4530 = vld [vmem:[%s1 + $0xe4] sm:$0xf]
      %v4531 = vld [vmem:[%s1 + $0xe8] sm:$0xf]
      %v4532 = vld [vmem:[%s1 + $0xec] sm:$0xf]
      %v4533 = vld [vmem:[%s1 + $0xf0] sm:$0xf]
      %v4534 = vld [vmem:[%s1 + $0xf4] sm:$0xf]
      %v4535 = vld [vmem:[%s1 + $0xf8] sm:$0xf]
      %v4536 = vld [vmem:[%s1 + $0xfc] sm:$0xf]
      %v4537 = vld [vmem:[%s1 + $0x100] sm:$0xf]
      %v4538 = vld [vmem:[%s1 + $0x104] sm:$0xf]
      %v4539 = vld [vmem:[%s1 + $0x108] sm:$0xf]
      %v4540 = vld [vmem:[%s1 + $0x10c] sm:$0xf]
      %v4541 = vld [vmem:[%s1 + $0x110] sm:$0xf]
      %v4542 = vld [vmem:[%s1 + $0x114] sm:$0xf]
      %v4543 = vld [vmem:[%s1 + $0x118] sm:$0xf]
      %v4544 = vld [vmem:[%s1 + $0x11c] sm:$0xf]
      %v4545 = vld [vmem:[%s1 + $0x120] sm:$0xf]
      %v4546 = vld [vmem:[%s1 + $0x124] sm:$0xf]
      %v4547 = vld [vmem:[%s1 + $0x128] sm:$0xf]
      %v4548 = vld [vmem:[%s1 + $0x12c] sm:$0xf]
      %v4549 = vld [vmem:[%s1 + $0x130] sm:$0xf]
      %v4550 = vld [vmem:[%s1 + $0x134] sm:$0xf]
      %v4551 = vld [vmem:[%s1 + $0x138] sm:$0xf]
      %v4552 = vld [vmem:[%s1 + $0x13c] sm:$0xf]
      %v4553 = vld [vmem:[%s1 + $0x140] sm:$0xf]
      %v4554 = vld [vmem:[%s1 + $0x144] sm:$0xf]
      %v4555 = vld [vmem:[%s1 + $0x148] sm:$0xf]
      %v4556 = vld [vmem:[%s1 + $0x14c] sm:$0xf]
      %v4557 = vld [vmem:[%s1 + $0x150] sm:$0xf]
      %v4558 = vld [vmem:[%s1 + $0x154] sm:$0xf]
      %v4559 = vld [vmem:[%s1 + $0x158] sm:$0xf]
      %v4560 = vld [vmem:[%s1 + $0x15c] sm:$0xf]
      %v4561 = vld [vmem:[%s1 + $0x160] sm:$0xf]
      %v4562 = vld [vmem:[%s1 + $0x164] sm:$0xf]
      %v4563 = vld [vmem:[%s1 + $0x168] sm:$0xf]
      %v4564 = vld [vmem:[%s1 + $0x16c] sm:$0xf]
      %v4565 = vld [vmem:[%s1 + $0x170] sm:$0xf]
      %v4566 = vld [vmem:[%s1 + $0x174] sm:$0xf]
      %v4567 = vld [vmem:[%s1 + $0x178] sm:$0xf]
      %v4568 = vld [vmem:[%s1 + $0x17c] sm:$0xf]
      %v4569 = vld [vmem:[%s1 + $0x180] sm:$0xf]
      %v4570 = vld [vmem:[%s1 + $0x184] sm:$0xf]
      %v4571 = vld [vmem:[%s1 + $0x188] sm:$0xf]
      %v4572 = vld [vmem:[%s1 + $0x18c] sm:$0xf]
      %v4573 = vld [vmem:[%s1 + $0x190] sm:$0xf]
      %v4574 = vld [vmem:[%s1 + $0x194] sm:$0xf]
      %v4575 = vld [vmem:[%s1 + $0x198] sm:$0xf]
      %v4576 = vld [vmem:[%s1 + $0x19c] sm:$0xf]
      %v4577 = vld [vmem:[%s1 + $0x1a0] sm:$0xf]
      %v4578 = vld [vmem:[%s1 + $0x1a4] sm:$0xf]
      %v4579 = vld [vmem:[%s1 + $0x1a8] sm:$0xf]
      %v4580 = vld [vmem:[%s1 + $0x1ac] sm:$0xf]
      %v4581 = vld [vmem:[%s1 + $0x1b0] sm:$0xf]
      %v4582 = vld [vmem:[%s1 + $0x1b4] sm:$0xf]
      %v4583 = vld [vmem:[%s1 + $0x1b8] sm:$0xf]
      %v4584 = vld [vmem:[%s1 + $0x1bc] sm:$0xf]
      %v4585 = vld [vmem:[%s1 + $0x1c0] sm:$0xf]
      %v4586 = vld [vmem:[%s1 + $0x1c4] sm:$0xf]
      %v4587 = vld [vmem:[%s1 + $0x1c8] sm:$0xf]
      %v4588 = vld [vmem:[%s1 + $0x1cc] sm:$0xf]
      %v4589 = vld [vmem:[%s1 + $0x1d0] sm:$0xf]
      %v4590 = vld [vmem:[%s1 + $0x1d4] sm:$0xf]
      %v4591 = vld [vmem:[%s1 + $0x1d8] sm:$0xf]
      %v4592 = vld [vmem:[%s1 + $0x1dc] sm:$0xf]
      %v4593 = vld [vmem:[%s1 + $0x1e0] sm:$0xf]
      %v4594 = vld [vmem:[%s1 + $0x1e4] sm:$0xf]
      %v4595 = vld [vmem:[%s1 + $0x1e8] sm:$0xf]
      %v4596 = vld [vmem:[%s1 + $0x1ec] sm:$0xf]
      %v4597 = vld [vmem:[%s1 + $0x1f0] sm:$0xf]
      %v4598 = vld [vmem:[%s1 + $0x1f4] sm:$0xf]
      %v4599 = vld [vmem:[%s1 + $0x1f8] sm:$0xf]
      %v4600 = vld [vmem:[%s1 + $0x1fc] sm:$0xf]
      %v4601 = vld [vmem:[%s1 + $0x200] sm:$0xf]
      %v4602 = vld [vmem:[%s1 + $0x204] sm:$0xf]
      %v4603 = vld [vmem:[%s1 + $0x208] sm:$0xf]
      %v4604 = vld [vmem:[%s1 + $0x20c] sm:$0xf]
      %v4605 = vld [vmem:[%s1 + $0x210] sm:$0xf]
      %v4606 = vld [vmem:[%s1 + $0x214] sm:$0xf]
      %v4607 = vld [vmem:[%s1 + $0x218] sm:$0xf]
      %v4608 = vld [vmem:[%s1 + $0x21c] sm:$0xf]
      %v4609 = vld [vmem:[%s1 + $0x220] sm:$0xf]
      %v4610 = vld [vmem:[%s1 + $0x224] sm:$0xf]
      %v4611 = vld [vmem:[%s1 + $0x228] sm:$0xf]
      %v4612 = vld [vmem:[%s1 + $0x22c] sm:$0xf]
      %v4613 = vld [vmem:[%s1 + $0x230] sm:$0xf]
      %v4614 = vld [vmem:[%s1 + $0x234] sm:$0xf]
      %v4615 = vld [vmem:[%s1 + $0x238] sm:$0xf]
      %v4616 = vld [vmem:[%s1 + $0x23c] sm:$0xf]
      %v4617 = vld [vmem:[%s2] sm:$0x1]
      %v4619 = vlaneseq
      %v4620 = vshrl.u32 %v4619, 7
      %v4621 = vsub.s32 0, %v4620
      %v4622 = vrot.slane %v4617, %v4621
      %v4784 = vunpack.c.l.b16 %v4313
      %v4785 = vunpack.c.h.b16 %v4313
      %v4786 = vunpack.c.l.b16 %v4314
      %v4787 = vunpack.c.h.b16 %v4314
      %v4788 = vunpack.c.l.b16 %v4315
      %v4789 = vunpack.c.h.b16 %v4315
      %v4790 = vunpack.c.l.b16 %v4316
      %v4791 = vunpack.c.h.b16 %v4316
      %v4792 = vunpack.c.l.b16 %v4317
      %v4793 = vunpack.c.l.b16 %v4318
      %v4794 = vunpack.c.h.b16 %v4318
      %v4795 = vunpack.c.l.b16 %v4319
      %v4796 = vunpack.c.h.b16 %v4319
      %v4797 = vunpack.c.l.b16 %v4320
      %v4798 = vunpack.c.h.b16 %v4320
      %v4799 = vunpack.c.l.b16 %v4321
      %v4800 = vunpack.c.h.b16 %v4321
      %v4801 = vunpack.c.l.b16 %v4322
      %v4802 = vunpack.c.l.b16 %v4323
      %v4803 = vunpack.c.h.b16 %v4323
      %v4804 = vunpack.c.l.b16 %v4324
      %v4805 = vunpack.c.h.b16 %v4324
      %v4806 = vunpack.c.l.b16 %v4325
      %v4807 = vunpack.c.h.b16 %v4325
      %v4808 = vunpack.c.l.b16 %v4326
      %v4809 = vunpack.c.h.b16 %v4326
      %v4810 = vunpack.c.l.b16 %v4327
      %v4811 = vunpack.c.l.b16 %v4328
      %v4812 = vunpack.c.h.b16 %v4328
      %v4813 = vunpack.c.l.b16 %v4329
      %v4814 = vunpack.c.h.b16 %v4329
      %v4815 = vunpack.c.l.b16 %v4330
      %v4816 = vunpack.c.h.b16 %v4330
      %v4817 = vunpack.c.l.b16 %v4331
      %v4818 = vunpack.c.h.b16 %v4331
      %v4819 = vunpack.c.l.b16 %v4332
      %v4820 = vunpack.c.l.b16 %v4333
      %v4821 = vunpack.c.h.b16 %v4333
      %v4822 = vunpack.c.l.b16 %v4334
      %v4823 = vunpack.c.h.b16 %v4334
      %v4824 = vunpack.c.l.b16 %v4335
      %v4825 = vunpack.c.h.b16 %v4335
      %v4826 = vunpack.c.l.b16 %v4336
      %v4827 = vunpack.c.h.b16 %v4336
      %v4828 = vunpack.c.l.b16 %v4337
      %v4829 = vunpack.c.l.b16 %v4338
      %v4830 = vunpack.c.h.b16 %v4338
      %v4831 = vunpack.c.l.b16 %v4339
      %v4832 = vunpack.c.h.b16 %v4339
      %v4833 = vunpack.c.l.b16 %v4340
      %v4834 = vunpack.c.h.b16 %v4340
      %v4835 = vunpack.c.l.b16 %v4341
      %v4836 = vunpack.c.h.b16 %v4341
      %v4837 = vunpack.c.l.b16 %v4342
      %v4838 = vunpack.c.l.b16 %v4343
      %v4839 = vunpack.c.h.b16 %v4343
      %v4840 = vunpack.c.l.b16 %v4344
      %v4841 = vunpack.c.h.b16 %v4344
      %v4842 = vunpack.c.l.b16 %v4345
      %v4843 = vunpack.c.h.b16 %v4345
      %v4844 = vunpack.c.l.b16 %v4346
      %v4845 = vunpack.c.h.b16 %v4346
      %v4846 = vunpack.c.l.b16 %v4347
      %v4847 = vunpack.c.l.b16 %v4348
      %v4848 = vunpack.c.h.b16 %v4348
      %v4849 = vunpack.c.l.b16 %v4349
      %v4850 = vunpack.c.h.b16 %v4349
      %v4851 = vunpack.c.l.b16 %v4350
      %v4852 = vunpack.c.h.b16 %v4350
      %v4853 = vunpack.c.l.b16 %v4351
      %v4854 = vunpack.c.h.b16 %v4351
      %v4855 = vunpack.c.l.b16 %v4352
      %v4856 = vunpack.c.l.b16 %v4353
      %v4857 = vunpack.c.h.b16 %v4353
      %v4858 = vunpack.c.l.b16 %v4354
      %v4859 = vunpack.c.h.b16 %v4354
      %v4860 = vunpack.c.l.b16 %v4355
      %v4861 = vunpack.c.h.b16 %v4355
      %v4862 = vunpack.c.l.b16 %v4356
      %v4863 = vunpack.c.h.b16 %v4356
      %v4864 = vunpack.c.l.b16 %v4357
      %v4865 = vunpack.c.l.b16 %v4358
      %v4866 = vunpack.c.h.b16 %v4358
      %v4867 = vunpack.c.l.b16 %v4359
      %v4868 = vunpack.c.h.b16 %v4359
      %v4869 = vunpack.c.l.b16 %v4360
      %v4870 = vunpack.c.h.b16 %v4360
      %v4871 = vunpack.c.l.b16 %v4361
      %v4872 = vunpack.c.h.b16 %v4361
      %v4873 = vunpack.c.l.b16 %v4362
      %v4874 = vunpack.c.l.b16 %v4363
      %v4875 = vunpack.c.h.b16 %v4363
      %v4876 = vunpack.c.l.b16 %v4364
      %v4877 = vunpack.c.h.b16 %v4364
      %v4878 = vunpack.c.l.b16 %v4365
      %v4879 = vunpack.c.h.b16 %v4365
      %v4880 = vunpack.c.l.b16 %v4366
      %v4881 = vunpack.c.h.b16 %v4366
      %v4882 = vunpack.c.l.b16 %v4367
      %v4883 = vunpack.c.l.b16 %v4368
      %v4884 = vunpack.c.h.b16 %v4368
      %v4885 = vunpack.c.l.b16 %v4369
      %v4886 = vunpack.c.h.b16 %v4369
      %v4887 = vunpack.c.l.b16 %v4370
      %v4888 = vunpack.c.h.b16 %v4370
      %v4889 = vunpack.c.l.b16 %v4371
      %v4890 = vunpack.c.h.b16 %v4371
      %v4891 = vunpack.c.l.b16 %v4372
      %v4892 = vunpack.c.l.b16 %v4373
      %v4893 = vunpack.c.h.b16 %v4373
      %v4894 = vunpack.c.l.b16 %v4374
      %v4895 = vunpack.c.h.b16 %v4374
      %v4896 = vunpack.c.l.b16 %v4375
      %v4897 = vunpack.c.h.b16 %v4375
      %v4898 = vunpack.c.l.b16 %v4376
      %v4899 = vunpack.c.h.b16 %v4376
      %v4900 = vunpack.c.l.b16 %v4377
      %v4901 = vunpack.c.l.b16 %v4378
      %v4902 = vunpack.c.h.b16 %v4378
      %v4903 = vunpack.c.l.b16 %v4379
      %v4904 = vunpack.c.h.b16 %v4379
      %v4905 = vunpack.c.l.b16 %v4380
      %v4906 = vunpack.c.h.b16 %v4380
      %v4907 = vunpack.c.l.b16 %v4381
      %v4908 = vunpack.c.h.b16 %v4381
      %v4909 = vunpack.c.l.b16 %v4382
      %v4910 = vunpack.c.l.b16 %v4383
      %v4911 = vunpack.c.h.b16 %v4383
      %v4912 = vunpack.c.l.b16 %v4384
      %v4913 = vunpack.c.h.b16 %v4384
      %v4914 = vunpack.c.l.b16 %v4385
      %v4915 = vunpack.c.h.b16 %v4385
      %v4916 = vunpack.c.l.b16 %v4386
      %v4917 = vunpack.c.h.b16 %v4386
      %v4918 = vunpack.c.l.b16 %v4387
      %v4919 = vunpack.c.l.b16 %v4388
      %v4920 = vunpack.c.h.b16 %v4388
      %v4921 = vunpack.c.l.b16 %v4389
      %v4922 = vunpack.c.h.b16 %v4389
      %v4923 = vunpack.c.l.b16 %v4390
      %v4924 = vunpack.c.h.b16 %v4390
      %v4925 = vunpack.c.l.b16 %v4391
      %v4926 = vunpack.c.h.b16 %v4391
      %v4927 = vunpack.c.l.b16 %v4392
      %v4928 = vunpack.c.l.b16 %v4393
      %v4929 = vunpack.c.h.b16 %v4393
      %v4930 = vunpack.c.l.b16 %v4394
      %v4931 = vunpack.c.h.b16 %v4394
      %v4932 = vunpack.c.l.b16 %v4395
      %v4933 = vunpack.c.h.b16 %v4395
      %v4934 = vunpack.c.l.b16 %v4396
      %v4935 = vunpack.c.h.b16 %v4396
      %v4936 = vunpack.c.l.b16 %v4397
      %v4937 = vunpack.c.l.b16 %v4398
      %v4938 = vunpack.c.h.b16 %v4398
      %v4939 = vunpack.c.l.b16 %v4399
      %v4940 = vunpack.c.h.b16 %v4399
      %v4941 = vunpack.c.l.b16 %v4400
      %v4942 = vunpack.c.h.b16 %v4400
      %v4943 = vunpack.c.l.b16 %v4401
      %v4944 = vunpack.c.h.b16 %v4401
      %v4945 = vunpack.c.l.b16 %v4402
      %v4946 = vunpack.c.l.b16 %v4403
      %v4947 = vunpack.c.h.b16 %v4403
      %v4948 = vunpack.c.l.b16 %v4404
      %v4949 = vunpack.c.h.b16 %v4404
      %v4950 = vunpack.c.l.b16 %v4405
      %v4951 = vunpack.c.h.b16 %v4405
      %v4952 = vunpack.c.l.b16 %v4406
      %v4953 = vunpack.c.h.b16 %v4406
      %v4954 = vunpack.c.l.b16 %v4407
      %v4955 = vunpack.c.l.b16 %v4408
      %v4956 = vunpack.c.h.b16 %v4408
      %v4957 = vunpack.c.l.b16 %v4409
      %v4958 = vunpack.c.h.b16 %v4409
      %v4959 = vunpack.c.l.b16 %v4410
      %v4960 = vunpack.c.h.b16 %v4410
      %v4961 = vunpack.c.l.b16 %v4411
      %v4962 = vunpack.c.h.b16 %v4411
      %v4963 = vunpack.c.l.b16 %v4412
      %v4964 = vunpack.c.l.b16 %v4413
      %v4965 = vunpack.c.h.b16 %v4413
      %v4966 = vunpack.c.l.b16 %v4414
      %v4967 = vunpack.c.h.b16 %v4414
      %v4968 = vunpack.c.l.b16 %v4415
      %v4969 = vunpack.c.h.b16 %v4415
      %v4970 = vunpack.c.l.b16 %v4416
      %v4971 = vunpack.c.h.b16 %v4416
      %v4972 = vunpack.c.l.b16 %v4417
      %v4973 = vunpack.c.l.b16 %v4418
      %v4974 = vunpack.c.h.b16 %v4418
      %v4975 = vunpack.c.l.b16 %v4419
      %v4976 = vunpack.c.h.b16 %v4419
      %v4977 = vunpack.c.l.b16 %v4420
      %v4978 = vunpack.c.h.b16 %v4420
      %v4979 = vunpack.c.l.b16 %v4421
      %v4980 = vunpack.c.h.b16 %v4421
      %v4981 = vunpack.c.l.b16 %v4422
      %v4982 = vunpack.c.l.b16 %v4423
      %v4983 = vunpack.c.h.b16 %v4423
      %v4984 = vunpack.c.l.b16 %v4424
      %v4985 = vunpack.c.h.b16 %v4424
      %v4986 = vunpack.c.l.b16 %v4425
      %v4987 = vunpack.c.h.b16 %v4425
      %v4988 = vunpack.c.l.b16 %v4426
      %v4989 = vunpack.c.h.b16 %v4426
      %v4990 = vunpack.c.l.b16 %v4427
      %v4991 = vunpack.c.l.b16 %v4428
      %v4992 = vunpack.c.h.b16 %v4428
      %v4993 = vunpack.c.l.b16 %v4429
      %v4994 = vunpack.c.h.b16 %v4429
      %v4995 = vunpack.c.l.b16 %v4430
      %v4996 = vunpack.c.h.b16 %v4430
      %v4997 = vunpack.c.l.b16 %v4431
      %v4998 = vunpack.c.h.b16 %v4431
      %v4999 = vunpack.c.l.b16 %v4432
      %v5000 = vunpack.c.l.b16 %v4433
      %v5001 = vunpack.c.h.b16 %v4433
      %v5002 = vunpack.c.l.b16 %v4434
      %v5003 = vunpack.c.h.b16 %v4434
      %v5004 = vunpack.c.l.b16 %v4435
      %v5005 = vunpack.c.h.b16 %v4435
      %v5006 = vunpack.c.l.b16 %v4436
      %v5007 = vunpack.c.h.b16 %v4436
      %v5008 = vunpack.c.l.b16 %v4437
      %v5009 = vunpack.c.l.b16 %v4438
      %v5010 = vunpack.c.h.b16 %v4438
      %v5011 = vunpack.c.l.b16 %v4439
      %v5012 = vunpack.c.h.b16 %v4439
      %v5013 = vunpack.c.l.b16 %v4440
      %v5014 = vunpack.c.h.b16 %v4440
      %v5015 = vunpack.c.l.b16 %v4441
      %v5016 = vunpack.c.h.b16 %v4441
      %v5017 = vunpack.c.l.b16 %v4442
      %v5018 = vunpack.c.l.b16 %v4443
      %v5019 = vunpack.c.h.b16 %v4443
      %v5020 = vunpack.c.l.b16 %v4444
      %v5021 = vunpack.c.h.b16 %v4444
      %v5022 = vunpack.c.l.b16 %v4445
      %v5023 = vunpack.c.h.b16 %v4445
      %v5024 = vunpack.c.l.b16 %v4446
      %v5025 = vunpack.c.h.b16 %v4446
      %v5026 = vunpack.c.l.b16 %v4447
      %v5027 = vunpack.c.l.b16 %v4448
      %v5028 = vunpack.c.h.b16 %v4448
      %v5029 = vunpack.c.l.b16 %v4449
      %v5030 = vunpack.c.h.b16 %v4449
      %v5031 = vunpack.c.l.b16 %v4450
      %v5032 = vunpack.c.h.b16 %v4450
      %v5033 = vunpack.c.l.b16 %v4451
      %v5034 = vunpack.c.h.b16 %v4451
      %v5035 = vunpack.c.l.b16 %v4452
      %v5036 = vunpack.c.l.b16 %v4453
      %v5037 = vunpack.c.h.b16 %v4453
      %v5038 = vunpack.c.l.b16 %v4454
      %v5039 = vunpack.c.h.b16 %v4454
      %v5040 = vunpack.c.l.b16 %v4455
      %v5041 = vunpack.c.h.b16 %v4455
      %v5042 = vunpack.c.l.b16 %v4456
      %v5043 = vunpack.c.h.b16 %v4456
      %v5044 = vunpack.c.l.b16 %v4457
      %v5045 = vunpack.c.l.b16 %v4458
      %v5046 = vunpack.c.h.b16 %v4458
      %v5047 = vunpack.c.l.b16 %v4459
      %v5048 = vunpack.c.h.b16 %v4459
      %v5049 = vunpack.c.l.b16 %v4460
      %v5050 = vunpack.c.h.b16 %v4460
      %v5051 = vunpack.c.l.b16 %v4461
      %v5052 = vunpack.c.h.b16 %v4461
      %v5053 = vunpack.c.l.b16 %v4462
      %v5054 = vunpack.c.l.b16 %v4463
      %v5055 = vunpack.c.h.b16 %v4463
      %v5056 = vunpack.c.l.b16 %v4464
      %v5057 = vunpack.c.h.b16 %v4464
      %v5058 = vunpack.c.l.b16 %v4465
      %v5059 = vunpack.c.h.b16 %v4465
      %v5060 = vunpack.c.l.b16 %v4466
      %v5061 = vunpack.c.h.b16 %v4466
      %v5062 = vunpack.c.l.b16 %v4467
      %v5063 = vunpack.c.l.b16 %v4468
      %v5064 = vunpack.c.h.b16 %v4468
      %v5065 = vunpack.c.l.b16 %v4469
      %v5066 = vunpack.c.h.b16 %v4469
      %v5067 = vunpack.c.l.b16 %v4470
      %v5068 = vunpack.c.h.b16 %v4470
      %v5069 = vunpack.c.l.b16 %v4471
      %v5070 = vunpack.c.h.b16 %v4471
      %v5071 = vunpack.c.l.b16 %v4472
      %v5072 = vpack.c.b16 %v4793, %v4784
      %v5073 = vpack.c.b16 %v4794, %v4785
      %v5074 = vpack.c.b16 %v4795, %v4786
      %v5075 = vpack.c.b16 %v4796, %v4787
      %v5076 = vpack.c.b16 %v4797, %v4788
      %v5077 = vpack.c.b16 %v4798, %v4789
      %v5078 = vpack.c.b16 %v4799, %v4790
      %v5079 = vpack.c.b16 %v4800, %v4791
      %v5080 = vpack.c.b16 %v4801, %v4792
      %v5081 = vpack.c.b16 %v4811, %v4802
      %v5082 = vpack.c.b16 %v4812, %v4803
      %v5083 = vpack.c.b16 %v4813, %v4804
      %v5084 = vpack.c.b16 %v4814, %v4805
      %v5085 = vpack.c.b16 %v4815, %v4806
      %v5086 = vpack.c.b16 %v4816, %v4807
      %v5087 = vpack.c.b16 %v4817, %v4808
      %v5088 = vpack.c.b16 %v4818, %v4809
      %v5089 = vpack.c.b16 %v4819, %v4810
      %v5090 = vpack.c.b16 %v4829, %v4820
      %v5091 = vpack.c.b16 %v4830, %v4821
      %v5092 = vpack.c.b16 %v4831, %v4822
      %v5093 = vpack.c.b16 %v4832, %v4823
      %v5094 = vpack.c.b16 %v4833, %v4824
      %v5095 = vpack.c.b16 %v4834, %v4825
      %v5096 = vpack.c.b16 %v4835, %v4826
      %v5097 = vpack.c.b16 %v4836, %v4827
      %v5098 = vpack.c.b16 %v4837, %v4828
      %v5099 = vpack.c.b16 %v4847, %v4838
      %v5100 = vpack.c.b16 %v4848, %v4839
      %v5101 = vpack.c.b16 %v4849, %v4840
      %v5102 = vpack.c.b16 %v4850, %v4841
      %v5103 = vpack.c.b16 %v4851, %v4842
      %v5104 = vpack.c.b16 %v4852, %v4843
      %v5105 = vpack.c.b16 %v4853, %v4844
      %v5106 = vpack.c.b16 %v4854, %v4845
      %v5107 = vpack.c.b16 %v4855, %v4846
      %v5108 = vpack.c.b16 %v4865, %v4856
      %v5109 = vpack.c.b16 %v4866, %v4857
      %v5110 = vpack.c.b16 %v4867, %v4858
      %v5111 = vpack.c.b16 %v4868, %v4859
      %v5112 = vpack.c.b16 %v4869, %v4860
      %v5113 = vpack.c.b16 %v4870, %v4861
      %v5114 = vpack.c.b16 %v4871, %v4862
      %v5115 = vpack.c.b16 %v4872, %v4863
      %v5116 = vpack.c.b16 %v4873, %v4864
      %v5117 = vpack.c.b16 %v4883, %v4874
      %v5118 = vpack.c.b16 %v4884, %v4875
      %v5119 = vpack.c.b16 %v4885, %v4876
      %v5120 = vpack.c.b16 %v4886, %v4877
      %v5121 = vpack.c.b16 %v4887, %v4878
      %v5122 = vpack.c.b16 %v4888, %v4879
      %v5123 = vpack.c.b16 %v4889, %v4880
      %v5124 = vpack.c.b16 %v4890, %v4881
      %v5125 = vpack.c.b16 %v4891, %v4882
      %v5126 = vpack.c.b16 %v4901, %v4892
      %v5127 = vpack.c.b16 %v4902, %v4893
      %v5128 = vpack.c.b16 %v4903, %v4894
      %v5129 = vpack.c.b16 %v4904, %v4895
      %v5130 = vpack.c.b16 %v4905, %v4896
      %v5131 = vpack.c.b16 %v4906, %v4897
      %v5132 = vpack.c.b16 %v4907, %v4898
      %v5133 = vpack.c.b16 %v4908, %v4899
      %v5134 = vpack.c.b16 %v4909, %v4900
      %v5135 = vpack.c.b16 %v4919, %v4910
      %v5136 = vpack.c.b16 %v4920, %v4911
      %v5137 = vpack.c.b16 %v4921, %v4912
      %v5138 = vpack.c.b16 %v4922, %v4913
      %v5139 = vpack.c.b16 %v4923, %v4914
      %v5140 = vpack.c.b16 %v4924, %v4915
      %v5141 = vpack.c.b16 %v4925, %v4916
      %v5142 = vpack.c.b16 %v4926, %v4917
      %v5143 = vpack.c.b16 %v4927, %v4918
      %v5144 = vpack.c.b16 %v4937, %v4928
      %v5145 = vpack.c.b16 %v4938, %v4929
      %v5146 = vpack.c.b16 %v4939, %v4930
      %v5147 = vpack.c.b16 %v4940, %v4931
      %v5148 = vpack.c.b16 %v4941, %v4932
      %v5149 = vpack.c.b16 %v4942, %v4933
      %v5150 = vpack.c.b16 %v4943, %v4934
      %v5151 = vpack.c.b16 %v4944, %v4935
      %v5152 = vpack.c.b16 %v4945, %v4936
      %v5153 = vpack.c.b16 %v4955, %v4946
      %v5154 = vpack.c.b16 %v4956, %v4947
      %v5155 = vpack.c.b16 %v4957, %v4948
      %v5156 = vpack.c.b16 %v4958, %v4949
      %v5157 = vpack.c.b16 %v4959, %v4950
      %v5158 = vpack.c.b16 %v4960, %v4951
      %v5159 = vpack.c.b16 %v4961, %v4952
      %v5160 = vpack.c.b16 %v4962, %v4953
      %v5161 = vpack.c.b16 %v4963, %v4954
      %v5162 = vpack.c.b16 %v4973, %v4964
      %v5163 = vpack.c.b16 %v4974, %v4965
      %v5164 = vpack.c.b16 %v4975, %v4966
      %v5165 = vpack.c.b16 %v4976, %v4967
      %v5166 = vpack.c.b16 %v4977, %v4968
      %v5167 = vpack.c.b16 %v4978, %v4969
      %v5168 = vpack.c.b16 %v4979, %v4970
      %v5169 = vpack.c.b16 %v4980, %v4971
      %v5170 = vpack.c.b16 %v4981, %v4972
      %v5171 = vpack.c.b16 %v4991, %v4982
      %v5172 = vpack.c.b16 %v4992, %v4983
      %v5173 = vpack.c.b16 %v4993, %v4984
      %v5174 = vpack.c.b16 %v4994, %v4985
      %v5175 = vpack.c.b16 %v4995, %v4986
      %v5176 = vpack.c.b16 %v4996, %v4987
      %v5177 = vpack.c.b16 %v4997, %v4988
      %v5178 = vpack.c.b16 %v4998, %v4989
      %v5179 = vpack.c.b16 %v4999, %v4990
      %v5180 = vpack.c.b16 %v5009, %v5000
      %v5181 = vpack.c.b16 %v5010, %v5001
      %v5182 = vpack.c.b16 %v5011, %v5002
      %v5183 = vpack.c.b16 %v5012, %v5003
      %v5184 = vpack.c.b16 %v5013, %v5004
      %v5185 = vpack.c.b16 %v5014, %v5005
      %v5186 = vpack.c.b16 %v5015, %v5006
      %v5187 = vpack.c.b16 %v5016, %v5007
      %v5188 = vpack.c.b16 %v5017, %v5008
      %v5189 = vpack.c.b16 %v5027, %v5018
      %v5190 = vpack.c.b16 %v5028, %v5019
      %v5191 = vpack.c.b16 %v5029, %v5020
      %v5192 = vpack.c.b16 %v5030, %v5021
      %v5193 = vpack.c.b16 %v5031, %v5022
      %v5194 = vpack.c.b16 %v5032, %v5023
      %v5195 = vpack.c.b16 %v5033, %v5024
      %v5196 = vpack.c.b16 %v5034, %v5025
      %v5197 = vpack.c.b16 %v5035, %v5026
      %v5198 = vpack.c.b16 %v5045, %v5036
      %v5199 = vpack.c.b16 %v5046, %v5037
      %v5200 = vpack.c.b16 %v5047, %v5038
      %v5201 = vpack.c.b16 %v5048, %v5039
      %v5202 = vpack.c.b16 %v5049, %v5040
      %v5203 = vpack.c.b16 %v5050, %v5041
      %v5204 = vpack.c.b16 %v5051, %v5042
      %v5205 = vpack.c.b16 %v5052, %v5043
      %v5206 = vpack.c.b16 %v5053, %v5044
      %v5207 = vpack.c.b16 %v5063, %v5054
      %v5208 = vpack.c.b16 %v5064, %v5055
      %v5209 = vpack.c.b16 %v5065, %v5056
      %v5210 = vpack.c.b16 %v5066, %v5057
      %v5211 = vpack.c.b16 %v5067, %v5058
      %v5212 = vpack.c.b16 %v5068, %v5059
      %v5213 = vpack.c.b16 %v5069, %v5060
      %v5214 = vpack.c.b16 %v5070, %v5061
      %v5215 = vpack.c.b16 %v5071, %v5062
      %v5504 = vunpack.c.l.b16 %v4473
      %v5505 = vunpack.c.l.b16 %v4474
      %v5506 = vunpack.c.l.b16 %v4475
      %v5507 = vunpack.c.l.b16 %v4476
      %v5508 = vunpack.c.l.b16 %v4477
      %v5509 = vunpack.c.l.b16 %v4478
      %v5510 = vunpack.c.l.b16 %v4479
      %v5511 = vunpack.c.l.b16 %v4480
      %v5512 = vunpack.c.l.b16 %v4481
      %v5513 = vunpack.c.l.b16 %v4482
      %v5514 = vunpack.c.l.b16 %v4483
      %v5515 = vunpack.c.l.b16 %v4484
      %v5516 = vunpack.c.l.b16 %v4485
      %v5517 = vunpack.c.l.b16 %v4486
      %v5518 = vunpack.c.l.b16 %v4487
      %v5519 = vunpack.c.l.b16 %v4488
      %v5520 = vunpack.c.l.b16 %v4489
      %v5521 = vunpack.c.l.b16 %v4490
      %v5522 = vunpack.c.l.b16 %v4491
      %v5523 = vunpack.c.l.b16 %v4492
      %v5524 = vunpack.c.l.b16 %v4493
      %v5525 = vunpack.c.l.b16 %v4494
      %v5526 = vunpack.c.l.b16 %v4495
      %v5527 = vunpack.c.l.b16 %v4496
      %v5528 = vunpack.c.l.b16 %v4497
      %v5529 = vunpack.c.l.b16 %v4498
      %v5530 = vunpack.c.l.b16 %v4499
      %v5531 = vunpack.c.l.b16 %v4500
      %v5532 = vunpack.c.l.b16 %v4501
      %v5533 = vunpack.c.l.b16 %v4502
      %v5534 = vunpack.c.l.b16 %v4503
      %v5535 = vunpack.c.l.b16 %v4504
      %v5536 = vunpack.c.l.b16 %v4505
      %v5537 = vunpack.c.l.b16 %v4506
      %v5538 = vunpack.c.l.b16 %v4507
      %v5539 = vunpack.c.l.b16 %v4508
      %v5540 = vunpack.c.l.b16 %v4509
      %v5541 = vunpack.c.l.b16 %v4510
      %v5542 = vunpack.c.l.b16 %v4511
      %v5543 = vunpack.c.l.b16 %v4512
      %v5544 = vunpack.c.l.b16 %v4513
      %v5545 = vunpack.c.l.b16 %v4514
      %v5546 = vunpack.c.l.b16 %v4515
      %v5547 = vunpack.c.l.b16 %v4516
      %v5548 = vunpack.c.l.b16 %v4517
      %v5549 = vunpack.c.l.b16 %v4518
      %v5550 = vunpack.c.l.b16 %v4519
      %v5551 = vunpack.c.l.b16 %v4520
      %v5552 = vunpack.c.l.b16 %v4521
      %v5553 = vunpack.c.l.b16 %v4522
      %v5554 = vunpack.c.l.b16 %v4523
      %v5555 = vunpack.c.l.b16 %v4524
      %v5556 = vunpack.c.l.b16 %v4525
      %v5557 = vunpack.c.l.b16 %v4526
      %v5558 = vunpack.c.l.b16 %v4527
      %v5559 = vunpack.c.l.b16 %v4528
      %v5560 = vunpack.c.l.b16 %v4529
      %v5561 = vunpack.c.l.b16 %v4530
      %v5562 = vunpack.c.l.b16 %v4531
      %v5563 = vunpack.c.l.b16 %v4532
      %v5564 = vunpack.c.l.b16 %v4533
      %v5565 = vunpack.c.l.b16 %v4534
      %v5566 = vunpack.c.l.b16 %v4535
      %v5567 = vunpack.c.l.b16 %v4536
      %v5568 = vunpack.c.l.b16 %v4537
      %v5569 = vunpack.c.l.b16 %v4538
      %v5570 = vunpack.c.l.b16 %v4539
      %v5571 = vunpack.c.l.b16 %v4540
      %v5572 = vunpack.c.l.b16 %v4541
      %v5573 = vunpack.c.l.b16 %v4542
      %v5574 = vunpack.c.l.b16 %v4543
      %v5575 = vunpack.c.l.b16 %v4544
      %v5576 = vunpack.c.l.b16 %v4545
      %v5577 = vunpack.c.l.b16 %v4546
      %v5578 = vunpack.c.l.b16 %v4547
      %v5579 = vunpack.c.l.b16 %v4548
      %v5580 = vunpack.c.l.b16 %v4549
      %v5581 = vunpack.c.l.b16 %v4550
      %v5582 = vunpack.c.l.b16 %v4551
      %v5583 = vunpack.c.l.b16 %v4552
      %v5584 = vunpack.c.l.b16 %v4553
      %v5585 = vunpack.c.l.b16 %v4554
      %v5586 = vunpack.c.l.b16 %v4555
      %v5587 = vunpack.c.l.b16 %v4556
      %v5588 = vunpack.c.l.b16 %v4557
      %v5589 = vunpack.c.l.b16 %v4558
      %v5590 = vunpack.c.l.b16 %v4559
      %v5591 = vunpack.c.l.b16 %v4560
      %v5592 = vunpack.c.l.b16 %v4561
      %v5593 = vunpack.c.l.b16 %v4562
      %v5594 = vunpack.c.l.b16 %v4563
      %v5595 = vunpack.c.l.b16 %v4564
      %v5596 = vunpack.c.l.b16 %v4565
      %v5597 = vunpack.c.l.b16 %v4566
      %v5598 = vunpack.c.l.b16 %v4567
      %v5599 = vunpack.c.l.b16 %v4568
      %v5600 = vunpack.c.l.b16 %v4569
      %v5601 = vunpack.c.l.b16 %v4570
      %v5602 = vunpack.c.l.b16 %v4571
      %v5603 = vunpack.c.l.b16 %v4572
      %v5604 = vunpack.c.l.b16 %v4573
      %v5605 = vunpack.c.l.b16 %v4574
      %v5606 = vunpack.c.l.b16 %v4575
      %v5607 = vunpack.c.l.b16 %v4576
      %v5608 = vunpack.c.l.b16 %v4577
      %v5609 = vunpack.c.l.b16 %v4578
      %v5610 = vunpack.c.l.b16 %v4579
      %v5611 = vunpack.c.l.b16 %v4580
      %v5612 = vunpack.c.l.b16 %v4581
      %v5613 = vunpack.c.l.b16 %v4582
      %v5614 = vunpack.c.l.b16 %v4583
      %v5615 = vunpack.c.l.b16 %v4584
      %v5616 = vunpack.c.l.b16 %v4585
      %v5617 = vunpack.c.l.b16 %v4586
      %v5618 = vunpack.c.l.b16 %v4587
      %v5619 = vunpack.c.l.b16 %v4588
      %v5620 = vunpack.c.l.b16 %v4589
      %v5621 = vunpack.c.l.b16 %v4590
      %v5622 = vunpack.c.l.b16 %v4591
      %v5623 = vunpack.c.l.b16 %v4592
      %v5624 = vunpack.c.l.b16 %v4593
      %v5625 = vunpack.c.l.b16 %v4594
      %v5626 = vunpack.c.l.b16 %v4595
      %v5627 = vunpack.c.l.b16 %v4596
      %v5628 = vunpack.c.l.b16 %v4597
      %v5629 = vunpack.c.l.b16 %v4598
      %v5630 = vunpack.c.l.b16 %v4599
      %v5631 = vunpack.c.l.b16 %v4600
      %v5632 = vunpack.c.l.b16 %v4601
      %v5633 = vunpack.c.l.b16 %v4602
      %v5634 = vunpack.c.l.b16 %v4603
      %v5635 = vunpack.c.l.b16 %v4604
      %v5636 = vunpack.c.l.b16 %v4605
      %v5637 = vunpack.c.l.b16 %v4606
      %v5638 = vunpack.c.l.b16 %v4607
      %v5639 = vunpack.c.l.b16 %v4608
      %v5640 = vunpack.c.l.b16 %v4609
      %v5641 = vunpack.c.l.b16 %v4610
      %v5642 = vunpack.c.l.b16 %v4611
      %v5643 = vunpack.c.l.b16 %v4612
      %v5644 = vunpack.c.l.b16 %v4613
      %v5645 = vunpack.c.l.b16 %v4614
      %v5646 = vunpack.c.l.b16 %v4615
      %v5647 = vunpack.c.l.b16 %v4616
      %v5648 = vpack.c.b16 %v5505, %v5504
      %v5649 = vpack.c.b16 %v5507, %v5506
      %v5650 = vpack.c.b16 %v5509, %v5508
      %v5651 = vpack.c.b16 %v5511, %v5510
      %v5652 = vpack.c.b16 %v5513, %v5512
      %v5653 = vpack.c.b16 %v5515, %v5514
      %v5654 = vpack.c.b16 %v5517, %v5516
      %v5655 = vpack.c.b16 %v5519, %v5518
      %v5656 = vpack.c.b16 %v5521, %v5520
      %v5657 = vpack.c.b16 %v5523, %v5522
      %v5658 = vpack.c.b16 %v5525, %v5524
      %v5659 = vpack.c.b16 %v5527, %v5526
      %v5660 = vpack.c.b16 %v5529, %v5528
      %v5661 = vpack.c.b16 %v5531, %v5530
      %v5662 = vpack.c.b16 %v5533, %v5532
      %v5663 = vpack.c.b16 %v5535, %v5534
      %v5664 = vpack.c.b16 %v5537, %v5536
      %v5665 = vpack.c.b16 %v5539, %v5538
      %v5666 = vpack.c.b16 %v5541, %v5540
      %v5667 = vpack.c.b16 %v5543, %v5542
      %v5668 = vpack.c.b16 %v5545, %v5544
      %v5669 = vpack.c.b16 %v5547, %v5546
      %v5670 = vpack.c.b16 %v5549, %v5548
      %v5671 = vpack.c.b16 %v5551, %v5550
      %v5672 = vpack.c.b16 %v5553, %v5552
      %v5673 = vpack.c.b16 %v5555, %v5554
      %v5674 = vpack.c.b16 %v5557, %v5556
      %v5675 = vpack.c.b16 %v5559, %v5558
      %v5676 = vpack.c.b16 %v5561, %v5560
      %v5677 = vpack.c.b16 %v5563, %v5562
      %v5678 = vpack.c.b16 %v5565, %v5564
      %v5679 = vpack.c.b16 %v5567, %v5566
      %v5680 = vpack.c.b16 %v5569, %v5568
      %v5681 = vpack.c.b16 %v5571, %v5570
      %v5682 = vpack.c.b16 %v5573, %v5572
      %v5683 = vpack.c.b16 %v5575, %v5574
      %v5684 = vpack.c.b16 %v5577, %v5576
      %v5685 = vpack.c.b16 %v5579, %v5578
      %v5686 = vpack.c.b16 %v5581, %v5580
      %v5687 = vpack.c.b16 %v5583, %v5582
      %v5688 = vpack.c.b16 %v5585, %v5584
      %v5689 = vpack.c.b16 %v5587, %v5586
      %v5690 = vpack.c.b16 %v5589, %v5588
      %v5691 = vpack.c.b16 %v5591, %v5590
      %v5692 = vpack.c.b16 %v5593, %v5592
      %v5693 = vpack.c.b16 %v5595, %v5594
      %v5694 = vpack.c.b16 %v5597, %v5596
      %v5695 = vpack.c.b16 %v5599, %v5598
      %v5696 = vpack.c.b16 %v5601, %v5600
      %v5697 = vpack.c.b16 %v5603, %v5602
      %v5698 = vpack.c.b16 %v5605, %v5604
      %v5699 = vpack.c.b16 %v5607, %v5606
      %v5700 = vpack.c.b16 %v5609, %v5608
      %v5701 = vpack.c.b16 %v5611, %v5610
      %v5702 = vpack.c.b16 %v5613, %v5612
      %v5703 = vpack.c.b16 %v5615, %v5614
      %v5704 = vpack.c.b16 %v5617, %v5616
      %v5705 = vpack.c.b16 %v5619, %v5618
      %v5706 = vpack.c.b16 %v5621, %v5620
      %v5707 = vpack.c.b16 %v5623, %v5622
      %v5708 = vpack.c.b16 %v5625, %v5624
      %v5709 = vpack.c.b16 %v5627, %v5626
      %v5710 = vpack.c.b16 %v5629, %v5628
      %v5711 = vpack.c.b16 %v5631, %v5630
      %v5712 = vpack.c.b16 %v5633, %v5632
      %v5713 = vpack.c.b16 %v5635, %v5634
      %v5714 = vpack.c.b16 %v5637, %v5636
      %v5715 = vpack.c.b16 %v5639, %v5638
      %v5716 = vpack.c.b16 %v5641, %v5640
      %v5717 = vpack.c.b16 %v5643, %v5642
      %v5718 = vpack.c.b16 %v5645, %v5644
      %v5719 = vpack.c.b16 %v5647, %v5646
      %5792 = vmatprep.subr.bf16.mxu0 0
      %5793 = vmatpush1.bf16.msra.mxu0 %v5655
      %5794 = vmatprep.subr.bf16.mxu0 0
      %5795 = vmatpush1.bf16.msra.mxu0 %v5654
      %5796 = vmatprep.subr.bf16.mxu0 0
      %5797 = vmatpush1.bf16.msra.mxu0 %v5653
      %5798 = vmatprep.subr.bf16.mxu0 0
      %5799 = vmatpush1.bf16.msra.mxu0 %v5652
      %5800 = vmatprep.subr.bf16.mxu0 0
      %5801 = vmatpush1.bf16.msra.mxu0 %v5651
      %5802 = vmatprep.subr.bf16.mxu0 0
      %5803 = vmatpush1.bf16.msra.mxu0 %v5650
      %5804 = vmatprep.subr.bf16.mxu0 0
      %5805 = vmatpush1.bf16.msra.mxu0 %v5649
      %5806 = vmatprep.subr.bf16.mxu0 0
      %5807 = vmatpush1.bf16.msra.mxu0 %v5648
      %5808 = vmatprep.subr.bf16.mxu0 0
      %5809 = vmatpush2.bf16.msra.mxu0 %v5663
      %5810 = vmatprep.subr.bf16.mxu0 0
      %5811 = vmatpush2.bf16.msra.mxu0 %v5662
      %5812 = vmatprep.subr.bf16.mxu0 0
      %5813 = vmatpush2.bf16.msra.mxu0 %v5661
      %5814 = vmatprep.subr.bf16.mxu0 0
      %5815 = vmatpush2.bf16.msra.mxu0 %v5660
      %5816 = vmatprep.subr.bf16.mxu0 0
      %5817 = vmatpush2.bf16.msra.mxu0 %v5659
      %5818 = vmatprep.subr.bf16.mxu0 0
      %5819 = vmatpush2.bf16.msra.mxu0 %v5658
      %5820 = vmatprep.subr.bf16.mxu0 0
      %5821 = vmatpush2.bf16.msra.mxu0 %v5657
      %5822 = vmatprep.subr.bf16.mxu0 0
      %5823 = vmatpush2.bf16.msra.mxu0 %v5656
      %5824 = vmatprep.mubr.bf16.mxu0 %v5073
      %5825 = vmatmul.mubr.bf16.gmra.mxu0 %v5072
      %v5826 = vpop.f32.mrf.mxu0
      %v5827 = vadd.f32 %v4622, %v5826
      %v5828 = vpop.f32.mrf.mxu0
      %v5829 = vpop.f32.mrf.mxu0
      %v5830 = vadd.f32 %v4622, %v5829
      %v5831 = vpop.f32.mrf.mxu0
      %5832 = vmatprep.mubr.bf16.mxu0 %v5082
      %5833 = vmatmul.mubr.bf16.gmra.mxu0 %v5081
      %v5834 = vpop.f32.mrf.mxu0
      %v5835 = vadd.f32 %v4622, %v5834
      %v5836 = vpop.f32.mrf.mxu0
      %v5837 = vpop.f32.mrf.mxu0
      %v5838 = vadd.f32 %v4622, %v5837
      %v5839 = vpop.f32.mrf.mxu0
      %5840 = vmatprep.mubr.bf16.mxu0 %v5091
      %5841 = vmatmul.mubr.bf16.gmra.mxu0 %v5090
      %v5842 = vpop.f32.mrf.mxu0
      %v5843 = vadd.f32 %v4622, %v5842
      %v5844 = vpop.f32.mrf.mxu0
      %v5845 = vpop.f32.mrf.mxu0
      %v5846 = vadd.f32 %v4622, %v5845
      %v5847 = vpop.f32.mrf.mxu0
      %5848 = vmatprep.mubr.bf16.mxu0 %v5100
      %5849 = vmatmul.mubr.bf16.gmra.mxu0 %v5099
      %v5850 = vpop.f32.mrf.mxu0
      %v5851 = vadd.f32 %v4622, %v5850
      %v5852 = vpop.f32.mrf.mxu0
      %v5853 = vpop.f32.mrf.mxu0
      %v5854 = vadd.f32 %v4622, %v5853
      %v5855 = vpop.f32.mrf.mxu0
      %5856 = vmatprep.mubr.bf16.mxu0 %v5109
      %5857 = vmatmul.mubr.bf16.gmra.mxu0 %v5108
      %v5858 = vpop.f32.mrf.mxu0
      %v5859 = vadd.f32 %v4622, %v5858
      %v5860 = vpop.f32.mrf.mxu0
      %v5861 = vpop.f32.mrf.mxu0
      %v5862 = vadd.f32 %v4622, %v5861
      %v5863 = vpop.f32.mrf.mxu0
      %5864 = vmatprep.mubr.bf16.mxu0 %v5118
      %5865 = vmatmul.mubr.bf16.gmra.mxu0 %v5117
      %v5866 = vpop.f32.mrf.mxu0
      %v5867 = vadd.f32 %v4622, %v5866
      %v5868 = vpop.f32.mrf.mxu0
      %v5869 = vpop.f32.mrf.mxu0
      %v5870 = vadd.f32 %v4622, %v5869
      %v5871 = vpop.f32.mrf.mxu0
      %5872 = vmatprep.mubr.bf16.mxu0 %v5127
      %5873 = vmatmul.mubr.bf16.gmra.mxu0 %v5126
      %v5874 = vpop.f32.mrf.mxu0
      %v5875 = vadd.f32 %v4622, %v5874
      %v5876 = vpop.f32.mrf.mxu0
      %v5877 = vpop.f32.mrf.mxu0
      %v5878 = vadd.f32 %v4622, %v5877
      %v5879 = vpop.f32.mrf.mxu0
      %5880 = vmatprep.mubr.bf16.mxu0 %v5136
      %5881 = vmatmul.mubr.bf16.gmra.mxu0 %v5135
      %v5882 = vpop.f32.mrf.mxu0
      %v5883 = vadd.f32 %v4622, %v5882
      %v5884 = vpop.f32.mrf.mxu0
      %v5885 = vpop.f32.mrf.mxu0
      %v5886 = vadd.f32 %v4622, %v5885
      %v5887 = vpop.f32.mrf.mxu0
      %5888 = vmatprep.mubr.bf16.mxu0 %v5145
      %5889 = vmatmul.mubr.bf16.gmra.mxu0 %v5144
      %v5890 = vpop.f32.mrf.mxu0
      %v5891 = vadd.f32 %v4622, %v5890
      %v5892 = vpop.f32.mrf.mxu0
      %v5893 = vpop.f32.mrf.mxu0
      %v5894 = vadd.f32 %v4622, %v5893
      %v5895 = vpop.f32.mrf.mxu0
      %5896 = vmatprep.mubr.bf16.mxu0 %v5154
      %5897 = vmatmul.mubr.bf16.gmra.mxu0 %v5153
      %v5898 = vpop.f32.mrf.mxu0
      %v5899 = vadd.f32 %v4622, %v5898
      %v5900 = vpop.f32.mrf.mxu0
      %v5901 = vpop.f32.mrf.mxu0
      %v5902 = vadd.f32 %v4622, %v5901
      %v5903 = vpop.f32.mrf.mxu0
      %5904 = vmatprep.mubr.bf16.mxu0 %v5163
      %5905 = vmatmul.mubr.bf16.gmra.mxu0 %v5162
      %v5906 = vpop.f32.mrf.mxu0
      %v5907 = vadd.f32 %v4622, %v5906
      %v5908 = vpop.f32.mrf.mxu0
      %v5909 = vpop.f32.mrf.mxu0
      %v5910 = vadd.f32 %v4622, %v5909
      %v5911 = vpop.f32.mrf.mxu0
      %5912 = vmatprep.mubr.bf16.mxu0 %v5172
      %5913 = vmatmul.mubr.bf16.gmra.mxu0 %v5171
      %v5914 = vpop.f32.mrf.mxu0
      %v5915 = vadd.f32 %v4622, %v5914
      %v5916 = vpop.f32.mrf.mxu0
      %v5917 = vpop.f32.mrf.mxu0
      %v5918 = vadd.f32 %v4622, %v5917
      %v5919 = vpop.f32.mrf.mxu0
      %5920 = vmatprep.mubr.bf16.mxu0 %v5181
      %5921 = vmatmul.mubr.bf16.gmra.mxu0 %v5180
      %v5922 = vpop.f32.mrf.mxu0
      %v5923 = vadd.f32 %v4622, %v5922
      %v5924 = vpop.f32.mrf.mxu0
      %v5925 = vpop.f32.mrf.mxu0
      %v5926 = vadd.f32 %v4622, %v5925
      %v5927 = vpop.f32.mrf.mxu0
      %5928 = vmatprep.mubr.bf16.mxu0 %v5190
      %5929 = vmatmul.mubr.bf16.gmra.mxu0 %v5189
      %v5930 = vpop.f32.mrf.mxu0
      %v5931 = vadd.f32 %v4622, %v5930
      %v5932 = vpop.f32.mrf.mxu0
      %v5933 = vpop.f32.mrf.mxu0
      %v5934 = vadd.f32 %v4622, %v5933
      %v5935 = vpop.f32.mrf.mxu0
      %5936 = vmatprep.mubr.bf16.mxu0 %v5199
      %5937 = vmatmul.mubr.bf16.gmra.mxu0 %v5198
      %v5938 = vpop.f32.mrf.mxu0
      %v5939 = vadd.f32 %v4622, %v5938
      %v5940 = vpop.f32.mrf.mxu0
      %v5941 = vpop.f32.mrf.mxu0
      %v5942 = vadd.f32 %v4622, %v5941
      %v5943 = vpop.f32.mrf.mxu0
      %5944 = vmatprep.mubr.bf16.mxu0 %v5208
      %5945 = vmatmul.mubr.bf16.gmra.mxu0 %v5207
      %v5946 = vpop.f32.mrf.mxu0
      %v5947 = vadd.f32 %v4622, %v5946
      %v5948 = vpop.f32.mrf.mxu0
      %v5949 = vpop.f32.mrf.mxu0
      %v5950 = vadd.f32 %v4622, %v5949
      %v5951 = vpop.f32.mrf.mxu0
      %5952 = vdwg.mxu0
      %5953 = vmatprep.subr.bf16.mxu0 0
      %5954 = vmatpush1.bf16.msra.mxu0 %v5671
      %5955 = vmatprep.subr.bf16.mxu0 0
      %5956 = vmatpush1.bf16.msra.mxu0 %v5670
      %5957 = vmatprep.subr.bf16.mxu0 0
      %5958 = vmatpush1.bf16.msra.mxu0 %v5669
      %5959 = vmatprep.subr.bf16.mxu0 0
      %5960 = vmatpush1.bf16.msra.mxu0 %v5668
      %5961 = vmatprep.subr.bf16.mxu0 0
      %5962 = vmatpush1.bf16.msra.mxu0 %v5667
      %5963 = vmatprep.subr.bf16.mxu0 0
      %5964 = vmatpush1.bf16.msra.mxu0 %v5666
      %5965 = vmatprep.subr.bf16.mxu0 0
      %5966 = vmatpush1.bf16.msra.mxu0 %v5665
      %5967 = vmatprep.subr.bf16.mxu0 0
      %5968 = vmatpush1.bf16.msra.mxu0 %v5664
      %5969 = vmatprep.subr.bf16.mxu0 0
      %5970 = vmatpush2.bf16.msra.mxu0 %v5679
      %5971 = vmatprep.subr.bf16.mxu0 0
      %5972 = vmatpush2.bf16.msra.mxu0 %v5678
      %5973 = vmatprep.subr.bf16.mxu0 0
      %5974 = vmatpush2.bf16.msra.mxu0 %v5677
      %5975 = vmatprep.subr.bf16.mxu0 0
      %5976 = vmatpush2.bf16.msra.mxu0 %v5676
      %5977 = vmatprep.subr.bf16.mxu0 0
      %5978 = vmatpush2.bf16.msra.mxu0 %v5675
      %5979 = vmatprep.subr.bf16.mxu0 0
      %5980 = vmatpush2.bf16.msra.mxu0 %v5674
      %5981 = vmatprep.subr.bf16.mxu0 0
      %5982 = vmatpush2.bf16.msra.mxu0 %v5673
      %5983 = vmatprep.subr.bf16.mxu0 0
      %5984 = vmatpush2.bf16.msra.mxu0 %v5672
      %5985 = vmatprep.mubr.bf16.mxu0 %v5075
      %5986 = vmatmul.mubr.bf16.gmra.mxu0 %v5074
      %v5987 = vpop.f32.mrf.mxu0
      %v5988 = vadd.f32 %v5827, %v5987
      %v5989 = vpop.f32.mrf.mxu0
      %v5990 = vpop.f32.mrf.mxu0
      %v5991 = vadd.f32 %v5830, %v5990
      %v5992 = vpop.f32.mrf.mxu0
      %5993 = vmatprep.mubr.bf16.mxu0 %v5084
      %5994 = vmatmul.mubr.bf16.gmra.mxu0 %v5083
      %v5995 = vpop.f32.mrf.mxu0
      %v5996 = vadd.f32 %v5835, %v5995
      %v5997 = vpop.f32.mrf.mxu0
      %v5998 = vpop.f32.mrf.mxu0
      %v5999 = vadd.f32 %v5838, %v5998
      %v6000 = vpop.f32.mrf.mxu0
      %6001 = vmatprep.mubr.bf16.mxu0 %v5093
      %6002 = vmatmul.mubr.bf16.gmra.mxu0 %v5092
      %v6003 = vpop.f32.mrf.mxu0
      %v6004 = vadd.f32 %v5843, %v6003
      %v6005 = vpop.f32.mrf.mxu0
      %v6006 = vpop.f32.mrf.mxu0
      %v6007 = vadd.f32 %v5846, %v6006
      %v6008 = vpop.f32.mrf.mxu0
      %6009 = vmatprep.mubr.bf16.mxu0 %v5102
      %6010 = vmatmul.mubr.bf16.gmra.mxu0 %v5101
      %v6011 = vpop.f32.mrf.mxu0
      %v6012 = vadd.f32 %v5851, %v6011
      %v6013 = vpop.f32.mrf.mxu0
      %v6014 = vpop.f32.mrf.mxu0
      %v6015 = vadd.f32 %v5854, %v6014
      %v6016 = vpop.f32.mrf.mxu0
      %6017 = vmatprep.mubr.bf16.mxu0 %v5111
      %6018 = vmatmul.mubr.bf16.gmra.mxu0 %v5110
      %v6019 = vpop.f32.mrf.mxu0
      %v6020 = vadd.f32 %v5859, %v6019
      %v6021 = vpop.f32.mrf.mxu0
      %v6022 = vpop.f32.mrf.mxu0
      %v6023 = vadd.f32 %v5862, %v6022
      %v6024 = vpop.f32.mrf.mxu0
      %6025 = vmatprep.mubr.bf16.mxu0 %v5120
      %6026 = vmatmul.mubr.bf16.gmra.mxu0 %v5119
      %v6027 = vpop.f32.mrf.mxu0
      %v6028 = vadd.f32 %v5867, %v6027
      %v6029 = vpop.f32.mrf.mxu0
      %v6030 = vpop.f32.mrf.mxu0
      %v6031 = vadd.f32 %v5870, %v6030
      %v6032 = vpop.f32.mrf.mxu0
      %6033 = vmatprep.mubr.bf16.mxu0 %v5129
      %6034 = vmatmul.mubr.bf16.gmra.mxu0 %v5128
      %v6035 = vpop.f32.mrf.mxu0
      %v6036 = vadd.f32 %v5875, %v6035
      %v6037 = vpop.f32.mrf.mxu0
      %v6038 = vpop.f32.mrf.mxu0
      %v6039 = vadd.f32 %v5878, %v6038
      %v6040 = vpop.f32.mrf.mxu0
      %6041 = vmatprep.mubr.bf16.mxu0 %v5138
      %6042 = vmatmul.mubr.bf16.gmra.mxu0 %v5137
      %v6043 = vpop.f32.mrf.mxu0
      %v6044 = vadd.f32 %v5883, %v6043
      %v6045 = vpop.f32.mrf.mxu0
      %v6046 = vpop.f32.mrf.mxu0
      %v6047 = vadd.f32 %v5886, %v6046
      %v6048 = vpop.f32.mrf.mxu0
      %6049 = vmatprep.mubr.bf16.mxu0 %v5147
      %6050 = vmatmul.mubr.bf16.gmra.mxu0 %v5146
      %v6051 = vpop.f32.mrf.mxu0
      %v6052 = vadd.f32 %v5891, %v6051
      %v6053 = vpop.f32.mrf.mxu0
      %v6054 = vpop.f32.mrf.mxu0
      %v6055 = vadd.f32 %v5894, %v6054
      %v6056 = vpop.f32.mrf.mxu0
      %6057 = vmatprep.mubr.bf16.mxu0 %v5156
      %6058 = vmatmul.mubr.bf16.gmra.mxu0 %v5155
      %v6059 = vpop.f32.mrf.mxu0
      %v6060 = vadd.f32 %v5899, %v6059
      %v6061 = vpop.f32.mrf.mxu0
      %v6062 = vpop.f32.mrf.mxu0
      %v6063 = vadd.f32 %v5902, %v6062
      %v6064 = vpop.f32.mrf.mxu0
      %6065 = vmatprep.mubr.bf16.mxu0 %v5165
      %6066 = vmatmul.mubr.bf16.gmra.mxu0 %v5164
      %v6067 = vpop.f32.mrf.mxu0
      %v6068 = vadd.f32 %v5907, %v6067
      %v6069 = vpop.f32.mrf.mxu0
      %v6070 = vpop.f32.mrf.mxu0
      %v6071 = vadd.f32 %v5910, %v6070
      %v6072 = vpop.f32.mrf.mxu0
      %6073 = vmatprep.mubr.bf16.mxu0 %v5174
      %6074 = vmatmul.mubr.bf16.gmra.mxu0 %v5173
      %v6075 = vpop.f32.mrf.mxu0
      %v6076 = vadd.f32 %v5915, %v6075
      %v6077 = vpop.f32.mrf.mxu0
      %v6078 = vpop.f32.mrf.mxu0
      %v6079 = vadd.f32 %v5918, %v6078
      %v6080 = vpop.f32.mrf.mxu0
      %6081 = vmatprep.mubr.bf16.mxu0 %v5183
      %6082 = vmatmul.mubr.bf16.gmra.mxu0 %v5182
      %v6083 = vpop.f32.mrf.mxu0
      %v6084 = vadd.f32 %v5923, %v6083
      %v6085 = vpop.f32.mrf.mxu0
      %v6086 = vpop.f32.mrf.mxu0
      %v6087 = vadd.f32 %v5926, %v6086
      %v6088 = vpop.f32.mrf.mxu0
      %6089 = vmatprep.mubr.bf16.mxu0 %v5192
      %6090 = vmatmul.mubr.bf16.gmra.mxu0 %v5191
      %v6091 = vpop.f32.mrf.mxu0
      %v6092 = vadd.f32 %v5931, %v6091
      %v6093 = vpop.f32.mrf.mxu0
      %v6094 = vpop.f32.mrf.mxu0
      %v6095 = vadd.f32 %v5934, %v6094
      %v6096 = vpop.f32.mrf.mxu0
      %6097 = vmatprep.mubr.bf16.mxu0 %v5201
      %6098 = vmatmul.mubr.bf16.gmra.mxu0 %v5200
      %v6099 = vpop.f32.mrf.mxu0
      %v6100 = vadd.f32 %v5939, %v6099
      %v6101 = vpop.f32.mrf.mxu0
      %v6102 = vpop.f32.mrf.mxu0
      %v6103 = vadd.f32 %v5942, %v6102
      %v6104 = vpop.f32.mrf.mxu0
      %6105 = vmatprep.mubr.bf16.mxu0 %v5210
      %6106 = vmatmul.mubr.bf16.gmra.mxu0 %v5209
      %v6107 = vpop.f32.mrf.mxu0
      %v6108 = vadd.f32 %v5947, %v6107
      %v6109 = vpop.f32.mrf.mxu0
      %v6110 = vpop.f32.mrf.mxu0
      %v6111 = vadd.f32 %v5950, %v6110
      %v6112 = vpop.f32.mrf.mxu0
      %6113 = vdwg.mxu0
      %6114 = vmatprep.subr.bf16.mxu0 0
      %6115 = vmatpush1.bf16.msra.mxu0 %v5687
      %6116 = vmatprep.subr.bf16.mxu0 0
      %6117 = vmatpush1.bf16.msra.mxu0 %v5686
      %6118 = vmatprep.subr.bf16.mxu0 0
      %6119 = vmatpush1.bf16.msra.mxu0 %v5685
      %6120 = vmatprep.subr.bf16.mxu0 0
      %6121 = vmatpush1.bf16.msra.mxu0 %v5684
      %6122 = vmatprep.subr.bf16.mxu0 0
      %6123 = vmatpush1.bf16.msra.mxu0 %v5683
      %6124 = vmatprep.subr.bf16.mxu0 0
      %6125 = vmatpush1.bf16.msra.mxu0 %v5682
      %6126 = vmatprep.subr.bf16.mxu0 0
      %6127 = vmatpush1.bf16.msra.mxu0 %v5681
      %6128 = vmatprep.subr.bf16.mxu0 0
      %6129 = vmatpush1.bf16.msra.mxu0 %v5680
      %6130 = vmatprep.subr.bf16.mxu0 0
      %6131 = vmatpush2.bf16.msra.mxu0 %v5695
      %6132 = vmatprep.subr.bf16.mxu0 0
      %6133 = vmatpush2.bf16.msra.mxu0 %v5694
      %6134 = vmatprep.subr.bf16.mxu0 0
      %6135 = vmatpush2.bf16.msra.mxu0 %v5693
      %6136 = vmatprep.subr.bf16.mxu0 0
      %6137 = vmatpush2.bf16.msra.mxu0 %v5692
      %6138 = vmatprep.subr.bf16.mxu0 0
      %6139 = vmatpush2.bf16.msra.mxu0 %v5691
      %6140 = vmatprep.subr.bf16.mxu0 0
      %6141 = vmatpush2.bf16.msra.mxu0 %v5690
      %6142 = vmatprep.subr.bf16.mxu0 0
      %6143 = vmatpush2.bf16.msra.mxu0 %v5689
      %6144 = vmatprep.subr.bf16.mxu0 0
      %6145 = vmatpush2.bf16.msra.mxu0 %v5688
      %6146 = vmatprep.mubr.bf16.mxu0 %v5077
      %6147 = vmatmul.mubr.bf16.gmra.mxu0 %v5076
      %v6148 = vpop.f32.mrf.mxu0
      %v6149 = vadd.f32 %v5988, %v6148
      %v6150 = vpop.f32.mrf.mxu0
      %v6151 = vpop.f32.mrf.mxu0
      %v6152 = vadd.f32 %v5991, %v6151
      %v6153 = vpop.f32.mrf.mxu0
      %6154 = vmatprep.mubr.bf16.mxu0 %v5086
      %6155 = vmatmul.mubr.bf16.gmra.mxu0 %v5085
      %v6156 = vpop.f32.mrf.mxu0
      %v6157 = vadd.f32 %v5996, %v6156
      %v6158 = vpop.f32.mrf.mxu0
      %v6159 = vpop.f32.mrf.mxu0
      %v6160 = vadd.f32 %v5999, %v6159
      %v6161 = vpop.f32.mrf.mxu0
      %6162 = vmatprep.mubr.bf16.mxu0 %v5095
      %6163 = vmatmul.mubr.bf16.gmra.mxu0 %v5094
      %v6164 = vpop.f32.mrf.mxu0
      %v6165 = vadd.f32 %v6004, %v6164
      %v6166 = vpop.f32.mrf.mxu0
      %v6167 = vpop.f32.mrf.mxu0
      %v6168 = vadd.f32 %v6007, %v6167
      %v6169 = vpop.f32.mrf.mxu0
      %6170 = vmatprep.mubr.bf16.mxu0 %v5104
      %6171 = vmatmul.mubr.bf16.gmra.mxu0 %v5103
      %v6172 = vpop.f32.mrf.mxu0
      %v6173 = vadd.f32 %v6012, %v6172
      %v6174 = vpop.f32.mrf.mxu0
      %v6175 = vpop.f32.mrf.mxu0
      %v6176 = vadd.f32 %v6015, %v6175
      %v6177 = vpop.f32.mrf.mxu0
      %6178 = vmatprep.mubr.bf16.mxu0 %v5113
      %6179 = vmatmul.mubr.bf16.gmra.mxu0 %v5112
      %v6180 = vpop.f32.mrf.mxu0
      %v6181 = vadd.f32 %v6020, %v6180
      %v6182 = vpop.f32.mrf.mxu0
      %v6183 = vpop.f32.mrf.mxu0
      %v6184 = vadd.f32 %v6023, %v6183
      %v6185 = vpop.f32.mrf.mxu0
      %6186 = vmatprep.mubr.bf16.mxu0 %v5122
      %6187 = vmatmul.mubr.bf16.gmra.mxu0 %v5121
      %v6188 = vpop.f32.mrf.mxu0
      %v6189 = vadd.f32 %v6028, %v6188
      %v6190 = vpop.f32.mrf.mxu0
      %v6191 = vpop.f32.mrf.mxu0
      %v6192 = vadd.f32 %v6031, %v6191
      %v6193 = vpop.f32.mrf.mxu0
      %6194 = vmatprep.mubr.bf16.mxu0 %v5131
      %6195 = vmatmul.mubr.bf16.gmra.mxu0 %v5130
      %v6196 = vpop.f32.mrf.mxu0
      %v6197 = vadd.f32 %v6036, %v6196
      %v6198 = vpop.f32.mrf.mxu0
      %v6199 = vpop.f32.mrf.mxu0
      %v6200 = vadd.f32 %v6039, %v6199
      %v6201 = vpop.f32.mrf.mxu0
      %6202 = vmatprep.mubr.bf16.mxu0 %v5140
      %6203 = vmatmul.mubr.bf16.gmra.mxu0 %v5139
      %v6204 = vpop.f32.mrf.mxu0
      %v6205 = vadd.f32 %v6044, %v6204
      %v6206 = vpop.f32.mrf.mxu0
      %v6207 = vpop.f32.mrf.mxu0
      %v6208 = vadd.f32 %v6047, %v6207
      %v6209 = vpop.f32.mrf.mxu0
      %6210 = vmatprep.mubr.bf16.mxu0 %v5149
      %6211 = vmatmul.mubr.bf16.gmra.mxu0 %v5148
      %v6212 = vpop.f32.mrf.mxu0
      %v6213 = vadd.f32 %v6052, %v6212
      %v6214 = vpop.f32.mrf.mxu0
      %v6215 = vpop.f32.mrf.mxu0
      %v6216 = vadd.f32 %v6055, %v6215
      %v6217 = vpop.f32.mrf.mxu0
      %6218 = vmatprep.mubr.bf16.mxu0 %v5158
      %6219 = vmatmul.mubr.bf16.gmra.mxu0 %v5157
      %v6220 = vpop.f32.mrf.mxu0
      %v6221 = vadd.f32 %v6060, %v6220
      %v6222 = vpop.f32.mrf.mxu0
      %v6223 = vpop.f32.mrf.mxu0
      %v6224 = vadd.f32 %v6063, %v6223
      %v6225 = vpop.f32.mrf.mxu0
      %6226 = vmatprep.mubr.bf16.mxu0 %v5167
      %6227 = vmatmul.mubr.bf16.gmra.mxu0 %v5166
      %v6228 = vpop.f32.mrf.mxu0
      %v6229 = vadd.f32 %v6068, %v6228
      %v6230 = vpop.f32.mrf.mxu0
      %v6231 = vpop.f32.mrf.mxu0
      %v6232 = vadd.f32 %v6071, %v6231
      %v6233 = vpop.f32.mrf.mxu0
      %6234 = vmatprep.mubr.bf16.mxu0 %v5176
      %6235 = vmatmul.mubr.bf16.gmra.mxu0 %v5175
      %v6236 = vpop.f32.mrf.mxu0
      %v6237 = vadd.f32 %v6076, %v6236
      %v6238 = vpop.f32.mrf.mxu0
      %v6239 = vpop.f32.mrf.mxu0
      %v6240 = vadd.f32 %v6079, %v6239
      %v6241 = vpop.f32.mrf.mxu0
      %6242 = vmatprep.mubr.bf16.mxu0 %v5185
      %6243 = vmatmul.mubr.bf16.gmra.mxu0 %v5184
      %v6244 = vpop.f32.mrf.mxu0
      %v6245 = vadd.f32 %v6084, %v6244
      %v6246 = vpop.f32.mrf.mxu0
      %v6247 = vpop.f32.mrf.mxu0
      %v6248 = vadd.f32 %v6087, %v6247
      %v6249 = vpop.f32.mrf.mxu0
      %6250 = vmatprep.mubr.bf16.mxu0 %v5194
      %6251 = vmatmul.mubr.bf16.gmra.mxu0 %v5193
      %v6252 = vpop.f32.mrf.mxu0
      %v6253 = vadd.f32 %v6092, %v6252
      %v6254 = vpop.f32.mrf.mxu0
      %v6255 = vpop.f32.mrf.mxu0
      %v6256 = vadd.f32 %v6095, %v6255
      %v6257 = vpop.f32.mrf.mxu0
      %6258 = vmatprep.mubr.bf16.mxu0 %v5203
      %6259 = vmatmul.mubr.bf16.gmra.mxu0 %v5202
      %v6260 = vpop.f32.mrf.mxu0
      %v6261 = vadd.f32 %v6100, %v6260
      %v6262 = vpop.f32.mrf.mxu0
      %v6263 = vpop.f32.mrf.mxu0
      %v6264 = vadd.f32 %v6103, %v6263
      %v6265 = vpop.f32.mrf.mxu0
      %6266 = vmatprep.mubr.bf16.mxu0 %v5212
      %6267 = vmatmul.mubr.bf16.gmra.mxu0 %v5211
      %v6268 = vpop.f32.mrf.mxu0
      %v6269 = vadd.f32 %v6108, %v6268
      %v6270 = vpop.f32.mrf.mxu0
      %v6271 = vpop.f32.mrf.mxu0
      %v6272 = vadd.f32 %v6111, %v6271
      %v6273 = vpop.f32.mrf.mxu0
      %6274 = vdwg.mxu0
      %6275 = vmatprep.subr.bf16.mxu0 0
      %6276 = vmatpush1.bf16.msra.mxu0 %v5703
      %6277 = vmatprep.subr.bf16.mxu0 0
      %6278 = vmatpush1.bf16.msra.mxu0 %v5702
      %6279 = vmatprep.subr.bf16.mxu0 0
      %6280 = vmatpush1.bf16.msra.mxu0 %v5701
      %6281 = vmatprep.subr.bf16.mxu0 0
      %6282 = vmatpush1.bf16.msra.mxu0 %v5700
      %6283 = vmatprep.subr.bf16.mxu0 0
      %6284 = vmatpush1.bf16.msra.mxu0 %v5699
      %6285 = vmatprep.subr.bf16.mxu0 0
      %6286 = vmatpush1.bf16.msra.mxu0 %v5698
      %6287 = vmatprep.subr.bf16.mxu0 0
      %6288 = vmatpush1.bf16.msra.mxu0 %v5697
      %6289 = vmatprep.subr.bf16.mxu0 0
      %6290 = vmatpush1.bf16.msra.mxu0 %v5696
      %6291 = vmatprep.subr.bf16.mxu0 0
      %6292 = vmatpush2.bf16.msra.mxu0 %v5711
      %6293 = vmatprep.subr.bf16.mxu0 0
      %6294 = vmatpush2.bf16.msra.mxu0 %v5710
      %6295 = vmatprep.subr.bf16.mxu0 0
      %6296 = vmatpush2.bf16.msra.mxu0 %v5709
      %6297 = vmatprep.subr.bf16.mxu0 0
      %6298 = vmatpush2.bf16.msra.mxu0 %v5708
      %6299 = vmatprep.subr.bf16.mxu0 0
      %6300 = vmatpush2.bf16.msra.mxu0 %v5707
      %6301 = vmatprep.subr.bf16.mxu0 0
      %6302 = vmatpush2.bf16.msra.mxu0 %v5706
      %6303 = vmatprep.subr.bf16.mxu0 0
      %6304 = vmatpush2.bf16.msra.mxu0 %v5705
      %6305 = vmatprep.subr.bf16.mxu0 0
      %6306 = vmatpush2.bf16.msra.mxu0 %v5704
      %6307 = vmatprep.mubr.bf16.mxu0 %v5079
      %6308 = vmatmul.mubr.bf16.gmra.mxu0 %v5078
      %v6309 = vpop.f32.mrf.mxu0
      %v6310 = vadd.f32 %v6149, %v6309
      %v6311 = vpop.f32.mrf.mxu0
      %v6312 = vpop.f32.mrf.mxu0
      %v6313 = vadd.f32 %v6152, %v6312
      %v6314 = vpop.f32.mrf.mxu0
      %6315 = vmatprep.mubr.bf16.mxu0 %v5088
      %6316 = vmatmul.mubr.bf16.gmra.mxu0 %v5087
      %v6317 = vpop.f32.mrf.mxu0
      %v6318 = vadd.f32 %v6157, %v6317
      %v6319 = vpop.f32.mrf.mxu0
      %v6320 = vpop.f32.mrf.mxu0
      %v6321 = vadd.f32 %v6160, %v6320
      %v6322 = vpop.f32.mrf.mxu0
      %6323 = vmatprep.mubr.bf16.mxu0 %v5097
      %6324 = vmatmul.mubr.bf16.gmra.mxu0 %v5096
      %v6325 = vpop.f32.mrf.mxu0
      %v6326 = vadd.f32 %v6165, %v6325
      %v6327 = vpop.f32.mrf.mxu0
      %v6328 = vpop.f32.mrf.mxu0
      %v6329 = vadd.f32 %v6168, %v6328
      %v6330 = vpop.f32.mrf.mxu0
      %6331 = vmatprep.mubr.bf16.mxu0 %v5106
      %6332 = vmatmul.mubr.bf16.gmra.mxu0 %v5105
      %v6333 = vpop.f32.mrf.mxu0
      %v6334 = vadd.f32 %v6173, %v6333
      %v6335 = vpop.f32.mrf.mxu0
      %v6336 = vpop.f32.mrf.mxu0
      %v6337 = vadd.f32 %v6176, %v6336
      %v6338 = vpop.f32.mrf.mxu0
      %6339 = vmatprep.mubr.bf16.mxu0 %v5115
      %6340 = vmatmul.mubr.bf16.gmra.mxu0 %v5114
      %v6341 = vpop.f32.mrf.mxu0
      %v6342 = vadd.f32 %v6181, %v6341
      %v6343 = vpop.f32.mrf.mxu0
      %v6344 = vpop.f32.mrf.mxu0
      %v6345 = vadd.f32 %v6184, %v6344
      %v6346 = vpop.f32.mrf.mxu0
      %6347 = vmatprep.mubr.bf16.mxu0 %v5124
      %6348 = vmatmul.mubr.bf16.gmra.mxu0 %v5123
      %v6349 = vpop.f32.mrf.mxu0
      %v6350 = vadd.f32 %v6189, %v6349
      %v6351 = vpop.f32.mrf.mxu0
      %v6352 = vpop.f32.mrf.mxu0
      %v6353 = vadd.f32 %v6192, %v6352
      %v6354 = vpop.f32.mrf.mxu0
      %6355 = vmatprep.mubr.bf16.mxu0 %v5133
      %6356 = vmatmul.mubr.bf16.gmra.mxu0 %v5132
      %v6357 = vpop.f32.mrf.mxu0
      %v6358 = vadd.f32 %v6197, %v6357
      %v6359 = vpop.f32.mrf.mxu0
      %v6360 = vpop.f32.mrf.mxu0
      %v6361 = vadd.f32 %v6200, %v6360
      %v6362 = vpop.f32.mrf.mxu0
      %6363 = vmatprep.mubr.bf16.mxu0 %v5142
      %6364 = vmatmul.mubr.bf16.gmra.mxu0 %v5141
      %v6365 = vpop.f32.mrf.mxu0
      %v6366 = vadd.f32 %v6205, %v6365
      %v6367 = vpop.f32.mrf.mxu0
      %v6368 = vpop.f32.mrf.mxu0
      %v6369 = vadd.f32 %v6208, %v6368
      %v6370 = vpop.f32.mrf.mxu0
      %6371 = vmatprep.mubr.bf16.mxu0 %v5151
      %6372 = vmatmul.mubr.bf16.gmra.mxu0 %v5150
      %v6373 = vpop.f32.mrf.mxu0
      %v6374 = vadd.f32 %v6213, %v6373
      %v6375 = vpop.f32.mrf.mxu0
      %v6376 = vpop.f32.mrf.mxu0
      %v6377 = vadd.f32 %v6216, %v6376
      %v6378 = vpop.f32.mrf.mxu0
      %6379 = vmatprep.mubr.bf16.mxu0 %v5160
      %6380 = vmatmul.mubr.bf16.gmra.mxu0 %v5159
      %v6381 = vpop.f32.mrf.mxu0
      %v6382 = vadd.f32 %v6221, %v6381
      %v6383 = vpop.f32.mrf.mxu0
      %v6384 = vpop.f32.mrf.mxu0
      %v6385 = vadd.f32 %v6224, %v6384
      %v6386 = vpop.f32.mrf.mxu0
      %6387 = vmatprep.mubr.bf16.mxu0 %v5169
      %6388 = vmatmul.mubr.bf16.gmra.mxu0 %v5168
      %v6389 = vpop.f32.mrf.mxu0
      %v6390 = vadd.f32 %v6229, %v6389
      %v6391 = vpop.f32.mrf.mxu0
      %v6392 = vpop.f32.mrf.mxu0
      %v6393 = vadd.f32 %v6232, %v6392
      %v6394 = vpop.f32.mrf.mxu0
      %6395 = vmatprep.mubr.bf16.mxu0 %v5178
      %6396 = vmatmul.mubr.bf16.gmra.mxu0 %v5177
      %v6397 = vpop.f32.mrf.mxu0
      %v6398 = vadd.f32 %v6237, %v6397
      %v6399 = vpop.f32.mrf.mxu0
      %v6400 = vpop.f32.mrf.mxu0
      %v6401 = vadd.f32 %v6240, %v6400
      %v6402 = vpop.f32.mrf.mxu0
      %6403 = vmatprep.mubr.bf16.mxu0 %v5187
      %6404 = vmatmul.mubr.bf16.gmra.mxu0 %v5186
      %v6405 = vpop.f32.mrf.mxu0
      %v6406 = vadd.f32 %v6245, %v6405
      %v6407 = vpop.f32.mrf.mxu0
      %v6408 = vpop.f32.mrf.mxu0
      %v6409 = vadd.f32 %v6248, %v6408
      %v6410 = vpop.f32.mrf.mxu0
      %6411 = vmatprep.mubr.bf16.mxu0 %v5196
      %6412 = vmatmul.mubr.bf16.gmra.mxu0 %v5195
      %v6413 = vpop.f32.mrf.mxu0
      %v6414 = vadd.f32 %v6253, %v6413
      %v6415 = vpop.f32.mrf.mxu0
      %v6416 = vpop.f32.mrf.mxu0
      %v6417 = vadd.f32 %v6256, %v6416
      %v6418 = vpop.f32.mrf.mxu0
      %6419 = vmatprep.mubr.bf16.mxu0 %v5205
      %6420 = vmatmul.mubr.bf16.gmra.mxu0 %v5204
      %v6421 = vpop.f32.mrf.mxu0
      %v6422 = vadd.f32 %v6261, %v6421
      %v6423 = vpop.f32.mrf.mxu0
      %v6424 = vpop.f32.mrf.mxu0
      %v6425 = vadd.f32 %v6264, %v6424
      %v6426 = vpop.f32.mrf.mxu0
      %6427 = vmatprep.mubr.bf16.mxu0 %v5214
      %6428 = vmatmul.mubr.bf16.gmra.mxu0 %v5213
      %v6429 = vpop.f32.mrf.mxu0
      %v6430 = vadd.f32 %v6269, %v6429
      %v6431 = vpop.f32.mrf.mxu0
      %v6432 = vpop.f32.mrf.mxu0
      %v6433 = vadd.f32 %v6272, %v6432
      %v6434 = vpop.f32.mrf.mxu0
      %6435 = vdwg.mxu0
      %6436 = vmatprep.subr.bf16.mxu0 0
      %6437 = vmatpush1.bf16.msra.mxu0 %v5719
      %6438 = vmatprep.subr.bf16.mxu0 0
      %6439 = vmatpush1.bf16.msra.mxu0 %v5718
      %6440 = vmatprep.subr.bf16.mxu0 0
      %6441 = vmatpush1.bf16.msra.mxu0 %v5717
      %6442 = vmatprep.subr.bf16.mxu0 0
      %6443 = vmatpush1.bf16.msra.mxu0 %v5716
      %6444 = vmatprep.subr.bf16.mxu0 0
      %6445 = vmatpush1.bf16.msra.mxu0 %v5715
      %6446 = vmatprep.subr.bf16.mxu0 0
      %6447 = vmatpush1.bf16.msra.mxu0 %v5714
      %6448 = vmatprep.subr.bf16.mxu0 0
      %6449 = vmatpush1.bf16.msra.mxu0 %v5713
      %6450 = vmatprep.subr.bf16.mxu0 0
      %6451 = vmatpush1.bf16.msra.mxu0 %v5712
      %6452 = vmatprep.subr.bf16.mxu0 0
      %6453 = vmatpush2.bf16.msra.mxu0 0
      %6454 = vmatprep.subr.bf16.mxu0 0
      %6455 = vmatpush2.bf16.msra.mxu0 0
      %6456 = vmatprep.subr.bf16.mxu0 0
      %6457 = vmatpush2.bf16.msra.mxu0 0
      %6458 = vmatprep.subr.bf16.mxu0 0
      %6459 = vmatpush2.bf16.msra.mxu0 0
      %6460 = vmatprep.subr.bf16.mxu0 0
      %6461 = vmatpush2.bf16.msra.mxu0 0
      %6462 = vmatprep.subr.bf16.mxu0 0
      %6463 = vmatpush2.bf16.msra.mxu0 0
      %6464 = vmatprep.subr.bf16.mxu0 0
      %6465 = vmatpush2.bf16.msra.mxu0 0
      %6466 = vmatprep.subr.bf16.mxu0 0
      %6467 = vmatpush2.bf16.msra.mxu0 0
      %6468 = vmatprep.mubr.bf16.mxu0 0
      %6469 = vmatmul.mubr.bf16.gmra.mxu0 %v5080
      %v6470 = vpop.f32.mrf.mxu0
      %v6471 = vadd.f32 %v6310, %v6470
      %v6472 = vpop.f32.mrf.mxu0
      %v6473 = vpop.f32.mrf.mxu0
      %v6474 = vadd.f32 %v6313, %v6473
      %v6475 = vpop.f32.mrf.mxu0
      %6476 = vmatprep.mubr.bf16.mxu0 0
      %6477 = vmatmul.mubr.bf16.gmra.mxu0 %v5089
      %v6478 = vpop.f32.mrf.mxu0
      %v6479 = vadd.f32 %v6318, %v6478
      %v6480 = vpop.f32.mrf.mxu0
      %v6481 = vpop.f32.mrf.mxu0
      %v6482 = vadd.f32 %v6321, %v6481
      %v6483 = vpop.f32.mrf.mxu0
      %6484 = vmatprep.mubr.bf16.mxu0 0
      %6485 = vmatmul.mubr.bf16.gmra.mxu0 %v5098
      %v6486 = vpop.f32.mrf.mxu0
      %v6487 = vadd.f32 %v6326, %v6486
      %v6488 = vpop.f32.mrf.mxu0
      %v6489 = vpop.f32.mrf.mxu0
      %v6490 = vadd.f32 %v6329, %v6489
      %v6491 = vpop.f32.mrf.mxu0
      %6492 = vmatprep.mubr.bf16.mxu0 0
      %6493 = vmatmul.mubr.bf16.gmra.mxu0 %v5107
      %v6494 = vpop.f32.mrf.mxu0
      %v6495 = vadd.f32 %v6334, %v6494
      %v6496 = vpop.f32.mrf.mxu0
      %v6497 = vpop.f32.mrf.mxu0
      %v6498 = vadd.f32 %v6337, %v6497
      %v6499 = vpop.f32.mrf.mxu0
      %6500 = vmatprep.mubr.bf16.mxu0 0
      %6501 = vmatmul.mubr.bf16.gmra.mxu0 %v5116
      %v6502 = vpop.f32.mrf.mxu0
      %v6503 = vadd.f32 %v6342, %v6502
      %v6504 = vpop.f32.mrf.mxu0
      %v6505 = vpop.f32.mrf.mxu0
      %v6506 = vadd.f32 %v6345, %v6505
      %v6507 = vpop.f32.mrf.mxu0
      %6508 = vmatprep.mubr.bf16.mxu0 0
      %6509 = vmatmul.mubr.bf16.gmra.mxu0 %v5125
      %v6510 = vpop.f32.mrf.mxu0
      %v6511 = vadd.f32 %v6350, %v6510
      %v6512 = vpop.f32.mrf.mxu0
      %v6513 = vpop.f32.mrf.mxu0
      %v6514 = vadd.f32 %v6353, %v6513
      %v6515 = vpop.f32.mrf.mxu0
      %6516 = vmatprep.mubr.bf16.mxu0 0
      %6517 = vmatmul.mubr.bf16.gmra.mxu0 %v5134
      %v6518 = vpop.f32.mrf.mxu0
      %v6519 = vadd.f32 %v6358, %v6518
      %v6520 = vpop.f32.mrf.mxu0
      %v6521 = vpop.f32.mrf.mxu0
      %v6522 = vadd.f32 %v6361, %v6521
      %v6523 = vpop.f32.mrf.mxu0
      %6524 = vmatprep.mubr.bf16.mxu0 0
      %6525 = vmatmul.mubr.bf16.gmra.mxu0 %v5143
      %v6526 = vpop.f32.mrf.mxu0
      %v6527 = vadd.f32 %v6366, %v6526
      %v6528 = vpop.f32.mrf.mxu0
      %v6529 = vpop.f32.mrf.mxu0
      %v6530 = vadd.f32 %v6369, %v6529
      %v6531 = vpop.f32.mrf.mxu0
      %6532 = vmatprep.mubr.bf16.mxu0 0
      %6533 = vmatmul.mubr.bf16.gmra.mxu0 %v5152
      %v6534 = vpop.f32.mrf.mxu0
      %v6535 = vadd.f32 %v6374, %v6534
      %v6536 = vpop.f32.mrf.mxu0
      %v6537 = vpop.f32.mrf.mxu0
      %v6538 = vadd.f32 %v6377, %v6537
      %v6539 = vpop.f32.mrf.mxu0
      %6540 = vmatprep.mubr.bf16.mxu0 0
      %6541 = vmatmul.mubr.bf16.gmra.mxu0 %v5161
      %v6542 = vpop.f32.mrf.mxu0
      %v6543 = vadd.f32 %v6382, %v6542
      %v6544 = vpop.f32.mrf.mxu0
      %v6545 = vpop.f32.mrf.mxu0
      %v6546 = vadd.f32 %v6385, %v6545
      %v6547 = vpop.f32.mrf.mxu0
      %6548 = vmatprep.mubr.bf16.mxu0 0
      %6549 = vmatmul.mubr.bf16.gmra.mxu0 %v5170
      %v6550 = vpop.f32.mrf.mxu0
      %v6551 = vadd.f32 %v6390, %v6550
      %v6552 = vpop.f32.mrf.mxu0
      %v6553 = vpop.f32.mrf.mxu0
      %v6554 = vadd.f32 %v6393, %v6553
      %v6555 = vpop.f32.mrf.mxu0
      %6556 = vmatprep.mubr.bf16.mxu0 0
      %6557 = vmatmul.mubr.bf16.gmra.mxu0 %v5179
      %v6558 = vpop.f32.mrf.mxu0
      %v6559 = vadd.f32 %v6398, %v6558
      %v6560 = vpop.f32.mrf.mxu0
      %v6561 = vpop.f32.mrf.mxu0
      %v6562 = vadd.f32 %v6401, %v6561
      %v6563 = vpop.f32.mrf.mxu0
      %6564 = vmatprep.mubr.bf16.mxu0 0
      %6565 = vmatmul.mubr.bf16.gmra.mxu0 %v5188
      %v6566 = vpop.f32.mrf.mxu0
      %v6567 = vadd.f32 %v6406, %v6566
      %v6568 = vpop.f32.mrf.mxu0
      %v6569 = vpop.f32.mrf.mxu0
      %v6570 = vadd.f32 %v6409, %v6569
      %v6571 = vpop.f32.mrf.mxu0
      %6572 = vmatprep.mubr.bf16.mxu0 0
      %6573 = vmatmul.mubr.bf16.gmra.mxu0 %v5197
      %v6574 = vpop.f32.mrf.mxu0
      %v6575 = vadd.f32 %v6414, %v6574
      %v6576 = vpop.f32.mrf.mxu0
      %v6577 = vpop.f32.mrf.mxu0
      %v6578 = vadd.f32 %v6417, %v6577
      %v6579 = vpop.f32.mrf.mxu0
      %6580 = vmatprep.mubr.bf16.mxu0 0
      %6581 = vmatmul.mubr.bf16.gmra.mxu0 %v5206
      %v6582 = vpop.f32.mrf.mxu0
      %v6583 = vadd.f32 %v6422, %v6582
      %v6584 = vpop.f32.mrf.mxu0
      %v6585 = vpop.f32.mrf.mxu0
      %v6586 = vadd.f32 %v6425, %v6585
      %v6587 = vpop.f32.mrf.mxu0
      %6588 = vmatprep.mubr.bf16.mxu0 0
      %6589 = vmatmul.mubr.bf16.gmra.mxu0 %v5215
      %v6590 = vpop.f32.mrf.mxu0
      %v6591 = vadd.f32 %v6430, %v6590
      %v6592 = vpop.f32.mrf.mxu0
      %v6593 = vpop.f32.mrf.mxu0
      %v6594 = vadd.f32 %v6433, %v6593
      %v6595 = vpop.f32.mrf.mxu0
      %6596 = vdwg.mxu0
      %v6597 = vmax.f32 %v6471, 0.0
      %v6598 = vmax.f32 %v6474, 0.0
      %v6599 = vmax.f32 %v6479, 0.0
      %v6600 = vmax.f32 %v6482, 0.0
      %v6601 = vmax.f32 %v6487, 0.0
      %v6602 = vmax.f32 %v6490, 0.0
      %v6603 = vmax.f32 %v6495, 0.0
      %v6604 = vmax.f32 %v6498, 0.0
      %v6605 = vmax.f32 %v6503, 0.0
      %v6606 = vmax.f32 %v6506, 0.0
      %v6607 = vmax.f32 %v6511, 0.0
      %v6608 = vmax.f32 %v6514, 0.0
      %v6609 = vmax.f32 %v6519, 0.0
      %v6610 = vmax.f32 %v6522, 0.0
      %v6611 = vmax.f32 %v6527, 0.0
      %v6612 = vmax.f32 %v6530, 0.0
      %v6613 = vmax.f32 %v6535, 0.0
      %v6614 = vmax.f32 %v6538, 0.0
      %v6615 = vmax.f32 %v6543, 0.0
      %v6616 = vmax.f32 %v6546, 0.0
      %v6617 = vmax.f32 %v6551, 0.0
      %v6618 = vmax.f32 %v6554, 0.0
      %v6619 = vmax.f32 %v6559, 0.0
      %v6620 = vmax.f32 %v6562, 0.0
      %v6621 = vmax.f32 %v6567, 0.0
      %v6622 = vmax.f32 %v6570, 0.0
      %v6623 = vmax.f32 %v6575, 0.0
      %v6624 = vmax.f32 %v6578, 0.0
      %v6625 = vmax.f32 %v6583, 0.0
      %v6626 = vmax.f32 %v6586, 0.0
      %v6627 = vmax.f32 %v6591, 0.0
      %v6628 = vmax.f32 %v6594, 0.0
      %v6629 = vadd.f32 %v6597, %v6598
      %v6630 = vadd.f32 %v6629, %v6599
      %v6631 = vadd.f32 %v6630, %v6600
      %v6632 = vadd.f32 %v6631, %v6601
      %v6633 = vadd.f32 %v6632, %v6602
      %v6634 = vadd.f32 %v6633, %v6603
      %v6635 = vadd.f32 %v6634, %v6604
      %v6636 = vadd.f32 %v6635, %v6605
      %v6637 = vadd.f32 %v6636, %v6606
      %v6638 = vadd.f32 %v6637, %v6607
      %v6639 = vadd.f32 %v6638, %v6608
      %v6640 = vadd.f32 %v6639, %v6609
      %v6641 = vadd.f32 %v6640, %v6610
      %v6642 = vadd.f32 %v6641, %v6611
      %v6643 = vadd.f32 %v6642, %v6612
      %v6644 = vadd.f32 %v6643, %v6613
      %v6645 = vadd.f32 %v6644, %v6614
      %v6646 = vadd.f32 %v6645, %v6615
      %v6647 = vadd.f32 %v6646, %v6616
      %v6648 = vadd.f32 %v6647, %v6617
      %v6649 = vadd.f32 %v6648, %v6618
      %v6650 = vadd.f32 %v6649, %v6619
      %v6651 = vadd.f32 %v6650, %v6620
      %v6652 = vadd.f32 %v6651, %v6621
      %v6653 = vadd.f32 %v6652, %v6622
      %v6654 = vadd.f32 %v6653, %v6623
      %v6655 = vadd.f32 %v6654, %v6624
      %v6656 = vadd.f32 %v6655, %v6625
      %v6657 = vadd.f32 %v6656, %v6626
      %v6658 = vadd.f32 %v6657, %v6627
      %v6659 = vadd.f32 %v6658, %v6628
      %v6660 = vrot.slane %v6659, 4
      %v6661 = vadd.f32 %v6659, %v6660
      %v6662 = vrot.slane %v6661, 2
      %v6663 = vadd.f32 %v6661, %v6662
      %v6664 = vrot.slane %v6663, 1
      %v6665 = vadd.f32 %v6663, %v6664
      %v6666 = vrcp.pop 256.0
      %v6667 = vmul.f32 %v6665, %v6666
      %v6668 = vpack.c.bf16 %v6598, %v6597
      %v6669 = vpack.c.bf16 %v6600, %v6599
      %v6670 = vpack.c.bf16 %v6602, %v6601
      %v6671 = vpack.c.bf16 %v6604, %v6603
      %v6672 = vpack.c.bf16 %v6606, %v6605
      %v6673 = vpack.c.bf16 %v6608, %v6607
      %v6674 = vpack.c.bf16 %v6610, %v6609
      %v6675 = vpack.c.bf16 %v6612, %v6611
      %v6676 = vpack.c.bf16 %v6614, %v6613
      %v6677 = vpack.c.bf16 %v6616, %v6615
      %v6678 = vpack.c.bf16 %v6618, %v6617
      %v6679 = vpack.c.bf16 %v6620, %v6619
      %v6680 = vpack.c.bf16 %v6622, %v6621
      %v6681 = vpack.c.bf16 %v6624, %v6623
      %v6682 = vpack.c.bf16 %v6626, %v6625
      %v6683 = vpack.c.bf16 %v6628, %v6627
      %v6700 = vunpack.c.l.b16 %v6668
      %v6701 = vunpack.c.h.b16 %v6668
      %v6702 = vunpack.c.l.b16 %v6669
      %v6703 = vunpack.c.h.b16 %v6669
      %v6704 = vunpack.c.l.b16 %v6670
      %v6705 = vunpack.c.h.b16 %v6670
      %v6706 = vunpack.c.l.b16 %v6671
      %v6707 = vunpack.c.h.b16 %v6671
      %v6708 = vunpack.c.l.b16 %v6672
      %v6709 = vunpack.c.h.b16 %v6672
      %v6710 = vunpack.c.l.b16 %v6673
      %v6711 = vunpack.c.h.b16 %v6673
      %v6712 = vunpack.c.l.b16 %v6674
      %v6713 = vunpack.c.h.b16 %v6674
      %v6714 = vunpack.c.l.b16 %v6675
      %v6715 = vunpack.c.h.b16 %v6675
      %v6716 = vunpack.c.l.b16 %v6676
      %v6717 = vunpack.c.h.b16 %v6676
      %v6718 = vunpack.c.l.b16 %v6677
      %v6719 = vunpack.c.h.b16 %v6677
      %v6720 = vunpack.c.l.b16 %v6678
      %v6721 = vunpack.c.h.b16 %v6678
      %v6722 = vunpack.c.l.b16 %v6679
      %v6723 = vunpack.c.h.b16 %v6679
      %v6724 = vunpack.c.l.b16 %v6680
      %v6725 = vunpack.c.h.b16 %v6680
      %v6726 = vunpack.c.l.b16 %v6681
      %v6727 = vunpack.c.h.b16 %v6681
      %v6728 = vunpack.c.l.b16 %v6682
      %v6729 = vunpack.c.h.b16 %v6682
      %v6730 = vunpack.c.l.b16 %v6683
      %v6731 = vunpack.c.h.b16 %v6683
      %v6732 = vpack.c.b16 %v6700, %v6700
      %v6733 = vpack.c.b16 %v6701, %v6701
      %v6734 = vpack.c.b16 %v6702, %v6702
      %v6735 = vpack.c.b16 %v6703, %v6703
      %v6736 = vpack.c.b16 %v6704, %v6704
      %v6737 = vpack.c.b16 %v6705, %v6705
      %v6738 = vpack.c.b16 %v6706, %v6706
      %v6739 = vpack.c.b16 %v6707, %v6707
      %v6740 = vpack.c.b16 %v6708, %v6708
      %v6741 = vpack.c.b16 %v6709, %v6709
      %v6742 = vpack.c.b16 %v6710, %v6710
      %v6743 = vpack.c.b16 %v6711, %v6711
      %v6744 = vpack.c.b16 %v6712, %v6712
      %v6745 = vpack.c.b16 %v6713, %v6713
      %v6746 = vpack.c.b16 %v6714, %v6714
      %v6747 = vpack.c.b16 %v6715, %v6715
      %v6748 = vpack.c.b16 %v6716, %v6716
      %v6749 = vpack.c.b16 %v6717, %v6717
      %v6750 = vpack.c.b16 %v6718, %v6718
      %v6751 = vpack.c.b16 %v6719, %v6719
      %v6752 = vpack.c.b16 %v6720, %v6720
      %v6753 = vpack.c.b16 %v6721, %v6721
      %v6754 = vpack.c.b16 %v6722, %v6722
      %v6755 = vpack.c.b16 %v6723, %v6723
      %v6756 = vpack.c.b16 %v6724, %v6724
      %v6757 = vpack.c.b16 %v6725, %v6725
      %v6758 = vpack.c.b16 %v6726, %v6726
      %v6759 = vpack.c.b16 %v6727, %v6727
      %v6760 = vpack.c.b16 %v6728, %v6728
      %v6761 = vpack.c.b16 %v6729, %v6729
      %v6762 = vpack.c.b16 %v6730, %v6730
      %v6763 = vpack.c.b16 %v6731, %v6731
      %6796 = vst [vmem:[#allocation2 + $0x10] sm:$0xf] %v6732
      %6797 = vst [vmem:[#allocation2 + $0x14] sm:$0xf] %v6733
      %6798 = vst [vmem:[#allocation2 + $0x18] sm:$0xf] %v6734
      %6799 = vst [vmem:[#allocation2 + $0x1c] sm:$0xf] %v6735
      %6800 = vst [vmem:[#allocation2 + $0x20] sm:$0xf] %v6736
      %6801 = vst [vmem:[#allocation2 + $0x24] sm:$0xf] %v6737
      %6802 = vst [vmem:[#allocation2 + $0x28] sm:$0xf] %v6738
      %6803 = vst [vmem:[#allocation2 + $0x2c] sm:$0xf] %v6739
      %6804 = vst [vmem:[#allocation2 + $0x30] sm:$0xf] %v6740
      %6805 = vst [vmem:[#allocation2 + $0x34] sm:$0xf] %v6741
      %6806 = vst [vmem:[#allocation2 + $0x38] sm:$0xf] %v6742
      %6807 = vst [vmem:[#allocation2 + $0x3c] sm:$0xf] %v6743
      %6808 = vst [vmem:[#allocation2 + $0x40] sm:$0xf] %v6744
      %6809 = vst [vmem:[#allocation2 + $0x44] sm:$0xf] %v6745
      %6810 = vst [vmem:[#allocation2 + $0x48] sm:$0xf] %v6746
      %6811 = vst [vmem:[#allocation2 + $0x4c] sm:$0xf] %v6747
      %6812 = vst [vmem:[#allocation2 + $0x50] sm:$0xf] %v6748
      %6813 = vst [vmem:[#allocation2 + $0x54] sm:$0xf] %v6749
      %6814 = vst [vmem:[#allocation2 + $0x58] sm:$0xf] %v6750
      %6815 = vst [vmem:[#allocation2 + $0x5c] sm:$0xf] %v6751
      %6816 = vst [vmem:[#allocation2 + $0x60] sm:$0xf] %v6752
      %6817 = vst [vmem:[#allocation2 + $0x64] sm:$0xf] %v6753
      %6818 = vst [vmem:[#allocation2 + $0x68] sm:$0xf] %v6754
      %6819 = vst [vmem:[#allocation2 + $0x6c] sm:$0xf] %v6755
      %6820 = vst [vmem:[#allocation2 + $0x70] sm:$0xf] %v6756
      %6821 = vst [vmem:[#allocation2 + $0x74] sm:$0xf] %v6757
      %6822 = vst [vmem:[#allocation2 + $0x78] sm:$0xf] %v6758
      %6823 = vst [vmem:[#allocation2 + $0x7c] sm:$0xf] %v6759
      %6824 = vst [vmem:[#allocation2 + $0x80] sm:$0xf] %v6760
      %6825 = vst [vmem:[#allocation2 + $0x84] sm:$0xf] %v6761
      %6826 = vst [vmem:[#allocation2 + $0x88] sm:$0xf] %v6762
      %6827 = vst [vmem:[#allocation2 + $0x8c] sm:$0xf] %v6763
      %v6828 = vld [vmem:[#allocation2 + $0x4] sm:$0x8]
      %v6829 = vld [vmem:[#allocation2 + $0x8] sm:$0xf]
      %v6830 = vld [vmem:[#allocation2 + $0xc] sm:$0xf]
      %v6831 = vld [vmem:[#allocation2 + $0x10] sm:$0xf]
      %v6832 = vld [vmem:[#allocation2 + $0x14] sm:$0xf]
      %v6833 = vld [vmem:[#allocation2 + $0x18] sm:$0xf]
      %v6834 = vld [vmem:[#allocation2 + $0x1c] sm:$0xf]
      %v6835 = vld [vmem:[#allocation2 + $0x20] sm:$0xf]
      %v6836 = vld [vmem:[#allocation2 + $0x24] sm:$0xf]
      %v6837 = vld [vmem:[#allocation2 + $0x28] sm:$0xf]
      %v6838 = vld [vmem:[#allocation2 + $0x2c] sm:$0xf]
      %v6839 = vld [vmem:[#allocation2 + $0x30] sm:$0xf]
      %v6840 = vld [vmem:[#allocation2 + $0x34] sm:$0xf]
      %v6841 = vld [vmem:[#allocation2 + $0x38] sm:$0xf]
      %v6842 = vld [vmem:[#allocation2 + $0x3c] sm:$0xf]
      %v6843 = vld [vmem:[#allocation2 + $0x40] sm:$0xf]
      %v6844 = vld [vmem:[#allocation2 + $0x44] sm:$0xf]
      %v6845 = vld [vmem:[#allocation2 + $0x48] sm:$0xf]
      %v6846 = vld [vmem:[#allocation2 + $0x4c] sm:$0xf]
      %v6847 = vld [vmem:[#allocation2 + $0x50] sm:$0xf]
      %v6848 = vld [vmem:[#allocation2 + $0x54] sm:$0xf]
      %v6849 = vld [vmem:[#allocation2 + $0x58] sm:$0xf]
      %v6850 = vld [vmem:[#allocation2 + $0x5c] sm:$0xf]
      %v6851 = vld [vmem:[#allocation2 + $0x60] sm:$0xf]
      %v6852 = vld [vmem:[#allocation2 + $0x64] sm:$0xf]
      %v6853 = vld [vmem:[#allocation2 + $0x68] sm:$0xf]
      %v6854 = vld [vmem:[#allocation2 + $0x6c] sm:$0xf]
      %v6855 = vld [vmem:[#allocation2 + $0x70] sm:$0xf]
      %v6856 = vld [vmem:[#allocation2 + $0x74] sm:$0xf]
      %v6857 = vld [vmem:[#allocation2 + $0x78] sm:$0xf]
      %v6858 = vld [vmem:[#allocation2 + $0x7c] sm:$0xf]
      %v6859 = vld [vmem:[#allocation2 + $0x80] sm:$0xf]
      %v6860 = vld [vmem:[#allocation2 + $0x84] sm:$0xf]
      %v6861 = vsel %vm946, %v6828, 0
      %v6862 = vsel %vm947, %v6829, 0
      %v6863 = vsel %vm948, %v6830, 0
      %v6864 = vsel %vm949, %v6831, 0
      %v6865 = vsel %vm950, %v6832, 0
      %v6866 = vsel %vm951, %v6833, 0
      %v6867 = vsel %vm952, %v6834, 0
      %v6868 = vsel %vm953, %v6835, 0
      %v6869 = vsel %vm954, %v6836, 0
      %v6870 = vsel %vm955, %v6837, 0
      %v6871 = vsel %vm956, %v6838, 0
      %v6872 = vsel %vm957, %v6839, 0
      %v6873 = vsel %vm958, %v6840, 0
      %v6874 = vsel %vm959, %v6841, 0
      %v6875 = vsel %vm960, %v6842, 0
      %v6876 = vsel %vm961, %v6843, 0
      %v6877 = vsel %vm962, %v6844, 0
      %v6878 = vsel %vm963, %v6845, 0
      %v6879 = vsel %vm964, %v6846, 0
      %v6880 = vsel %vm965, %v6847, 0
      %v6881 = vsel %vm966, %v6848, 0
      %v6882 = vsel %vm967, %v6849, 0
      %v6883 = vsel %vm968, %v6850, 0
      %v6884 = vsel %vm969, %v6851, 0
      %v6885 = vsel %vm970, %v6852, 0
      %v6886 = vsel %vm971, %v6853, 0
      %v6887 = vsel %vm972, %v6854, 0
      %v6888 = vsel %vm973, %v6855, 0
      %v6889 = vsel %vm974, %v6856, 0
      %v6890 = vsel %vm975, %v6857, 0
      %v6891 = vsel %vm976, %v6858, 0
      %v6892 = vsel %vm977, %v6859, 0
      %v6893 = vsel %vm978, %v6860, 0
      %v6895 = vshrl.u32 %v6861, 16
      %v6897 = vrot.slane %v6895, 7
      %v6898 = vrot.slane %v6897, 4
      %v6900 = vshrl.u32 %v6862, 16
      %v6902 = vrot.slane %v6900, 7
      %v6903 = vshll.u32 %v6862, 16
      %v6905 = vor.u32 %v6902, %v6903
      %v6906 = vsel %vm1014, %v6898, %v6905
      %v6907 = vrot.slane %v6902, 4
      %v6909 = vshrl.u32 %v6863, 16
      %v6911 = vrot.slane %v6909, 7
      %v6912 = vshll.u32 %v6863, 16
      %v6914 = vor.u32 %v6911, %v6912
      %v6915 = vsel %vm1014, %v6907, %v6914
      %v6916 = vrot.slane %v6911, 4
      %v6918 = vshrl.u32 %v6864, 16
      %v6920 = vrot.slane %v6918, 7
      %v6921 = vshll.u32 %v6864, 16
      %v6923 = vor.u32 %v6920, %v6921
      %v6924 = vsel %vm1014, %v6916, %v6923
      %v6925 = vrot.slane %v6920, 4
      %v6927 = vshrl.u32 %v6865, 16
      %v6929 = vrot.slane %v6927, 7
      %v6930 = vshll.u32 %v6865, 16
      %v6932 = vor.u32 %v6929, %v6930
      %v6933 = vsel %vm1014, %v6925, %v6932
      %v6934 = vrot.slane %v6929, 4
      %v6936 = vshrl.u32 %v6866, 16
      %v6938 = vrot.slane %v6936, 7
      %v6939 = vshll.u32 %v6866, 16
      %v6941 = vor.u32 %v6938, %v6939
      %v6942 = vsel %vm1014, %v6934, %v6941
      %v6943 = vrot.slane %v6938, 4
      %v6945 = vshrl.u32 %v6867, 16
      %v6947 = vrot.slane %v6945, 7
      %v6948 = vshll.u32 %v6867, 16
      %v6950 = vor.u32 %v6947, %v6948
      %v6951 = vsel %vm1014, %v6943, %v6950
      %v6952 = vrot.slane %v6947, 4
      %v6954 = vshrl.u32 %v6868, 16
      %v6956 = vrot.slane %v6954, 7
      %v6957 = vshll.u32 %v6868, 16
      %v6959 = vor.u32 %v6956, %v6957
      %v6960 = vsel %vm1014, %v6952, %v6959
      %v6961 = vrot.slane %v6956, 4
      %v6963 = vshrl.u32 %v6869, 16
      %v6965 = vrot.slane %v6963, 7
      %v6966 = vshll.u32 %v6869, 16
      %v6968 = vor.u32 %v6965, %v6966
      %v6969 = vsel %vm1014, %v6961, %v6968
      %v6970 = vrot.slane %v6965, 4
      %v6972 = vshrl.u32 %v6870, 16
      %v6974 = vrot.slane %v6972, 7
      %v6975 = vshll.u32 %v6870, 16
      %v6977 = vor.u32 %v6974, %v6975
      %v6978 = vsel %vm1014, %v6970, %v6977
      %v6979 = vrot.slane %v6974, 4
      %v6981 = vshrl.u32 %v6871, 16
      %v6983 = vrot.slane %v6981, 7
      %v6984 = vshll.u32 %v6871, 16
      %v6986 = vor.u32 %v6983, %v6984
      %v6987 = vsel %vm1014, %v6979, %v6986
      %v6988 = vrot.slane %v6983, 4
      %v6990 = vshrl.u32 %v6872, 16
      %v6992 = vrot.slane %v6990, 7
      %v6993 = vshll.u32 %v6872, 16
      %v6995 = vor.u32 %v6992, %v6993
      %v6996 = vsel %vm1014, %v6988, %v6995
      %v6997 = vrot.slane %v6992, 4
      %v6999 = vshrl.u32 %v6873, 16
      %v7001 = vrot.slane %v6999, 7
      %v7002 = vshll.u32 %v6873, 16
      %v7004 = vor.u32 %v7001, %v7002
      %v7005 = vsel %vm1014, %v6997, %v7004
      %v7006 = vrot.slane %v7001, 4
      %v7008 = vshrl.u32 %v6874, 16
      %v7010 = vrot.slane %v7008, 7
      %v7011 = vshll.u32 %v6874, 16
      %v7013 = vor.u32 %v7010, %v7011
      %v7014 = vsel %vm1014, %v7006, %v7013
      %v7015 = vrot.slane %v7010, 4
      %v7017 = vshrl.u32 %v6875, 16
      %v7019 = vrot.slane %v7017, 7
      %v7020 = vshll.u32 %v6875, 16
      %v7022 = vor.u32 %v7019, %v7020
      %v7023 = vsel %vm1014, %v7015, %v7022
      %v7024 = vrot.slane %v7019, 4
      %v7026 = vshrl.u32 %v6876, 16
      %v7028 = vrot.slane %v7026, 7
      %v7029 = vshll.u32 %v6876, 16
      %v7031 = vor.u32 %v7028, %v7029
      %v7032 = vsel %vm1014, %v7024, %v7031
      %v7033 = vrot.slane %v7028, 4
      %v7035 = vshrl.u32 %v6877, 16
      %v7037 = vrot.slane %v7035, 7
      %v7038 = vshll.u32 %v6877, 16
      %v7040 = vor.u32 %v7037, %v7038
      %v7041 = vsel %vm1014, %v7033, %v7040
      %v7042 = vrot.slane %v7037, 4
      %v7044 = vshrl.u32 %v6878, 16
      %v7046 = vrot.slane %v7044, 7
      %v7047 = vshll.u32 %v6878, 16
      %v7049 = vor.u32 %v7046, %v7047
      %v7050 = vsel %vm1014, %v7042, %v7049
      %v7051 = vrot.slane %v7046, 4
      %v7053 = vshrl.u32 %v6879, 16
      %v7055 = vrot.slane %v7053, 7
      %v7056 = vshll.u32 %v6879, 16
      %v7058 = vor.u32 %v7055, %v7056
      %v7059 = vsel %vm1014, %v7051, %v7058
      %v7060 = vrot.slane %v7055, 4
      %v7062 = vshrl.u32 %v6880, 16
      %v7064 = vrot.slane %v7062, 7
      %v7065 = vshll.u32 %v6880, 16
      %v7067 = vor.u32 %v7064, %v7065
      %v7068 = vsel %vm1014, %v7060, %v7067
      %v7069 = vrot.slane %v7064, 4
      %v7071 = vshrl.u32 %v6881, 16
      %v7073 = vrot.slane %v7071, 7
      %v7074 = vshll.u32 %v6881, 16
      %v7076 = vor.u32 %v7073, %v7074
      %v7077 = vsel %vm1014, %v7069, %v7076
      %v7078 = vrot.slane %v7073, 4
      %v7080 = vshrl.u32 %v6882, 16
      %v7082 = vrot.slane %v7080, 7
      %v7083 = vshll.u32 %v6882, 16
      %v7085 = vor.u32 %v7082, %v7083
      %v7086 = vsel %vm1014, %v7078, %v7085
      %v7087 = vrot.slane %v7082, 4
      %v7089 = vshrl.u32 %v6883, 16
      %v7091 = vrot.slane %v7089, 7
      %v7092 = vshll.u32 %v6883, 16
      %v7094 = vor.u32 %v7091, %v7092
      %v7095 = vsel %vm1014, %v7087, %v7094
      %v7096 = vrot.slane %v7091, 4
      %v7098 = vshrl.u32 %v6884, 16
      %v7100 = vrot.slane %v7098, 7
      %v7101 = vshll.u32 %v6884, 16
      %v7103 = vor.u32 %v7100, %v7101
      %v7104 = vsel %vm1014, %v7096, %v7103
      %v7105 = vrot.slane %v7100, 4
      %v7107 = vshrl.u32 %v6885, 16
      %v7109 = vrot.slane %v7107, 7
      %v7110 = vshll.u32 %v6885, 16
      %v7112 = vor.u32 %v7109, %v7110
      %v7113 = vsel %vm1014, %v7105, %v7112
      %v7114 = vrot.slane %v7109, 4
      %v7116 = vshrl.u32 %v6886, 16
      %v7118 = vrot.slane %v7116, 7
      %v7119 = vshll.u32 %v6886, 16
      %v7121 = vor.u32 %v7118, %v7119
      %v7122 = vsel %vm1014, %v7114, %v7121
      %v7123 = vrot.slane %v7118, 4
      %v7125 = vshrl.u32 %v6887, 16
      %v7127 = vrot.slane %v7125, 7
      %v7128 = vshll.u32 %v6887, 16
      %v7130 = vor.u32 %v7127, %v7128
      %v7131 = vsel %vm1014, %v7123, %v7130
      %v7132 = vrot.slane %v7127, 4
      %v7134 = vshrl.u32 %v6888, 16
      %v7136 = vrot.slane %v7134, 7
      %v7137 = vshll.u32 %v6888, 16
      %v7139 = vor.u32 %v7136, %v7137
      %v7140 = vsel %vm1014, %v7132, %v7139
      %v7141 = vrot.slane %v7136, 4
      %v7143 = vshrl.u32 %v6889, 16
      %v7145 = vrot.slane %v7143, 7
      %v7146 = vshll.u32 %v6889, 16
      %v7148 = vor.u32 %v7145, %v7146
      %v7149 = vsel %vm1014, %v7141, %v7148
      %v7150 = vrot.slane %v7145, 4
      %v7152 = vshrl.u32 %v6890, 16
      %v7154 = vrot.slane %v7152, 7
      %v7155 = vshll.u32 %v6890, 16
      %v7157 = vor.u32 %v7154, %v7155
      %v7158 = vsel %vm1014, %v7150, %v7157
      %v7159 = vrot.slane %v7154, 4
      %v7161 = vshrl.u32 %v6891, 16
      %v7163 = vrot.slane %v7161, 7
      %v7164 = vshll.u32 %v6891, 16
      %v7166 = vor.u32 %v7163, %v7164
      %v7167 = vsel %vm1014, %v7159, %v7166
      %v7168 = vrot.slane %v7163, 4
      %v7170 = vshrl.u32 %v6892, 16
      %v7172 = vrot.slane %v7170, 7
      %v7173 = vshll.u32 %v6892, 16
      %v7175 = vor.u32 %v7172, %v7173
      %v7176 = vsel %vm1014, %v7168, %v7175
      %v7177 = vrot.slane %v7172, 4
      %v7179 = vshrl.u32 %v6893, 16
      %v7181 = vrot.slane %v7179, 7
      %v7182 = vshll.u32 %v6893, 16
      %v7184 = vor.u32 %v7181, %v7182
      %v7185 = vsel %vm1014, %v7177, %v7184
      %7218 = vst [vmem:[#allocation3] sm:$0xf] %v6906
      %7219 = vst [vmem:[#allocation3 + $0x24] sm:$0xf] %v6915
      %7220 = vst [vmem:[#allocation3 + $0x48] sm:$0xf] %v6924
      %7221 = vst [vmem:[#allocation3 + $0x6c] sm:$0xf] %v6933
      %7222 = vst [vmem:[#allocation3 + $0x90] sm:$0xf] %v6942
      %7223 = vst [vmem:[#allocation3 + $0xb4] sm:$0xf] %v6951
      %7224 = vst [vmem:[#allocation3 + $0xd8] sm:$0xf] %v6960
      %7225 = vst [vmem:[#allocation3 + $0xfc] sm:$0xf] %v6969
      %7226 = vst [vmem:[#allocation3 + $0x120] sm:$0xf] %v6978
      %7227 = vst [vmem:[#allocation3 + $0x144] sm:$0xf] %v6987
      %7228 = vst [vmem:[#allocation3 + $0x168] sm:$0xf] %v6996
      %7229 = vst [vmem:[#allocation3 + $0x18c] sm:$0xf] %v7005
      %7230 = vst [vmem:[#allocation3 + $0x1b0] sm:$0xf] %v7014
      %7231 = vst [vmem:[#allocation3 + $0x1d4] sm:$0xf] %v7023
      %7232 = vst [vmem:[#allocation3 + $0x1f8] sm:$0xf] %v7032
      %7233 = vst [vmem:[#allocation3 + $0x21c] sm:$0xf] %v7041
      %7234 = vst [vmem:[#allocation3 + $0x240] sm:$0xf] %v7050
      %7235 = vst [vmem:[#allocation3 + $0x264] sm:$0xf] %v7059
      %7236 = vst [vmem:[#allocation3 + $0x288] sm:$0xf] %v7068
      %7237 = vst [vmem:[#allocation3 + $0x2ac] sm:$0xf] %v7077
      %7238 = vst [vmem:[#allocation3 + $0x2d0] sm:$0xf] %v7086
      %7239 = vst [vmem:[#allocation3 + $0x2f4] sm:$0xf] %v7095
      %7240 = vst [vmem:[#allocation3 + $0x318] sm:$0xf] %v7104
      %7241 = vst [vmem:[#allocation3 + $0x33c] sm:$0xf] %v7113
      %7242 = vst [vmem:[#allocation3 + $0x360] sm:$0xf] %v7122
      %7243 = vst [vmem:[#allocation3 + $0x384] sm:$0xf] %v7131
      %7244 = vst [vmem:[#allocation3 + $0x3a8] sm:$0xf] %v7140
      %7245 = vst [vmem:[#allocation3 + $0x3cc] sm:$0xf] %v7149
      %7246 = vst [vmem:[#allocation3 + $0x3f0] sm:$0xf] %v7158
      %7247 = vst [vmem:[#allocation3 + $0x414] sm:$0xf] %v7167
      %7248 = vst [vmem:[#allocation3 + $0x438] sm:$0xf] %v7176
      %7249 = vst [vmem:[#allocation3 + $0x45c] sm:$0xf] %v7185
      %v7250 = vld [vmem:[#allocation2 + $0x8] sm:$0xf]
      %v7251 = vld [vmem:[#allocation2 + $0xc] sm:$0xf]
      %v7252 = vld [vmem:[#allocation2 + $0x10] sm:$0xf]
      %v7253 = vld [vmem:[#allocation2 + $0x14] sm:$0xf]
      %v7254 = vld [vmem:[#allocation2 + $0x18] sm:$0xf]
      %v7255 = vld [vmem:[#allocation2 + $0x1c] sm:$0xf]
      %v7256 = vld [vmem:[#allocation2 + $0x20] sm:$0xf]
      %v7257 = vld [vmem:[#allocation2 + $0x24] sm:$0xf]
      %v7258 = vld [vmem:[#allocation2 + $0x28] sm:$0xf]
      %v7259 = vld [vmem:[#allocation2 + $0x2c] sm:$0xf]
      %v7260 = vld [vmem:[#allocation2 + $0x30] sm:$0xf]
      %v7261 = vld [vmem:[#allocation2 + $0x34] sm:$0xf]
      %v7262 = vld [vmem:[#allocation2 + $0x38] sm:$0xf]
      %v7263 = vld [vmem:[#allocation2 + $0x3c] sm:$0xf]
      %v7264 = vld [vmem:[#allocation2 + $0x40] sm:$0xf]
      %v7265 = vld [vmem:[#allocation2 + $0x44] sm:$0xf]
      %v7266 = vld [vmem:[#allocation2 + $0x48] sm:$0xf]
      %v7267 = vld [vmem:[#allocation2 + $0x4c] sm:$0xf]
      %v7268 = vld [vmem:[#allocation2 + $0x50] sm:$0xf]
      %v7269 = vld [vmem:[#allocation2 + $0x54] sm:$0xf]
      %v7270 = vld [vmem:[#allocation2 + $0x58] sm:$0xf]
      %v7271 = vld [vmem:[#allocation2 + $0x5c] sm:$0xf]
      %v7272 = vld [vmem:[#allocation2 + $0x60] sm:$0xf]
      %v7273 = vld [vmem:[#allocation2 + $0x64] sm:$0xf]
      %v7274 = vld [vmem:[#allocation2 + $0x68] sm:$0xf]
      %v7275 = vld [vmem:[#allocation2 + $0x6c] sm:$0xf]
      %v7276 = vld [vmem:[#allocation2 + $0x70] sm:$0xf]
      %v7277 = vld [vmem:[#allocation2 + $0x74] sm:$0xf]
      %v7278 = vld [vmem:[#allocation2 + $0x78] sm:$0xf]
      %v7279 = vld [vmem:[#allocation2 + $0x7c] sm:$0xf]
      %v7280 = vld [vmem:[#allocation2 + $0x80] sm:$0xf]
      %v7281 = vld [vmem:[#allocation2 + $0x84] sm:$0xf]
      %7282 = vst [vmem:[#allocation3 + $0x4] sm:$0xf] %v7250
      %7283 = vst [vmem:[#allocation3 + $0x28] sm:$0xf] %v7251
      %7284 = vst [vmem:[#allocation3 + $0x4c] sm:$0xf] %v7252
      %7285 = vst [vmem:[#allocation3 + $0x70] sm:$0xf] %v7253
      %7286 = vst [vmem:[#allocation3 + $0x94] sm:$0xf] %v7254
      %7287 = vst [vmem:[#allocation3 + $0xb8] sm:$0xf] %v7255
      %7288 = vst [vmem:[#allocation3 + $0xdc] sm:$0xf] %v7256
      %7289 = vst [vmem:[#allocation3 + $0x100] sm:$0xf] %v7257
      %7290 = vst [vmem:[#allocation3 + $0x124] sm:$0xf] %v7258
      %7291 = vst [vmem:[#allocation3 + $0x148] sm:$0xf] %v7259
      %7292 = vst [vmem:[#allocation3 + $0x16c] sm:$0xf] %v7260
      %7293 = vst [vmem:[#allocation3 + $0x190] sm:$0xf] %v7261
      %7294 = vst [vmem:[#allocation3 + $0x1b4] sm:$0xf] %v7262
      %7295 = vst [vmem:[#allocation3 + $0x1d8] sm:$0xf] %v7263
      %7296 = vst [vmem:[#allocation3 + $0x1fc] sm:$0xf] %v7264
      %7297 = vst [vmem:[#allocation3 + $0x220] sm:$0xf] %v7265
      %7298 = vst [vmem:[#allocation3 + $0x244] sm:$0xf] %v7266
      %7299 = vst [vmem:[#allocation3 + $0x268] sm:$0xf] %v7267
      %7300 = vst [vmem:[#allocation3 + $0x28c] sm:$0xf] %v7268
      %7301 = vst [vmem:[#allocation3 + $0x2b0] sm:$0xf] %v7269
      %7302 = vst [vmem:[#allocation3 + $0x2d4] sm:$0xf] %v7270
      %7303 = vst [vmem:[#allocation3 + $0x2f8] sm:$0xf] %v7271
      %7304 = vst [vmem:[#allocation3 + $0x31c] sm:$0xf] %v7272
      %7305 = vst [vmem:[#allocation3 + $0x340] sm:$0xf] %v7273
      %7306 = vst [vmem:[#allocation3 + $0x364] sm:$0xf] %v7274
      %7307 = vst [vmem:[#allocation3 + $0x388] sm:$0xf] %v7275
      %7308 = vst [vmem:[#allocation3 + $0x3ac] sm:$0xf] %v7276
      %7309 = vst [vmem:[#allocation3 + $0x3d0] sm:$0xf] %v7277
      %7310 = vst [vmem:[#allocation3 + $0x3f4] sm:$0xf] %v7278
      %7311 = vst [vmem:[#allocation3 + $0x418] sm:$0xf] %v7279
      %7312 = vst [vmem:[#allocation3 + $0x43c] sm:$0xf] %v7280
      %7313 = vst [vmem:[#allocation3 + $0x460] sm:$0xf] %v7281
      %v7314 = vld [vmem:[#allocation2 + $0x8] sm:$0xf]
      %v7315 = vld [vmem:[#allocation2 + $0xc] sm:$0xf]
      %v7316 = vld [vmem:[#allocation2 + $0x10] sm:$0xf]
      %v7317 = vld [vmem:[#allocation2 + $0x14] sm:$0xf]
      %v7318 = vld [vmem:[#allocation2 + $0x18] sm:$0xf]
      %v7319 = vld [vmem:[#allocation2 + $0x1c] sm:$0xf]
      %v7320 = vld [vmem:[#allocation2 + $0x20] sm:$0xf]
      %v7321 = vld [vmem:[#allocation2 + $0x24] sm:$0xf]
      %v7322 = vld [vmem:[#allocation2 + $0x28] sm:$0xf]
      %v7323 = vld [vmem:[#allocation2 + $0x2c] sm:$0xf]
      %v7324 = vld [vmem:[#allocation2 + $0x30] sm:$0xf]
      %v7325 = vld [vmem:[#allocation2 + $0x34] sm:$0xf]
      %v7326 = vld [vmem:[#allocation2 + $0x38] sm:$0xf]
      %v7327 = vld [vmem:[#allocation2 + $0x3c] sm:$0xf]
      %v7328 = vld [vmem:[#allocation2 + $0x40] sm:$0xf]
      %v7329 = vld [vmem:[#allocation2 + $0x44] sm:$0xf]
      %v7330 = vld [vmem:[#allocation2 + $0x48] sm:$0xf]
      %v7331 = vld [vmem:[#allocation2 + $0x4c] sm:$0xf]
      %v7332 = vld [vmem:[#allocation2 + $0x50] sm:$0xf]
      %v7333 = vld [vmem:[#allocation2 + $0x54] sm:$0xf]
      %v7334 = vld [vmem:[#allocation2 + $0x58] sm:$0xf]
      %v7335 = vld [vmem:[#allocation2 + $0x5c] sm:$0xf]
      %v7336 = vld [vmem:[#allocation2 + $0x60] sm:$0xf]
      %v7337 = vld [vmem:[#allocation2 + $0x64] sm:$0xf]
      %v7338 = vld [vmem:[#allocation2 + $0x68] sm:$0xf]
      %v7339 = vld [vmem:[#allocation2 + $0x6c] sm:$0xf]
      %v7340 = vld [vmem:[#allocation2 + $0x70] sm:$0xf]
      %v7341 = vld [vmem:[#allocation2 + $0x74] sm:$0xf]
      %v7342 = vld [vmem:[#allocation2 + $0x78] sm:$0xf]
      %v7343 = vld [vmem:[#allocation2 + $0x7c] sm:$0xf]
      %v7344 = vld [vmem:[#allocation2 + $0x80] sm:$0xf]
      %v7345 = vld [vmem:[#allocation2 + $0x84] sm:$0xf]
      %v7346 = vld [vmem:[#allocation2 + $0x88] sm:$0x1]
      %v7347 = vsel %vm1979, %v7314, 0
      %v7348 = vsel %vm1980, %v7315, 0
      %v7349 = vsel %vm1981, %v7316, 0
      %v7350 = vsel %vm1982, %v7317, 0
      %v7351 = vsel %vm1983, %v7318, 0
      %v7352 = vsel %vm1984, %v7319, 0
      %v7353 = vsel %vm1985, %v7320, 0
      %v7354 = vsel %vm1986, %v7321, 0
      %v7355 = vsel %vm1987, %v7322, 0
      %v7356 = vsel %vm1988, %v7323, 0
      %v7357 = vsel %vm1989, %v7324, 0
      %v7358 = vsel %vm1990, %v7325, 0
      %v7359 = vsel %vm1991, %v7326, 0
      %v7360 = vsel %vm1992, %v7327, 0
      %v7361 = vsel %vm1993, %v7328, 0
      %v7362 = vsel %vm1994, %v7329, 0
      %v7363 = vsel %vm1995, %v7330, 0
      %v7364 = vsel %vm1996, %v7331, 0
      %v7365 = vsel %vm1997, %v7332, 0
      %v7366 = vsel %vm1998, %v7333, 0
      %v7367 = vsel %vm1999, %v7334, 0
      %v7368 = vsel %vm2000, %v7335, 0
      %v7369 = vsel %vm2001, %v7336, 0
      %v7370 = vsel %vm2002, %v7337, 0
      %v7371 = vsel %vm2003, %v7338, 0
      %v7372 = vsel %vm2004, %v7339, 0
      %v7373 = vsel %vm2005, %v7340, 0
      %v7374 = vsel %vm2006, %v7341, 0
      %v7375 = vsel %vm2007, %v7342, 0
      %v7376 = vsel %vm2008, %v7343, 0
      %v7377 = vsel %vm2009, %v7344, 0
      %v7378 = vsel %vm2010, %v7345, 0
      %v7379 = vsel %vm2011, %v7346, 0
      %v7381 = vshrl.u32 %v7347, 16
      %v7383 = vrot.slane %v7381, 4
      %v7384 = vshll.u32 %v7347, 16
      %v7386 = vrot.slane %v7384, 5
      %v7387 = vor.u32 %v7383, %v7386
      %v7388 = vrot.slane %v7387, 4
      %v7390 = vshll.u32 %v7348, 16
      %v7392 = vrot.slane %v7390, 5
      %v7393 = vsel %vm626, %v7388, %v7392
      %v7394 = vshrl.u32 %v7348, 16
      %v7396 = vrot.slane %v7394, 4
      %v7397 = vor.u32 %v7396, %v7392
      %v7398 = vrot.slane %v7397, 4
      %v7400 = vshll.u32 %v7349, 16
      %v7402 = vrot.slane %v7400, 5
      %v7403 = vsel %vm626, %v7398, %v7402
      %v7404 = vshrl.u32 %v7349, 16
      %v7406 = vrot.slane %v7404, 4
      %v7407 = vor.u32 %v7406, %v7402
      %v7408 = vrot.slane %v7407, 4
      %v7410 = vshll.u32 %v7350, 16
      %v7412 = vrot.slane %v7410, 5
      %v7413 = vsel %vm626, %v7408, %v7412
      %v7414 = vshrl.u32 %v7350, 16
      %v7416 = vrot.slane %v7414, 4
      %v7417 = vor.u32 %v7416, %v7412
      %v7418 = vrot.slane %v7417, 4
      %v7420 = vshll.u32 %v7351, 16
      %v7422 = vrot.slane %v7420, 5
      %v7423 = vsel %vm626, %v7418, %v7422
      %v7424 = vshrl.u32 %v7351, 16
      %v7426 = vrot.slane %v7424, 4
      %v7427 = vor.u32 %v7426, %v7422
      %v7428 = vrot.slane %v7427, 4
      %v7430 = vshll.u32 %v7352, 16
      %v7432 = vrot.slane %v7430, 5
      %v7433 = vsel %vm626, %v7428, %v7432
      %v7434 = vshrl.u32 %v7352, 16
      %v7436 = vrot.slane %v7434, 4
      %v7437 = vor.u32 %v7436, %v7432
      %v7438 = vrot.slane %v7437, 4
      %v7440 = vshll.u32 %v7353, 16
      %v7442 = vrot.slane %v7440, 5
      %v7443 = vsel %vm626, %v7438, %v7442
      %v7444 = vshrl.u32 %v7353, 16
      %v7446 = vrot.slane %v7444, 4
      %v7447 = vor.u32 %v7446, %v7442
      %v7448 = vrot.slane %v7447, 4
      %v7450 = vshll.u32 %v7354, 16
      %v7452 = vrot.slane %v7450, 5
      %v7453 = vsel %vm626, %v7448, %v7452
      %v7454 = vshrl.u32 %v7354, 16
      %v7456 = vrot.slane %v7454, 4
      %v7457 = vor.u32 %v7456, %v7452
      %v7458 = vrot.slane %v7457, 4
      %v7460 = vshll.u32 %v7355, 16
      %v7462 = vrot.slane %v7460, 5
      %v7463 = vsel %vm626, %v7458, %v7462
      %v7464 = vshrl.u32 %v7355, 16
      %v7466 = vrot.slane %v7464, 4
      %v7467 = vor.u32 %v7466, %v7462
      %v7468 = vrot.slane %v7467, 4
      %v7470 = vshll.u32 %v7356, 16
      %v7472 = vrot.slane %v7470, 5
      %v7473 = vsel %vm626, %v7468, %v7472
      %v7474 = vshrl.u32 %v7356, 16
      %v7476 = vrot.slane %v7474, 4
      %v7477 = vor.u32 %v7476, %v7472
      %v7478 = vrot.slane %v7477, 4
      %v7480 = vshll.u32 %v7357, 16
      %v7482 = vrot.slane %v7480, 5
      %v7483 = vsel %vm626, %v7478, %v7482
      %v7484 = vshrl.u32 %v7357, 16
      %v7486 = vrot.slane %v7484, 4
      %v7487 = vor.u32 %v7486, %v7482
      %v7488 = vrot.slane %v7487, 4
      %v7490 = vshll.u32 %v7358, 16
      %v7492 = vrot.slane %v7490, 5
      %v7493 = vsel %vm626, %v7488, %v7492
      %v7494 = vshrl.u32 %v7358, 16
      %v7496 = vrot.slane %v7494, 4
      %v7497 = vor.u32 %v7496, %v7492
      %v7498 = vrot.slane %v7497, 4
      %v7500 = vshll.u32 %v7359, 16
      %v7502 = vrot.slane %v7500, 5
      %v7503 = vsel %vm626, %v7498, %v7502
      %v7504 = vshrl.u32 %v7359, 16
      %v7506 = vrot.slane %v7504, 4
      %v7507 = vor.u32 %v7506, %v7502
      %v7508 = vrot.slane %v7507, 4
      %v7510 = vshll.u32 %v7360, 16
      %v7512 = vrot.slane %v7510, 5
      %v7513 = vsel %vm626, %v7508, %v7512
      %v7514 = vshrl.u32 %v7360, 16
      %v7516 = vrot.slane %v7514, 4
      %v7517 = vor.u32 %v7516, %v7512
      %v7518 = vrot.slane %v7517, 4
      %v7520 = vshll.u32 %v7361, 16
      %v7522 = vrot.slane %v7520, 5
      %v7523 = vsel %vm626, %v7518, %v7522
      %v7524 = vshrl.u32 %v7361, 16
      %v7526 = vrot.slane %v7524, 4
      %v7527 = vor.u32 %v7526, %v7522
      %v7528 = vrot.slane %v7527, 4
      %v7530 = vshll.u32 %v7362, 16
      %v7532 = vrot.slane %v7530, 5
      %v7533 = vsel %vm626, %v7528, %v7532
      %v7534 = vshrl.u32 %v7362, 16
      %v7536 = vrot.slane %v7534, 4
      %v7537 = vor.u32 %v7536, %v7532
      %v7538 = vrot.slane %v7537, 4
      %v7540 = vshll.u32 %v7363, 16
      %v7542 = vrot.slane %v7540, 5
      %v7543 = vsel %vm626, %v7538, %v7542
      %v7544 = vshrl.u32 %v7363, 16
      %v7546 = vrot.slane %v7544, 4
      %v7547 = vor.u32 %v7546, %v7542
      %v7548 = vrot.slane %v7547, 4
      %v7550 = vshll.u32 %v7364, 16
      %v7552 = vrot.slane %v7550, 5
      %v7553 = vsel %vm626, %v7548, %v7552
      %v7554 = vshrl.u32 %v7364, 16
      %v7556 = vrot.slane %v7554, 4
      %v7557 = vor.u32 %v7556, %v7552
      %v7558 = vrot.slane %v7557, 4
      %v7560 = vshll.u32 %v7365, 16
      %v7562 = vrot.slane %v7560, 5
      %v7563 = vsel %vm626, %v7558, %v7562
      %v7564 = vshrl.u32 %v7365, 16
      %v7566 = vrot.slane %v7564, 4
      %v7567 = vor.u32 %v7566, %v7562
      %v7568 = vrot.slane %v7567, 4
      %v7570 = vshll.u32 %v7366, 16
      %v7572 = vrot.slane %v7570, 5
      %v7573 = vsel %vm626, %v7568, %v7572
      %v7574 = vshrl.u32 %v7366, 16
      %v7576 = vrot.slane %v7574, 4
      %v7577 = vor.u32 %v7576, %v7572
      %v7578 = vrot.slane %v7577, 4
      %v7580 = vshll.u32 %v7367, 16
      %v7582 = vrot.slane %v7580, 5
      %v7583 = vsel %vm626, %v7578, %v7582
      %v7584 = vshrl.u32 %v7367, 16
      %v7586 = vrot.slane %v7584, 4
      %v7587 = vor.u32 %v7586, %v7582
      %v7588 = vrot.slane %v7587, 4
      %v7590 = vshll.u32 %v7368, 16
      %v7592 = vrot.slane %v7590, 5
      %v7593 = vsel %vm626, %v7588, %v7592
      %v7594 = vshrl.u32 %v7368, 16
      %v7596 = vrot.slane %v7594, 4
      %v7597 = vor.u32 %v7596, %v7592
      %v7598 = vrot.slane %v7597, 4
      %v7600 = vshll.u32 %v7369, 16
      %v7602 = vrot.slane %v7600, 5
      %v7603 = vsel %vm626, %v7598, %v7602
      %v7604 = vshrl.u32 %v7369, 16
      %v7606 = vrot.slane %v7604, 4
      %v7607 = vor.u32 %v7606, %v7602
      %v7608 = vrot.slane %v7607, 4
      %v7610 = vshll.u32 %v7370, 16
      %v7612 = vrot.slane %v7610, 5
      %v7613 = vsel %vm626, %v7608, %v7612
      %v7614 = vshrl.u32 %v7370, 16
      %v7616 = vrot.slane %v7614, 4
      %v7617 = vor.u32 %v7616, %v7612
      %v7618 = vrot.slane %v7617, 4
      %v7620 = vshll.u32 %v7371, 16
      %v7622 = vrot.slane %v7620, 5
      %v7623 = vsel %vm626, %v7618, %v7622
      %v7624 = vshrl.u32 %v7371, 16
      %v7626 = vrot.slane %v7624, 4
      %v7627 = vor.u32 %v7626, %v7622
      %v7628 = vrot.slane %v7627, 4
      %v7630 = vshll.u32 %v7372, 16
      %v7632 = vrot.slane %v7630, 5
      %v7633 = vsel %vm626, %v7628, %v7632
      %v7634 = vshrl.u32 %v7372, 16
      %v7636 = vrot.slane %v7634, 4
      %v7637 = vor.u32 %v7636, %v7632
      %v7638 = vrot.slane %v7637, 4
      %v7640 = vshll.u32 %v7373, 16
      %v7642 = vrot.slane %v7640, 5
      %v7643 = vsel %vm626, %v7638, %v7642
      %v7644 = vshrl.u32 %v7373, 16
      %v7646 = vrot.slane %v7644, 4
      %v7647 = vor.u32 %v7646, %v7642
      %v7648 = vrot.slane %v7647, 4
      %v7650 = vshll.u32 %v7374, 16
      %v7652 = vrot.slane %v7650, 5
      %v7653 = vsel %vm626, %v7648, %v7652
      %v7654 = vshrl.u32 %v7374, 16
      %v7656 = vrot.slane %v7654, 4
      %v7657 = vor.u32 %v7656, %v7652
      %v7658 = vrot.slane %v7657, 4
      %v7660 = vshll.u32 %v7375, 16
      %v7662 = vrot.slane %v7660, 5
      %v7663 = vsel %vm626, %v7658, %v7662
      %v7664 = vshrl.u32 %v7375, 16
      %v7666 = vrot.slane %v7664, 4
      %v7667 = vor.u32 %v7666, %v7662
      %v7668 = vrot.slane %v7667, 4
      %v7670 = vshll.u32 %v7376, 16
      %v7672 = vrot.slane %v7670, 5
      %v7673 = vsel %vm626, %v7668, %v7672
      %v7674 = vshrl.u32 %v7376, 16
      %v7676 = vrot.slane %v7674, 4
      %v7677 = vor.u32 %v7676, %v7672
      %v7678 = vrot.slane %v7677, 4
      %v7680 = vshll.u32 %v7377, 16
      %v7682 = vrot.slane %v7680, 5
      %v7683 = vsel %vm626, %v7678, %v7682
      %v7684 = vshrl.u32 %v7377, 16
      %v7686 = vrot.slane %v7684, 4
      %v7687 = vor.u32 %v7686, %v7682
      %v7688 = vrot.slane %v7687, 4
      %v7690 = vshll.u32 %v7378, 16
      %v7692 = vrot.slane %v7690, 5
      %v7693 = vsel %vm626, %v7688, %v7692
      %v7694 = vshrl.u32 %v7378, 16
      %v7696 = vrot.slane %v7694, 4
      %v7697 = vor.u32 %v7696, %v7692
      %v7698 = vrot.slane %v7697, 4
      %v7700 = vshll.u32 %v7379, 16
      %v7702 = vrot.slane %v7700, 5
      %v7703 = vsel %vm626, %v7698, %v7702
      %7736 = vst [vmem:[#allocation3 + $0x8] sm:$0xf] %v7393
      %7737 = vst [vmem:[#allocation3 + $0x2c] sm:$0xf] %v7403
      %7738 = vst [vmem:[#allocation3 + $0x50] sm:$0xf] %v7413
      %7739 = vst [vmem:[#allocation3 + $0x74] sm:$0xf] %v7423
      %7740 = vst [vmem:[#allocation3 + $0x98] sm:$0xf] %v7433
      %7741 = vst [vmem:[#allocation3 + $0xbc] sm:$0xf] %v7443
      %7742 = vst [vmem:[#allocation3 + $0xe0] sm:$0xf] %v7453
      %7743 = vst [vmem:[#allocation3 + $0x104] sm:$0xf] %v7463
      %7744 = vst [vmem:[#allocation3 + $0x128] sm:$0xf] %v7473
      %7745 = vst [vmem:[#allocation3 + $0x14c] sm:$0xf] %v7483
      %7746 = vst [vmem:[#allocation3 + $0x170] sm:$0xf] %v7493
      %7747 = vst [vmem:[#allocation3 + $0x194] sm:$0xf] %v7503
      %7748 = vst [vmem:[#allocation3 + $0x1b8] sm:$0xf] %v7513
      %7749 = vst [vmem:[#allocation3 + $0x1dc] sm:$0xf] %v7523
      %7750 = vst [vmem:[#allocation3 + $0x200] sm:$0xf] %v7533
      %7751 = vst [vmem:[#allocation3 + $0x224] sm:$0xf] %v7543
      %7752 = vst [vmem:[#allocation3 + $0x248] sm:$0xf] %v7553
      %7753 = vst [vmem:[#allocation3 + $0x26c] sm:$0xf] %v7563
      %7754 = vst [vmem:[#allocation3 + $0x290] sm:$0xf] %v7573
      %7755 = vst [vmem:[#allocation3 + $0x2b4] sm:$0xf] %v7583
      %7756 = vst [vmem:[#allocation3 + $0x2d8] sm:$0xf] %v7593
      %7757 = vst [vmem:[#allocation3 + $0x2fc] sm:$0xf] %v7603
      %7758 = vst [vmem:[#allocation3 + $0x320] sm:$0xf] %v7613
      %7759 = vst [vmem:[#allocation3 + $0x344] sm:$0xf] %v7623
      %7760 = vst [vmem:[#allocation3 + $0x368] sm:$0xf] %v7633
      %7761 = vst [vmem:[#allocation3 + $0x38c] sm:$0xf] %v7643
      %7762 = vst [vmem:[#allocation3 + $0x3b0] sm:$0xf] %v7653
      %7763 = vst [vmem:[#allocation3 + $0x3d4] sm:$0xf] %v7663
      %7764 = vst [vmem:[#allocation3 + $0x3f8] sm:$0xf] %v7673
      %7765 = vst [vmem:[#allocation3 + $0x41c] sm:$0xf] %v7683
      %7766 = vst [vmem:[#allocation3 + $0x440] sm:$0xf] %v7693
      %7767 = vst [vmem:[#allocation3 + $0x464] sm:$0xf] %v7703
      %v7768 = vld [vmem:[#allocation2 + $0xc] sm:$0x8]
      %v7769 = vld [vmem:[#allocation2 + $0x10] sm:$0xf]
      %v7770 = vld [vmem:[#allocation2 + $0x14] sm:$0xf]
      %v7771 = vld [vmem:[#allocation2 + $0x18] sm:$0xf]
      %v7772 = vld [vmem:[#allocation2 + $0x1c] sm:$0xf]
      %v7773 = vld [vmem:[#allocation2 + $0x20] sm:$0xf]
      %v7774 = vld [vmem:[#allocation2 + $0x24] sm:$0xf]
      %v7775 = vld [vmem:[#allocation2 + $0x28] sm:$0xf]
      %v7776 = vld [vmem:[#allocation2 + $0x2c] sm:$0xf]
      %v7777 = vld [vmem:[#allocation2 + $0x30] sm:$0xf]
      %v7778 = vld [vmem:[#allocation2 + $0x34] sm:$0xf]
      %v7779 = vld [vmem:[#allocation2 + $0x38] sm:$0xf]
      %v7780 = vld [vmem:[#allocation2 + $0x3c] sm:$0xf]
      %v7781 = vld [vmem:[#allocation2 + $0x40] sm:$0xf]
      %v7782 = vld [vmem:[#allocation2 + $0x44] sm:$0xf]
      %v7783 = vld [vmem:[#allocation2 + $0x48] sm:$0xf]
      %v7784 = vld [vmem:[#allocation2 + $0x4c] sm:$0xf]
      %v7785 = vld [vmem:[#allocation2 + $0x50] sm:$0xf]
      %v7786 = vld [vmem:[#allocation2 + $0x54] sm:$0xf]
      %v7787 = vld [vmem:[#allocation2 + $0x58] sm:$0xf]
      %v7788 = vld [vmem:[#allocation2 + $0x5c] sm:$0xf]
      %v7789 = vld [vmem:[#allocation2 + $0x60] sm:$0xf]
      %v7790 = vld [vmem:[#allocation2 + $0x64] sm:$0xf]
      %v7791 = vld [vmem:[#allocation2 + $0x68] sm:$0xf]
      %v7792 = vld [vmem:[#allocation2 + $0x6c] sm:$0xf]
      %v7793 = vld [vmem:[#allocation2 + $0x70] sm:$0xf]
      %v7794 = vld [vmem:[#allocation2 + $0x74] sm:$0xf]
      %v7795 = vld [vmem:[#allocation2 + $0x78] sm:$0xf]
      %v7796 = vld [vmem:[#allocation2 + $0x7c] sm:$0xf]
      %v7797 = vld [vmem:[#allocation2 + $0x80] sm:$0xf]
      %v7798 = vld [vmem:[#allocation2 + $0x84] sm:$0xf]
      %v7799 = vld [vmem:[#allocation2 + $0x88] sm:$0xf]
      %v7800 = vld [vmem:[#allocation2 + $0x8c] sm:$0xf]
      %v7801 = vsel %vm946, %v7768, 0
      %v7802 = vsel %vm947, %v7769, 0
      %v7803 = vsel %vm948, %v7770, 0
      %v7804 = vsel %vm949, %v7771, 0
      %v7805 = vsel %vm950, %v7772, 0
      %v7806 = vsel %vm951, %v7773, 0
      %v7807 = vsel %vm952, %v7774, 0
      %v7808 = vsel %vm953, %v7775, 0
      %v7809 = vsel %vm954, %v7776, 0
      %v7810 = vsel %vm955, %v7777, 0
      %v7811 = vsel %vm956, %v7778, 0
      %v7812 = vsel %vm957, %v7779, 0
      %v7813 = vsel %vm958, %v7780, 0
      %v7814 = vsel %vm959, %v7781, 0
      %v7815 = vsel %vm960, %v7782, 0
      %v7816 = vsel %vm961, %v7783, 0
      %v7817 = vsel %vm962, %v7784, 0
      %v7818 = vsel %vm963, %v7785, 0
      %v7819 = vsel %vm964, %v7786, 0
      %v7820 = vsel %vm965, %v7787, 0
      %v7821 = vsel %vm966, %v7788, 0
      %v7822 = vsel %vm967, %v7789, 0
      %v7823 = vsel %vm968, %v7790, 0
      %v7824 = vsel %vm969, %v7791, 0
      %v7825 = vsel %vm970, %v7792, 0
      %v7826 = vsel %vm971, %v7793, 0
      %v7827 = vsel %vm972, %v7794, 0
      %v7828 = vsel %vm973, %v7795, 0
      %v7829 = vsel %vm974, %v7796, 0
      %v7830 = vsel %vm975, %v7797, 0
      %v7831 = vsel %vm976, %v7798, 0
      %v7832 = vsel %vm977, %v7799, 0
      %v7833 = vsel %vm978, %v7800, 0
      %v7835 = vshrl.u32 %v7801, 16
      %v7837 = vrot.slane %v7835, 7
      %v7838 = vrot.slane %v7837, 4
      %v7840 = vshrl.u32 %v7802, 16
      %v7842 = vrot.slane %v7840, 7
      %v7843 = vshll.u32 %v7802, 16
      %v7845 = vor.u32 %v7842, %v7843
      %v7846 = vsel %vm1014, %v7838, %v7845
      %v7847 = vrot.slane %v7842, 4
      %v7849 = vshrl.u32 %v7803, 16
      %v7851 = vrot.slane %v7849, 7
      %v7852 = vshll.u32 %v7803, 16
      %v7854 = vor.u32 %v7851, %v7852
      %v7855 = vsel %vm1014, %v7847, %v7854
      %v7856 = vrot.slane %v7851, 4
      %v7858 = vshrl.u32 %v7804, 16
      %v7860 = vrot.slane %v7858, 7
      %v7861 = vshll.u32 %v7804, 16
      %v7863 = vor.u32 %v7860, %v7861
      %v7864 = vsel %vm1014, %v7856, %v7863
      %v7865 = vrot.slane %v7860, 4
      %v7867 = vshrl.u32 %v7805, 16
      %v7869 = vrot.slane %v7867, 7
      %v7870 = vshll.u32 %v7805, 16
      %v7872 = vor.u32 %v7869, %v7870
      %v7873 = vsel %vm1014, %v7865, %v7872
      %v7874 = vrot.slane %v7869, 4
      %v7876 = vshrl.u32 %v7806, 16
      %v7878 = vrot.slane %v7876, 7
      %v7879 = vshll.u32 %v7806, 16
      %v7881 = vor.u32 %v7878, %v7879
      %v7882 = vsel %vm1014, %v7874, %v7881
      %v7883 = vrot.slane %v7878, 4
      %v7885 = vshrl.u32 %v7807, 16
      %v7887 = vrot.slane %v7885, 7
      %v7888 = vshll.u32 %v7807, 16
      %v7890 = vor.u32 %v7887, %v7888
      %v7891 = vsel %vm1014, %v7883, %v7890
      %v7892 = vrot.slane %v7887, 4
      %v7894 = vshrl.u32 %v7808, 16
      %v7896 = vrot.slane %v7894, 7
      %v7897 = vshll.u32 %v7808, 16
      %v7899 = vor.u32 %v7896, %v7897
      %v7900 = vsel %vm1014, %v7892, %v7899
      %v7901 = vrot.slane %v7896, 4
      %v7903 = vshrl.u32 %v7809, 16
      %v7905 = vrot.slane %v7903, 7
      %v7906 = vshll.u32 %v7809, 16
      %v7908 = vor.u32 %v7905, %v7906
      %v7909 = vsel %vm1014, %v7901, %v7908
      %v7910 = vrot.slane %v7905, 4
      %v7912 = vshrl.u32 %v7810, 16
      %v7914 = vrot.slane %v7912, 7
      %v7915 = vshll.u32 %v7810, 16
      %v7917 = vor.u32 %v7914, %v7915
      %v7918 = vsel %vm1014, %v7910, %v7917
      %v7919 = vrot.slane %v7914, 4
      %v7921 = vshrl.u32 %v7811, 16
      %v7923 = vrot.slane %v7921, 7
      %v7924 = vshll.u32 %v7811, 16
      %v7926 = vor.u32 %v7923, %v7924
      %v7927 = vsel %vm1014, %v7919, %v7926
      %v7928 = vrot.slane %v7923, 4
      %v7930 = vshrl.u32 %v7812, 16
      %v7932 = vrot.slane %v7930, 7
      %v7933 = vshll.u32 %v7812, 16
      %v7935 = vor.u32 %v7932, %v7933
      %v7936 = vsel %vm1014, %v7928, %v7935
      %v7937 = vrot.slane %v7932, 4
      %v7939 = vshrl.u32 %v7813, 16
      %v7941 = vrot.slane %v7939, 7
      %v7942 = vshll.u32 %v7813, 16
      %v7944 = vor.u32 %v7941, %v7942
      %v7945 = vsel %vm1014, %v7937, %v7944
      %v7946 = vrot.slane %v7941, 4
      %v7948 = vshrl.u32 %v7814, 16
      %v7950 = vrot.slane %v7948, 7
      %v7951 = vshll.u32 %v7814, 16
      %v7953 = vor.u32 %v7950, %v7951
      %v7954 = vsel %vm1014, %v7946, %v7953
      %v7955 = vrot.slane %v7950, 4
      %v7957 = vshrl.u32 %v7815, 16
      %v7959 = vrot.slane %v7957, 7
      %v7960 = vshll.u32 %v7815, 16
      %v7962 = vor.u32 %v7959, %v7960
      %v7963 = vsel %vm1014, %v7955, %v7962
      %v7964 = vrot.slane %v7959, 4
      %v7966 = vshrl.u32 %v7816, 16
      %v7968 = vrot.slane %v7966, 7
      %v7969 = vshll.u32 %v7816, 16
      %v7971 = vor.u32 %v7968, %v7969
      %v7972 = vsel %vm1014, %v7964, %v7971
      %v7973 = vrot.slane %v7968, 4
      %v7975 = vshrl.u32 %v7817, 16
      %v7977 = vrot.slane %v7975, 7
      %v7978 = vshll.u32 %v7817, 16
      %v7980 = vor.u32 %v7977, %v7978
      %v7981 = vsel %vm1014, %v7973, %v7980
      %v7982 = vrot.slane %v7977, 4
      %v7984 = vshrl.u32 %v7818, 16
      %v7986 = vrot.slane %v7984, 7
      %v7987 = vshll.u32 %v7818, 16
      %v7989 = vor.u32 %v7986, %v7987
      %v7990 = vsel %vm1014, %v7982, %v7989
      %v7991 = vrot.slane %v7986, 4
      %v7993 = vshrl.u32 %v7819, 16
      %v7995 = vrot.slane %v7993, 7
      %v7996 = vshll.u32 %v7819, 16
      %v7998 = vor.u32 %v7995, %v7996
      %v7999 = vsel %vm1014, %v7991, %v7998
      %v8000 = vrot.slane %v7995, 4
      %v8002 = vshrl.u32 %v7820, 16
      %v8004 = vrot.slane %v8002, 7
      %v8005 = vshll.u32 %v7820, 16
      %v8007 = vor.u32 %v8004, %v8005
      %v8008 = vsel %vm1014, %v8000, %v8007
      %v8009 = vrot.slane %v8004, 4
      %v8011 = vshrl.u32 %v7821, 16
      %v8013 = vrot.slane %v8011, 7
      %v8014 = vshll.u32 %v7821, 16
      %v8016 = vor.u32 %v8013, %v8014
      %v8017 = vsel %vm1014, %v8009, %v8016
      %v8018 = vrot.slane %v8013, 4
      %v8020 = vshrl.u32 %v7822, 16
      %v8022 = vrot.slane %v8020, 7
      %v8023 = vshll.u32 %v7822, 16
      %v8025 = vor.u32 %v8022, %v8023
      %v8026 = vsel %vm1014, %v8018, %v8025
      %v8027 = vrot.slane %v8022, 4
      %v8029 = vshrl.u32 %v7823, 16
      %v8031 = vrot.slane %v8029, 7
      %v8032 = vshll.u32 %v7823, 16
      %v8034 = vor.u32 %v8031, %v8032
      %v8035 = vsel %vm1014, %v8027, %v8034
      %v8036 = vrot.slane %v8031, 4
      %v8038 = vshrl.u32 %v7824, 16
      %v8040 = vrot.slane %v8038, 7
      %v8041 = vshll.u32 %v7824, 16
      %v8043 = vor.u32 %v8040, %v8041
      %v8044 = vsel %vm1014, %v8036, %v8043
      %v8045 = vrot.slane %v8040, 4
      %v8047 = vshrl.u32 %v7825, 16
      %v8049 = vrot.slane %v8047, 7
      %v8050 = vshll.u32 %v7825, 16
      %v8052 = vor.u32 %v8049, %v8050
      %v8053 = vsel %vm1014, %v8045, %v8052
      %v8054 = vrot.slane %v8049, 4
      %v8056 = vshrl.u32 %v7826, 16
      %v8058 = vrot.slane %v8056, 7
      %v8059 = vshll.u32 %v7826, 16
      %v8061 = vor.u32 %v8058, %v8059
      %v8062 = vsel %vm1014, %v8054, %v8061
      %v8063 = vrot.slane %v8058, 4
      %v8065 = vshrl.u32 %v7827, 16
      %v8067 = vrot.slane %v8065, 7
      %v8068 = vshll.u32 %v7827, 16
      %v8070 = vor.u32 %v8067, %v8068
      %v8071 = vsel %vm1014, %v8063, %v8070
      %v8072 = vrot.slane %v8067, 4
      %v8074 = vshrl.u32 %v7828, 16
      %v8076 = vrot.slane %v8074, 7
      %v8077 = vshll.u32 %v7828, 16
      %v8079 = vor.u32 %v8076, %v8077
      %v8080 = vsel %vm1014, %v8072, %v8079
      %v8081 = vrot.slane %v8076, 4
      %v8083 = vshrl.u32 %v7829, 16
      %v8085 = vrot.slane %v8083, 7
      %v8086 = vshll.u32 %v7829, 16
      %v8088 = vor.u32 %v8085, %v8086
      %v8089 = vsel %vm1014, %v8081, %v8088
      %v8090 = vrot.slane %v8085, 4
      %v8092 = vshrl.u32 %v7830, 16
      %v8094 = vrot.slane %v8092, 7
      %v8095 = vshll.u32 %v7830, 16
      %v8097 = vor.u32 %v8094, %v8095
      %v8098 = vsel %vm1014, %v8090, %v8097
      %v8099 = vrot.slane %v8094, 4
      %v8101 = vshrl.u32 %v7831, 16
      %v8103 = vrot.slane %v8101, 7
      %v8104 = vshll.u32 %v7831, 16
      %v8106 = vor.u32 %v8103, %v8104
      %v8107 = vsel %vm1014, %v8099, %v8106
      %v8108 = vrot.slane %v8103, 4
      %v8110 = vshrl.u32 %v7832, 16
      %v8112 = vrot.slane %v8110, 7
      %v8113 = vshll.u32 %v7832, 16
      %v8115 = vor.u32 %v8112, %v8113
      %v8116 = vsel %vm1014, %v8108, %v8115
      %v8117 = vrot.slane %v8112, 4
      %v8119 = vshrl.u32 %v7833, 16
      %v8121 = vrot.slane %v8119, 7
      %v8122 = vshll.u32 %v7833, 16
      %v8124 = vor.u32 %v8121, %v8122
      %v8125 = vsel %vm1014, %v8117, %v8124
      %8158 = vst [vmem:[#allocation3 + $0xc] sm:$0xf] %v7846
      %8159 = vst [vmem:[#allocation3 + $0x30] sm:$0xf] %v7855
      %8160 = vst [vmem:[#allocation3 + $0x54] sm:$0xf] %v7864
      %8161 = vst [vmem:[#allocation3 + $0x78] sm:$0xf] %v7873
      %8162 = vst [vmem:[#allocation3 + $0x9c] sm:$0xf] %v7882
      %8163 = vst [vmem:[#allocation3 + $0xc0] sm:$0xf] %v7891
      %8164 = vst [vmem:[#allocation3 + $0xe4] sm:$0xf] %v7900
      %8165 = vst [vmem:[#allocation3 + $0x108] sm:$0xf] %v7909
      %8166 = vst [vmem:[#allocation3 + $0x12c] sm:$0xf] %v7918
      %8167 = vst [vmem:[#allocation3 + $0x150] sm:$0xf] %v7927
      %8168 = vst [vmem:[#allocation3 + $0x174] sm:$0xf] %v7936
      %8169 = vst [vmem:[#allocation3 + $0x198] sm:$0xf] %v7945
      %8170 = vst [vmem:[#allocation3 + $0x1bc] sm:$0xf] %v7954
      %8171 = vst [vmem:[#allocation3 + $0x1e0] sm:$0xf] %v7963
      %8172 = vst [vmem:[#allocation3 + $0x204] sm:$0xf] %v7972
      %8173 = vst [vmem:[#allocation3 + $0x228] sm:$0xf] %v7981
      %8174 = vst [vmem:[#allocation3 + $0x24c] sm:$0xf] %v7990
      %8175 = vst [vmem:[#allocation3 + $0x270] sm:$0xf] %v7999
      %8176 = vst [vmem:[#allocation3 + $0x294] sm:$0xf] %v8008
      %8177 = vst [vmem:[#allocation3 + $0x2b8] sm:$0xf] %v8017
      %8178 = vst [vmem:[#allocation3 + $0x2dc] sm:$0xf] %v8026
      %8179 = vst [vmem:[#allocation3 + $0x300] sm:$0xf] %v8035
      %8180 = vst [vmem:[#allocation3 + $0x324] sm:$0xf] %v8044
      %8181 = vst [vmem:[#allocation3 + $0x348] sm:$0xf] %v8053
      %8182 = vst [vmem:[#allocation3 + $0x36c] sm:$0xf] %v8062
      %8183 = vst [vmem:[#allocation3 + $0x390] sm:$0xf] %v8071
      %8184 = vst [vmem:[#allocation3 + $0x3b4] sm:$0xf] %v8080
      %8185 = vst [vmem:[#allocation3 + $0x3d8] sm:$0xf] %v8089
      %8186 = vst [vmem:[#allocation3 + $0x3fc] sm:$0xf] %v8098
      %8187 = vst [vmem:[#allocation3 + $0x420] sm:$0xf] %v8107
      %8188 = vst [vmem:[#allocation3 + $0x444] sm:$0xf] %v8116
      %8189 = vst [vmem:[#allocation3 + $0x468] sm:$0xf] %v8125
      %v8190 = vld [vmem:[#allocation2 + $0x10] sm:$0xf]
      %v8191 = vld [vmem:[#allocation2 + $0x14] sm:$0xf]
      %v8192 = vld [vmem:[#allocation2 + $0x18] sm:$0xf]
      %v8193 = vld [vmem:[#allocation2 + $0x1c] sm:$0xf]
      %v8194 = vld [vmem:[#allocation2 + $0x20] sm:$0xf]
      %v8195 = vld [vmem:[#allocation2 + $0x24] sm:$0xf]
      %v8196 = vld [vmem:[#allocation2 + $0x28] sm:$0xf]
      %v8197 = vld [vmem:[#allocation2 + $0x2c] sm:$0xf]
      %v8198 = vld [vmem:[#allocation2 + $0x30] sm:$0xf]
      %v8199 = vld [vmem:[#allocation2 + $0x34] sm:$0xf]
      %v8200 = vld [vmem:[#allocation2 + $0x38] sm:$0xf]
      %v8201 = vld [vmem:[#allocation2 + $0x3c] sm:$0xf]
      %v8202 = vld [vmem:[#allocation2 + $0x40] sm:$0xf]
      %v8203 = vld [vmem:[#allocation2 + $0x44] sm:$0xf]
      %v8204 = vld [vmem:[#allocation2 + $0x48] sm:$0xf]
      %v8205 = vld [vmem:[#allocation2 + $0x4c] sm:$0xf]
      %v8206 = vld [vmem:[#allocation2 + $0x50] sm:$0xf]
      %v8207 = vld [vmem:[#allocation2 + $0x54] sm:$0xf]
      %v8208 = vld [vmem:[#allocation2 + $0x58] sm:$0xf]
      %v8209 = vld [vmem:[#allocation2 + $0x5c] sm:$0xf]
      %v8210 = vld [vmem:[#allocation2 + $0x60] sm:$0xf]
      %v8211 = vld [vmem:[#allocation2 + $0x64] sm:$0xf]
      %v8212 = vld [vmem:[#allocation2 + $0x68] sm:$0xf]
      %v8213 = vld [vmem:[#allocation2 + $0x6c] sm:$0xf]
      %v8214 = vld [vmem:[#allocation2 + $0x70] sm:$0xf]
      %v8215 = vld [vmem:[#allocation2 + $0x74] sm:$0xf]
      %v8216 = vld [vmem:[#allocation2 + $0x78] sm:$0xf]
      %v8217 = vld [vmem:[#allocation2 + $0x7c] sm:$0xf]
      %v8218 = vld [vmem:[#allocation2 + $0x80] sm:$0xf]
      %v8219 = vld [vmem:[#allocation2 + $0x84] sm:$0xf]
      %v8220 = vld [vmem:[#allocation2 + $0x88] sm:$0xf]
      %v8221 = vld [vmem:[#allocation2 + $0x8c] sm:$0xf]
      %8222 = vst [vmem:[#allocation3 + $0x10] sm:$0xf] %v8190
      %8223 = vst [vmem:[#allocation3 + $0x34] sm:$0xf] %v8191
      %8224 = vst [vmem:[#allocation3 + $0x58] sm:$0xf] %v8192
      %8225 = vst [vmem:[#allocation3 + $0x7c] sm:$0xf] %v8193
      %8226 = vst [vmem:[#allocation3 + $0xa0] sm:$0xf] %v8194
      %8227 = vst [vmem:[#allocation3 + $0xc4] sm:$0xf] %v8195
      %8228 = vst [vmem:[#allocation3 + $0xe8] sm:$0xf] %v8196
      %8229 = vst [vmem:[#allocation3 + $0x10c] sm:$0xf] %v8197
      %8230 = vst [vmem:[#allocation3 + $0x130] sm:$0xf] %v8198
      %8231 = vst [vmem:[#allocation3 + $0x154] sm:$0xf] %v8199
      %8232 = vst [vmem:[#allocation3 + $0x178] sm:$0xf] %v8200
      %8233 = vst [vmem:[#allocation3 + $0x19c] sm:$0xf] %v8201
      %8234 = vst [vmem:[#allocation3 + $0x1c0] sm:$0xf] %v8202
      %8235 = vst [vmem:[#allocation3 + $0x1e4] sm:$0xf] %v8203
      %8236 = vst [vmem:[#allocation3 + $0x208] sm:$0xf] %v8204
      %8237 = vst [vmem:[#allocation3 + $0x22c] sm:$0xf] %v8205
      %8238 = vst [vmem:[#allocation3 + $0x250] sm:$0xf] %v8206
      %8239 = vst [vmem:[#allocation3 + $0x274] sm:$0xf] %v8207
      %8240 = vst [vmem:[#allocation3 + $0x298] sm:$0xf] %v8208
      %8241 = vst [vmem:[#allocation3 + $0x2bc] sm:$0xf] %v8209
      %8242 = vst [vmem:[#allocation3 + $0x2e0] sm:$0xf] %v8210
      %8243 = vst [vmem:[#allocation3 + $0x304] sm:$0xf] %v8211
      %8244 = vst [vmem:[#allocation3 + $0x328] sm:$0xf] %v8212
      %8245 = vst [vmem:[#allocation3 + $0x34c] sm:$0xf] %v8213
      %8246 = vst [vmem:[#allocation3 + $0x370] sm:$0xf] %v8214
      %8247 = vst [vmem:[#allocation3 + $0x394] sm:$0xf] %v8215
      %8248 = vst [vmem:[#allocation3 + $0x3b8] sm:$0xf] %v8216
      %8249 = vst [vmem:[#allocation3 + $0x3dc] sm:$0xf] %v8217
      %8250 = vst [vmem:[#allocation3 + $0x400] sm:$0xf] %v8218
      %8251 = vst [vmem:[#allocation3 + $0x424] sm:$0xf] %v8219
      %8252 = vst [vmem:[#allocation3 + $0x448] sm:$0xf] %v8220
      %8253 = vst [vmem:[#allocation3 + $0x46c] sm:$0xf] %v8221
      %v8254 = vld [vmem:[#allocation2 + $0x10] sm:$0xf]
      %v8255 = vld [vmem:[#allocation2 + $0x14] sm:$0xf]
      %v8256 = vld [vmem:[#allocation2 + $0x18] sm:$0xf]
      %v8257 = vld [vmem:[#allocation2 + $0x1c] sm:$0xf]
      %v8258 = vld [vmem:[#allocation2 + $0x20] sm:$0xf]
      %v8259 = vld [vmem:[#allocation2 + $0x24] sm:$0xf]
      %v8260 = vld [vmem:[#allocation2 + $0x28] sm:$0xf]
      %v8261 = vld [vmem:[#allocation2 + $0x2c] sm:$0xf]
      %v8262 = vld [vmem:[#allocation2 + $0x30] sm:$0xf]
      %v8263 = vld [vmem:[#allocation2 + $0x34] sm:$0xf]
      %v8264 = vld [vmem:[#allocation2 + $0x38] sm:$0xf]
      %v8265 = vld [vmem:[#allocation2 + $0x3c] sm:$0xf]
      %v8266 = vld [vmem:[#allocation2 + $0x40] sm:$0xf]
      %v8267 = vld [vmem:[#allocation2 + $0x44] sm:$0xf]
      %v8268 = vld [vmem:[#allocation2 + $0x48] sm:$0xf]
      %v8269 = vld [vmem:[#allocation2 + $0x4c] sm:$0xf]
      %v8270 = vld [vmem:[#allocation2 + $0x50] sm:$0xf]
      %v8271 = vld [vmem:[#allocation2 + $0x54] sm:$0xf]
      %v8272 = vld [vmem:[#allocation2 + $0x58] sm:$0xf]
      %v8273 = vld [vmem:[#allocation2 + $0x5c] sm:$0xf]
      %v8274 = vld [vmem:[#allocation2 + $0x60] sm:$0xf]
      %v8275 = vld [vmem:[#allocation2 + $0x64] sm:$0xf]
      %v8276 = vld [vmem:[#allocation2 + $0x68] sm:$0xf]
      %v8277 = vld [vmem:[#allocation2 + $0x6c] sm:$0xf]
      %v8278 = vld [vmem:[#allocation2 + $0x70] sm:$0xf]
      %v8279 = vld [vmem:[#allocation2 + $0x74] sm:$0xf]
      %v8280 = vld [vmem:[#allocation2 + $0x78] sm:$0xf]
      %v8281 = vld [vmem:[#allocation2 + $0x7c] sm:$0xf]
      %v8282 = vld [vmem:[#allocation2 + $0x80] sm:$0xf]
      %v8283 = vld [vmem:[#allocation2 + $0x84] sm:$0xf]
      %v8284 = vld [vmem:[#allocation2 + $0x88] sm:$0xf]
      %v8285 = vld [vmem:[#allocation2 + $0x8c] sm:$0xf]
      %v8286 = vld [vmem:[#allocation2 + $0x90] sm:$0x1]
      %v8287 = vsel %vm1979, %v8254, 0
      %v8288 = vsel %vm1980, %v8255, 0
      %v8289 = vsel %vm1981, %v8256, 0
      %v8290 = vsel %vm1982, %v8257, 0
      %v8291 = vsel %vm1983, %v8258, 0
      %v8292 = vsel %vm1984, %v8259, 0
      %v8293 = vsel %vm1985, %v8260, 0
      %v8294 = vsel %vm1986, %v8261, 0
      %v8295 = vsel %vm1987, %v8262, 0
      %v8296 = vsel %vm1988, %v8263, 0
      %v8297 = vsel %vm1989, %v8264, 0
      %v8298 = vsel %vm1990, %v8265, 0
      %v8299 = vsel %vm1991, %v8266, 0
      %v8300 = vsel %vm1992, %v8267, 0
      %v8301 = vsel %vm1993, %v8268, 0
      %v8302 = vsel %vm1994, %v8269, 0
      %v8303 = vsel %vm1995, %v8270, 0
      %v8304 = vsel %vm1996, %v8271, 0
      %v8305 = vsel %vm1997, %v8272, 0
      %v8306 = vsel %vm1998, %v8273, 0
      %v8307 = vsel %vm1999, %v8274, 0
      %v8308 = vsel %vm2000, %v8275, 0
      %v8309 = vsel %vm2001, %v8276, 0
      %v8310 = vsel %vm2002, %v8277, 0
      %v8311 = vsel %vm2003, %v8278, 0
      %v8312 = vsel %vm2004, %v8279, 0
      %v8313 = vsel %vm2005, %v8280, 0
      %v8314 = vsel %vm2006, %v8281, 0
      %v8315 = vsel %vm2007, %v8282, 0
      %v8316 = vsel %vm2008, %v8283, 0
      %v8317 = vsel %vm2009, %v8284, 0
      %v8318 = vsel %vm2010, %v8285, 0
      %v8319 = vsel %vm2011, %v8286, 0
      %v8321 = vshrl.u32 %v8287, 16
      %v8323 = vrot.slane %v8321, 4
      %v8324 = vshll.u32 %v8287, 16
      %v8326 = vrot.slane %v8324, 5
      %v8327 = vor.u32 %v8323, %v8326
      %v8328 = vrot.slane %v8327, 4
      %v8330 = vshll.u32 %v8288, 16
      %v8332 = vrot.slane %v8330, 5
      %v8333 = vsel %vm626, %v8328, %v8332
      %v8334 = vshrl.u32 %v8288, 16
      %v8336 = vrot.slane %v8334, 4
      %v8337 = vor.u32 %v8336, %v8332
      %v8338 = vrot.slane %v8337, 4
      %v8340 = vshll.u32 %v8289, 16
      %v8342 = vrot.slane %v8340, 5
      %v8343 = vsel %vm626, %v8338, %v8342
      %v8344 = vshrl.u32 %v8289, 16
      %v8346 = vrot.slane %v8344, 4
      %v8347 = vor.u32 %v8346, %v8342
      %v8348 = vrot.slane %v8347, 4
      %v8350 = vshll.u32 %v8290, 16
      %v8352 = vrot.slane %v8350, 5
      %v8353 = vsel %vm626, %v8348, %v8352
      %v8354 = vshrl.u32 %v8290, 16
      %v8356 = vrot.slane %v8354, 4
      %v8357 = vor.u32 %v8356, %v8352
      %v8358 = vrot.slane %v8357, 4
      %v8360 = vshll.u32 %v8291, 16
      %v8362 = vrot.slane %v8360, 5
      %v8363 = vsel %vm626, %v8358, %v8362
      %v8364 = vshrl.u32 %v8291, 16
      %v8366 = vrot.slane %v8364, 4
      %v8367 = vor.u32 %v8366, %v8362
      %v8368 = vrot.slane %v8367, 4
      %v8370 = vshll.u32 %v8292, 16
      %v8372 = vrot.slane %v8370, 5
      %v8373 = vsel %vm626, %v8368, %v8372
      %v8374 = vshrl.u32 %v8292, 16
      %v8376 = vrot.slane %v8374, 4
      %v8377 = vor.u32 %v8376, %v8372
      %v8378 = vrot.slane %v8377, 4
      %v8380 = vshll.u32 %v8293, 16
      %v8382 = vrot.slane %v8380, 5
      %v8383 = vsel %vm626, %v8378, %v8382
      %v8384 = vshrl.u32 %v8293, 16
      %v8386 = vrot.slane %v8384, 4
      %v8387 = vor.u32 %v8386, %v8382
      %v8388 = vrot.slane %v8387, 4
      %v8390 = vshll.u32 %v8294, 16
      %v8392 = vrot.slane %v8390, 5
      %v8393 = vsel %vm626, %v8388, %v8392
      %v8394 = vshrl.u32 %v8294, 16
      %v8396 = vrot.slane %v8394, 4
      %v8397 = vor.u32 %v8396, %v8392
      %v8398 = vrot.slane %v8397, 4
      %v8400 = vshll.u32 %v8295, 16
      %v8402 = vrot.slane %v8400, 5
      %v8403 = vsel %vm626, %v8398, %v8402
      %v8404 = vshrl.u32 %v8295, 16
      %v8406 = vrot.slane %v8404, 4
      %v8407 = vor.u32 %v8406, %v8402
      %v8408 = vrot.slane %v8407, 4
      %v8410 = vshll.u32 %v8296, 16
      %v8412 = vrot.slane %v8410, 5
      %v8413 = vsel %vm626, %v8408, %v8412
      %v8414 = vshrl.u32 %v8296, 16
      %v8416 = vrot.slane %v8414, 4
      %v8417 = vor.u32 %v8416, %v8412
      %v8418 = vrot.slane %v8417, 4
      %v8420 = vshll.u32 %v8297, 16
      %v8422 = vrot.slane %v8420, 5
      %v8423 = vsel %vm626, %v8418, %v8422
      %v8424 = vshrl.u32 %v8297, 16
      %v8426 = vrot.slane %v8424, 4
      %v8427 = vor.u32 %v8426, %v8422
      %v8428 = vrot.slane %v8427, 4
      %v8430 = vshll.u32 %v8298, 16
      %v8432 = vrot.slane %v8430, 5
      %v8433 = vsel %vm626, %v8428, %v8432
      %v8434 = vshrl.u32 %v8298, 16
      %v8436 = vrot.slane %v8434, 4
      %v8437 = vor.u32 %v8436, %v8432
      %v8438 = vrot.slane %v8437, 4
      %v8440 = vshll.u32 %v8299, 16
      %v8442 = vrot.slane %v8440, 5
      %v8443 = vsel %vm626, %v8438, %v8442
      %v8444 = vshrl.u32 %v8299, 16
      %v8446 = vrot.slane %v8444, 4
      %v8447 = vor.u32 %v8446, %v8442
      %v8448 = vrot.slane %v8447, 4
      %v8450 = vshll.u32 %v8300, 16
      %v8452 = vrot.slane %v8450, 5
      %v8453 = vsel %vm626, %v8448, %v8452
      %v8454 = vshrl.u32 %v8300, 16
      %v8456 = vrot.slane %v8454, 4
      %v8457 = vor.u32 %v8456, %v8452
      %v8458 = vrot.slane %v8457, 4
      %v8460 = vshll.u32 %v8301, 16
      %v8462 = vrot.slane %v8460, 5
      %v8463 = vsel %vm626, %v8458, %v8462
      %v8464 = vshrl.u32 %v8301, 16
      %v8466 = vrot.slane %v8464, 4
      %v8467 = vor.u32 %v8466, %v8462
      %v8468 = vrot.slane %v8467, 4
      %v8470 = vshll.u32 %v8302, 16
      %v8472 = vrot.slane %v8470, 5
      %v8473 = vsel %vm626, %v8468, %v8472
      %v8474 = vshrl.u32 %v8302, 16
      %v8476 = vrot.slane %v8474, 4
      %v8477 = vor.u32 %v8476, %v8472
      %v8478 = vrot.slane %v8477, 4
      %v8480 = vshll.u32 %v8303, 16
      %v8482 = vrot.slane %v8480, 5
      %v8483 = vsel %vm626, %v8478, %v8482
      %v8484 = vshrl.u32 %v8303, 16
      %v8486 = vrot.slane %v8484, 4
      %v8487 = vor.u32 %v8486, %v8482
      %v8488 = vrot.slane %v8487, 4
      %v8490 = vshll.u32 %v8304, 16
      %v8492 = vrot.slane %v8490, 5
      %v8493 = vsel %vm626, %v8488, %v8492
      %v8494 = vshrl.u32 %v8304, 16
      %v8496 = vrot.slane %v8494, 4
      %v8497 = vor.u32 %v8496, %v8492
      %v8498 = vrot.slane %v8497, 4
      %v8500 = vshll.u32 %v8305, 16
      %v8502 = vrot.slane %v8500, 5
      %v8503 = vsel %vm626, %v8498, %v8502
      %v8504 = vshrl.u32 %v8305, 16
      %v8506 = vrot.slane %v8504, 4
      %v8507 = vor.u32 %v8506, %v8502
      %v8508 = vrot.slane %v8507, 4
      %v8510 = vshll.u32 %v8306, 16
      %v8512 = vrot.slane %v8510, 5
      %v8513 = vsel %vm626, %v8508, %v8512
      %v8514 = vshrl.u32 %v8306, 16
      %v8516 = vrot.slane %v8514, 4
      %v8517 = vor.u32 %v8516, %v8512
      %v8518 = vrot.slane %v8517, 4
      %v8520 = vshll.u32 %v8307, 16
      %v8522 = vrot.slane %v8520, 5
      %v8523 = vsel %vm626, %v8518, %v8522
      %v8524 = vshrl.u32 %v8307, 16
      %v8526 = vrot.slane %v8524, 4
      %v8527 = vor.u32 %v8526, %v8522
      %v8528 = vrot.slane %v8527, 4
      %v8530 = vshll.u32 %v8308, 16
      %v8532 = vrot.slane %v8530, 5
      %v8533 = vsel %vm626, %v8528, %v8532
      %v8534 = vshrl.u32 %v8308, 16
      %v8536 = vrot.slane %v8534, 4
      %v8537 = vor.u32 %v8536, %v8532
      %v8538 = vrot.slane %v8537, 4
      %v8540 = vshll.u32 %v8309, 16
      %v8542 = vrot.slane %v8540, 5
      %v8543 = vsel %vm626, %v8538, %v8542
      %v8544 = vshrl.u32 %v8309, 16
      %v8546 = vrot.slane %v8544, 4
      %v8547 = vor.u32 %v8546, %v8542
      %v8548 = vrot.slane %v8547, 4
      %v8550 = vshll.u32 %v8310, 16
      %v8552 = vrot.slane %v8550, 5
      %v8553 = vsel %vm626, %v8548, %v8552
      %v8554 = vshrl.u32 %v8310, 16
      %v8556 = vrot.slane %v8554, 4
      %v8557 = vor.u32 %v8556, %v8552
      %v8558 = vrot.slane %v8557, 4
      %v8560 = vshll.u32 %v8311, 16
      %v8562 = vrot.slane %v8560, 5
      %v8563 = vsel %vm626, %v8558, %v8562
      %v8564 = vshrl.u32 %v8311, 16
      %v8566 = vrot.slane %v8564, 4
      %v8567 = vor.u32 %v8566, %v8562
      %v8568 = vrot.slane %v8567, 4
      %v8570 = vshll.u32 %v8312, 16
      %v8572 = vrot.slane %v8570, 5
      %v8573 = vsel %vm626, %v8568, %v8572
      %v8574 = vshrl.u32 %v8312, 16
      %v8576 = vrot.slane %v8574, 4
      %v8577 = vor.u32 %v8576, %v8572
      %v8578 = vrot.slane %v8577, 4
      %v8580 = vshll.u32 %v8313, 16
      %v8582 = vrot.slane %v8580, 5
      %v8583 = vsel %vm626, %v8578, %v8582
      %v8584 = vshrl.u32 %v8313, 16
      %v8586 = vrot.slane %v8584, 4
      %v8587 = vor.u32 %v8586, %v8582
      %v8588 = vrot.slane %v8587, 4
      %v8590 = vshll.u32 %v8314, 16
      %v8592 = vrot.slane %v8590, 5
      %v8593 = vsel %vm626, %v8588, %v8592
      %v8594 = vshrl.u32 %v8314, 16
      %v8596 = vrot.slane %v8594, 4
      %v8597 = vor.u32 %v8596, %v8592
      %v8598 = vrot.slane %v8597, 4
      %v8600 = vshll.u32 %v8315, 16
      %v8602 = vrot.slane %v8600, 5
      %v8603 = vsel %vm626, %v8598, %v8602
      %v8604 = vshrl.u32 %v8315, 16
      %v8606 = vrot.slane %v8604, 4
      %v8607 = vor.u32 %v8606, %v8602
      %v8608 = vrot.slane %v8607, 4
      %v8610 = vshll.u32 %v8316, 16
      %v8612 = vrot.slane %v8610, 5
      %v8613 = vsel %vm626, %v8608, %v8612
      %v8614 = vshrl.u32 %v8316, 16
      %v8616 = vrot.slane %v8614, 4
      %v8617 = vor.u32 %v8616, %v8612
      %v8618 = vrot.slane %v8617, 4
      %v8620 = vshll.u32 %v8317, 16
      %v8622 = vrot.slane %v8620, 5
      %v8623 = vsel %vm626, %v8618, %v8622
      %v8624 = vshrl.u32 %v8317, 16
      %v8626 = vrot.slane %v8624, 4
      %v8627 = vor.u32 %v8626, %v8622
      %v8628 = vrot.slane %v8627, 4
      %v8630 = vshll.u32 %v8318, 16
      %v8632 = vrot.slane %v8630, 5
      %v8633 = vsel %vm626, %v8628, %v8632
      %v8634 = vshrl.u32 %v8318, 16
      %v8636 = vrot.slane %v8634, 4
      %v8637 = vor.u32 %v8636, %v8632
      %v8638 = vrot.slane %v8637, 4
      %v8640 = vshll.u32 %v8319, 16
      %v8642 = vrot.slane %v8640, 5
      %v8643 = vsel %vm626, %v8638, %v8642
      %8676 = vst [vmem:[#allocation3 + $0x14] sm:$0xf] %v8333
      %8677 = vst [vmem:[#allocation3 + $0x38] sm:$0xf] %v8343
      %8678 = vst [vmem:[#allocation3 + $0x5c] sm:$0xf] %v8353
      %8679 = vst [vmem:[#allocation3 + $0x80] sm:$0xf] %v8363
      %8680 = vst [vmem:[#allocation3 + $0xa4] sm:$0xf] %v8373
      %8681 = vst [vmem:[#allocation3 + $0xc8] sm:$0xf] %v8383
      %8682 = vst [vmem:[#allocation3 + $0xec] sm:$0xf] %v8393
      %8683 = vst [vmem:[#allocation3 + $0x110] sm:$0xf] %v8403
      %8684 = vst [vmem:[#allocation3 + $0x134] sm:$0xf] %v8413
      %8685 = vst [vmem:[#allocation3 + $0x158] sm:$0xf] %v8423
      %8686 = vst [vmem:[#allocation3 + $0x17c] sm:$0xf] %v8433
      %8687 = vst [vmem:[#allocation3 + $0x1a0] sm:$0xf] %v8443
      %8688 = vst [vmem:[#allocation3 + $0x1c4] sm:$0xf] %v8453
      %8689 = vst [vmem:[#allocation3 + $0x1e8] sm:$0xf] %v8463
      %8690 = vst [vmem:[#allocation3 + $0x20c] sm:$0xf] %v8473
      %8691 = vst [vmem:[#allocation3 + $0x230] sm:$0xf] %v8483
      %8692 = vst [vmem:[#allocation3 + $0x254] sm:$0xf] %v8493
      %8693 = vst [vmem:[#allocation3 + $0x278] sm:$0xf] %v8503
      %8694 = vst [vmem:[#allocation3 + $0x29c] sm:$0xf] %v8513
      %8695 = vst [vmem:[#allocation3 + $0x2c0] sm:$0xf] %v8523
      %8696 = vst [vmem:[#allocation3 + $0x2e4] sm:$0xf] %v8533
      %8697 = vst [vmem:[#allocation3 + $0x308] sm:$0xf] %v8543
      %8698 = vst [vmem:[#allocation3 + $0x32c] sm:$0xf] %v8553
      %8699 = vst [vmem:[#allocation3 + $0x350] sm:$0xf] %v8563
      %8700 = vst [vmem:[#allocation3 + $0x374] sm:$0xf] %v8573
      %8701 = vst [vmem:[#allocation3 + $0x398] sm:$0xf] %v8583
      %8702 = vst [vmem:[#allocation3 + $0x3bc] sm:$0xf] %v8593
      %8703 = vst [vmem:[#allocation3 + $0x3e0] sm:$0xf] %v8603
      %8704 = vst [vmem:[#allocation3 + $0x404] sm:$0xf] %v8613
      %8705 = vst [vmem:[#allocation3 + $0x428] sm:$0xf] %v8623
      %8706 = vst [vmem:[#allocation3 + $0x44c] sm:$0xf] %v8633
      %8707 = vst [vmem:[#allocation3 + $0x470] sm:$0xf] %v8643
      %v8708 = vld [vmem:[#allocation2 + $0x14] sm:$0x8]
      %v8709 = vld [vmem:[#allocation2 + $0x18] sm:$0xf]
      %v8710 = vld [vmem:[#allocation2 + $0x1c] sm:$0xf]
      %v8711 = vld [vmem:[#allocation2 + $0x20] sm:$0xf]
      %v8712 = vld [vmem:[#allocation2 + $0x24] sm:$0xf]
      %v8713 = vld [vmem:[#allocation2 + $0x28] sm:$0xf]
      %v8714 = vld [vmem:[#allocation2 + $0x2c] sm:$0xf]
      %v8715 = vld [vmem:[#allocation2 + $0x30] sm:$0xf]
      %v8716 = vld [vmem:[#allocation2 + $0x34] sm:$0xf]
      %v8717 = vld [vmem:[#allocation2 + $0x38] sm:$0xf]
      %v8718 = vld [vmem:[#allocation2 + $0x3c] sm:$0xf]
      %v8719 = vld [vmem:[#allocation2 + $0x40] sm:$0xf]
      %v8720 = vld [vmem:[#allocation2 + $0x44] sm:$0xf]
      %v8721 = vld [vmem:[#allocation2 + $0x48] sm:$0xf]
      %v8722 = vld [vmem:[#allocation2 + $0x4c] sm:$0xf]
      %v8723 = vld [vmem:[#allocation2 + $0x50] sm:$0xf]
      %v8724 = vld [vmem:[#allocation2 + $0x54] sm:$0xf]
      %v8725 = vld [vmem:[#allocation2 + $0x58] sm:$0xf]
      %v8726 = vld [vmem:[#allocation2 + $0x5c] sm:$0xf]
      %v8727 = vld [vmem:[#allocation2 + $0x60] sm:$0xf]
      %v8728 = vld [vmem:[#allocation2 + $0x64] sm:$0xf]
      %v8729 = vld [vmem:[#allocation2 + $0x68] sm:$0xf]
      %v8730 = vld [vmem:[#allocation2 + $0x6c] sm:$0xf]
      %v8731 = vld [vmem:[#allocation2 + $0x70] sm:$0xf]
      %v8732 = vld [vmem:[#allocation2 + $0x74] sm:$0xf]
      %v8733 = vld [vmem:[#allocation2 + $0x78] sm:$0xf]
      %v8734 = vld [vmem:[#allocation2 + $0x7c] sm:$0xf]
      %v8735 = vld [vmem:[#allocation2 + $0x80] sm:$0xf]
      %v8736 = vld [vmem:[#allocation2 + $0x84] sm:$0xf]
      %v8737 = vld [vmem:[#allocation2 + $0x88] sm:$0xf]
      %v8738 = vld [vmem:[#allocation2 + $0x8c] sm:$0xf]
      %v8739 = vld [vmem:[#allocation2 + $0x90] sm:$0xf]
      %v8740 = vld [vmem:[#allocation2 + $0x94] sm:$0xf]
      %v8741 = vsel %vm946, %v8708, 0
      %v8742 = vsel %vm947, %v8709, 0
      %v8743 = vsel %vm948, %v8710, 0
      %v8744 = vsel %vm949, %v8711, 0
      %v8745 = vsel %vm950, %v8712, 0
      %v8746 = vsel %vm951, %v8713, 0
      %v8747 = vsel %vm952, %v8714, 0
      %v8748 = vsel %vm953, %v8715, 0
      %v8749 = vsel %vm954, %v8716, 0
      %v8750 = vsel %vm955, %v8717, 0
      %v8751 = vsel %vm956, %v8718, 0
      %v8752 = vsel %vm957, %v8719, 0
      %v8753 = vsel %vm958, %v8720, 0
      %v8754 = vsel %vm959, %v8721, 0
      %v8755 = vsel %vm960, %v8722, 0
      %v8756 = vsel %vm961, %v8723, 0
      %v8757 = vsel %vm962, %v8724, 0
      %v8758 = vsel %vm963, %v8725, 0
      %v8759 = vsel %vm964, %v8726, 0
      %v8760 = vsel %vm965, %v8727, 0
      %v8761 = vsel %vm966, %v8728, 0
      %v8762 = vsel %vm967, %v8729, 0
      %v8763 = vsel %vm968, %v8730, 0
      %v8764 = vsel %vm969, %v8731, 0
      %v8765 = vsel %vm970, %v8732, 0
      %v8766 = vsel %vm971, %v8733, 0
      %v8767 = vsel %vm972, %v8734, 0
      %v8768 = vsel %vm973, %v8735, 0
      %v8769 = vsel %vm974, %v8736, 0
      %v8770 = vsel %vm975, %v8737, 0
      %v8771 = vsel %vm976, %v8738, 0
      %v8772 = vsel %vm977, %v8739, 0
      %v8773 = vsel %vm978, %v8740, 0
      %v8775 = vshrl.u32 %v8741, 16
      %v8777 = vrot.slane %v8775, 7
      %v8778 = vrot.slane %v8777, 4
      %v8780 = vshrl.u32 %v8742, 16
      %v8782 = vrot.slane %v8780, 7
      %v8783 = vshll.u32 %v8742, 16
      %v8785 = vor.u32 %v8782, %v8783
      %v8786 = vsel %vm1014, %v8778, %v8785
      %v8787 = vrot.slane %v8782, 4
      %v8789 = vshrl.u32 %v8743, 16
      %v8791 = vrot.slane %v8789, 7
      %v8792 = vshll.u32 %v8743, 16
      %v8794 = vor.u32 %v8791, %v8792
      %v8795 = vsel %vm1014, %v8787, %v8794
      %v8796 = vrot.slane %v8791, 4
      %v8798 = vshrl.u32 %v8744, 16
      %v8800 = vrot.slane %v8798, 7
      %v8801 = vshll.u32 %v8744, 16
      %v8803 = vor.u32 %v8800, %v8801
      %v8804 = vsel %vm1014, %v8796, %v8803
      %v8805 = vrot.slane %v8800, 4
      %v8807 = vshrl.u32 %v8745, 16
      %v8809 = vrot.slane %v8807, 7
      %v8810 = vshll.u32 %v8745, 16
      %v8812 = vor.u32 %v8809, %v8810
      %v8813 = vsel %vm1014, %v8805, %v8812
      %v8814 = vrot.slane %v8809, 4
      %v8816 = vshrl.u32 %v8746, 16
      %v8818 = vrot.slane %v8816, 7
      %v8819 = vshll.u32 %v8746, 16
      %v8821 = vor.u32 %v8818, %v8819
      %v8822 = vsel %vm1014, %v8814, %v8821
      %v8823 = vrot.slane %v8818, 4
      %v8825 = vshrl.u32 %v8747, 16
      %v8827 = vrot.slane %v8825, 7
      %v8828 = vshll.u32 %v8747, 16
      %v8830 = vor.u32 %v8827, %v8828
      %v8831 = vsel %vm1014, %v8823, %v8830
      %v8832 = vrot.slane %v8827, 4
      %v8834 = vshrl.u32 %v8748, 16
      %v8836 = vrot.slane %v8834, 7
      %v8837 = vshll.u32 %v8748, 16
      %v8839 = vor.u32 %v8836, %v8837
      %v8840 = vsel %vm1014, %v8832, %v8839
      %v8841 = vrot.slane %v8836, 4
      %v8843 = vshrl.u32 %v8749, 16
      %v8845 = vrot.slane %v8843, 7
      %v8846 = vshll.u32 %v8749, 16
      %v8848 = vor.u32 %v8845, %v8846
      %v8849 = vsel %vm1014, %v8841, %v8848
      %v8850 = vrot.slane %v8845, 4
      %v8852 = vshrl.u32 %v8750, 16
      %v8854 = vrot.slane %v8852, 7
      %v8855 = vshll.u32 %v8750, 16
      %v8857 = vor.u32 %v8854, %v8855
      %v8858 = vsel %vm1014, %v8850, %v8857
      %v8859 = vrot.slane %v8854, 4
      %v8861 = vshrl.u32 %v8751, 16
      %v8863 = vrot.slane %v8861, 7
      %v8864 = vshll.u32 %v8751, 16
      %v8866 = vor.u32 %v8863, %v8864
      %v8867 = vsel %vm1014, %v8859, %v8866
      %v8868 = vrot.slane %v8863, 4
      %v8870 = vshrl.u32 %v8752, 16
      %v8872 = vrot.slane %v8870, 7
      %v8873 = vshll.u32 %v8752, 16
      %v8875 = vor.u32 %v8872, %v8873
      %v8876 = vsel %vm1014, %v8868, %v8875
      %v8877 = vrot.slane %v8872, 4
      %v8879 = vshrl.u32 %v8753, 16
      %v8881 = vrot.slane %v8879, 7
      %v8882 = vshll.u32 %v8753, 16
      %v8884 = vor.u32 %v8881, %v8882
      %v8885 = vsel %vm1014, %v8877, %v8884
      %v8886 = vrot.slane %v8881, 4
      %v8888 = vshrl.u32 %v8754, 16
      %v8890 = vrot.slane %v8888, 7
      %v8891 = vshll.u32 %v8754, 16
      %v8893 = vor.u32 %v8890, %v8891
      %v8894 = vsel %vm1014, %v8886, %v8893
      %v8895 = vrot.slane %v8890, 4
      %v8897 = vshrl.u32 %v8755, 16
      %v8899 = vrot.slane %v8897, 7
      %v8900 = vshll.u32 %v8755, 16
      %v8902 = vor.u32 %v8899, %v8900
      %v8903 = vsel %vm1014, %v8895, %v8902
      %v8904 = vrot.slane %v8899, 4
      %v8906 = vshrl.u32 %v8756, 16
      %v8908 = vrot.slane %v8906, 7
      %v8909 = vshll.u32 %v8756, 16
      %v8911 = vor.u32 %v8908, %v8909
      %v8912 = vsel %vm1014, %v8904, %v8911
      %v8913 = vrot.slane %v8908, 4
      %v8915 = vshrl.u32 %v8757, 16
      %v8917 = vrot.slane %v8915, 7
      %v8918 = vshll.u32 %v8757, 16
      %v8920 = vor.u32 %v8917, %v8918
      %v8921 = vsel %vm1014, %v8913, %v8920
      %v8922 = vrot.slane %v8917, 4
      %v8924 = vshrl.u32 %v8758, 16
      %v8926 = vrot.slane %v8924, 7
      %v8927 = vshll.u32 %v8758, 16
      %v8929 = vor.u32 %v8926, %v8927
      %v8930 = vsel %vm1014, %v8922, %v8929
      %v8931 = vrot.slane %v8926, 4
      %v8933 = vshrl.u32 %v8759, 16
      %v8935 = vrot.slane %v8933, 7
      %v8936 = vshll.u32 %v8759, 16
      %v8938 = vor.u32 %v8935, %v8936
      %v8939 = vsel %vm1014, %v8931, %v8938
      %v8940 = vrot.slane %v8935, 4
      %v8942 = vshrl.u32 %v8760, 16
      %v8944 = vrot.slane %v8942, 7
      %v8945 = vshll.u32 %v8760, 16
      %v8947 = vor.u32 %v8944, %v8945
      %v8948 = vsel %vm1014, %v8940, %v8947
      %v8949 = vrot.slane %v8944, 4
      %v8951 = vshrl.u32 %v8761, 16
      %v8953 = vrot.slane %v8951, 7
      %v8954 = vshll.u32 %v8761, 16
      %v8956 = vor.u32 %v8953, %v8954
      %v8957 = vsel %vm1014, %v8949, %v8956
      %v8958 = vrot.slane %v8953, 4
      %v8960 = vshrl.u32 %v8762, 16
      %v8962 = vrot.slane %v8960, 7
      %v8963 = vshll.u32 %v8762, 16
      %v8965 = vor.u32 %v8962, %v8963
      %v8966 = vsel %vm1014, %v8958, %v8965
      %v8967 = vrot.slane %v8962, 4
      %v8969 = vshrl.u32 %v8763, 16
      %v8971 = vrot.slane %v8969, 7
      %v8972 = vshll.u32 %v8763, 16
      %v8974 = vor.u32 %v8971, %v8972
      %v8975 = vsel %vm1014, %v8967, %v8974
      %v8976 = vrot.slane %v8971, 4
      %v8978 = vshrl.u32 %v8764, 16
      %v8980 = vrot.slane %v8978, 7
      %v8981 = vshll.u32 %v8764, 16
      %v8983 = vor.u32 %v8980, %v8981
      %v8984 = vsel %vm1014, %v8976, %v8983
      %v8985 = vrot.slane %v8980, 4
      %v8987 = vshrl.u32 %v8765, 16
      %v8989 = vrot.slane %v8987, 7
      %v8990 = vshll.u32 %v8765, 16
      %v8992 = vor.u32 %v8989, %v8990
      %v8993 = vsel %vm1014, %v8985, %v8992
      %v8994 = vrot.slane %v8989, 4
      %v8996 = vshrl.u32 %v8766, 16
      %v8998 = vrot.slane %v8996, 7
      %v8999 = vshll.u32 %v8766, 16
      %v9001 = vor.u32 %v8998, %v8999
      %v9002 = vsel %vm1014, %v8994, %v9001
      %v9003 = vrot.slane %v8998, 4
      %v9005 = vshrl.u32 %v8767, 16
      %v9007 = vrot.slane %v9005, 7
      %v9008 = vshll.u32 %v8767, 16
      %v9010 = vor.u32 %v9007, %v9008
      %v9011 = vsel %vm1014, %v9003, %v9010
      %v9012 = vrot.slane %v9007, 4
      %v9014 = vshrl.u32 %v8768, 16
      %v9016 = vrot.slane %v9014, 7
      %v9017 = vshll.u32 %v8768, 16
      %v9019 = vor.u32 %v9016, %v9017
      %v9020 = vsel %vm1014, %v9012, %v9019
      %v9021 = vrot.slane %v9016, 4
      %v9023 = vshrl.u32 %v8769, 16
      %v9025 = vrot.slane %v9023, 7
      %v9026 = vshll.u32 %v8769, 16
      %v9028 = vor.u32 %v9025, %v9026
      %v9029 = vsel %vm1014, %v9021, %v9028
      %v9030 = vrot.slane %v9025, 4
      %v9032 = vshrl.u32 %v8770, 16
      %v9034 = vrot.slane %v9032, 7
      %v9035 = vshll.u32 %v8770, 16
      %v9037 = vor.u32 %v9034, %v9035
      %v9038 = vsel %vm1014, %v9030, %v9037
      %v9039 = vrot.slane %v9034, 4
      %v9041 = vshrl.u32 %v8771, 16
      %v9043 = vrot.slane %v9041, 7
      %v9044 = vshll.u32 %v8771, 16
      %v9046 = vor.u32 %v9043, %v9044
      %v9047 = vsel %vm1014, %v9039, %v9046
      %v9048 = vrot.slane %v9043, 4
      %v9050 = vshrl.u32 %v8772, 16
      %v9052 = vrot.slane %v9050, 7
      %v9053 = vshll.u32 %v8772, 16
      %v9055 = vor.u32 %v9052, %v9053
      %v9056 = vsel %vm1014, %v9048, %v9055
      %v9057 = vrot.slane %v9052, 4
      %v9059 = vshrl.u32 %v8773, 16
      %v9061 = vrot.slane %v9059, 7
      %v9062 = vshll.u32 %v8773, 16
      %v9064 = vor.u32 %v9061, %v9062
      %v9065 = vsel %vm1014, %v9057, %v9064
      %9098 = vst [vmem:[#allocation3 + $0x18] sm:$0xf] %v8786
      %9099 = vst [vmem:[#allocation3 + $0x3c] sm:$0xf] %v8795
      %9100 = vst [vmem:[#allocation3 + $0x60] sm:$0xf] %v8804
      %9101 = vst [vmem:[#allocation3 + $0x84] sm:$0xf] %v8813
      %9102 = vst [vmem:[#allocation3 + $0xa8] sm:$0xf] %v8822
      %9103 = vst [vmem:[#allocation3 + $0xcc] sm:$0xf] %v8831
      %9104 = vst [vmem:[#allocation3 + $0xf0] sm:$0xf] %v8840
      %9105 = vst [vmem:[#allocation3 + $0x114] sm:$0xf] %v8849
      %9106 = vst [vmem:[#allocation3 + $0x138] sm:$0xf] %v8858
      %9107 = vst [vmem:[#allocation3 + $0x15c] sm:$0xf] %v8867
      %9108 = vst [vmem:[#allocation3 + $0x180] sm:$0xf] %v8876
      %9109 = vst [vmem:[#allocation3 + $0x1a4] sm:$0xf] %v8885
      %9110 = vst [vmem:[#allocation3 + $0x1c8] sm:$0xf] %v8894
      %9111 = vst [vmem:[#allocation3 + $0x1ec] sm:$0xf] %v8903
      %9112 = vst [vmem:[#allocation3 + $0x210] sm:$0xf] %v8912
      %9113 = vst [vmem:[#allocation3 + $0x234] sm:$0xf] %v8921
      %9114 = vst [vmem:[#allocation3 + $0x258] sm:$0xf] %v8930
      %9115 = vst [vmem:[#allocation3 + $0x27c] sm:$0xf] %v8939
      %9116 = vst [vmem:[#allocation3 + $0x2a0] sm:$0xf] %v8948
      %9117 = vst [vmem:[#allocation3 + $0x2c4] sm:$0xf] %v8957
      %9118 = vst [vmem:[#allocation3 + $0x2e8] sm:$0xf] %v8966
      %9119 = vst [vmem:[#allocation3 + $0x30c] sm:$0xf] %v8975
      %9120 = vst [vmem:[#allocation3 + $0x330] sm:$0xf] %v8984
      %9121 = vst [vmem:[#allocation3 + $0x354] sm:$0xf] %v8993
      %9122 = vst [vmem:[#allocation3 + $0x378] sm:$0xf] %v9002
      %9123 = vst [vmem:[#allocation3 + $0x39c] sm:$0xf] %v9011
      %9124 = vst [vmem:[#allocation3 + $0x3c0] sm:$0xf] %v9020
      %9125 = vst [vmem:[#allocation3 + $0x3e4] sm:$0xf] %v9029
      %9126 = vst [vmem:[#allocation3 + $0x408] sm:$0xf] %v9038
      %9127 = vst [vmem:[#allocation3 + $0x42c] sm:$0xf] %v9047
      %9128 = vst [vmem:[#allocation3 + $0x450] sm:$0xf] %v9056
      %9129 = vst [vmem:[#allocation3 + $0x474] sm:$0xf] %v9065
      %v9130 = vld [vmem:[#allocation2 + $0x18] sm:$0xf]
      %v9131 = vld [vmem:[#allocation2 + $0x1c] sm:$0xf]
      %v9132 = vld [vmem:[#allocation2 + $0x20] sm:$0xf]
      %v9133 = vld [vmem:[#allocation2 + $0x24] sm:$0xf]
      %v9134 = vld [vmem:[#allocation2 + $0x28] sm:$0xf]
      %v9135 = vld [vmem:[#allocation2 + $0x2c] sm:$0xf]
      %v9136 = vld [vmem:[#allocation2 + $0x30] sm:$0xf]
      %v9137 = vld [vmem:[#allocation2 + $0x34] sm:$0xf]
      %v9138 = vld [vmem:[#allocation2 + $0x38] sm:$0xf]
      %v9139 = vld [vmem:[#allocation2 + $0x3c] sm:$0xf]
      %v9140 = vld [vmem:[#allocation2 + $0x40] sm:$0xf]
      %v9141 = vld [vmem:[#allocation2 + $0x44] sm:$0xf]
      %v9142 = vld [vmem:[#allocation2 + $0x48] sm:$0xf]
      %v9143 = vld [vmem:[#allocation2 + $0x4c] sm:$0xf]
      %v9144 = vld [vmem:[#allocation2 + $0x50] sm:$0xf]
      %v9145 = vld [vmem:[#allocation2 + $0x54] sm:$0xf]
      %v9146 = vld [vmem:[#allocation2 + $0x58] sm:$0xf]
      %v9147 = vld [vmem:[#allocation2 + $0x5c] sm:$0xf]
      %v9148 = vld [vmem:[#allocation2 + $0x60] sm:$0xf]
      %v9149 = vld [vmem:[#allocation2 + $0x64] sm:$0xf]
      %v9150 = vld [vmem:[#allocation2 + $0x68] sm:$0xf]
      %v9151 = vld [vmem:[#allocation2 + $0x6c] sm:$0xf]
      %v9152 = vld [vmem:[#allocation2 + $0x70] sm:$0xf]
      %v9153 = vld [vmem:[#allocation2 + $0x74] sm:$0xf]
      %v9154 = vld [vmem:[#allocation2 + $0x78] sm:$0xf]
      %v9155 = vld [vmem:[#allocation2 + $0x7c] sm:$0xf]
      %v9156 = vld [vmem:[#allocation2 + $0x80] sm:$0xf]
      %v9157 = vld [vmem:[#allocation2 + $0x84] sm:$0xf]
      %v9158 = vld [vmem:[#allocation2 + $0x88] sm:$0xf]
      %v9159 = vld [vmem:[#allocation2 + $0x8c] sm:$0xf]
      %v9160 = vld [vmem:[#allocation2 + $0x90] sm:$0xf]
      %v9161 = vld [vmem:[#allocation2 + $0x94] sm:$0xf]
      %9162 = vst [vmem:[#allocation3 + $0x1c] sm:$0xf] %v9130
      %9163 = vst [vmem:[#allocation3 + $0x40] sm:$0xf] %v9131
      %9164 = vst [vmem:[#allocation3 + $0x64] sm:$0xf] %v9132
      %9165 = vst [vmem:[#allocation3 + $0x88] sm:$0xf] %v9133
      %9166 = vst [vmem:[#allocation3 + $0xac] sm:$0xf] %v9134
      %9167 = vst [vmem:[#allocation3 + $0xd0] sm:$0xf] %v9135
      %9168 = vst [vmem:[#allocation3 + $0xf4] sm:$0xf] %v9136
      %9169 = vst [vmem:[#allocation3 + $0x118] sm:$0xf] %v9137
      %9170 = vst [vmem:[#allocation3 + $0x13c] sm:$0xf] %v9138
      %9171 = vst [vmem:[#allocation3 + $0x160] sm:$0xf] %v9139
      %9172 = vst [vmem:[#allocation3 + $0x184] sm:$0xf] %v9140
      %9173 = vst [vmem:[#allocation3 + $0x1a8] sm:$0xf] %v9141
      %9174 = vst [vmem:[#allocation3 + $0x1cc] sm:$0xf] %v9142
      %9175 = vst [vmem:[#allocation3 + $0x1f0] sm:$0xf] %v9143
      %9176 = vst [vmem:[#allocation3 + $0x214] sm:$0xf] %v9144
      %9177 = vst [vmem:[#allocation3 + $0x238] sm:$0xf] %v9145
      %9178 = vst [vmem:[#allocation3 + $0x25c] sm:$0xf] %v9146
      %9179 = vst [vmem:[#allocation3 + $0x280] sm:$0xf] %v9147
      %9180 = vst [vmem:[#allocation3 + $0x2a4] sm:$0xf] %v9148
      %9181 = vst [vmem:[#allocation3 + $0x2c8] sm:$0xf] %v9149
      %9182 = vst [vmem:[#allocation3 + $0x2ec] sm:$0xf] %v9150
      %9183 = vst [vmem:[#allocation3 + $0x310] sm:$0xf] %v9151
      %9184 = vst [vmem:[#allocation3 + $0x334] sm:$0xf] %v9152
      %9185 = vst [vmem:[#allocation3 + $0x358] sm:$0xf] %v9153
      %9186 = vst [vmem:[#allocation3 + $0x37c] sm:$0xf] %v9154
      %9187 = vst [vmem:[#allocation3 + $0x3a0] sm:$0xf] %v9155
      %9188 = vst [vmem:[#allocation3 + $0x3c4] sm:$0xf] %v9156
      %9189 = vst [vmem:[#allocation3 + $0x3e8] sm:$0xf] %v9157
      %9190 = vst [vmem:[#allocation3 + $0x40c] sm:$0xf] %v9158
      %9191 = vst [vmem:[#allocation3 + $0x430] sm:$0xf] %v9159
      %9192 = vst [vmem:[#allocation3 + $0x454] sm:$0xf] %v9160
      %9193 = vst [vmem:[#allocation3 + $0x478] sm:$0xf] %v9161
      %v9194 = vld [vmem:[#allocation2 + $0x18] sm:$0xf]
      %v9195 = vld [vmem:[#allocation2 + $0x1c] sm:$0xf]
      %v9196 = vld [vmem:[#allocation2 + $0x20] sm:$0xf]
      %v9197 = vld [vmem:[#allocation2 + $0x24] sm:$0xf]
      %v9198 = vld [vmem:[#allocation2 + $0x28] sm:$0xf]
      %v9199 = vld [vmem:[#allocation2 + $0x2c] sm:$0xf]
      %v9200 = vld [vmem:[#allocation2 + $0x30] sm:$0xf]
      %v9201 = vld [vmem:[#allocation2 + $0x34] sm:$0xf]
      %v9202 = vld [vmem:[#allocation2 + $0x38] sm:$0xf]
      %v9203 = vld [vmem:[#allocation2 + $0x3c] sm:$0xf]
      %v9204 = vld [vmem:[#allocation2 + $0x40] sm:$0xf]
      %v9205 = vld [vmem:[#allocation2 + $0x44] sm:$0xf]
      %v9206 = vld [vmem:[#allocation2 + $0x48] sm:$0xf]
      %v9207 = vld [vmem:[#allocation2 + $0x4c] sm:$0xf]
      %v9208 = vld [vmem:[#allocation2 + $0x50] sm:$0xf]
      %v9209 = vld [vmem:[#allocation2 + $0x54] sm:$0xf]
      %v9210 = vld [vmem:[#allocation2 + $0x58] sm:$0xf]
      %v9211 = vld [vmem:[#allocation2 + $0x5c] sm:$0xf]
      %v9212 = vld [vmem:[#allocation2 + $0x60] sm:$0xf]
      %v9213 = vld [vmem:[#allocation2 + $0x64] sm:$0xf]
      %v9214 = vld [vmem:[#allocation2 + $0x68] sm:$0xf]
      %v9215 = vld [vmem:[#allocation2 + $0x6c] sm:$0xf]
      %v9216 = vld [vmem:[#allocation2 + $0x70] sm:$0xf]
      %v9217 = vld [vmem:[#allocation2 + $0x74] sm:$0xf]
      %v9218 = vld [vmem:[#allocation2 + $0x78] sm:$0xf]
      %v9219 = vld [vmem:[#allocation2 + $0x7c] sm:$0xf]
      %v9220 = vld [vmem:[#allocation2 + $0x80] sm:$0xf]
      %v9221 = vld [vmem:[#allocation2 + $0x84] sm:$0xf]
      %v9222 = vld [vmem:[#allocation2 + $0x88] sm:$0xf]
      %v9223 = vld [vmem:[#allocation2 + $0x8c] sm:$0xf]
      %v9224 = vld [vmem:[#allocation2 + $0x90] sm:$0xf]
      %v9225 = vld [vmem:[#allocation2 + $0x94] sm:$0xf]
      %v9226 = vld [vmem:[#allocation2 + $0x98] sm:$0x1]
      %v9227 = vsel %vm1979, %v9194, 0
      %v9228 = vsel %vm1980, %v9195, 0
      %v9229 = vsel %vm1981, %v9196, 0
      %v9230 = vsel %vm1982, %v9197, 0
      %v9231 = vsel %vm1983, %v9198, 0
      %v9232 = vsel %vm1984, %v9199, 0
      %v9233 = vsel %vm1985, %v9200, 0
      %v9234 = vsel %vm1986, %v9201, 0
      %v9235 = vsel %vm1987, %v9202, 0
      %v9236 = vsel %vm1988, %v9203, 0
      %v9237 = vsel %vm1989, %v9204, 0
      %v9238 = vsel %vm1990, %v9205, 0
      %v9239 = vsel %vm1991, %v9206, 0
      %v9240 = vsel %vm1992, %v9207, 0
      %v9241 = vsel %vm1993, %v9208, 0
      %v9242 = vsel %vm1994, %v9209, 0
      %v9243 = vsel %vm1995, %v9210, 0
      %v9244 = vsel %vm1996, %v9211, 0
      %v9245 = vsel %vm1997, %v9212, 0
      %v9246 = vsel %vm1998, %v9213, 0
      %v9247 = vsel %vm1999, %v9214, 0
      %v9248 = vsel %vm2000, %v9215, 0
      %v9249 = vsel %vm2001, %v9216, 0
      %v9250 = vsel %vm2002, %v9217, 0
      %v9251 = vsel %vm2003, %v9218, 0
      %v9252 = vsel %vm2004, %v9219, 0
      %v9253 = vsel %vm2005, %v9220, 0
      %v9254 = vsel %vm2006, %v9221, 0
      %v9255 = vsel %vm2007, %v9222, 0
      %v9256 = vsel %vm2008, %v9223, 0
      %v9257 = vsel %vm2009, %v9224, 0
      %v9258 = vsel %vm2010, %v9225, 0
      %v9259 = vsel %vm2011, %v9226, 0
      %v9261 = vshrl.u32 %v9227, 16
      %v9263 = vrot.slane %v9261, 4
      %v9264 = vshll.u32 %v9227, 16
      %v9266 = vrot.slane %v9264, 5
      %v9267 = vor.u32 %v9263, %v9266
      %v9268 = vrot.slane %v9267, 4
      %v9270 = vshll.u32 %v9228, 16
      %v9272 = vrot.slane %v9270, 5
      %v9273 = vsel %vm626, %v9268, %v9272
      %v9274 = vshrl.u32 %v9228, 16
      %v9276 = vrot.slane %v9274, 4
      %v9277 = vor.u32 %v9276, %v9272
      %v9278 = vrot.slane %v9277, 4
      %v9280 = vshll.u32 %v9229, 16
      %v9282 = vrot.slane %v9280, 5
      %v9283 = vsel %vm626, %v9278, %v9282
      %v9284 = vshrl.u32 %v9229, 16
      %v9286 = vrot.slane %v9284, 4
      %v9287 = vor.u32 %v9286, %v9282
      %v9288 = vrot.slane %v9287, 4
      %v9290 = vshll.u32 %v9230, 16
      %v9292 = vrot.slane %v9290, 5
      %v9293 = vsel %vm626, %v9288, %v9292
      %v9294 = vshrl.u32 %v9230, 16
      %v9296 = vrot.slane %v9294, 4
      %v9297 = vor.u32 %v9296, %v9292
      %v9298 = vrot.slane %v9297, 4
      %v9300 = vshll.u32 %v9231, 16
      %v9302 = vrot.slane %v9300, 5
      %v9303 = vsel %vm626, %v9298, %v9302
      %v9304 = vshrl.u32 %v9231, 16
      %v9306 = vrot.slane %v9304, 4
      %v9307 = vor.u32 %v9306, %v9302
      %v9308 = vrot.slane %v9307, 4
      %v9310 = vshll.u32 %v9232, 16
      %v9312 = vrot.slane %v9310, 5
      %v9313 = vsel %vm626, %v9308, %v9312
      %v9314 = vshrl.u32 %v9232, 16
      %v9316 = vrot.slane %v9314, 4
      %v9317 = vor.u32 %v9316, %v9312
      %v9318 = vrot.slane %v9317, 4
      %v9320 = vshll.u32 %v9233, 16
      %v9322 = vrot.slane %v9320, 5
      %v9323 = vsel %vm626, %v9318, %v9322
      %v9324 = vshrl.u32 %v9233, 16
      %v9326 = vrot.slane %v9324, 4
      %v9327 = vor.u32 %v9326, %v9322
      %v9328 = vrot.slane %v9327, 4
      %v9330 = vshll.u32 %v9234, 16
      %v9332 = vrot.slane %v9330, 5
      %v9333 = vsel %vm626, %v9328, %v9332
      %v9334 = vshrl.u32 %v9234, 16
      %v9336 = vrot.slane %v9334, 4
      %v9337 = vor.u32 %v9336, %v9332
      %v9338 = vrot.slane %v9337, 4
      %v9340 = vshll.u32 %v9235, 16
      %v9342 = vrot.slane %v9340, 5
      %v9343 = vsel %vm626, %v9338, %v9342
      %v9344 = vshrl.u32 %v9235, 16
      %v9346 = vrot.slane %v9344, 4
      %v9347 = vor.u32 %v9346, %v9342
      %v9348 = vrot.slane %v9347, 4
      %v9350 = vshll.u32 %v9236, 16
      %v9352 = vrot.slane %v9350, 5
      %v9353 = vsel %vm626, %v9348, %v9352
      %v9354 = vshrl.u32 %v9236, 16
      %v9356 = vrot.slane %v9354, 4
      %v9357 = vor.u32 %v9356, %v9352
      %v9358 = vrot.slane %v9357, 4
      %v9360 = vshll.u32 %v9237, 16
      %v9362 = vrot.slane %v9360, 5
      %v9363 = vsel %vm626, %v9358, %v9362
      %v9364 = vshrl.u32 %v9237, 16
      %v9366 = vrot.slane %v9364, 4
      %v9367 = vor.u32 %v9366, %v9362
      %v9368 = vrot.slane %v9367, 4
      %v9370 = vshll.u32 %v9238, 16
      %v9372 = vrot.slane %v9370, 5
      %v9373 = vsel %vm626, %v9368, %v9372
      %v9374 = vshrl.u32 %v9238, 16
      %v9376 = vrot.slane %v9374, 4
      %v9377 = vor.u32 %v9376, %v9372
      %v9378 = vrot.slane %v9377, 4
      %v9380 = vshll.u32 %v9239, 16
      %v9382 = vrot.slane %v9380, 5
      %v9383 = vsel %vm626, %v9378, %v9382
      %v9384 = vshrl.u32 %v9239, 16
      %v9386 = vrot.slane %v9384, 4
      %v9387 = vor.u32 %v9386, %v9382
      %v9388 = vrot.slane %v9387, 4
      %v9390 = vshll.u32 %v9240, 16
      %v9392 = vrot.slane %v9390, 5
      %v9393 = vsel %vm626, %v9388, %v9392
      %v9394 = vshrl.u32 %v9240, 16
      %v9396 = vrot.slane %v9394, 4
      %v9397 = vor.u32 %v9396, %v9392
      %v9398 = vrot.slane %v9397, 4
      %v9400 = vshll.u32 %v9241, 16
      %v9402 = vrot.slane %v9400, 5
      %v9403 = vsel %vm626, %v9398, %v9402
      %v9404 = vshrl.u32 %v9241, 16
      %v9406 = vrot.slane %v9404, 4
      %v9407 = vor.u32 %v9406, %v9402
      %v9408 = vrot.slane %v9407, 4
      %v9410 = vshll.u32 %v9242, 16
      %v9412 = vrot.slane %v9410, 5
      %v9413 = vsel %vm626, %v9408, %v9412
      %v9414 = vshrl.u32 %v9242, 16
      %v9416 = vrot.slane %v9414, 4
      %v9417 = vor.u32 %v9416, %v9412
      %v9418 = vrot.slane %v9417, 4
      %v9420 = vshll.u32 %v9243, 16
      %v9422 = vrot.slane %v9420, 5
      %v9423 = vsel %vm626, %v9418, %v9422
      %v9424 = vshrl.u32 %v9243, 16
      %v9426 = vrot.slane %v9424, 4
      %v9427 = vor.u32 %v9426, %v9422
      %v9428 = vrot.slane %v9427, 4
      %v9430 = vshll.u32 %v9244, 16
      %v9432 = vrot.slane %v9430, 5
      %v9433 = vsel %vm626, %v9428, %v9432
      %v9434 = vshrl.u32 %v9244, 16
      %v9436 = vrot.slane %v9434, 4
      %v9437 = vor.u32 %v9436, %v9432
      %v9438 = vrot.slane %v9437, 4
      %v9440 = vshll.u32 %v9245, 16
      %v9442 = vrot.slane %v9440, 5
      %v9443 = vsel %vm626, %v9438, %v9442
      %v9444 = vshrl.u32 %v9245, 16
      %v9446 = vrot.slane %v9444, 4
      %v9447 = vor.u32 %v9446, %v9442
      %v9448 = vrot.slane %v9447, 4
      %v9450 = vshll.u32 %v9246, 16
      %v9452 = vrot.slane %v9450, 5
      %v9453 = vsel %vm626, %v9448, %v9452
      %v9454 = vshrl.u32 %v9246, 16
      %v9456 = vrot.slane %v9454, 4
      %v9457 = vor.u32 %v9456, %v9452
      %v9458 = vrot.slane %v9457, 4
      %v9460 = vshll.u32 %v9247, 16
      %v9462 = vrot.slane %v9460, 5
      %v9463 = vsel %vm626, %v9458, %v9462
      %v9464 = vshrl.u32 %v9247, 16
      %v9466 = vrot.slane %v9464, 4
      %v9467 = vor.u32 %v9466, %v9462
      %v9468 = vrot.slane %v9467, 4
      %v9470 = vshll.u32 %v9248, 16
      %v9472 = vrot.slane %v9470, 5
      %v9473 = vsel %vm626, %v9468, %v9472
      %v9474 = vshrl.u32 %v9248, 16
      %v9476 = vrot.slane %v9474, 4
      %v9477 = vor.u32 %v9476, %v9472
      %v9478 = vrot.slane %v9477, 4
      %v9480 = vshll.u32 %v9249, 16
      %v9482 = vrot.slane %v9480, 5
      %v9483 = vsel %vm626, %v9478, %v9482
      %v9484 = vshrl.u32 %v9249, 16
      %v9486 = vrot.slane %v9484, 4
      %v9487 = vor.u32 %v9486, %v9482
      %v9488 = vrot.slane %v9487, 4
      %v9490 = vshll.u32 %v9250, 16
      %v9492 = vrot.slane %v9490, 5
      %v9493 = vsel %vm626, %v9488, %v9492
      %v9494 = vshrl.u32 %v9250, 16
      %v9496 = vrot.slane %v9494, 4
      %v9497 = vor.u32 %v9496, %v9492
      %v9498 = vrot.slane %v9497, 4
      %v9500 = vshll.u32 %v9251, 16
      %v9502 = vrot.slane %v9500, 5
      %v9503 = vsel %vm626, %v9498, %v9502
      %v9504 = vshrl.u32 %v9251, 16
      %v9506 = vrot.slane %v9504, 4
      %v9507 = vor.u32 %v9506, %v9502
      %v9508 = vrot.slane %v9507, 4
      %v9510 = vshll.u32 %v9252, 16
      %v9512 = vrot.slane %v9510, 5
      %v9513 = vsel %vm626, %v9508, %v9512
      %v9514 = vshrl.u32 %v9252, 16
      %v9516 = vrot.slane %v9514, 4
      %v9517 = vor.u32 %v9516, %v9512
      %v9518 = vrot.slane %v9517, 4
      %v9520 = vshll.u32 %v9253, 16
      %v9522 = vrot.slane %v9520, 5
      %v9523 = vsel %vm626, %v9518, %v9522
      %v9524 = vshrl.u32 %v9253, 16
      %v9526 = vrot.slane %v9524, 4
      %v9527 = vor.u32 %v9526, %v9522
      %v9528 = vrot.slane %v9527, 4
      %v9530 = vshll.u32 %v9254, 16
      %v9532 = vrot.slane %v9530, 5
      %v9533 = vsel %vm626, %v9528, %v9532
      %v9534 = vshrl.u32 %v9254, 16
      %v9536 = vrot.slane %v9534, 4
      %v9537 = vor.u32 %v9536, %v9532
      %v9538 = vrot.slane %v9537, 4
      %v9540 = vshll.u32 %v9255, 16
      %v9542 = vrot.slane %v9540, 5
      %v9543 = vsel %vm626, %v9538, %v9542
      %v9544 = vshrl.u32 %v9255, 16
      %v9546 = vrot.slane %v9544, 4
      %v9547 = vor.u32 %v9546, %v9542
      %v9548 = vrot.slane %v9547, 4
      %v9550 = vshll.u32 %v9256, 16
      %v9552 = vrot.slane %v9550, 5
      %v9553 = vsel %vm626, %v9548, %v9552
      %v9554 = vshrl.u32 %v9256, 16
      %v9556 = vrot.slane %v9554, 4
      %v9557 = vor.u32 %v9556, %v9552
      %v9558 = vrot.slane %v9557, 4
      %v9560 = vshll.u32 %v9257, 16
      %v9562 = vrot.slane %v9560, 5
      %v9563 = vsel %vm626, %v9558, %v9562
      %v9564 = vshrl.u32 %v9257, 16
      %v9566 = vrot.slane %v9564, 4
      %v9567 = vor.u32 %v9566, %v9562
      %v9568 = vrot.slane %v9567, 4
      %v9570 = vshll.u32 %v9258, 16
      %v9572 = vrot.slane %v9570, 5
      %v9573 = vsel %vm626, %v9568, %v9572
      %v9574 = vshrl.u32 %v9258, 16
      %v9576 = vrot.slane %v9574, 4
      %v9577 = vor.u32 %v9576, %v9572
      %v9578 = vrot.slane %v9577, 4
      %v9580 = vshll.u32 %v9259, 16
      %v9582 = vrot.slane %v9580, 5
      %v9583 = vsel %vm626, %v9578, %v9582
      %9616 = vst [vmem:[#allocation3 + $0x20] sm:$0xf] %v9273
      %9617 = vst [vmem:[#allocation3 + $0x44] sm:$0xf] %v9283
      %9618 = vst [vmem:[#allocation3 + $0x68] sm:$0xf] %v9293
      %9619 = vst [vmem:[#allocation3 + $0x8c] sm:$0xf] %v9303
      %9620 = vst [vmem:[#allocation3 + $0xb0] sm:$0xf] %v9313
      %9621 = vst [vmem:[#allocation3 + $0xd4] sm:$0xf] %v9323
      %9622 = vst [vmem:[#allocation3 + $0xf8] sm:$0xf] %v9333
      %9623 = vst [vmem:[#allocation3 + $0x11c] sm:$0xf] %v9343
      %9624 = vst [vmem:[#allocation3 + $0x140] sm:$0xf] %v9353
      %9625 = vst [vmem:[#allocation3 + $0x164] sm:$0xf] %v9363
      %9626 = vst [vmem:[#allocation3 + $0x188] sm:$0xf] %v9373
      %9627 = vst [vmem:[#allocation3 + $0x1ac] sm:$0xf] %v9383
      %9628 = vst [vmem:[#allocation3 + $0x1d0] sm:$0xf] %v9393
      %9629 = vst [vmem:[#allocation3 + $0x1f4] sm:$0xf] %v9403
      %9630 = vst [vmem:[#allocation3 + $0x218] sm:$0xf] %v9413
      %9631 = vst [vmem:[#allocation3 + $0x23c] sm:$0xf] %v9423
      %9632 = vst [vmem:[#allocation3 + $0x260] sm:$0xf] %v9433
      %9633 = vst [vmem:[#allocation3 + $0x284] sm:$0xf] %v9443
      %9634 = vst [vmem:[#allocation3 + $0x2a8] sm:$0xf] %v9453
      %9635 = vst [vmem:[#allocation3 + $0x2cc] sm:$0xf] %v9463
      %9636 = vst [vmem:[#allocation3 + $0x2f0] sm:$0xf] %v9473
      %9637 = vst [vmem:[#allocation3 + $0x314] sm:$0xf] %v9483
      %9638 = vst [vmem:[#allocation3 + $0x338] sm:$0xf] %v9493
      %9639 = vst [vmem:[#allocation3 + $0x35c] sm:$0xf] %v9503
      %9640 = vst [vmem:[#allocation3 + $0x380] sm:$0xf] %v9513
      %9641 = vst [vmem:[#allocation3 + $0x3a4] sm:$0xf] %v9523
      %9642 = vst [vmem:[#allocation3 + $0x3c8] sm:$0xf] %v9533
      %9643 = vst [vmem:[#allocation3 + $0x3ec] sm:$0xf] %v9543
      %9644 = vst [vmem:[#allocation3 + $0x410] sm:$0xf] %v9553
      %9645 = vst [vmem:[#allocation3 + $0x434] sm:$0xf] %v9563
      %9646 = vst [vmem:[#allocation3 + $0x458] sm:$0xf] %v9573
      %9647 = vst [vmem:[#allocation3 + $0x47c] sm:$0xf] %v9583
      %v9648 = vld [vmem:[#allocation3] sm:$0xff]
      %v9649 = vld [vmem:[#allocation3 + $0x8] sm:$0xff]
      %v9650 = vld [vmem:[#allocation3 + $0x10] sm:$0xff]
      %v9651 = vld [vmem:[#allocation3 + $0x18] sm:$0xff]
      %v9652 = vld [vmem:[#allocation3 + $0x20] sm:$0xf]
      %v9653 = vld [vmem:[#allocation3 + $0x24] sm:$0xff]
      %v9654 = vld [vmem:[#allocation3 + $0x2c] sm:$0xff]
      %v9655 = vld [vmem:[#allocation3 + $0x34] sm:$0xff]
      %v9656 = vld [vmem:[#allocation3 + $0x3c] sm:$0xff]
      %v9657 = vld [vmem:[#allocation3 + $0x44] sm:$0xf]
      %v9658 = vld [vmem:[#allocation3 + $0x48] sm:$0xff]
      %v9659 = vld [vmem:[#allocation3 + $0x50] sm:$0xff]
      %v9660 = vld [vmem:[#allocation3 + $0x58] sm:$0xff]
      %v9661 = vld [vmem:[#allocation3 + $0x60] sm:$0xff]
      %v9662 = vld [vmem:[#allocation3 + $0x68] sm:$0xf]
      %v9663 = vld [vmem:[#allocation3 + $0x6c] sm:$0xff]
      %v9664 = vld [vmem:[#allocation3 + $0x74] sm:$0xff]
      %v9665 = vld [vmem:[#allocation3 + $0x7c] sm:$0xff]
      %v9666 = vld [vmem:[#allocation3 + $0x84] sm:$0xff]
      %v9667 = vld [vmem:[#allocation3 + $0x8c] sm:$0xf]
      %v9668 = vld [vmem:[#allocation3 + $0x90] sm:$0xff]
      %v9669 = vld [vmem:[#allocation3 + $0x98] sm:$0xff]
      %v9670 = vld [vmem:[#allocation3 + $0xa0] sm:$0xff]
      %v9671 = vld [vmem:[#allocation3 + $0xa8] sm:$0xff]
      %v9672 = vld [vmem:[#allocation3 + $0xb0] sm:$0xf]
      %v9673 = vld [vmem:[#allocation3 + $0xb4] sm:$0xff]
      %v9674 = vld [vmem:[#allocation3 + $0xbc] sm:$0xff]
      %v9675 = vld [vmem:[#allocation3 + $0xc4] sm:$0xff]
      %v9676 = vld [vmem:[#allocation3 + $0xcc] sm:$0xff]
      %v9677 = vld [vmem:[#allocation3 + $0xd4] sm:$0xf]
      %v9678 = vld [vmem:[#allocation3 + $0xd8] sm:$0xff]
      %v9679 = vld [vmem:[#allocation3 + $0xe0] sm:$0xff]
      %v9680 = vld [vmem:[#allocation3 + $0xe8] sm:$0xff]
      %v9681 = vld [vmem:[#allocation3 + $0xf0] sm:$0xff]
      %v9682 = vld [vmem:[#allocation3 + $0xf8] sm:$0xf]
      %v9683 = vld [vmem:[#allocation3 + $0xfc] sm:$0xff]
      %v9684 = vld [vmem:[#allocation3 + $0x104] sm:$0xff]
      %v9685 = vld [vmem:[#allocation3 + $0x10c] sm:$0xff]
      %v9686 = vld [vmem:[#allocation3 + $0x114] sm:$0xff]
      %v9687 = vld [vmem:[#allocation3 + $0x11c] sm:$0xf]
      %v9688 = vld [vmem:[#allocation3 + $0x120] sm:$0xff]
      %v9689 = vld [vmem:[#allocation3 + $0x128] sm:$0xff]
      %v9690 = vld [vmem:[#allocation3 + $0x130] sm:$0xff]
      %v9691 = vld [vmem:[#allocation3 + $0x138] sm:$0xff]
      %v9692 = vld [vmem:[#allocation3 + $0x140] sm:$0xf]
      %v9693 = vld [vmem:[#allocation3 + $0x144] sm:$0xff]
      %v9694 = vld [vmem:[#allocation3 + $0x14c] sm:$0xff]
      %v9695 = vld [vmem:[#allocation3 + $0x154] sm:$0xff]
      %v9696 = vld [vmem:[#allocation3 + $0x15c] sm:$0xff]
      %v9697 = vld [vmem:[#allocation3 + $0x164] sm:$0xf]
      %v9698 = vld [vmem:[#allocation3 + $0x168] sm:$0xff]
      %v9699 = vld [vmem:[#allocation3 + $0x170] sm:$0xff]
      %v9700 = vld [vmem:[#allocation3 + $0x178] sm:$0xff]
      %v9701 = vld [vmem:[#allocation3 + $0x180] sm:$0xff]
      %v9702 = vld [vmem:[#allocation3 + $0x188] sm:$0xf]
      %v9703 = vld [vmem:[#allocation3 + $0x18c] sm:$0xff]
      %v9704 = vld [vmem:[#allocation3 + $0x194] sm:$0xff]
      %v9705 = vld [vmem:[#allocation3 + $0x19c] sm:$0xff]
      %v9706 = vld [vmem:[#allocation3 + $0x1a4] sm:$0xff]
      %v9707 = vld [vmem:[#allocation3 + $0x1ac] sm:$0xf]
      %v9708 = vld [vmem:[#allocation3 + $0x1b0] sm:$0xff]
      %v9709 = vld [vmem:[#allocation3 + $0x1b8] sm:$0xff]
      %v9710 = vld [vmem:[#allocation3 + $0x1c0] sm:$0xff]
      %v9711 = vld [vmem:[#allocation3 + $0x1c8] sm:$0xff]
      %v9712 = vld [vmem:[#allocation3 + $0x1d0] sm:$0xf]
      %v9713 = vld [vmem:[#allocation3 + $0x1d4] sm:$0xff]
      %v9714 = vld [vmem:[#allocation3 + $0x1dc] sm:$0xff]
      %v9715 = vld [vmem:[#allocation3 + $0x1e4] sm:$0xff]
      %v9716 = vld [vmem:[#allocation3 + $0x1ec] sm:$0xff]
      %v9717 = vld [vmem:[#allocation3 + $0x1f4] sm:$0xf]
      %v9718 = vld [vmem:[#allocation3 + $0x1f8] sm:$0xff]
      %v9719 = vld [vmem:[#allocation3 + $0x200] sm:$0xff]
      %v9720 = vld [vmem:[#allocation3 + $0x208] sm:$0xff]
      %v9721 = vld [vmem:[#allocation3 + $0x210] sm:$0xff]
      %v9722 = vld [vmem:[#allocation3 + $0x218] sm:$0xf]
      %v9723 = vld [vmem:[#allocation3 + $0x21c] sm:$0xff]
      %v9724 = vld [vmem:[#allocation3 + $0x224] sm:$0xff]
      %v9725 = vld [vmem:[#allocation3 + $0x22c] sm:$0xff]
      %v9726 = vld [vmem:[#allocation3 + $0x234] sm:$0xff]
      %v9727 = vld [vmem:[#allocation3 + $0x23c] sm:$0xf]
      %v9728 = vld [vmem:[#allocation3 + $0x240] sm:$0xff]
      %v9729 = vld [vmem:[#allocation3 + $0x248] sm:$0xff]
      %v9730 = vld [vmem:[#allocation3 + $0x250] sm:$0xff]
      %v9731 = vld [vmem:[#allocation3 + $0x258] sm:$0xff]
      %v9732 = vld [vmem:[#allocation3 + $0x260] sm:$0xf]
      %v9733 = vld [vmem:[#allocation3 + $0x264] sm:$0xff]
      %v9734 = vld [vmem:[#allocation3 + $0x26c] sm:$0xff]
      %v9735 = vld [vmem:[#allocation3 + $0x274] sm:$0xff]
      %v9736 = vld [vmem:[#allocation3 + $0x27c] sm:$0xff]
      %v9737 = vld [vmem:[#allocation3 + $0x284] sm:$0xf]
      %v9738 = vld [vmem:[#allocation3 + $0x288] sm:$0xff]
      %v9739 = vld [vmem:[#allocation3 + $0x290] sm:$0xff]
      %v9740 = vld [vmem:[#allocation3 + $0x298] sm:$0xff]
      %v9741 = vld [vmem:[#allocation3 + $0x2a0] sm:$0xff]
      %v9742 = vld [vmem:[#allocation3 + $0x2a8] sm:$0xf]
      %v9743 = vld [vmem:[#allocation3 + $0x2ac] sm:$0xff]
      %v9744 = vld [vmem:[#allocation3 + $0x2b4] sm:$0xff]
      %v9745 = vld [vmem:[#allocation3 + $0x2bc] sm:$0xff]
      %v9746 = vld [vmem:[#allocation3 + $0x2c4] sm:$0xff]
      %v9747 = vld [vmem:[#allocation3 + $0x2cc] sm:$0xf]
      %v9748 = vld [vmem:[#allocation3 + $0x2d0] sm:$0xff]
      %v9749 = vld [vmem:[#allocation3 + $0x2d8] sm:$0xff]
      %v9750 = vld [vmem:[#allocation3 + $0x2e0] sm:$0xff]
      %v9751 = vld [vmem:[#allocation3 + $0x2e8] sm:$0xff]
      %v9752 = vld [vmem:[#allocation3 + $0x2f0] sm:$0xf]
      %v9753 = vld [vmem:[#allocation3 + $0x2f4] sm:$0xff]
      %v9754 = vld [vmem:[#allocation3 + $0x2fc] sm:$0xff]
      %v9755 = vld [vmem:[#allocation3 + $0x304] sm:$0xff]
      %v9756 = vld [vmem:[#allocation3 + $0x30c] sm:$0xff]
      %v9757 = vld [vmem:[#allocation3 + $0x314] sm:$0xf]
      %v9758 = vld [vmem:[#allocation3 + $0x318] sm:$0xff]
      %v9759 = vld [vmem:[#allocation3 + $0x320] sm:$0xff]
      %v9760 = vld [vmem:[#allocation3 + $0x328] sm:$0xff]
      %v9761 = vld [vmem:[#allocation3 + $0x330] sm:$0xff]
      %v9762 = vld [vmem:[#allocation3 + $0x338] sm:$0xf]
      %v9763 = vld [vmem:[#allocation3 + $0x33c] sm:$0xff]
      %v9764 = vld [vmem:[#allocation3 + $0x344] sm:$0xff]
      %v9765 = vld [vmem:[#allocation3 + $0x34c] sm:$0xff]
      %v9766 = vld [vmem:[#allocation3 + $0x354] sm:$0xff]
      %v9767 = vld [vmem:[#allocation3 + $0x35c] sm:$0xf]
      %v9768 = vld [vmem:[#allocation3 + $0x360] sm:$0xff]
      %v9769 = vld [vmem:[#allocation3 + $0x368] sm:$0xff]
      %v9770 = vld [vmem:[#allocation3 + $0x370] sm:$0xff]
      %v9771 = vld [vmem:[#allocation3 + $0x378] sm:$0xff]
      %v9772 = vld [vmem:[#allocation3 + $0x380] sm:$0xf]
      %v9773 = vld [vmem:[#allocation3 + $0x384] sm:$0xff]
      %v9774 = vld [vmem:[#allocation3 + $0x38c] sm:$0xff]
      %v9775 = vld [vmem:[#allocation3 + $0x394] sm:$0xff]
      %v9776 = vld [vmem:[#allocation3 + $0x39c] sm:$0xff]
      %v9777 = vld [vmem:[#allocation3 + $0x3a4] sm:$0xf]
      %v9778 = vld [vmem:[#allocation3 + $0x3a8] sm:$0xff]
      %v9779 = vld [vmem:[#allocation3 + $0x3b0] sm:$0xff]
      %v9780 = vld [vmem:[#allocation3 + $0x3b8] sm:$0xff]
      %v9781 = vld [vmem:[#allocation3 + $0x3c0] sm:$0xff]
      %v9782 = vld [vmem:[#allocation3 + $0x3c8] sm:$0xf]
      %v9783 = vld [vmem:[#allocation3 + $0x3cc] sm:$0xff]
      %v9784 = vld [vmem:[#allocation3 + $0x3d4] sm:$0xff]
      %v9785 = vld [vmem:[#allocation3 + $0x3dc] sm:$0xff]
      %v9786 = vld [vmem:[#allocation3 + $0x3e4] sm:$0xff]
      %v9787 = vld [vmem:[#allocation3 + $0x3ec] sm:$0xf]
      %v9788 = vld [vmem:[#allocation3 + $0x3f0] sm:$0xff]
      %v9789 = vld [vmem:[#allocation3 + $0x3f8] sm:$0xff]
      %v9790 = vld [vmem:[#allocation3 + $0x400] sm:$0xff]
      %v9791 = vld [vmem:[#allocation3 + $0x408] sm:$0xff]
      %v9792 = vld [vmem:[#allocation3 + $0x410] sm:$0xf]
      %v9793 = vld [vmem:[#allocation3 + $0x414] sm:$0xff]
      %v9794 = vld [vmem:[#allocation3 + $0x41c] sm:$0xff]
      %v9795 = vld [vmem:[#allocation3 + $0x424] sm:$0xff]
      %v9796 = vld [vmem:[#allocation3 + $0x42c] sm:$0xff]
      %v9797 = vld [vmem:[#allocation3 + $0x434] sm:$0xf]
      %v9798 = vld [vmem:[#allocation3 + $0x438] sm:$0xff]
      %v9799 = vld [vmem:[#allocation3 + $0x440] sm:$0xff]
      %v9800 = vld [vmem:[#allocation3 + $0x448] sm:$0xff]
      %v9801 = vld [vmem:[#allocation3 + $0x450] sm:$0xff]
      %v9802 = vld [vmem:[#allocation3 + $0x458] sm:$0xf]
      %v9803 = vld [vmem:[#allocation3 + $0x45c] sm:$0xff]
      %v9804 = vld [vmem:[#allocation3 + $0x464] sm:$0xff]
      %v9805 = vld [vmem:[#allocation3 + $0x46c] sm:$0xff]
      %v9806 = vld [vmem:[#allocation3 + $0x474] sm:$0xff]
      %v9807 = vld [vmem:[#allocation3 + $0x47c] sm:$0xf]
      %s9808 = scalar_lea.vmem %s1, 576
      %v9809 = vld [vmem:[%s9808] sm:$0xf]
      %v9810 = vld [vmem:[%s9808 + $0x4] sm:$0xf]
      %v9811 = vld [vmem:[%s9808 + $0x8] sm:$0xf]
      %v9812 = vld [vmem:[%s9808 + $0xc] sm:$0xf]
      %v9813 = vld [vmem:[%s9808 + $0x10] sm:$0xf]
      %v9814 = vld [vmem:[%s9808 + $0x14] sm:$0xf]
      %v9815 = vld [vmem:[%s9808 + $0x18] sm:$0xf]
      %v9816 = vld [vmem:[%s9808 + $0x1c] sm:$0xf]
      %v9817 = vld [vmem:[%s9808 + $0x20] sm:$0xf]
      %v9818 = vld [vmem:[%s9808 + $0x24] sm:$0xf]
      %v9819 = vld [vmem:[%s9808 + $0x28] sm:$0xf]
      %v9820 = vld [vmem:[%s9808 + $0x2c] sm:$0xf]
      %v9821 = vld [vmem:[%s9808 + $0x30] sm:$0xf]
      %v9822 = vld [vmem:[%s9808 + $0x34] sm:$0xf]
      %v9823 = vld [vmem:[%s9808 + $0x38] sm:$0xf]
      %v9824 = vld [vmem:[%s9808 + $0x3c] sm:$0xf]
      %v9825 = vld [vmem:[%s9808 + $0x40] sm:$0xf]
      %v9826 = vld [vmem:[%s9808 + $0x44] sm:$0xf]
      %v9827 = vld [vmem:[%s9808 + $0x48] sm:$0xf]
      %v9828 = vld [vmem:[%s9808 + $0x4c] sm:$0xf]
      %v9829 = vld [vmem:[%s9808 + $0x50] sm:$0xf]
      %v9830 = vld [vmem:[%s9808 + $0x54] sm:$0xf]
      %v9831 = vld [vmem:[%s9808 + $0x58] sm:$0xf]
      %v9832 = vld [vmem:[%s9808 + $0x5c] sm:$0xf]
      %v9833 = vld [vmem:[%s9808 + $0x60] sm:$0xf]
      %v9834 = vld [vmem:[%s9808 + $0x64] sm:$0xf]
      %v9835 = vld [vmem:[%s9808 + $0x68] sm:$0xf]
      %v9836 = vld [vmem:[%s9808 + $0x6c] sm:$0xf]
      %v9837 = vld [vmem:[%s9808 + $0x70] sm:$0xf]
      %v9838 = vld [vmem:[%s9808 + $0x74] sm:$0xf]
      %v9839 = vld [vmem:[%s9808 + $0x78] sm:$0xf]
      %v9840 = vld [vmem:[%s9808 + $0x7c] sm:$0xf]
      %v9841 = vld [vmem:[%s9808 + $0x80] sm:$0xf]
      %v9842 = vld [vmem:[%s9808 + $0x84] sm:$0xf]
      %v9843 = vld [vmem:[%s9808 + $0x88] sm:$0xf]
      %v9844 = vld [vmem:[%s9808 + $0x8c] sm:$0xf]
      %v9845 = vld [vmem:[%s9808 + $0x90] sm:$0xf]
      %v9846 = vld [vmem:[%s9808 + $0x94] sm:$0xf]
      %v9847 = vld [vmem:[%s9808 + $0x98] sm:$0xf]
      %v9848 = vld [vmem:[%s9808 + $0x9c] sm:$0xf]
      %v9849 = vld [vmem:[%s9808 + $0xa0] sm:$0xf]
      %v9850 = vld [vmem:[%s9808 + $0xa4] sm:$0xf]
      %v9851 = vld [vmem:[%s9808 + $0xa8] sm:$0xf]
      %v9852 = vld [vmem:[%s9808 + $0xac] sm:$0xf]
      %v9853 = vld [vmem:[%s9808 + $0xb0] sm:$0xf]
      %v9854 = vld [vmem:[%s9808 + $0xb4] sm:$0xf]
      %v9855 = vld [vmem:[%s9808 + $0xb8] sm:$0xf]
      %v9856 = vld [vmem:[%s9808 + $0xbc] sm:$0xf]
      %v9857 = vld [vmem:[%s9808 + $0xc0] sm:$0xf]
      %v9858 = vld [vmem:[%s9808 + $0xc4] sm:$0xf]
      %v9859 = vld [vmem:[%s9808 + $0xc8] sm:$0xf]
      %v9860 = vld [vmem:[%s9808 + $0xcc] sm:$0xf]
      %v9861 = vld [vmem:[%s9808 + $0xd0] sm:$0xf]
      %v9862 = vld [vmem:[%s9808 + $0xd4] sm:$0xf]
      %v9863 = vld [vmem:[%s9808 + $0xd8] sm:$0xf]
      %v9864 = vld [vmem:[%s9808 + $0xdc] sm:$0xf]
      %v9865 = vld [vmem:[%s9808 + $0xe0] sm:$0xf]
      %v9866 = vld [vmem:[%s9808 + $0xe4] sm:$0xf]
      %v9867 = vld [vmem:[%s9808 + $0xe8] sm:$0xf]
      %v9868 = vld [vmem:[%s9808 + $0xec] sm:$0xf]
      %v9869 = vld [vmem:[%s9808 + $0xf0] sm:$0xf]
      %v9870 = vld [vmem:[%s9808 + $0xf4] sm:$0xf]
      %v9871 = vld [vmem:[%s9808 + $0xf8] sm:$0xf]
      %v9872 = vld [vmem:[%s9808 + $0xfc] sm:$0xf]
      %v9873 = vld [vmem:[%s9808 + $0x100] sm:$0xf]
      %v9874 = vld [vmem:[%s9808 + $0x104] sm:$0xf]
      %v9875 = vld [vmem:[%s9808 + $0x108] sm:$0xf]
      %v9876 = vld [vmem:[%s9808 + $0x10c] sm:$0xf]
      %v9877 = vld [vmem:[%s9808 + $0x110] sm:$0xf]
      %v9878 = vld [vmem:[%s9808 + $0x114] sm:$0xf]
      %v9879 = vld [vmem:[%s9808 + $0x118] sm:$0xf]
      %v9880 = vld [vmem:[%s9808 + $0x11c] sm:$0xf]
      %v9881 = vld [vmem:[%s9808 + $0x120] sm:$0xf]
      %v9882 = vld [vmem:[%s9808 + $0x124] sm:$0xf]
      %v9883 = vld [vmem:[%s9808 + $0x128] sm:$0xf]
      %v9884 = vld [vmem:[%s9808 + $0x12c] sm:$0xf]
      %v9885 = vld [vmem:[%s9808 + $0x130] sm:$0xf]
      %v9886 = vld [vmem:[%s9808 + $0x134] sm:$0xf]
      %v9887 = vld [vmem:[%s9808 + $0x138] sm:$0xf]
      %v9888 = vld [vmem:[%s9808 + $0x13c] sm:$0xf]
      %v9889 = vld [vmem:[%s9808 + $0x140] sm:$0xf]
      %v9890 = vld [vmem:[%s9808 + $0x144] sm:$0xf]
      %v9891 = vld [vmem:[%s9808 + $0x148] sm:$0xf]
      %v9892 = vld [vmem:[%s9808 + $0x14c] sm:$0xf]
      %v9893 = vld [vmem:[%s9808 + $0x150] sm:$0xf]
      %v9894 = vld [vmem:[%s9808 + $0x154] sm:$0xf]
      %v9895 = vld [vmem:[%s9808 + $0x158] sm:$0xf]
      %v9896 = vld [vmem:[%s9808 + $0x15c] sm:$0xf]
      %v9897 = vld [vmem:[%s9808 + $0x160] sm:$0xf]
      %v9898 = vld [vmem:[%s9808 + $0x164] sm:$0xf]
      %v9899 = vld [vmem:[%s9808 + $0x168] sm:$0xf]
      %v9900 = vld [vmem:[%s9808 + $0x16c] sm:$0xf]
      %v9901 = vld [vmem:[%s9808 + $0x170] sm:$0xf]
      %v9902 = vld [vmem:[%s9808 + $0x174] sm:$0xf]
      %v9903 = vld [vmem:[%s9808 + $0x178] sm:$0xf]
      %v9904 = vld [vmem:[%s9808 + $0x17c] sm:$0xf]
      %v9905 = vld [vmem:[%s9808 + $0x180] sm:$0xf]
      %v9906 = vld [vmem:[%s9808 + $0x184] sm:$0xf]
      %v9907 = vld [vmem:[%s9808 + $0x188] sm:$0xf]
      %v9908 = vld [vmem:[%s9808 + $0x18c] sm:$0xf]
      %v9909 = vld [vmem:[%s9808 + $0x190] sm:$0xf]
      %v9910 = vld [vmem:[%s9808 + $0x194] sm:$0xf]
      %v9911 = vld [vmem:[%s9808 + $0x198] sm:$0xf]
      %v9912 = vld [vmem:[%s9808 + $0x19c] sm:$0xf]
      %v9913 = vld [vmem:[%s9808 + $0x1a0] sm:$0xf]
      %v9914 = vld [vmem:[%s9808 + $0x1a4] sm:$0xf]
      %v9915 = vld [vmem:[%s9808 + $0x1a8] sm:$0xf]
      %v9916 = vld [vmem:[%s9808 + $0x1ac] sm:$0xf]
      %v9917 = vld [vmem:[%s9808 + $0x1b0] sm:$0xf]
      %v9918 = vld [vmem:[%s9808 + $0x1b4] sm:$0xf]
      %v9919 = vld [vmem:[%s9808 + $0x1b8] sm:$0xf]
      %v9920 = vld [vmem:[%s9808 + $0x1bc] sm:$0xf]
      %v9921 = vld [vmem:[%s9808 + $0x1c0] sm:$0xf]
      %v9922 = vld [vmem:[%s9808 + $0x1c4] sm:$0xf]
      %v9923 = vld [vmem:[%s9808 + $0x1c8] sm:$0xf]
      %v9924 = vld [vmem:[%s9808 + $0x1cc] sm:$0xf]
      %v9925 = vld [vmem:[%s9808 + $0x1d0] sm:$0xf]
      %v9926 = vld [vmem:[%s9808 + $0x1d4] sm:$0xf]
      %v9927 = vld [vmem:[%s9808 + $0x1d8] sm:$0xf]
      %v9928 = vld [vmem:[%s9808 + $0x1dc] sm:$0xf]
      %v9929 = vld [vmem:[%s9808 + $0x1e0] sm:$0xf]
      %v9930 = vld [vmem:[%s9808 + $0x1e4] sm:$0xf]
      %v9931 = vld [vmem:[%s9808 + $0x1e8] sm:$0xf]
      %v9932 = vld [vmem:[%s9808 + $0x1ec] sm:$0xf]
      %v9933 = vld [vmem:[%s9808 + $0x1f0] sm:$0xf]
      %v9934 = vld [vmem:[%s9808 + $0x1f4] sm:$0xf]
      %v9935 = vld [vmem:[%s9808 + $0x1f8] sm:$0xf]
      %v9936 = vld [vmem:[%s9808 + $0x1fc] sm:$0xf]
      %v9937 = vld [vmem:[%s9808 + $0x200] sm:$0xf]
      %v9938 = vld [vmem:[%s9808 + $0x204] sm:$0xf]
      %v9939 = vld [vmem:[%s9808 + $0x208] sm:$0xf]
      %v9940 = vld [vmem:[%s9808 + $0x20c] sm:$0xf]
      %v9941 = vld [vmem:[%s9808 + $0x210] sm:$0xf]
      %v9942 = vld [vmem:[%s9808 + $0x214] sm:$0xf]
      %v9943 = vld [vmem:[%s9808 + $0x218] sm:$0xf]
      %v9944 = vld [vmem:[%s9808 + $0x21c] sm:$0xf]
      %v9945 = vld [vmem:[%s9808 + $0x220] sm:$0xf]
      %v9946 = vld [vmem:[%s9808 + $0x224] sm:$0xf]
      %v9947 = vld [vmem:[%s9808 + $0x228] sm:$0xf]
      %v9948 = vld [vmem:[%s9808 + $0x22c] sm:$0xf]
      %v9949 = vld [vmem:[%s9808 + $0x230] sm:$0xf]
      %v9950 = vld [vmem:[%s9808 + $0x234] sm:$0xf]
      %v9951 = vld [vmem:[%s9808 + $0x238] sm:$0xf]
      %v9952 = vld [vmem:[%s9808 + $0x23c] sm:$0xf]
      %s9953 = scalar_lea.vmem %s2, 1
      %v9954 = vld [vmem:[%s9953] sm:$0x1]
      %v9956 = vlaneseq
      %v9957 = vshrl.u32 %v9956, 7
      %v9958 = vsub.s32 0, %v9957
      %v9959 = vrot.slane %v9954, %v9958
      %v10121 = vunpack.c.l.b16 %v9648
      %v10122 = vunpack.c.h.b16 %v9648
      %v10123 = vunpack.c.l.b16 %v9649
      %v10124 = vunpack.c.h.b16 %v9649
      %v10125 = vunpack.c.l.b16 %v9650
      %v10126 = vunpack.c.h.b16 %v9650
      %v10127 = vunpack.c.l.b16 %v9651
      %v10128 = vunpack.c.h.b16 %v9651
      %v10129 = vunpack.c.l.b16 %v9652
      %v10130 = vunpack.c.l.b16 %v9653
      %v10131 = vunpack.c.h.b16 %v9653
      %v10132 = vunpack.c.l.b16 %v9654
      %v10133 = vunpack.c.h.b16 %v9654
      %v10134 = vunpack.c.l.b16 %v9655
      %v10135 = vunpack.c.h.b16 %v9655
      %v10136 = vunpack.c.l.b16 %v9656
      %v10137 = vunpack.c.h.b16 %v9656
      %v10138 = vunpack.c.l.b16 %v9657
      %v10139 = vunpack.c.l.b16 %v9658
      %v10140 = vunpack.c.h.b16 %v9658
      %v10141 = vunpack.c.l.b16 %v9659
      %v10142 = vunpack.c.h.b16 %v9659
      %v10143 = vunpack.c.l.b16 %v9660
      %v10144 = vunpack.c.h.b16 %v9660
      %v10145 = vunpack.c.l.b16 %v9661
      %v10146 = vunpack.c.h.b16 %v9661
      %v10147 = vunpack.c.l.b16 %v9662
      %v10148 = vunpack.c.l.b16 %v9663
      %v10149 = vunpack.c.h.b16 %v9663
      %v10150 = vunpack.c.l.b16 %v9664
      %v10151 = vunpack.c.h.b16 %v9664
      %v10152 = vunpack.c.l.b16 %v9665
      %v10153 = vunpack.c.h.b16 %v9665
      %v10154 = vunpack.c.l.b16 %v9666
      %v10155 = vunpack.c.h.b16 %v9666
      %v10156 = vunpack.c.l.b16 %v9667
      %v10157 = vunpack.c.l.b16 %v9668
      %v10158 = vunpack.c.h.b16 %v9668
      %v10159 = vunpack.c.l.b16 %v9669
      %v10160 = vunpack.c.h.b16 %v9669
      %v10161 = vunpack.c.l.b16 %v9670
      %v10162 = vunpack.c.h.b16 %v9670
      %v10163 = vunpack.c.l.b16 %v9671
      %v10164 = vunpack.c.h.b16 %v9671
      %v10165 = vunpack.c.l.b16 %v9672
      %v10166 = vunpack.c.l.b16 %v9673
      %v10167 = vunpack.c.h.b16 %v9673
      %v10168 = vunpack.c.l.b16 %v9674
      %v10169 = vunpack.c.h.b16 %v9674
      %v10170 = vunpack.c.l.b16 %v9675
      %v10171 = vunpack.c.h.b16 %v9675
      %v10172 = vunpack.c.l.b16 %v9676
      %v10173 = vunpack.c.h.b16 %v9676
      %v10174 = vunpack.c.l.b16 %v9677
      %v10175 = vunpack.c.l.b16 %v9678
      %v10176 = vunpack.c.h.b16 %v9678
      %v10177 = vunpack.c.l.b16 %v9679
      %v10178 = vunpack.c.h.b16 %v9679
      %v10179 = vunpack.c.l.b16 %v9680
      %v10180 = vunpack.c.h.b16 %v9680
      %v10181 = vunpack.c.l.b16 %v9681
      %v10182 = vunpack.c.h.b16 %v9681
      %v10183 = vunpack.c.l.b16 %v9682
      %v10184 = vunpack.c.l.b16 %v9683
      %v10185 = vunpack.c.h.b16 %v9683
      %v10186 = vunpack.c.l.b16 %v9684
      %v10187 = vunpack.c.h.b16 %v9684
      %v10188 = vunpack.c.l.b16 %v9685
      %v10189 = vunpack.c.h.b16 %v9685
      %v10190 = vunpack.c.l.b16 %v9686
      %v10191 = vunpack.c.h.b16 %v9686
      %v10192 = vunpack.c.l.b16 %v9687
      %v10193 = vunpack.c.l.b16 %v9688
      %v10194 = vunpack.c.h.b16 %v9688
      %v10195 = vunpack.c.l.b16 %v9689
      %v10196 = vunpack.c.h.b16 %v9689
      %v10197 = vunpack.c.l.b16 %v9690
      %v10198 = vunpack.c.h.b16 %v9690
      %v10199 = vunpack.c.l.b16 %v9691
      %v10200 = vunpack.c.h.b16 %v9691
      %v10201 = vunpack.c.l.b16 %v9692
      %v10202 = vunpack.c.l.b16 %v9693
      %v10203 = vunpack.c.h.b16 %v9693
      %v10204 = vunpack.c.l.b16 %v9694
      %v10205 = vunpack.c.h.b16 %v9694
      %v10206 = vunpack.c.l.b16 %v9695
      %v10207 = vunpack.c.h.b16 %v9695
      %v10208 = vunpack.c.l.b16 %v9696
      %v10209 = vunpack.c.h.b16 %v9696
      %v10210 = vunpack.c.l.b16 %v9697
      %v10211 = vunpack.c.l.b16 %v9698
      %v10212 = vunpack.c.h.b16 %v9698
      %v10213 = vunpack.c.l.b16 %v9699
      %v10214 = vunpack.c.h.b16 %v9699
      %v10215 = vunpack.c.l.b16 %v9700
      %v10216 = vunpack.c.h.b16 %v9700
      %v10217 = vunpack.c.l.b16 %v9701
      %v10218 = vunpack.c.h.b16 %v9701
      %v10219 = vunpack.c.l.b16 %v9702
      %v10220 = vunpack.c.l.b16 %v9703
      %v10221 = vunpack.c.h.b16 %v9703
      %v10222 = vunpack.c.l.b16 %v9704
      %v10223 = vunpack.c.h.b16 %v9704
      %v10224 = vunpack.c.l.b16 %v9705
      %v10225 = vunpack.c.h.b16 %v9705
      %v10226 = vunpack.c.l.b16 %v9706
      %v10227 = vunpack.c.h.b16 %v9706
      %v10228 = vunpack.c.l.b16 %v9707
      %v10229 = vunpack.c.l.b16 %v9708
      %v10230 = vunpack.c.h.b16 %v9708
      %v10231 = vunpack.c.l.b16 %v9709
      %v10232 = vunpack.c.h.b16 %v9709
      %v10233 = vunpack.c.l.b16 %v9710
      %v10234 = vunpack.c.h.b16 %v9710
      %v10235 = vunpack.c.l.b16 %v9711
      %v10236 = vunpack.c.h.b16 %v9711
      %v10237 = vunpack.c.l.b16 %v9712
      %v10238 = vunpack.c.l.b16 %v9713
      %v10239 = vunpack.c.h.b16 %v9713
      %v10240 = vunpack.c.l.b16 %v9714
      %v10241 = vunpack.c.h.b16 %v9714
      %v10242 = vunpack.c.l.b16 %v9715
      %v10243 = vunpack.c.h.b16 %v9715
      %v10244 = vunpack.c.l.b16 %v9716
      %v10245 = vunpack.c.h.b16 %v9716
      %v10246 = vunpack.c.l.b16 %v9717
      %v10247 = vunpack.c.l.b16 %v9718
      %v10248 = vunpack.c.h.b16 %v9718
      %v10249 = vunpack.c.l.b16 %v9719
      %v10250 = vunpack.c.h.b16 %v9719
      %v10251 = vunpack.c.l.b16 %v9720
      %v10252 = vunpack.c.h.b16 %v9720
      %v10253 = vunpack.c.l.b16 %v9721
      %v10254 = vunpack.c.h.b16 %v9721
      %v10255 = vunpack.c.l.b16 %v9722
      %v10256 = vunpack.c.l.b16 %v9723
      %v10257 = vunpack.c.h.b16 %v9723
      %v10258 = vunpack.c.l.b16 %v9724
      %v10259 = vunpack.c.h.b16 %v9724
      %v10260 = vunpack.c.l.b16 %v9725
      %v10261 = vunpack.c.h.b16 %v9725
      %v10262 = vunpack.c.l.b16 %v9726
      %v10263 = vunpack.c.h.b16 %v9726
      %v10264 = vunpack.c.l.b16 %v9727
      %v10265 = vunpack.c.l.b16 %v9728
      %v10266 = vunpack.c.h.b16 %v9728
      %v10267 = vunpack.c.l.b16 %v9729
      %v10268 = vunpack.c.h.b16 %v9729
      %v10269 = vunpack.c.l.b16 %v9730
      %v10270 = vunpack.c.h.b16 %v9730
      %v10271 = vunpack.c.l.b16 %v9731
      %v10272 = vunpack.c.h.b16 %v9731
      %v10273 = vunpack.c.l.b16 %v9732
      %v10274 = vunpack.c.l.b16 %v9733
      %v10275 = vunpack.c.h.b16 %v9733
      %v10276 = vunpack.c.l.b16 %v9734
      %v10277 = vunpack.c.h.b16 %v9734
      %v10278 = vunpack.c.l.b16 %v9735
      %v10279 = vunpack.c.h.b16 %v9735
      %v10280 = vunpack.c.l.b16 %v9736
      %v10281 = vunpack.c.h.b16 %v9736
      %v10282 = vunpack.c.l.b16 %v9737
      %v10283 = vunpack.c.l.b16 %v9738
      %v10284 = vunpack.c.h.b16 %v9738
      %v10285 = vunpack.c.l.b16 %v9739
      %v10286 = vunpack.c.h.b16 %v9739
      %v10287 = vunpack.c.l.b16 %v9740
      %v10288 = vunpack.c.h.b16 %v9740
      %v10289 = vunpack.c.l.b16 %v9741
      %v10290 = vunpack.c.h.b16 %v9741
      %v10291 = vunpack.c.l.b16 %v9742
      %v10292 = vunpack.c.l.b16 %v9743
      %v10293 = vunpack.c.h.b16 %v9743
      %v10294 = vunpack.c.l.b16 %v9744
      %v10295 = vunpack.c.h.b16 %v9744
      %v10296 = vunpack.c.l.b16 %v9745
      %v10297 = vunpack.c.h.b16 %v9745
      %v10298 = vunpack.c.l.b16 %v9746
      %v10299 = vunpack.c.h.b16 %v9746
      %v10300 = vunpack.c.l.b16 %v9747
      %v10301 = vunpack.c.l.b16 %v9748
      %v10302 = vunpack.c.h.b16 %v9748
      %v10303 = vunpack.c.l.b16 %v9749
      %v10304 = vunpack.c.h.b16 %v9749
      %v10305 = vunpack.c.l.b16 %v9750
      %v10306 = vunpack.c.h.b16 %v9750
      %v10307 = vunpack.c.l.b16 %v9751
      %v10308 = vunpack.c.h.b16 %v9751
      %v10309 = vunpack.c.l.b16 %v9752
      %v10310 = vunpack.c.l.b16 %v9753
      %v10311 = vunpack.c.h.b16 %v9753
      %v10312 = vunpack.c.l.b16 %v9754
      %v10313 = vunpack.c.h.b16 %v9754
      %v10314 = vunpack.c.l.b16 %v9755
      %v10315 = vunpack.c.h.b16 %v9755
      %v10316 = vunpack.c.l.b16 %v9756
      %v10317 = vunpack.c.h.b16 %v9756
      %v10318 = vunpack.c.l.b16 %v9757
      %v10319 = vunpack.c.l.b16 %v9758
      %v10320 = vunpack.c.h.b16 %v9758
      %v10321 = vunpack.c.l.b16 %v9759
      %v10322 = vunpack.c.h.b16 %v9759
      %v10323 = vunpack.c.l.b16 %v9760
      %v10324 = vunpack.c.h.b16 %v9760
      %v10325 = vunpack.c.l.b16 %v9761
      %v10326 = vunpack.c.h.b16 %v9761
      %v10327 = vunpack.c.l.b16 %v9762
      %v10328 = vunpack.c.l.b16 %v9763
      %v10329 = vunpack.c.h.b16 %v9763
      %v10330 = vunpack.c.l.b16 %v9764
      %v10331 = vunpack.c.h.b16 %v9764
      %v10332 = vunpack.c.l.b16 %v9765
      %v10333 = vunpack.c.h.b16 %v9765
      %v10334 = vunpack.c.l.b16 %v9766
      %v10335 = vunpack.c.h.b16 %v9766
      %v10336 = vunpack.c.l.b16 %v9767
      %v10337 = vunpack.c.l.b16 %v9768
      %v10338 = vunpack.c.h.b16 %v9768
      %v10339 = vunpack.c.l.b16 %v9769
      %v10340 = vunpack.c.h.b16 %v9769
      %v10341 = vunpack.c.l.b16 %v9770
      %v10342 = vunpack.c.h.b16 %v9770
      %v10343 = vunpack.c.l.b16 %v9771
      %v10344 = vunpack.c.h.b16 %v9771
      %v10345 = vunpack.c.l.b16 %v9772
      %v10346 = vunpack.c.l.b16 %v9773
      %v10347 = vunpack.c.h.b16 %v9773
      %v10348 = vunpack.c.l.b16 %v9774
      %v10349 = vunpack.c.h.b16 %v9774
      %v10350 = vunpack.c.l.b16 %v9775
      %v10351 = vunpack.c.h.b16 %v9775
      %v10352 = vunpack.c.l.b16 %v9776
      %v10353 = vunpack.c.h.b16 %v9776
      %v10354 = vunpack.c.l.b16 %v9777
      %v10355 = vunpack.c.l.b16 %v9778
      %v10356 = vunpack.c.h.b16 %v9778
      %v10357 = vunpack.c.l.b16 %v9779
      %v10358 = vunpack.c.h.b16 %v9779
      %v10359 = vunpack.c.l.b16 %v9780
      %v10360 = vunpack.c.h.b16 %v9780
      %v10361 = vunpack.c.l.b16 %v9781
      %v10362 = vunpack.c.h.b16 %v9781
      %v10363 = vunpack.c.l.b16 %v9782
      %v10364 = vunpack.c.l.b16 %v9783
      %v10365 = vunpack.c.h.b16 %v9783
      %v10366 = vunpack.c.l.b16 %v9784
      %v10367 = vunpack.c.h.b16 %v9784
      %v10368 = vunpack.c.l.b16 %v9785
      %v10369 = vunpack.c.h.b16 %v9785
      %v10370 = vunpack.c.l.b16 %v9786
      %v10371 = vunpack.c.h.b16 %v9786
      %v10372 = vunpack.c.l.b16 %v9787
      %v10373 = vunpack.c.l.b16 %v9788
      %v10374 = vunpack.c.h.b16 %v9788
      %v10375 = vunpack.c.l.b16 %v9789
      %v10376 = vunpack.c.h.b16 %v9789
      %v10377 = vunpack.c.l.b16 %v9790
      %v10378 = vunpack.c.h.b16 %v9790
      %v10379 = vunpack.c.l.b16 %v9791
      %v10380 = vunpack.c.h.b16 %v9791
      %v10381 = vunpack.c.l.b16 %v9792
      %v10382 = vunpack.c.l.b16 %v9793
      %v10383 = vunpack.c.h.b16 %v9793
      %v10384 = vunpack.c.l.b16 %v9794
      %v10385 = vunpack.c.h.b16 %v9794
      %v10386 = vunpack.c.l.b16 %v9795
      %v10387 = vunpack.c.h.b16 %v9795
      %v10388 = vunpack.c.l.b16 %v9796
      %v10389 = vunpack.c.h.b16 %v9796
      %v10390 = vunpack.c.l.b16 %v9797
      %v10391 = vunpack.c.l.b16 %v9798
      %v10392 = vunpack.c.h.b16 %v9798
      %v10393 = vunpack.c.l.b16 %v9799
      %v10394 = vunpack.c.h.b16 %v9799
      %v10395 = vunpack.c.l.b16 %v9800
      %v10396 = vunpack.c.h.b16 %v9800
      %v10397 = vunpack.c.l.b16 %v9801
      %v10398 = vunpack.c.h.b16 %v9801
      %v10399 = vunpack.c.l.b16 %v9802
      %v10400 = vunpack.c.l.b16 %v9803
      %v10401 = vunpack.c.h.b16 %v9803
      %v10402 = vunpack.c.l.b16 %v9804
      %v10403 = vunpack.c.h.b16 %v9804
      %v10404 = vunpack.c.l.b16 %v9805
      %v10405 = vunpack.c.h.b16 %v9805
      %v10406 = vunpack.c.l.b16 %v9806
      %v10407 = vunpack.c.h.b16 %v9806
      %v10408 = vunpack.c.l.b16 %v9807
      %v10409 = vpack.c.b16 %v10130, %v10121
      %v10410 = vpack.c.b16 %v10131, %v10122
      %v10411 = vpack.c.b16 %v10132, %v10123
      %v10412 = vpack.c.b16 %v10133, %v10124
      %v10413 = vpack.c.b16 %v10134, %v10125
      %v10414 = vpack.c.b16 %v10135, %v10126
      %v10415 = vpack.c.b16 %v10136, %v10127
      %v10416 = vpack.c.b16 %v10137, %v10128
      %v10417 = vpack.c.b16 %v10138, %v10129
      %v10418 = vpack.c.b16 %v10148, %v10139
      %v10419 = vpack.c.b16 %v10149, %v10140
      %v10420 = vpack.c.b16 %v10150, %v10141
      %v10421 = vpack.c.b16 %v10151, %v10142
      %v10422 = vpack.c.b16 %v10152, %v10143
      %v10423 = vpack.c.b16 %v10153, %v10144
      %v10424 = vpack.c.b16 %v10154, %v10145
      %v10425 = vpack.c.b16 %v10155, %v10146
      %v10426 = vpack.c.b16 %v10156, %v10147
      %v10427 = vpack.c.b16 %v10166, %v10157
      %v10428 = vpack.c.b16 %v10167, %v10158
      %v10429 = vpack.c.b16 %v10168, %v10159
      %v10430 = vpack.c.b16 %v10169, %v10160
      %v10431 = vpack.c.b16 %v10170, %v10161
      %v10432 = vpack.c.b16 %v10171, %v10162
      %v10433 = vpack.c.b16 %v10172, %v10163
      %v10434 = vpack.c.b16 %v10173, %v10164
      %v10435 = vpack.c.b16 %v10174, %v10165
      %v10436 = vpack.c.b16 %v10184, %v10175
      %v10437 = vpack.c.b16 %v10185, %v10176
      %v10438 = vpack.c.b16 %v10186, %v10177
      %v10439 = vpack.c.b16 %v10187, %v10178
      %v10440 = vpack.c.b16 %v10188, %v10179
      %v10441 = vpack.c.b16 %v10189, %v10180
      %v10442 = vpack.c.b16 %v10190, %v10181
      %v10443 = vpack.c.b16 %v10191, %v10182
      %v10444 = vpack.c.b16 %v10192, %v10183
      %v10445 = vpack.c.b16 %v10202, %v10193
      %v10446 = vpack.c.b16 %v10203, %v10194
      %v10447 = vpack.c.b16 %v10204, %v10195
      %v10448 = vpack.c.b16 %v10205, %v10196
      %v10449 = vpack.c.b16 %v10206, %v10197
      %v10450 = vpack.c.b16 %v10207, %v10198
      %v10451 = vpack.c.b16 %v10208, %v10199
      %v10452 = vpack.c.b16 %v10209, %v10200
      %v10453 = vpack.c.b16 %v10210, %v10201
      %v10454 = vpack.c.b16 %v10220, %v10211
      %v10455 = vpack.c.b16 %v10221, %v10212
      %v10456 = vpack.c.b16 %v10222, %v10213
      %v10457 = vpack.c.b16 %v10223, %v10214
      %v10458 = vpack.c.b16 %v10224, %v10215
      %v10459 = vpack.c.b16 %v10225, %v10216
      %v10460 = vpack.c.b16 %v10226, %v10217
      %v10461 = vpack.c.b16 %v10227, %v10218
      %v10462 = vpack.c.b16 %v10228, %v10219
      %v10463 = vpack.c.b16 %v10238, %v10229
      %v10464 = vpack.c.b16 %v10239, %v10230
      %v10465 = vpack.c.b16 %v10240, %v10231
      %v10466 = vpack.c.b16 %v10241, %v10232
      %v10467 = vpack.c.b16 %v10242, %v10233
      %v10468 = vpack.c.b16 %v10243, %v10234
      %v10469 = vpack.c.b16 %v10244, %v10235
      %v10470 = vpack.c.b16 %v10245, %v10236
      %v10471 = vpack.c.b16 %v10246, %v10237
      %v10472 = vpack.c.b16 %v10256, %v10247
      %v10473 = vpack.c.b16 %v10257, %v10248
      %v10474 = vpack.c.b16 %v10258, %v10249
      %v10475 = vpack.c.b16 %v10259, %v10250
      %v10476 = vpack.c.b16 %v10260, %v10251
      %v10477 = vpack.c.b16 %v10261, %v10252
      %v10478 = vpack.c.b16 %v10262, %v10253
      %v10479 = vpack.c.b16 %v10263, %v10254
      %v10480 = vpack.c.b16 %v10264, %v10255
      %v10481 = vpack.c.b16 %v10274, %v10265
      %v10482 = vpack.c.b16 %v10275, %v10266
      %v10483 = vpack.c.b16 %v10276, %v10267
      %v10484 = vpack.c.b16 %v10277, %v10268
      %v10485 = vpack.c.b16 %v10278, %v10269
      %v10486 = vpack.c.b16 %v10279, %v10270
      %v10487 = vpack.c.b16 %v10280, %v10271
      %v10488 = vpack.c.b16 %v10281, %v10272
      %v10489 = vpack.c.b16 %v10282, %v10273
      %v10490 = vpack.c.b16 %v10292, %v10283
      %v10491 = vpack.c.b16 %v10293, %v10284
      %v10492 = vpack.c.b16 %v10294, %v10285
      %v10493 = vpack.c.b16 %v10295, %v10286
      %v10494 = vpack.c.b16 %v10296, %v10287
      %v10495 = vpack.c.b16 %v10297, %v10288
      %v10496 = vpack.c.b16 %v10298, %v10289
      %v10497 = vpack.c.b16 %v10299, %v10290
      %v10498 = vpack.c.b16 %v10300, %v10291
      %v10499 = vpack.c.b16 %v10310, %v10301
      %v10500 = vpack.c.b16 %v10311, %v10302
      %v10501 = vpack.c.b16 %v10312, %v10303
      %v10502 = vpack.c.b16 %v10313, %v10304
      %v10503 = vpack.c.b16 %v10314, %v10305
      %v10504 = vpack.c.b16 %v10315, %v10306
      %v10505 = vpack.c.b16 %v10316, %v10307
      %v10506 = vpack.c.b16 %v10317, %v10308
      %v10507 = vpack.c.b16 %v10318, %v10309
      %v10508 = vpack.c.b16 %v10328, %v10319
      %v10509 = vpack.c.b16 %v10329, %v10320
      %v10510 = vpack.c.b16 %v10330, %v10321
      %v10511 = vpack.c.b16 %v10331, %v10322
      %v10512 = vpack.c.b16 %v10332, %v10323
      %v10513 = vpack.c.b16 %v10333, %v10324
      %v10514 = vpack.c.b16 %v10334, %v10325
      %v10515 = vpack.c.b16 %v10335, %v10326
      %v10516 = vpack.c.b16 %v10336, %v10327
      %v10517 = vpack.c.b16 %v10346, %v10337
      %v10518 = vpack.c.b16 %v10347, %v10338
      %v10519 = vpack.c.b16 %v10348, %v10339
      %v10520 = vpack.c.b16 %v10349, %v10340
      %v10521 = vpack.c.b16 %v10350, %v10341
      %v10522 = vpack.c.b16 %v10351, %v10342
      %v10523 = vpack.c.b16 %v10352, %v10343
      %v10524 = vpack.c.b16 %v10353, %v10344
      %v10525 = vpack.c.b16 %v10354, %v10345
      %v10526 = vpack.c.b16 %v10364, %v10355
      %v10527 = vpack.c.b16 %v10365, %v10356
      %v10528 = vpack.c.b16 %v10366, %v10357
      %v10529 = vpack.c.b16 %v10367, %v10358
      %v10530 = vpack.c.b16 %v10368, %v10359
      %v10531 = vpack.c.b16 %v10369, %v10360
      %v10532 = vpack.c.b16 %v10370, %v10361
      %v10533 = vpack.c.b16 %v10371, %v10362
      %v10534 = vpack.c.b16 %v10372, %v10363
      %v10535 = vpack.c.b16 %v10382, %v10373
      %v10536 = vpack.c.b16 %v10383, %v10374
      %v10537 = vpack.c.b16 %v10384, %v10375
      %v10538 = vpack.c.b16 %v10385, %v10376
      %v10539 = vpack.c.b16 %v10386, %v10377
      %v10540 = vpack.c.b16 %v10387, %v10378
      %v10541 = vpack.c.b16 %v10388, %v10379
      %v10542 = vpack.c.b16 %v10389, %v10380
      %v10543 = vpack.c.b16 %v10390, %v10381
      %v10544 = vpack.c.b16 %v10400, %v10391
      %v10545 = vpack.c.b16 %v10401, %v10392
      %v10546 = vpack.c.b16 %v10402, %v10393
      %v10547 = vpack.c.b16 %v10403, %v10394
      %v10548 = vpack.c.b16 %v10404, %v10395
      %v10549 = vpack.c.b16 %v10405, %v10396
      %v10550 = vpack.c.b16 %v10406, %v10397
      %v10551 = vpack.c.b16 %v10407, %v10398
      %v10552 = vpack.c.b16 %v10408, %v10399
      %v10841 = vunpack.c.l.b16 %v9809
      %v10842 = vunpack.c.l.b16 %v9810
      %v10843 = vunpack.c.l.b16 %v9811
      %v10844 = vunpack.c.l.b16 %v9812
      %v10845 = vunpack.c.l.b16 %v9813
      %v10846 = vunpack.c.l.b16 %v9814
      %v10847 = vunpack.c.l.b16 %v9815
      %v10848 = vunpack.c.l.b16 %v9816
      %v10849 = vunpack.c.l.b16 %v9817
      %v10850 = vunpack.c.l.b16 %v9818
      %v10851 = vunpack.c.l.b16 %v9819
      %v10852 = vunpack.c.l.b16 %v9820
      %v10853 = vunpack.c.l.b16 %v9821
      %v10854 = vunpack.c.l.b16 %v9822
      %v10855 = vunpack.c.l.b16 %v9823
      %v10856 = vunpack.c.l.b16 %v9824
      %v10857 = vunpack.c.l.b16 %v9825
      %v10858 = vunpack.c.l.b16 %v9826
      %v10859 = vunpack.c.l.b16 %v9827
      %v10860 = vunpack.c.l.b16 %v9828
      %v10861 = vunpack.c.l.b16 %v9829
      %v10862 = vunpack.c.l.b16 %v9830
      %v10863 = vunpack.c.l.b16 %v9831
      %v10864 = vunpack.c.l.b16 %v9832
      %v10865 = vunpack.c.l.b16 %v9833
      %v10866 = vunpack.c.l.b16 %v9834
      %v10867 = vunpack.c.l.b16 %v9835
      %v10868 = vunpack.c.l.b16 %v9836
      %v10869 = vunpack.c.l.b16 %v9837
      %v10870 = vunpack.c.l.b16 %v9838
      %v10871 = vunpack.c.l.b16 %v9839
      %v10872 = vunpack.c.l.b16 %v9840
      %v10873 = vunpack.c.l.b16 %v9841
      %v10874 = vunpack.c.l.b16 %v9842
      %v10875 = vunpack.c.l.b16 %v9843
      %v10876 = vunpack.c.l.b16 %v9844
      %v10877 = vunpack.c.l.b16 %v9845
      %v10878 = vunpack.c.l.b16 %v9846
      %v10879 = vunpack.c.l.b16 %v9847
      %v10880 = vunpack.c.l.b16 %v9848
      %v10881 = vunpack.c.l.b16 %v9849
      %v10882 = vunpack.c.l.b16 %v9850
      %v10883 = vunpack.c.l.b16 %v9851
      %v10884 = vunpack.c.l.b16 %v9852
      %v10885 = vunpack.c.l.b16 %v9853
      %v10886 = vunpack.c.l.b16 %v9854
      %v10887 = vunpack.c.l.b16 %v9855
      %v10888 = vunpack.c.l.b16 %v9856
      %v10889 = vunpack.c.l.b16 %v9857
      %v10890 = vunpack.c.l.b16 %v9858
      %v10891 = vunpack.c.l.b16 %v9859
      %v10892 = vunpack.c.l.b16 %v9860
      %v10893 = vunpack.c.l.b16 %v9861
      %v10894 = vunpack.c.l.b16 %v9862
      %v10895 = vunpack.c.l.b16 %v9863
      %v10896 = vunpack.c.l.b16 %v9864
      %v10897 = vunpack.c.l.b16 %v9865
      %v10898 = vunpack.c.l.b16 %v9866
      %v10899 = vunpack.c.l.b16 %v9867
      %v10900 = vunpack.c.l.b16 %v9868
      %v10901 = vunpack.c.l.b16 %v9869
      %v10902 = vunpack.c.l.b16 %v9870
      %v10903 = vunpack.c.l.b16 %v9871
      %v10904 = vunpack.c.l.b16 %v9872
      %v10905 = vunpack.c.l.b16 %v9873
      %v10906 = vunpack.c.l.b16 %v9874
      %v10907 = vunpack.c.l.b16 %v9875
      %v10908 = vunpack.c.l.b16 %v9876
      %v10909 = vunpack.c.l.b16 %v9877
      %v10910 = vunpack.c.l.b16 %v9878
      %v10911 = vunpack.c.l.b16 %v9879
      %v10912 = vunpack.c.l.b16 %v9880
      %v10913 = vunpack.c.l.b16 %v9881
      %v10914 = vunpack.c.l.b16 %v9882
      %v10915 = vunpack.c.l.b16 %v9883
      %v10916 = vunpack.c.l.b16 %v9884
      %v10917 = vunpack.c.l.b16 %v9885
      %v10918 = vunpack.c.l.b16 %v9886
      %v10919 = vunpack.c.l.b16 %v9887
      %v10920 = vunpack.c.l.b16 %v9888
      %v10921 = vunpack.c.l.b16 %v9889
      %v10922 = vunpack.c.l.b16 %v9890
      %v10923 = vunpack.c.l.b16 %v9891
      %v10924 = vunpack.c.l.b16 %v9892
      %v10925 = vunpack.c.l.b16 %v9893
      %v10926 = vunpack.c.l.b16 %v9894
      %v10927 = vunpack.c.l.b16 %v9895
      %v10928 = vunpack.c.l.b16 %v9896
      %v10929 = vunpack.c.l.b16 %v9897
      %v10930 = vunpack.c.l.b16 %v9898
      %v10931 = vunpack.c.l.b16 %v9899
      %v10932 = vunpack.c.l.b16 %v9900
      %v10933 = vunpack.c.l.b16 %v9901
      %v10934 = vunpack.c.l.b16 %v9902
      %v10935 = vunpack.c.l.b16 %v9903
      %v10936 = vunpack.c.l.b16 %v9904
      %v10937 = vunpack.c.l.b16 %v9905
      %v10938 = vunpack.c.l.b16 %v9906
      %v10939 = vunpack.c.l.b16 %v9907
      %v10940 = vunpack.c.l.b16 %v9908
      %v10941 = vunpack.c.l.b16 %v9909
      %v10942 = vunpack.c.l.b16 %v9910
      %v10943 = vunpack.c.l.b16 %v9911
      %v10944 = vunpack.c.l.b16 %v9912
      %v10945 = vunpack.c.l.b16 %v9913
      %v10946 = vunpack.c.l.b16 %v9914
      %v10947 = vunpack.c.l.b16 %v9915
      %v10948 = vunpack.c.l.b16 %v9916
      %v10949 = vunpack.c.l.b16 %v9917
      %v10950 = vunpack.c.l.b16 %v9918
      %v10951 = vunpack.c.l.b16 %v9919
      %v10952 = vunpack.c.l.b16 %v9920
      %v10953 = vunpack.c.l.b16 %v9921
      %v10954 = vunpack.c.l.b16 %v9922
      %v10955 = vunpack.c.l.b16 %v9923
      %v10956 = vunpack.c.l.b16 %v9924
      %v10957 = vunpack.c.l.b16 %v9925
      %v10958 = vunpack.c.l.b16 %v9926
      %v10959 = vunpack.c.l.b16 %v9927
      %v10960 = vunpack.c.l.b16 %v9928
      %v10961 = vunpack.c.l.b16 %v9929
      %v10962 = vunpack.c.l.b16 %v9930
      %v10963 = vunpack.c.l.b16 %v9931
      %v10964 = vunpack.c.l.b16 %v9932
      %v10965 = vunpack.c.l.b16 %v9933
      %v10966 = vunpack.c.l.b16 %v9934
      %v10967 = vunpack.c.l.b16 %v9935
      %v10968 = vunpack.c.l.b16 %v9936
      %v10969 = vunpack.c.l.b16 %v9937
      %v10970 = vunpack.c.l.b16 %v9938
      %v10971 = vunpack.c.l.b16 %v9939
      %v10972 = vunpack.c.l.b16 %v9940
      %v10973 = vunpack.c.l.b16 %v9941
      %v10974 = vunpack.c.l.b16 %v9942
      %v10975 = vunpack.c.l.b16 %v9943
      %v10976 = vunpack.c.l.b16 %v9944
      %v10977 = vunpack.c.l.b16 %v9945
      %v10978 = vunpack.c.l.b16 %v9946
      %v10979 = vunpack.c.l.b16 %v9947
      %v10980 = vunpack.c.l.b16 %v9948
      %v10981 = vunpack.c.l.b16 %v9949
      %v10982 = vunpack.c.l.b16 %v9950
      %v10983 = vunpack.c.l.b16 %v9951
      %v10984 = vunpack.c.l.b16 %v9952
      %v10985 = vpack.c.b16 %v10842, %v10841
      %v10986 = vpack.c.b16 %v10844, %v10843
      %v10987 = vpack.c.b16 %v10846, %v10845
      %v10988 = vpack.c.b16 %v10848, %v10847
      %v10989 = vpack.c.b16 %v10850, %v10849
      %v10990 = vpack.c.b16 %v10852, %v10851
      %v10991 = vpack.c.b16 %v10854, %v10853
      %v10992 = vpack.c.b16 %v10856, %v10855
      %v10993 = vpack.c.b16 %v10858, %v10857
      %v10994 = vpack.c.b16 %v10860, %v10859
      %v10995 = vpack.c.b16 %v10862, %v10861
      %v10996 = vpack.c.b16 %v10864, %v10863
      %v10997 = vpack.c.b16 %v10866, %v10865
      %v10998 = vpack.c.b16 %v10868, %v10867
      %v10999 = vpack.c.b16 %v10870, %v10869
      %v11000 = vpack.c.b16 %v10872, %v10871
      %v11001 = vpack.c.b16 %v10874, %v10873
      %v11002 = vpack.c.b16 %v10876, %v10875
      %v11003 = vpack.c.b16 %v10878, %v10877
      %v11004 = vpack.c.b16 %v10880, %v10879
      %v11005 = vpack.c.b16 %v10882, %v10881
      %v11006 = vpack.c.b16 %v10884, %v10883
      %v11007 = vpack.c.b16 %v10886, %v10885
      %v11008 = vpack.c.b16 %v10888, %v10887
      %v11009 = vpack.c.b16 %v10890, %v10889
      %v11010 = vpack.c.b16 %v10892, %v10891
      %v11011 = vpack.c.b16 %v10894, %v10893
      %v11012 = vpack.c.b16 %v10896, %v10895
      %v11013 = vpack.c.b16 %v10898, %v10897
      %v11014 = vpack.c.b16 %v10900, %v10899
      %v11015 = vpack.c.b16 %v10902, %v10901
      %v11016 = vpack.c.b16 %v10904, %v10903
      %v11017 = vpack.c.b16 %v10906, %v10905
      %v11018 = vpack.c.b16 %v10908, %v10907
      %v11019 = vpack.c.b16 %v10910, %v10909
      %v11020 = vpack.c.b16 %v10912, %v10911
      %v11021 = vpack.c.b16 %v10914, %v10913
      %v11022 = vpack.c.b16 %v10916, %v10915
      %v11023 = vpack.c.b16 %v10918, %v10917
      %v11024 = vpack.c.b16 %v10920, %v10919
      %v11025 = vpack.c.b16 %v10922, %v10921
      %v11026 = vpack.c.b16 %v10924, %v10923
      %v11027 = vpack.c.b16 %v10926, %v10925
      %v11028 = vpack.c.b16 %v10928, %v10927
      %v11029 = vpack.c.b16 %v10930, %v10929
      %v11030 = vpack.c.b16 %v10932, %v10931
      %v11031 = vpack.c.b16 %v10934, %v10933
      %v11032 = vpack.c.b16 %v10936, %v10935
      %v11033 = vpack.c.b16 %v10938, %v10937
      %v11034 = vpack.c.b16 %v10940, %v10939
      %v11035 = vpack.c.b16 %v10942, %v10941
      %v11036 = vpack.c.b16 %v10944, %v10943
      %v11037 = vpack.c.b16 %v10946, %v10945
      %v11038 = vpack.c.b16 %v10948, %v10947
      %v11039 = vpack.c.b16 %v10950, %v10949
      %v11040 = vpack.c.b16 %v10952, %v10951
      %v11041 = vpack.c.b16 %v10954, %v10953
      %v11042 = vpack.c.b16 %v10956, %v10955
      %v11043 = vpack.c.b16 %v10958, %v10957
      %v11044 = vpack.c.b16 %v10960, %v10959
      %v11045 = vpack.c.b16 %v10962, %v10961
      %v11046 = vpack.c.b16 %v10964, %v10963
      %v11047 = vpack.c.b16 %v10966, %v10965
      %v11048 = vpack.c.b16 %v10968, %v10967
      %v11049 = vpack.c.b16 %v10970, %v10969
      %v11050 = vpack.c.b16 %v10972, %v10971
      %v11051 = vpack.c.b16 %v10974, %v10973
      %v11052 = vpack.c.b16 %v10976, %v10975
      %v11053 = vpack.c.b16 %v10978, %v10977
      %v11054 = vpack.c.b16 %v10980, %v10979
      %v11055 = vpack.c.b16 %v10982, %v10981
      %v11056 = vpack.c.b16 %v10984, %v10983
      %11129 = vmatprep.subr.bf16.mxu0 0
      %11130 = vmatpush1.bf16.msra.mxu0 %v10992
      %11131 = vmatprep.subr.bf16.mxu0 0
      %11132 = vmatpush1.bf16.msra.mxu0 %v10991
      %11133 = vmatprep.subr.bf16.mxu0 0
      %11134 = vmatpush1.bf16.msra.mxu0 %v10990
      %11135 = vmatprep.subr.bf16.mxu0 0
      %11136 = vmatpush1.bf16.msra.mxu0 %v10989
      %11137 = vmatprep.subr.bf16.mxu0 0
      %11138 = vmatpush1.bf16.msra.mxu0 %v10988
      %11139 = vmatprep.subr.bf16.mxu0 0
      %11140 = vmatpush1.bf16.msra.mxu0 %v10987
      %11141 = vmatprep.subr.bf16.mxu0 0
      %11142 = vmatpush1.bf16.msra.mxu0 %v10986
      %11143 = vmatprep.subr.bf16.mxu0 0
      %11144 = vmatpush1.bf16.msra.mxu0 %v10985
      %11145 = vmatprep.subr.bf16.mxu0 0
      %11146 = vmatpush2.bf16.msra.mxu0 %v11000
      %11147 = vmatprep.subr.bf16.mxu0 0
      %11148 = vmatpush2.bf16.msra.mxu0 %v10999
      %11149 = vmatprep.subr.bf16.mxu0 0
      %11150 = vmatpush2.bf16.msra.mxu0 %v10998
      %11151 = vmatprep.subr.bf16.mxu0 0
      %11152 = vmatpush2.bf16.msra.mxu0 %v10997
      %11153 = vmatprep.subr.bf16.mxu0 0
      %11154 = vmatpush2.bf16.msra.mxu0 %v10996
      %11155 = vmatprep.subr.bf16.mxu0 0
      %11156 = vmatpush2.bf16.msra.mxu0 %v10995
      %11157 = vmatprep.subr.bf16.mxu0 0
      %11158 = vmatpush2.bf16.msra.mxu0 %v10994
      %11159 = vmatprep.subr.bf16.mxu0 0
      %11160 = vmatpush2.bf16.msra.mxu0 %v10993
      %11161 = vmatprep.mubr.bf16.mxu0 %v10410
      %11162 = vmatmul.mubr.bf16.gmra.mxu0 %v10409
      %v11163 = vpop.f32.mrf.mxu0
      %v11164 = vadd.f32 %v9959, %v11163
      %v11165 = vpop.f32.mrf.mxu0
      %v11166 = vpop.f32.mrf.mxu0
      %v11167 = vadd.f32 %v9959, %v11166
      %v11168 = vpop.f32.mrf.mxu0
      %11169 = vmatprep.mubr.bf16.mxu0 %v10419
      %11170 = vmatmul.mubr.bf16.gmra.mxu0 %v10418
      %v11171 = vpop.f32.mrf.mxu0
      %v11172 = vadd.f32 %v9959, %v11171
      %v11173 = vpop.f32.mrf.mxu0
      %v11174 = vpop.f32.mrf.mxu0
      %v11175 = vadd.f32 %v9959, %v11174
      %v11176 = vpop.f32.mrf.mxu0
      %11177 = vmatprep.mubr.bf16.mxu0 %v10428
      %11178 = vmatmul.mubr.bf16.gmra.mxu0 %v10427
      %v11179 = vpop.f32.mrf.mxu0
      %v11180 = vadd.f32 %v9959, %v11179
      %v11181 = vpop.f32.mrf.mxu0
      %v11182 = vpop.f32.mrf.mxu0
      %v11183 = vadd.f32 %v9959, %v11182
      %v11184 = vpop.f32.mrf.mxu0
      %11185 = vmatprep.mubr.bf16.mxu0 %v10437
      %11186 = vmatmul.mubr.bf16.gmra.mxu0 %v10436
      %v11187 = vpop.f32.mrf.mxu0
      %v11188 = vadd.f32 %v9959, %v11187
      %v11189 = vpop.f32.mrf.mxu0
      %v11190 = vpop.f32.mrf.mxu0
      %v11191 = vadd.f32 %v9959, %v11190
      %v11192 = vpop.f32.mrf.mxu0
      %11193 = vmatprep.mubr.bf16.mxu0 %v10446
      %11194 = vmatmul.mubr.bf16.gmra.mxu0 %v10445
      %v11195 = vpop.f32.mrf.mxu0
      %v11196 = vadd.f32 %v9959, %v11195
      %v11197 = vpop.f32.mrf.mxu0
      %v11198 = vpop.f32.mrf.mxu0
      %v11199 = vadd.f32 %v9959, %v11198
      %v11200 = vpop.f32.mrf.mxu0
      %11201 = vmatprep.mubr.bf16.mxu0 %v10455
      %11202 = vmatmul.mubr.bf16.gmra.mxu0 %v10454
      %v11203 = vpop.f32.mrf.mxu0
      %v11204 = vadd.f32 %v9959, %v11203
      %v11205 = vpop.f32.mrf.mxu0
      %v11206 = vpop.f32.mrf.mxu0
      %v11207 = vadd.f32 %v9959, %v11206
      %v11208 = vpop.f32.mrf.mxu0
      %11209 = vmatprep.mubr.bf16.mxu0 %v10464
      %11210 = vmatmul.mubr.bf16.gmra.mxu0 %v10463
      %v11211 = vpop.f32.mrf.mxu0
      %v11212 = vadd.f32 %v9959, %v11211
      %v11213 = vpop.f32.mrf.mxu0
      %v11214 = vpop.f32.mrf.mxu0
      %v11215 = vadd.f32 %v9959, %v11214
      %v11216 = vpop.f32.mrf.mxu0
      %11217 = vmatprep.mubr.bf16.mxu0 %v10473
      %11218 = vmatmul.mubr.bf16.gmra.mxu0 %v10472
      %v11219 = vpop.f32.mrf.mxu0
      %v11220 = vadd.f32 %v9959, %v11219
      %v11221 = vpop.f32.mrf.mxu0
      %v11222 = vpop.f32.mrf.mxu0
      %v11223 = vadd.f32 %v9959, %v11222
      %v11224 = vpop.f32.mrf.mxu0
      %11225 = vmatprep.mubr.bf16.mxu0 %v10482
      %11226 = vmatmul.mubr.bf16.gmra.mxu0 %v10481
      %v11227 = vpop.f32.mrf.mxu0
      %v11228 = vadd.f32 %v9959, %v11227
      %v11229 = vpop.f32.mrf.mxu0
      %v11230 = vpop.f32.mrf.mxu0
      %v11231 = vadd.f32 %v9959, %v11230
      %v11232 = vpop.f32.mrf.mxu0
      %11233 = vmatprep.mubr.bf16.mxu0 %v10491
      %11234 = vmatmul.mubr.bf16.gmra.mxu0 %v10490
      %v11235 = vpop.f32.mrf.mxu0
      %v11236 = vadd.f32 %v9959, %v11235
      %v11237 = vpop.f32.mrf.mxu0
      %v11238 = vpop.f32.mrf.mxu0
      %v11239 = vadd.f32 %v9959, %v11238
      %v11240 = vpop.f32.mrf.mxu0
      %11241 = vmatprep.mubr.bf16.mxu0 %v10500
      %11242 = vmatmul.mubr.bf16.gmra.mxu0 %v10499
      %v11243 = vpop.f32.mrf.mxu0
      %v11244 = vadd.f32 %v9959, %v11243
      %v11245 = vpop.f32.mrf.mxu0
      %v11246 = vpop.f32.mrf.mxu0
      %v11247 = vadd.f32 %v9959, %v11246
      %v11248 = vpop.f32.mrf.mxu0
      %11249 = vmatprep.mubr.bf16.mxu0 %v10509
      %11250 = vmatmul.mubr.bf16.gmra.mxu0 %v10508
      %v11251 = vpop.f32.mrf.mxu0
      %v11252 = vadd.f32 %v9959, %v11251
      %v11253 = vpop.f32.mrf.mxu0
      %v11254 = vpop.f32.mrf.mxu0
      %v11255 = vadd.f32 %v9959, %v11254
      %v11256 = vpop.f32.mrf.mxu0
      %11257 = vmatprep.mubr.bf16.mxu0 %v10518
      %11258 = vmatmul.mubr.bf16.gmra.mxu0 %v10517
      %v11259 = vpop.f32.mrf.mxu0
      %v11260 = vadd.f32 %v9959, %v11259
      %v11261 = vpop.f32.mrf.mxu0
      %v11262 = vpop.f32.mrf.mxu0
      %v11263 = vadd.f32 %v9959, %v11262
      %v11264 = vpop.f32.mrf.mxu0
      %11265 = vmatprep.mubr.bf16.mxu0 %v10527
      %11266 = vmatmul.mubr.bf16.gmra.mxu0 %v10526
      %v11267 = vpop.f32.mrf.mxu0
      %v11268 = vadd.f32 %v9959, %v11267
      %v11269 = vpop.f32.mrf.mxu0
      %v11270 = vpop.f32.mrf.mxu0
      %v11271 = vadd.f32 %v9959, %v11270
      %v11272 = vpop.f32.mrf.mxu0
      %11273 = vmatprep.mubr.bf16.mxu0 %v10536
      %11274 = vmatmul.mubr.bf16.gmra.mxu0 %v10535
      %v11275 = vpop.f32.mrf.mxu0
      %v11276 = vadd.f32 %v9959, %v11275
      %v11277 = vpop.f32.mrf.mxu0
      %v11278 = vpop.f32.mrf.mxu0
      %v11279 = vadd.f32 %v9959, %v11278
      %v11280 = vpop.f32.mrf.mxu0
      %11281 = vmatprep.mubr.bf16.mxu0 %v10545
      %11282 = vmatmul.mubr.bf16.gmra.mxu0 %v10544
      %v11283 = vpop.f32.mrf.mxu0
      %v11284 = vadd.f32 %v9959, %v11283
      %v11285 = vpop.f32.mrf.mxu0
      %v11286 = vpop.f32.mrf.mxu0
      %v11287 = vadd.f32 %v9959, %v11286
      %v11288 = vpop.f32.mrf.mxu0
      %11289 = vdwg.mxu0
      %11290 = vmatprep.subr.bf16.mxu0 0
      %11291 = vmatpush1.bf16.msra.mxu0 %v11008
      %11292 = vmatprep.subr.bf16.mxu0 0
      %11293 = vmatpush1.bf16.msra.mxu0 %v11007
      %11294 = vmatprep.subr.bf16.mxu0 0
      %11295 = vmatpush1.bf16.msra.mxu0 %v11006
      %11296 = vmatprep.subr.bf16.mxu0 0
      %11297 = vmatpush1.bf16.msra.mxu0 %v11005
      %11298 = vmatprep.subr.bf16.mxu0 0
      %11299 = vmatpush1.bf16.msra.mxu0 %v11004
      %11300 = vmatprep.subr.bf16.mxu0 0
      %11301 = vmatpush1.bf16.msra.mxu0 %v11003
      %11302 = vmatprep.subr.bf16.mxu0 0
      %11303 = vmatpush1.bf16.msra.mxu0 %v11002
      %11304 = vmatprep.subr.bf16.mxu0 0
      %11305 = vmatpush1.bf16.msra.mxu0 %v11001
      %11306 = vmatprep.subr.bf16.mxu0 0
      %11307 = vmatpush2.bf16.msra.mxu0 %v11016
      %11308 = vmatprep.subr.bf16.mxu0 0
      %11309 = vmatpush2.bf16.msra.mxu0 %v11015
      %11310 = vmatprep.subr.bf16.mxu0 0
      %11311 = vmatpush2.bf16.msra.mxu0 %v11014
      %11312 = vmatprep.subr.bf16.mxu0 0
      %11313 = vmatpush2.bf16.msra.mxu0 %v11013
      %11314 = vmatprep.subr.bf16.mxu0 0
      %11315 = vmatpush2.bf16.msra.mxu0 %v11012
      %11316 = vmatprep.subr.bf16.mxu0 0
      %11317 = vmatpush2.bf16.msra.mxu0 %v11011
      %11318 = vmatprep.subr.bf16.mxu0 0
      %11319 = vmatpush2.bf16.msra.mxu0 %v11010
      %11320 = vmatprep.subr.bf16.mxu0 0
      %11321 = vmatpush2.bf16.msra.mxu0 %v11009
      %11322 = vmatprep.mubr.bf16.mxu0 %v10412
      %11323 = vmatmul.mubr.bf16.gmra.mxu0 %v10411
      %v11324 = vpop.f32.mrf.mxu0
      %v11325 = vadd.f32 %v11164, %v11324
      %v11326 = vpop.f32.mrf.mxu0
      %v11327 = vpop.f32.mrf.mxu0
      %v11328 = vadd.f32 %v11167, %v11327
      %v11329 = vpop.f32.mrf.mxu0
      %11330 = vmatprep.mubr.bf16.mxu0 %v10421
      %11331 = vmatmul.mubr.bf16.gmra.mxu0 %v10420
      %v11332 = vpop.f32.mrf.mxu0
      %v11333 = vadd.f32 %v11172, %v11332
      %v11334 = vpop.f32.mrf.mxu0
      %v11335 = vpop.f32.mrf.mxu0
      %v11336 = vadd.f32 %v11175, %v11335
      %v11337 = vpop.f32.mrf.mxu0
      %11338 = vmatprep.mubr.bf16.mxu0 %v10430
      %11339 = vmatmul.mubr.bf16.gmra.mxu0 %v10429
      %v11340 = vpop.f32.mrf.mxu0
      %v11341 = vadd.f32 %v11180, %v11340
      %v11342 = vpop.f32.mrf.mxu0
      %v11343 = vpop.f32.mrf.mxu0
      %v11344 = vadd.f32 %v11183, %v11343
      %v11345 = vpop.f32.mrf.mxu0
      %11346 = vmatprep.mubr.bf16.mxu0 %v10439
      %11347 = vmatmul.mubr.bf16.gmra.mxu0 %v10438
      %v11348 = vpop.f32.mrf.mxu0
      %v11349 = vadd.f32 %v11188, %v11348
      %v11350 = vpop.f32.mrf.mxu0
      %v11351 = vpop.f32.mrf.mxu0
      %v11352 = vadd.f32 %v11191, %v11351
      %v11353 = vpop.f32.mrf.mxu0
      %11354 = vmatprep.mubr.bf16.mxu0 %v10448
      %11355 = vmatmul.mubr.bf16.gmra.mxu0 %v10447
      %v11356 = vpop.f32.mrf.mxu0
      %v11357 = vadd.f32 %v11196, %v11356
      %v11358 = vpop.f32.mrf.mxu0
      %v11359 = vpop.f32.mrf.mxu0
      %v11360 = vadd.f32 %v11199, %v11359
      %v11361 = vpop.f32.mrf.mxu0
      %11362 = vmatprep.mubr.bf16.mxu0 %v10457
      %11363 = vmatmul.mubr.bf16.gmra.mxu0 %v10456
      %v11364 = vpop.f32.mrf.mxu0
      %v11365 = vadd.f32 %v11204, %v11364
      %v11366 = vpop.f32.mrf.mxu0
      %v11367 = vpop.f32.mrf.mxu0
      %v11368 = vadd.f32 %v11207, %v11367
      %v11369 = vpop.f32.mrf.mxu0
      %11370 = vmatprep.mubr.bf16.mxu0 %v10466
      %11371 = vmatmul.mubr.bf16.gmra.mxu0 %v10465
      %v11372 = vpop.f32.mrf.mxu0
      %v11373 = vadd.f32 %v11212, %v11372
      %v11374 = vpop.f32.mrf.mxu0
      %v11375 = vpop.f32.mrf.mxu0
      %v11376 = vadd.f32 %v11215, %v11375
      %v11377 = vpop.f32.mrf.mxu0
      %11378 = vmatprep.mubr.bf16.mxu0 %v10475
      %11379 = vmatmul.mubr.bf16.gmra.mxu0 %v10474
      %v11380 = vpop.f32.mrf.mxu0
      %v11381 = vadd.f32 %v11220, %v11380
      %v11382 = vpop.f32.mrf.mxu0
      %v11383 = vpop.f32.mrf.mxu0
      %v11384 = vadd.f32 %v11223, %v11383
      %v11385 = vpop.f32.mrf.mxu0
      %11386 = vmatprep.mubr.bf16.mxu0 %v10484
      %11387 = vmatmul.mubr.bf16.gmra.mxu0 %v10483
      %v11388 = vpop.f32.mrf.mxu0
      %v11389 = vadd.f32 %v11228, %v11388
      %v11390 = vpop.f32.mrf.mxu0
      %v11391 = vpop.f32.mrf.mxu0
      %v11392 = vadd.f32 %v11231, %v11391
      %v11393 = vpop.f32.mrf.mxu0
      %11394 = vmatprep.mubr.bf16.mxu0 %v10493
      %11395 = vmatmul.mubr.bf16.gmra.mxu0 %v10492
      %v11396 = vpop.f32.mrf.mxu0
      %v11397 = vadd.f32 %v11236, %v11396
      %v11398 = vpop.f32.mrf.mxu0
      %v11399 = vpop.f32.mrf.mxu0
      %v11400 = vadd.f32 %v11239, %v11399
      %v11401 = vpop.f32.mrf.mxu0
      %11402 = vmatprep.mubr.bf16.mxu0 %v10502
      %11403 = vmatmul.mubr.bf16.gmra.mxu0 %v10501
      %v11404 = vpop.f32.mrf.mxu0
      %v11405 = vadd.f32 %v11244, %v11404
      %v11406 = vpop.f32.mrf.mxu0
      %v11407 = vpop.f32.mrf.mxu0
      %v11408 = vadd.f32 %v11247, %v11407
      %v11409 = vpop.f32.mrf.mxu0
      %11410 = vmatprep.mubr.bf16.mxu0 %v10511
      %11411 = vmatmul.mubr.bf16.gmra.mxu0 %v10510
      %v11412 = vpop.f32.mrf.mxu0
      %v11413 = vadd.f32 %v11252, %v11412
      %v11414 = vpop.f32.mrf.mxu0
      %v11415 = vpop.f32.mrf.mxu0
      %v11416 = vadd.f32 %v11255, %v11415
      %v11417 = vpop.f32.mrf.mxu0
      %11418 = vmatprep.mubr.bf16.mxu0 %v10520
      %11419 = vmatmul.mubr.bf16.gmra.mxu0 %v10519
      %v11420 = vpop.f32.mrf.mxu0
      %v11421 = vadd.f32 %v11260, %v11420
      %v11422 = vpop.f32.mrf.mxu0
      %v11423 = vpop.f32.mrf.mxu0
      %v11424 = vadd.f32 %v11263, %v11423
      %v11425 = vpop.f32.mrf.mxu0
      %11426 = vmatprep.mubr.bf16.mxu0 %v10529
      %11427 = vmatmul.mubr.bf16.gmra.mxu0 %v10528
      %v11428 = vpop.f32.mrf.mxu0
      %v11429 = vadd.f32 %v11268, %v11428
      %v11430 = vpop.f32.mrf.mxu0
      %v11431 = vpop.f32.mrf.mxu0
      %v11432 = vadd.f32 %v11271, %v11431
      %v11433 = vpop.f32.mrf.mxu0
      %11434 = vmatprep.mubr.bf16.mxu0 %v10538
      %11435 = vmatmul.mubr.bf16.gmra.mxu0 %v10537
      %v11436 = vpop.f32.mrf.mxu0
      %v11437 = vadd.f32 %v11276, %v11436
      %v11438 = vpop.f32.mrf.mxu0
      %v11439 = vpop.f32.mrf.mxu0
      %v11440 = vadd.f32 %v11279, %v11439
      %v11441 = vpop.f32.mrf.mxu0
      %11442 = vmatprep.mubr.bf16.mxu0 %v10547
      %11443 = vmatmul.mubr.bf16.gmra.mxu0 %v10546
      %v11444 = vpop.f32.mrf.mxu0
      %v11445 = vadd.f32 %v11284, %v11444
      %v11446 = vpop.f32.mrf.mxu0
      %v11447 = vpop.f32.mrf.mxu0
      %v11448 = vadd.f32 %v11287, %v11447
      %v11449 = vpop.f32.mrf.mxu0
      %11450 = vdwg.mxu0
      %11451 = vmatprep.subr.bf16.mxu0 0
      %11452 = vmatpush1.bf16.msra.mxu0 %v11024
      %11453 = vmatprep.subr.bf16.mxu0 0
      %11454 = vmatpush1.bf16.msra.mxu0 %v11023
      %11455 = vmatprep.subr.bf16.mxu0 0
      %11456 = vmatpush1.bf16.msra.mxu0 %v11022
      %11457 = vmatprep.subr.bf16.mxu0 0
      %11458 = vmatpush1.bf16.msra.mxu0 %v11021
      %11459 = vmatprep.subr.bf16.mxu0 0
      %11460 = vmatpush1.bf16.msra.mxu0 %v11020
      %11461 = vmatprep.subr.bf16.mxu0 0
      %11462 = vmatpush1.bf16.msra.mxu0 %v11019
      %11463 = vmatprep.subr.bf16.mxu0 0
      %11464 = vmatpush1.bf16.msra.mxu0 %v11018
      %11465 = vmatprep.subr.bf16.mxu0 0
      %11466 = vmatpush1.bf16.msra.mxu0 %v11017
      %11467 = vmatprep.subr.bf16.mxu0 0
      %11468 = vmatpush2.bf16.msra.mxu0 %v11032
      %11469 = vmatprep.subr.bf16.mxu0 0
      %11470 = vmatpush2.bf16.msra.mxu0 %v11031
      %11471 = vmatprep.subr.bf16.mxu0 0
      %11472 = vmatpush2.bf16.msra.mxu0 %v11030
      %11473 = vmatprep.subr.bf16.mxu0 0
      %11474 = vmatpush2.bf16.msra.mxu0 %v11029
      %11475 = vmatprep.subr.bf16.mxu0 0
      %11476 = vmatpush2.bf16.msra.mxu0 %v11028
      %11477 = vmatprep.subr.bf16.mxu0 0
      %11478 = vmatpush2.bf16.msra.mxu0 %v11027
      %11479 = vmatprep.subr.bf16.mxu0 0
      %11480 = vmatpush2.bf16.msra.mxu0 %v11026
      %11481 = vmatprep.subr.bf16.mxu0 0
      %11482 = vmatpush2.bf16.msra.mxu0 %v11025
      %11483 = vmatprep.mubr.bf16.mxu0 %v10414
      %11484 = vmatmul.mubr.bf16.gmra.mxu0 %v10413
      %v11485 = vpop.f32.mrf.mxu0
      %v11486 = vadd.f32 %v11325, %v11485
      %v11487 = vpop.f32.mrf.mxu0
      %v11488 = vpop.f32.mrf.mxu0
      %v11489 = vadd.f32 %v11328, %v11488
      %v11490 = vpop.f32.mrf.mxu0
      %11491 = vmatprep.mubr.bf16.mxu0 %v10423
      %11492 = vmatmul.mubr.bf16.gmra.mxu0 %v10422
      %v11493 = vpop.f32.mrf.mxu0
      %v11494 = vadd.f32 %v11333, %v11493
      %v11495 = vpop.f32.mrf.mxu0
      %v11496 = vpop.f32.mrf.mxu0
      %v11497 = vadd.f32 %v11336, %v11496
      %v11498 = vpop.f32.mrf.mxu0
      %11499 = vmatprep.mubr.bf16.mxu0 %v10432
      %11500 = vmatmul.mubr.bf16.gmra.mxu0 %v10431
      %v11501 = vpop.f32.mrf.mxu0
      %v11502 = vadd.f32 %v11341, %v11501
      %v11503 = vpop.f32.mrf.mxu0
      %v11504 = vpop.f32.mrf.mxu0
      %v11505 = vadd.f32 %v11344, %v11504
      %v11506 = vpop.f32.mrf.mxu0
      %11507 = vmatprep.mubr.bf16.mxu0 %v10441
      %11508 = vmatmul.mubr.bf16.gmra.mxu0 %v10440
      %v11509 = vpop.f32.mrf.mxu0
      %v11510 = vadd.f32 %v11349, %v11509
      %v11511 = vpop.f32.mrf.mxu0
      %v11512 = vpop.f32.mrf.mxu0
      %v11513 = vadd.f32 %v11352, %v11512
      %v11514 = vpop.f32.mrf.mxu0
      %11515 = vmatprep.mubr.bf16.mxu0 %v10450
      %11516 = vmatmul.mubr.bf16.gmra.mxu0 %v10449
      %v11517 = vpop.f32.mrf.mxu0
      %v11518 = vadd.f32 %v11357, %v11517
      %v11519 = vpop.f32.mrf.mxu0
      %v11520 = vpop.f32.mrf.mxu0
      %v11521 = vadd.f32 %v11360, %v11520
      %v11522 = vpop.f32.mrf.mxu0
      %11523 = vmatprep.mubr.bf16.mxu0 %v10459
      %11524 = vmatmul.mubr.bf16.gmra.mxu0 %v10458
      %v11525 = vpop.f32.mrf.mxu0
      %v11526 = vadd.f32 %v11365, %v11525
      %v11527 = vpop.f32.mrf.mxu0
      %v11528 = vpop.f32.mrf.mxu0
      %v11529 = vadd.f32 %v11368, %v11528
      %v11530 = vpop.f32.mrf.mxu0
      %11531 = vmatprep.mubr.bf16.mxu0 %v10468
      %11532 = vmatmul.mubr.bf16.gmra.mxu0 %v10467
      %v11533 = vpop.f32.mrf.mxu0
      %v11534 = vadd.f32 %v11373, %v11533
      %v11535 = vpop.f32.mrf.mxu0
      %v11536 = vpop.f32.mrf.mxu0
      %v11537 = vadd.f32 %v11376, %v11536
      %v11538 = vpop.f32.mrf.mxu0
      %11539 = vmatprep.mubr.bf16.mxu0 %v10477
      %11540 = vmatmul.mubr.bf16.gmra.mxu0 %v10476
      %v11541 = vpop.f32.mrf.mxu0
      %v11542 = vadd.f32 %v11381, %v11541
      %v11543 = vpop.f32.mrf.mxu0
      %v11544 = vpop.f32.mrf.mxu0
      %v11545 = vadd.f32 %v11384, %v11544
      %v11546 = vpop.f32.mrf.mxu0
      %11547 = vmatprep.mubr.bf16.mxu0 %v10486
      %11548 = vmatmul.mubr.bf16.gmra.mxu0 %v10485
      %v11549 = vpop.f32.mrf.mxu0
      %v11550 = vadd.f32 %v11389, %v11549
      %v11551 = vpop.f32.mrf.mxu0
      %v11552 = vpop.f32.mrf.mxu0
      %v11553 = vadd.f32 %v11392, %v11552
      %v11554 = vpop.f32.mrf.mxu0
      %11555 = vmatprep.mubr.bf16.mxu0 %v10495
      %11556 = vmatmul.mubr.bf16.gmra.mxu0 %v10494
      %v11557 = vpop.f32.mrf.mxu0
      %v11558 = vadd.f32 %v11397, %v11557
      %v11559 = vpop.f32.mrf.mxu0
      %v11560 = vpop.f32.mrf.mxu0
      %v11561 = vadd.f32 %v11400, %v11560
      %v11562 = vpop.f32.mrf.mxu0
      %11563 = vmatprep.mubr.bf16.mxu0 %v10504
      %11564 = vmatmul.mubr.bf16.gmra.mxu0 %v10503
      %v11565 = vpop.f32.mrf.mxu0
      %v11566 = vadd.f32 %v11405, %v11565
      %v11567 = vpop.f32.mrf.mxu0
      %v11568 = vpop.f32.mrf.mxu0
      %v11569 = vadd.f32 %v11408, %v11568
      %v11570 = vpop.f32.mrf.mxu0
      %11571 = vmatprep.mubr.bf16.mxu0 %v10513
      %11572 = vmatmul.mubr.bf16.gmra.mxu0 %v10512
      %v11573 = vpop.f32.mrf.mxu0
      %v11574 = vadd.f32 %v11413, %v11573
      %v11575 = vpop.f32.mrf.mxu0
      %v11576 = vpop.f32.mrf.mxu0
      %v11577 = vadd.f32 %v11416, %v11576
      %v11578 = vpop.f32.mrf.mxu0
      %11579 = vmatprep.mubr.bf16.mxu0 %v10522
      %11580 = vmatmul.mubr.bf16.gmra.mxu0 %v10521
      %v11581 = vpop.f32.mrf.mxu0
      %v11582 = vadd.f32 %v11421, %v11581
      %v11583 = vpop.f32.mrf.mxu0
      %v11584 = vpop.f32.mrf.mxu0
      %v11585 = vadd.f32 %v11424, %v11584
      %v11586 = vpop.f32.mrf.mxu0
      %11587 = vmatprep.mubr.bf16.mxu0 %v10531
      %11588 = vmatmul.mubr.bf16.gmra.mxu0 %v10530
      %v11589 = vpop.f32.mrf.mxu0
      %v11590 = vadd.f32 %v11429, %v11589
      %v11591 = vpop.f32.mrf.mxu0
      %v11592 = vpop.f32.mrf.mxu0
      %v11593 = vadd.f32 %v11432, %v11592
      %v11594 = vpop.f32.mrf.mxu0
      %11595 = vmatprep.mubr.bf16.mxu0 %v10540
      %11596 = vmatmul.mubr.bf16.gmra.mxu0 %v10539
      %v11597 = vpop.f32.mrf.mxu0
      %v11598 = vadd.f32 %v11437, %v11597
      %v11599 = vpop.f32.mrf.mxu0
      %v11600 = vpop.f32.mrf.mxu0
      %v11601 = vadd.f32 %v11440, %v11600
      %v11602 = vpop.f32.mrf.mxu0
      %11603 = vmatprep.mubr.bf16.mxu0 %v10549
      %11604 = vmatmul.mubr.bf16.gmra.mxu0 %v10548
      %v11605 = vpop.f32.mrf.mxu0
      %v11606 = vadd.f32 %v11445, %v11605
      %v11607 = vpop.f32.mrf.mxu0
      %v11608 = vpop.f32.mrf.mxu0
      %v11609 = vadd.f32 %v11448, %v11608
      %v11610 = vpop.f32.mrf.mxu0
      %11611 = vdwg.mxu0
      %11612 = vmatprep.subr.bf16.mxu0 0
      %11613 = vmatpush1.bf16.msra.mxu0 %v11040
      %11614 = vmatprep.subr.bf16.mxu0 0
      %11615 = vmatpush1.bf16.msra.mxu0 %v11039
      %11616 = vmatprep.subr.bf16.mxu0 0
      %11617 = vmatpush1.bf16.msra.mxu0 %v11038
      %11618 = vmatprep.subr.bf16.mxu0 0
      %11619 = vmatpush1.bf16.msra.mxu0 %v11037
      %11620 = vmatprep.subr.bf16.mxu0 0
      %11621 = vmatpush1.bf16.msra.mxu0 %v11036
      %11622 = vmatprep.subr.bf16.mxu0 0
      %11623 = vmatpush1.bf16.msra.mxu0 %v11035
      %11624 = vmatprep.subr.bf16.mxu0 0
      %11625 = vmatpush1.bf16.msra.mxu0 %v11034
      %11626 = vmatprep.subr.bf16.mxu0 0
      %11627 = vmatpush1.bf16.msra.mxu0 %v11033
      %11628 = vmatprep.subr.bf16.mxu0 0
      %11629 = vmatpush2.bf16.msra.mxu0 %v11048
      %11630 = vmatprep.subr.bf16.mxu0 0
      %11631 = vmatpush2.bf16.msra.mxu0 %v11047
      %11632 = vmatprep.subr.bf16.mxu0 0
      %11633 = vmatpush2.bf16.msra.mxu0 %v11046
      %11634 = vmatprep.subr.bf16.mxu0 0
      %11635 = vmatpush2.bf16.msra.mxu0 %v11045
      %11636 = vmatprep.subr.bf16.mxu0 0
      %11637 = vmatpush2.bf16.msra.mxu0 %v11044
      %11638 = vmatprep.subr.bf16.mxu0 0
      %11639 = vmatpush2.bf16.msra.mxu0 %v11043
      %11640 = vmatprep.subr.bf16.mxu0 0
      %11641 = vmatpush2.bf16.msra.mxu0 %v11042
      %11642 = vmatprep.subr.bf16.mxu0 0
      %11643 = vmatpush2.bf16.msra.mxu0 %v11041
      %11644 = vmatprep.mubr.bf16.mxu0 %v10416
      %11645 = vmatmul.mubr.bf16.gmra.mxu0 %v10415
      %v11646 = vpop.f32.mrf.mxu0
      %v11647 = vadd.f32 %v11486, %v11646
      %v11648 = vpop.f32.mrf.mxu0
      %v11649 = vpop.f32.mrf.mxu0
      %v11650 = vadd.f32 %v11489, %v11649
      %v11651 = vpop.f32.mrf.mxu0
      %11652 = vmatprep.mubr.bf16.mxu0 %v10425
      %11653 = vmatmul.mubr.bf16.gmra.mxu0 %v10424
      %v11654 = vpop.f32.mrf.mxu0
      %v11655 = vadd.f32 %v11494, %v11654
      %v11656 = vpop.f32.mrf.mxu0
      %v11657 = vpop.f32.mrf.mxu0
      %v11658 = vadd.f32 %v11497, %v11657
      %v11659 = vpop.f32.mrf.mxu0
      %11660 = vmatprep.mubr.bf16.mxu0 %v10434
      %11661 = vmatmul.mubr.bf16.gmra.mxu0 %v10433
      %v11662 = vpop.f32.mrf.mxu0
      %v11663 = vadd.f32 %v11502, %v11662
      %v11664 = vpop.f32.mrf.mxu0
      %v11665 = vpop.f32.mrf.mxu0
      %v11666 = vadd.f32 %v11505, %v11665
      %v11667 = vpop.f32.mrf.mxu0
      %11668 = vmatprep.mubr.bf16.mxu0 %v10443
      %11669 = vmatmul.mubr.bf16.gmra.mxu0 %v10442
      %v11670 = vpop.f32.mrf.mxu0
      %v11671 = vadd.f32 %v11510, %v11670
      %v11672 = vpop.f32.mrf.mxu0
      %v11673 = vpop.f32.mrf.mxu0
      %v11674 = vadd.f32 %v11513, %v11673
      %v11675 = vpop.f32.mrf.mxu0
      %11676 = vmatprep.mubr.bf16.mxu0 %v10452
      %11677 = vmatmul.mubr.bf16.gmra.mxu0 %v10451
      %v11678 = vpop.f32.mrf.mxu0
      %v11679 = vadd.f32 %v11518, %v11678
      %v11680 = vpop.f32.mrf.mxu0
      %v11681 = vpop.f32.mrf.mxu0
      %v11682 = vadd.f32 %v11521, %v11681
      %v11683 = vpop.f32.mrf.mxu0
      %11684 = vmatprep.mubr.bf16.mxu0 %v10461
      %11685 = vmatmul.mubr.bf16.gmra.mxu0 %v10460
      %v11686 = vpop.f32.mrf.mxu0
      %v11687 = vadd.f32 %v11526, %v11686
      %v11688 = vpop.f32.mrf.mxu0
      %v11689 = vpop.f32.mrf.mxu0
      %v11690 = vadd.f32 %v11529, %v11689
      %v11691 = vpop.f32.mrf.mxu0
      %11692 = vmatprep.mubr.bf16.mxu0 %v10470
      %11693 = vmatmul.mubr.bf16.gmra.mxu0 %v10469
      %v11694 = vpop.f32.mrf.mxu0
      %v11695 = vadd.f32 %v11534, %v11694
      %v11696 = vpop.f32.mrf.mxu0
      %v11697 = vpop.f32.mrf.mxu0
      %v11698 = vadd.f32 %v11537, %v11697
      %v11699 = vpop.f32.mrf.mxu0
      %11700 = vmatprep.mubr.bf16.mxu0 %v10479
      %11701 = vmatmul.mubr.bf16.gmra.mxu0 %v10478
      %v11702 = vpop.f32.mrf.mxu0
      %v11703 = vadd.f32 %v11542, %v11702
      %v11704 = vpop.f32.mrf.mxu0
      %v11705 = vpop.f32.mrf.mxu0
      %v11706 = vadd.f32 %v11545, %v11705
      %v11707 = vpop.f32.mrf.mxu0
      %11708 = vmatprep.mubr.bf16.mxu0 %v10488
      %11709 = vmatmul.mubr.bf16.gmra.mxu0 %v10487
      %v11710 = vpop.f32.mrf.mxu0
      %v11711 = vadd.f32 %v11550, %v11710
      %v11712 = vpop.f32.mrf.mxu0
      %v11713 = vpop.f32.mrf.mxu0
      %v11714 = vadd.f32 %v11553, %v11713
      %v11715 = vpop.f32.mrf.mxu0
      %11716 = vmatprep.mubr.bf16.mxu0 %v10497
      %11717 = vmatmul.mubr.bf16.gmra.mxu0 %v10496
      %v11718 = vpop.f32.mrf.mxu0
      %v11719 = vadd.f32 %v11558, %v11718
      %v11720 = vpop.f32.mrf.mxu0
      %v11721 = vpop.f32.mrf.mxu0
      %v11722 = vadd.f32 %v11561, %v11721
      %v11723 = vpop.f32.mrf.mxu0
      %11724 = vmatprep.mubr.bf16.mxu0 %v10506
      %11725 = vmatmul.mubr.bf16.gmra.mxu0 %v10505
      %v11726 = vpop.f32.mrf.mxu0
      %v11727 = vadd.f32 %v11566, %v11726
      %v11728 = vpop.f32.mrf.mxu0
      %v11729 = vpop.f32.mrf.mxu0
      %v11730 = vadd.f32 %v11569, %v11729
      %v11731 = vpop.f32.mrf.mxu0
      %11732 = vmatprep.mubr.bf16.mxu0 %v10515
      %11733 = vmatmul.mubr.bf16.gmra.mxu0 %v10514
      %v11734 = vpop.f32.mrf.mxu0
      %v11735 = vadd.f32 %v11574, %v11734
      %v11736 = vpop.f32.mrf.mxu0
      %v11737 = vpop.f32.mrf.mxu0
      %v11738 = vadd.f32 %v11577, %v11737
      %v11739 = vpop.f32.mrf.mxu0
      %11740 = vmatprep.mubr.bf16.mxu0 %v10524
      %11741 = vmatmul.mubr.bf16.gmra.mxu0 %v10523
      %v11742 = vpop.f32.mrf.mxu0
      %v11743 = vadd.f32 %v11582, %v11742
      %v11744 = vpop.f32.mrf.mxu0
      %v11745 = vpop.f32.mrf.mxu0
      %v11746 = vadd.f32 %v11585, %v11745
      %v11747 = vpop.f32.mrf.mxu0
      %11748 = vmatprep.mubr.bf16.mxu0 %v10533
      %11749 = vmatmul.mubr.bf16.gmra.mxu0 %v10532
      %v11750 = vpop.f32.mrf.mxu0
      %v11751 = vadd.f32 %v11590, %v11750
      %v11752 = vpop.f32.mrf.mxu0
      %v11753 = vpop.f32.mrf.mxu0
      %v11754 = vadd.f32 %v11593, %v11753
      %v11755 = vpop.f32.mrf.mxu0
      %11756 = vmatprep.mubr.bf16.mxu0 %v10542
      %11757 = vmatmul.mubr.bf16.gmra.mxu0 %v10541
      %v11758 = vpop.f32.mrf.mxu0
      %v11759 = vadd.f32 %v11598, %v11758
      %v11760 = vpop.f32.mrf.mxu0
      %v11761 = vpop.f32.mrf.mxu0
      %v11762 = vadd.f32 %v11601, %v11761
      %v11763 = vpop.f32.mrf.mxu0
      %11764 = vmatprep.mubr.bf16.mxu0 %v10551
      %11765 = vmatmul.mubr.bf16.gmra.mxu0 %v10550
      %v11766 = vpop.f32.mrf.mxu0
      %v11767 = vadd.f32 %v11606, %v11766
      %v11768 = vpop.f32.mrf.mxu0
      %v11769 = vpop.f32.mrf.mxu0
      %v11770 = vadd.f32 %v11609, %v11769
      %v11771 = vpop.f32.mrf.mxu0
      %11772 = vdwg.mxu0
      %11773 = vmatprep.subr.bf16.mxu0 0
      %11774 = vmatpush1.bf16.msra.mxu0 %v11056
      %11775 = vmatprep.subr.bf16.mxu0 0
      %11776 = vmatpush1.bf16.msra.mxu0 %v11055
      %11777 = vmatprep.subr.bf16.mxu0 0
      %11778 = vmatpush1.bf16.msra.mxu0 %v11054
      %11779 = vmatprep.subr.bf16.mxu0 0
      %11780 = vmatpush1.bf16.msra.mxu0 %v11053
      %11781 = vmatprep.subr.bf16.mxu0 0
      %11782 = vmatpush1.bf16.msra.mxu0 %v11052
      %11783 = vmatprep.subr.bf16.mxu0 0
      %11784 = vmatpush1.bf16.msra.mxu0 %v11051
      %11785 = vmatprep.subr.bf16.mxu0 0
      %11786 = vmatpush1.bf16.msra.mxu0 %v11050
      %11787 = vmatprep.subr.bf16.mxu0 0
      %11788 = vmatpush1.bf16.msra.mxu0 %v11049
      %11789 = vmatprep.subr.bf16.mxu0 0
      %11790 = vmatpush2.bf16.msra.mxu0 0
      %11791 = vmatprep.subr.bf16.mxu0 0
      %11792 = vmatpush2.bf16.msra.mxu0 0
      %11793 = vmatprep.subr.bf16.mxu0 0
      %11794 = vmatpush2.bf16.msra.mxu0 0
      %11795 = vmatprep.subr.bf16.mxu0 0
      %11796 = vmatpush2.bf16.msra.mxu0 0
      %11797 = vmatprep.subr.bf16.mxu0 0
      %11798 = vmatpush2.bf16.msra.mxu0 0
      %11799 = vmatprep.subr.bf16.mxu0 0
      %11800 = vmatpush2.bf16.msra.mxu0 0
      %11801 = vmatprep.subr.bf16.mxu0 0
      %11802 = vmatpush2.bf16.msra.mxu0 0
      %11803 = vmatprep.subr.bf16.mxu0 0
      %11804 = vmatpush2.bf16.msra.mxu0 0
      %11805 = vmatprep.mubr.bf16.mxu0 0
      %11806 = vmatmul.mubr.bf16.gmra.mxu0 %v10417
      %v11807 = vpop.f32.mrf.mxu0
      %v11808 = vadd.f32 %v11647, %v11807
      %v11809 = vpop.f32.mrf.mxu0
      %v11810 = vpop.f32.mrf.mxu0
      %v11811 = vadd.f32 %v11650, %v11810
      %v11812 = vpop.f32.mrf.mxu0
      %11813 = vmatprep.mubr.bf16.mxu0 0
      %11814 = vmatmul.mubr.bf16.gmra.mxu0 %v10426
      %v11815 = vpop.f32.mrf.mxu0
      %v11816 = vadd.f32 %v11655, %v11815
      %v11817 = vpop.f32.mrf.mxu0
      %v11818 = vpop.f32.mrf.mxu0
      %v11819 = vadd.f32 %v11658, %v11818
      %v11820 = vpop.f32.mrf.mxu0
      %11821 = vmatprep.mubr.bf16.mxu0 0
      %11822 = vmatmul.mubr.bf16.gmra.mxu0 %v10435
      %v11823 = vpop.f32.mrf.mxu0
      %v11824 = vadd.f32 %v11663, %v11823
      %v11825 = vpop.f32.mrf.mxu0
      %v11826 = vpop.f32.mrf.mxu0
      %v11827 = vadd.f32 %v11666, %v11826
      %v11828 = vpop.f32.mrf.mxu0
      %11829 = vmatprep.mubr.bf16.mxu0 0
      %11830 = vmatmul.mubr.bf16.gmra.mxu0 %v10444
      %v11831 = vpop.f32.mrf.mxu0
      %v11832 = vadd.f32 %v11671, %v11831
      %v11833 = vpop.f32.mrf.mxu0
      %v11834 = vpop.f32.mrf.mxu0
      %v11835 = vadd.f32 %v11674, %v11834
      %v11836 = vpop.f32.mrf.mxu0
      %11837 = vmatprep.mubr.bf16.mxu0 0
      %11838 = vmatmul.mubr.bf16.gmra.mxu0 %v10453
      %v11839 = vpop.f32.mrf.mxu0
      %v11840 = vadd.f32 %v11679, %v11839
      %v11841 = vpop.f32.mrf.mxu0
      %v11842 = vpop.f32.mrf.mxu0
      %v11843 = vadd.f32 %v11682, %v11842
      %v11844 = vpop.f32.mrf.mxu0
      %11845 = vmatprep.mubr.bf16.mxu0 0
      %11846 = vmatmul.mubr.bf16.gmra.mxu0 %v10462
      %v11847 = vpop.f32.mrf.mxu0
      %v11848 = vadd.f32 %v11687, %v11847
      %v11849 = vpop.f32.mrf.mxu0
      %v11850 = vpop.f32.mrf.mxu0
      %v11851 = vadd.f32 %v11690, %v11850
      %v11852 = vpop.f32.mrf.mxu0
      %11853 = vmatprep.mubr.bf16.mxu0 0
      %11854 = vmatmul.mubr.bf16.gmra.mxu0 %v10471
      %v11855 = vpop.f32.mrf.mxu0
      %v11856 = vadd.f32 %v11695, %v11855
      %v11857 = vpop.f32.mrf.mxu0
      %v11858 = vpop.f32.mrf.mxu0
      %v11859 = vadd.f32 %v11698, %v11858
      %v11860 = vpop.f32.mrf.mxu0
      %11861 = vmatprep.mubr.bf16.mxu0 0
      %11862 = vmatmul.mubr.bf16.gmra.mxu0 %v10480
      %v11863 = vpop.f32.mrf.mxu0
      %v11864 = vadd.f32 %v11703, %v11863
      %v11865 = vpop.f32.mrf.mxu0
      %v11866 = vpop.f32.mrf.mxu0
      %v11867 = vadd.f32 %v11706, %v11866
      %v11868 = vpop.f32.mrf.mxu0
      %11869 = vmatprep.mubr.bf16.mxu0 0
      %11870 = vmatmul.mubr.bf16.gmra.mxu0 %v10489
      %v11871 = vpop.f32.mrf.mxu0
      %v11872 = vadd.f32 %v11711, %v11871
      %v11873 = vpop.f32.mrf.mxu0
      %v11874 = vpop.f32.mrf.mxu0
      %v11875 = vadd.f32 %v11714, %v11874
      %v11876 = vpop.f32.mrf.mxu0
      %11877 = vmatprep.mubr.bf16.mxu0 0
      %11878 = vmatmul.mubr.bf16.gmra.mxu0 %v10498
      %v11879 = vpop.f32.mrf.mxu0
      %v11880 = vadd.f32 %v11719, %v11879
      %v11881 = vpop.f32.mrf.mxu0
      %v11882 = vpop.f32.mrf.mxu0
      %v11883 = vadd.f32 %v11722, %v11882
      %v11884 = vpop.f32.mrf.mxu0
      %11885 = vmatprep.mubr.bf16.mxu0 0
      %11886 = vmatmul.mubr.bf16.gmra.mxu0 %v10507
      %v11887 = vpop.f32.mrf.mxu0
      %v11888 = vadd.f32 %v11727, %v11887
      %v11889 = vpop.f32.mrf.mxu0
      %v11890 = vpop.f32.mrf.mxu0
      %v11891 = vadd.f32 %v11730, %v11890
      %v11892 = vpop.f32.mrf.mxu0
      %11893 = vmatprep.mubr.bf16.mxu0 0
      %11894 = vmatmul.mubr.bf16.gmra.mxu0 %v10516
      %v11895 = vpop.f32.mrf.mxu0
      %v11896 = vadd.f32 %v11735, %v11895
      %v11897 = vpop.f32.mrf.mxu0
      %v11898 = vpop.f32.mrf.mxu0
      %v11899 = vadd.f32 %v11738, %v11898
      %v11900 = vpop.f32.mrf.mxu0
      %11901 = vmatprep.mubr.bf16.mxu0 0
      %11902 = vmatmul.mubr.bf16.gmra.mxu0 %v10525
      %v11903 = vpop.f32.mrf.mxu0
      %v11904 = vadd.f32 %v11743, %v11903
      %v11905 = vpop.f32.mrf.mxu0
      %v11906 = vpop.f32.mrf.mxu0
      %v11907 = vadd.f32 %v11746, %v11906
      %v11908 = vpop.f32.mrf.mxu0
      %11909 = vmatprep.mubr.bf16.mxu0 0
      %11910 = vmatmul.mubr.bf16.gmra.mxu0 %v10534
      %v11911 = vpop.f32.mrf.mxu0
      %v11912 = vadd.f32 %v11751, %v11911
      %v11913 = vpop.f32.mrf.mxu0
      %v11914 = vpop.f32.mrf.mxu0
      %v11915 = vadd.f32 %v11754, %v11914
      %v11916 = vpop.f32.mrf.mxu0
      %11917 = vmatprep.mubr.bf16.mxu0 0
      %11918 = vmatmul.mubr.bf16.gmra.mxu0 %v10543
      %v11919 = vpop.f32.mrf.mxu0
      %v11920 = vadd.f32 %v11759, %v11919
      %v11921 = vpop.f32.mrf.mxu0
      %v11922 = vpop.f32.mrf.mxu0
      %v11923 = vadd.f32 %v11762, %v11922
      %v11924 = vpop.f32.mrf.mxu0
      %11925 = vmatprep.mubr.bf16.mxu0 0
      %11926 = vmatmul.mubr.bf16.gmra.mxu0 %v10552
      %v11927 = vpop.f32.mrf.mxu0
      %v11928 = vadd.f32 %v11767, %v11927
      %v11929 = vpop.f32.mrf.mxu0
      %v11930 = vpop.f32.mrf.mxu0
      %v11931 = vadd.f32 %v11770, %v11930
      %v11932 = vpop.f32.mrf.mxu0
      %11933 = vdwg.mxu0
      %v11934 = vmax.f32 %v11808, 0.0
      %v11935 = vmax.f32 %v11811, 0.0
      %v11936 = vmax.f32 %v11816, 0.0
      %v11937 = vmax.f32 %v11819, 0.0
      %v11938 = vmax.f32 %v11824, 0.0
      %v11939 = vmax.f32 %v11827, 0.0
      %v11940 = vmax.f32 %v11832, 0.0
      %v11941 = vmax.f32 %v11835, 0.0
      %v11942 = vmax.f32 %v11840, 0.0
      %v11943 = vmax.f32 %v11843, 0.0
      %v11944 = vmax.f32 %v11848, 0.0
      %v11945 = vmax.f32 %v11851, 0.0
      %v11946 = vmax.f32 %v11856, 0.0
      %v11947 = vmax.f32 %v11859, 0.0
      %v11948 = vmax.f32 %v11864, 0.0
      %v11949 = vmax.f32 %v11867, 0.0
      %v11950 = vmax.f32 %v11872, 0.0
      %v11951 = vmax.f32 %v11875, 0.0
      %v11952 = vmax.f32 %v11880, 0.0
      %v11953 = vmax.f32 %v11883, 0.0
      %v11954 = vmax.f32 %v11888, 0.0
      %v11955 = vmax.f32 %v11891, 0.0
      %v11956 = vmax.f32 %v11896, 0.0
      %v11957 = vmax.f32 %v11899, 0.0
      %v11958 = vmax.f32 %v11904, 0.0
      %v11959 = vmax.f32 %v11907, 0.0
      %v11960 = vmax.f32 %v11912, 0.0
      %v11961 = vmax.f32 %v11915, 0.0
      %v11962 = vmax.f32 %v11920, 0.0
      %v11963 = vmax.f32 %v11923, 0.0
      %v11964 = vmax.f32 %v11928, 0.0
      %v11965 = vmax.f32 %v11931, 0.0
      %v11966 = vadd.f32 %v11934, %v11935
      %v11967 = vadd.f32 %v11966, %v11936
      %v11968 = vadd.f32 %v11967, %v11937
      %v11969 = vadd.f32 %v11968, %v11938
      %v11970 = vadd.f32 %v11969, %v11939
      %v11971 = vadd.f32 %v11970, %v11940
      %v11972 = vadd.f32 %v11971, %v11941
      %v11973 = vadd.f32 %v11972, %v11942
      %v11974 = vadd.f32 %v11973, %v11943
      %v11975 = vadd.f32 %v11974, %v11944
      %v11976 = vadd.f32 %v11975, %v11945
      %v11977 = vadd.f32 %v11976, %v11946
      %v11978 = vadd.f32 %v11977, %v11947
      %v11979 = vadd.f32 %v11978, %v11948
      %v11980 = vadd.f32 %v11979, %v11949
      %v11981 = vadd.f32 %v11980, %v11950
      %v11982 = vadd.f32 %v11981, %v11951
      %v11983 = vadd.f32 %v11982, %v11952
      %v11984 = vadd.f32 %v11983, %v11953
      %v11985 = vadd.f32 %v11984, %v11954
      %v11986 = vadd.f32 %v11985, %v11955
      %v11987 = vadd.f32 %v11986, %v11956
      %v11988 = vadd.f32 %v11987, %v11957
      %v11989 = vadd.f32 %v11988, %v11958
      %v11990 = vadd.f32 %v11989, %v11959
      %v11991 = vadd.f32 %v11990, %v11960
      %v11992 = vadd.f32 %v11991, %v11961
      %v11993 = vadd.f32 %v11992, %v11962
      %v11994 = vadd.f32 %v11993, %v11963
      %v11995 = vadd.f32 %v11994, %v11964
      %v11996 = vadd.f32 %v11995, %v11965
      %v11997 = vrot.slane %v11996, 4
      %v11998 = vadd.f32 %v11996, %v11997
      %v11999 = vrot.slane %v11998, 2
      %v12000 = vadd.f32 %v11998, %v11999
      %v12001 = vrot.slane %v12000, 1
      %v12002 = vadd.f32 %v12000, %v12001
      %v12003 = vmul.f32 %v12002, %v6666
      %vm12004 = vcmask 1040384
      %v12005 = vsel %vm12004, %v6667, %v12003
      %vm12006 = vcmask 1041408
      %v12007 = vsel %vm12006, %v12005, 0.0
      %12008 = vst [vmem:[%s195] sm:$0xff] %v12007
      %p12009 = scmp.lt.s32.totalorder %s15, 199
      %s12010 = scalar_select %p12009, %s15, 199
      %s12011 = smul.addr %s12010, 8
      %s12012 = scalar_lea.vmem %s4, %s12011
      // Predicated region
      $region37: #{fit_banks.1} parent=35 // pred_check
        %p12013 = pneg %p122
      $region38: #{fit_banks.1} parent=35 // pred_check_branch
        %12015 = sbr.rel (%p12013) target = $region40
      $region39: #{fit_banks.1} parent=35 // pred_region
        _
      $region40: #{fit_banks.1} parent=35 // pred_fallthru
        _
    $region36: #{fit_banks.1} parent=5 // pred_fallthru
      _
    %p12016 = scmp.le.s32.totalorder 2, %s10
    // Predicated region
    $region41: #{fit_banks.1} parent=5 // pred_check
      %p12017 = pneg %p12016
    $region42: #{fit_banks.1} parent=5 // pred_check_branch
      %12019 = sbr.rel (%p12017) target = $region44
    $region43: #{fit_banks.1} parent=5 // pred_region
      %s12020 = ssub.s32 %s10, 2
      // Predicated region
      $region45: #{fit_banks.1} parent=43 // pred_check
        %p12021 = pneg %p128
      $region46: #{fit_banks.1} parent=43 // pred_check_branch
        %12023 = sbr.rel (%p12021) target = $region48
      $region47: #{fit_banks.1} parent=43 // pred_region
        %p12024 = scmp.lt.s32.totalorder %s16, 199
        %s12025 = scalar_select %p12024, %s16, 199
        %s12026 = smul.addr %s12025, 8
        %s12027 = scalar_lea.vmem %s4, %s12026
      $region48: #{fit_banks.1} parent=43 // pred_fallthru
        _
    $region44: #{fit_banks.1} parent=5 // pred_fallthru
      _
  $region6: #{fit_banks.1} parent=0 // loop_footer
    %s14 = sadd.s32 1, %s10
  $region7: #{fit_banks.1} parent=0 // loop_footer_branch
    %9 = sbr.rel target = $region3
  $region8: #{fit_banks.1} parent=0 // loop_exit
    _

</llo_original>
